<compile_context>
chip_gen: v7x
topology: tpu7x:2x2x1
jax: 0.10.0
libtpu: 0.0.40
codegen_flags: <defaults>
</compile_context>

<pallas_src>
import functools

import jax
import jax.numpy as jnp
from jax.experimental import pallas as pl
from jax.experimental.pallas import tpu as pltpu


# ----------------------------------------------------------------------------
# Fused Pallas kernel: all DCGRU layers + projection, one batch tile per step.
# ----------------------------------------------------------------------------
def _decoder_sigma_kernel(*refs, num_layers, num_supports, max_diffusion_step,
                          num_nodes, rnn_units, batch_tile, compute_dtype):
    L, S, K = num_layers, num_supports, max_diffusion_step
    N, U, BT = num_nodes, rnn_units, batch_tile
    R = BT * N
    cd = compute_dtype
    f32 = jnp.float32

    x_ref, h_ref, sup_ref = refs[0], refs[1], refs[2]
    w_refs = refs[3:3 + 4 * L]
    wproj_ref = refs[3 + 4 * L]
    bproj_ref = refs[4 + 4 * L]
    h_out_ref = refs[5 + 4 * L]
    proj_out_ref = refs[6 + 4 * L]

    def wmm(term_list, w):
        """One per-term weight matmul.

        term_list: BT per-sample (N, f) float32 arrays (batch-major row order).
        w: (f, width) in compute dtype.  Returns (BT*N, width) float32.
        """
        rows = jnp.concatenate(term_list, axis=0) if BT > 1 else term_list[0]
        if w.shape[0] == 1:
            # f == 1 (layer-0 input feature): length-1 contraction == broadcast.
            return rows * w.astype(f32)
        return jnp.dot(rows.astype(cd), w, preferred_element_type=f32)

    def diffuse_mm(z_list, w_ref):
        """sum_m diffusion_term_m(z) @ W[m]  without materializing term lists.

        z_list: BT per-sample (N, f) float32 arrays; w_ref: (M, f, width).
        Diffusion runs as plain 2-D (N, N) @ (N, f) MXU matmuls (no support
        broadcast over batch); mirrors DCGRUCell._gconv exactly, including the
        x0/x1 carry across supports (a quirk of the original DCRNN code).
        """
        acc = wmm(z_list, w_ref[0])
        x0 = z_list
        idx = 1
        for s in range(S):
            sup = sup_ref[s]                                       # (N, N)
            x1 = [jnp.dot(sup, z.astype(cd), preferred_element_type=f32)
                  for z in x0]
            acc = acc + wmm(x1, w_ref[idx])
            idx += 1
            for _ in range(2, K + 1):
                x2 = [2.0 * jnp.dot(sup, a.astype(cd),
                                    preferred_element_type=f32) - b
                      for a, b in zip(x1, x0)]
                acc = acc + wmm(x2, w_ref[idx])
                idx += 1
                x1, x0 = x2, x1
        return acc

    x_tile = x_ref[...].astype(f32)                      # (BT, N, Din)
    out_list = [x_tile[b] for b in range(BT)]
    h_new = None
    for layer in range(L):
        wx_ruc, wh_ru, wc_h, b_ruc = w_refs[4 * layer:4 * layer + 4]
        h_tile = h_ref[layer].astype(f32)                # (BT, N, U)
        h_rows = h_tile.reshape(R, U)
        h_list = [h_tile[b] for b in range(BT)]

        # Fused gate passes: one 3U-wide x-side sweep, one 2U-wide h-side sweep.
        gx = diffuse_mm(out_list, wx_ruc) + b_ruc[...]             # (R, 3U)
        gh = diffuse_mm(h_list, wh_ru)                             # (R, 2U)

        r = jax.nn.sigmoid(gx[:, :U] + gh[:, :U])
        u = jax.nn.sigmoid(gx[:, U:2 * U] + gh[:, U:2 * U])

        rh = r * h_rows
        rh_list = [rh[b * N:(b + 1) * N, :] for b in range(BT)]
        ch = diffuse_mm(rh_list, wc_h)                             # (R, U)
        c = jnp.tanh(gx[:, 2 * U:] + ch)

        h_new = u * h_rows + (1.0 - u) * c                         # (R, U)
        h_out_ref[layer] = h_new.reshape(BT, N, U)
        out_list = [h_new[b * N:(b + 1) * N, :] for b in range(BT)]

    # Projection epilogue on the resident last hidden state; the weight was
    # pre-transposed to (U, O) in glue so no in-kernel transpose of h is needed.
    proj = jnp.dot(h_new.astype(cd), wproj_ref[...],
                   preferred_element_type=f32) + bproj_ref[...]
    proj_out_ref[...] = proj.reshape(BT, N, proj.shape[1])


# ----------------------------------------------------------------------------
# pallas_call wrapper
# ----------------------------------------------------------------------------
def _pick_batch_tile(batch, cap=8):
    bt = min(batch, cap)
    while batch % bt:
        bt -= 1
    return bt


def decoder_sigma_forward(inputs, hidden_state, layer_params, proj_params,
                          supports, *, num_nodes, rnn_units, output_dim,
                          max_diffusion_step, compute_dtype=jnp.bfloat16,
                          batch_tile=None):
    """inputs: (B, N*output_dim); hidden_state: (L, B, N*rnn_units).

    Returns (output (B, N*output_dim), new hidden (L, B, N*rnn_units)).
    """
    B = inputs.shape[0]
    L = hidden_state.shape[0]
    N, U, O = num_nodes, rnn_units, output_dim
    S = supports.shape[0]

    bt = _pick_batch_tile(B) if batch_tile is None else batch_tile
    grid = (B // bt,)

    x = inputs.reshape(B, N, O).astype(jnp.float32)
    h = hidden_state.reshape(L, B, N, U).astype(jnp.float32)
    sup = supports.astype(compute_dtype)

    flat_w = []
    for p in layer_params:
        flat_w += [p["wx_ruc"], p["wh_ru"], p["wc_h"], p["b_ruc"]]

    kernel = functools.partial(
        _decoder_sigma_kernel, num_layers=L, num_supports=S,
        max_diffusion_step=max_diffusion_step, num_nodes=N, rnn_units=U,
        batch_tile=bt, compute_dtype=compute_dtype)

    def _const_spec(arr):
        return pl.BlockSpec(arr.shape, lambda b, _nd=arr.ndim: (0,) * _nd)

    in_specs = [
        pl.BlockSpec((bt, N, O), lambda b: (b, 0, 0)),         # inputs
        pl.BlockSpec((L, bt, N, U), lambda b: (0, b, 0, 0)),   # hidden (aliased)
        _const_spec(sup),
    ]
    in_specs += [_const_spec(w) for w in flat_w]
    in_specs += [_const_spec(proj_params["w"]), _const_spec(proj_params["b"])]

    out_specs = (
        pl.BlockSpec((L, bt, N, U), lambda b: (0, b, 0, 0)),   # new hidden
        pl.BlockSpec((bt, N, O), lambda b: (b, 0, 0)),         # projection
    )

    # VMEM budget: double-buffered I/O blocks + resident weights + headroom
    # for the live f32 gate / diffusion intermediates of one batch tile.
    io_block_bytes = 4 * (2 * bt * N * O + 2 * L * bt * N * U)
    w_bytes = sum(int(w.size) * w.dtype.itemsize for w in flat_w)
    w_bytes += int(sup.size) * sup.dtype.itemsize
    w_bytes += int(proj_params["w"].size) * proj_params["w"].dtype.itemsize
    w_bytes += int(proj_params["b"].size) * 4
    interm_bytes = 4 * bt * N * (8 * 3 * U + 4 * max(U, O))
    vmem_limit = int(min(64 << 20,
                         max(32 << 20,
                             2 * (io_block_bytes + w_bytes) + interm_bytes)))

    h_out, proj_out = pl.pallas_call(
        kernel,
        grid=grid,
        out_shape=(jax.ShapeDtypeStruct((L, B, N, U), jnp.float32),
                   jax.ShapeDtypeStruct((B, N, O), jnp.float32)),
        in_specs=in_specs,
        out_specs=out_specs,
        input_output_aliases={1: 0},      # hidden state in -> hidden state out
        compiler_params=pltpu.CompilerParams(
            dimension_semantics=("parallel",),
            vmem_limit_bytes=vmem_limit),
    )(x, h, sup, *flat_w, proj_params["w"], proj_params["b"])

    output = proj_out.reshape(B, N * O)
    new_hidden = h_out.reshape(L, B, N * U)
    return output, new_hidden


# ----------------------------------------------------------------------------
# Glue: supports + parameters (reference layout -> kernel layout)
# ----------------------------------------------------------------------------
def _random_walk_matrix(adj):
    d = adj.sum(axis=1)
    d_inv = jnp.where(d > 0, 1.0 / d, 0.0)
    return d_inv[:, None] * adj


def build_supports(adj):
    # filter_type == "dual_random_walk"
    s0 = _random_walk_matrix(adj).T
    s1 = _random_walk_matrix(adj.T).T
    return jnp.stack([s0, s1], axis=0).astype(jnp.float32)


def init_reference_params(key, *, rnn_units, output_dim, num_rnn_layers,
                          max_diffusion_step, num_supports):
    """Parameters in the reference (PyTorch DCGRUCell / nn.Linear) layout."""
    M = num_supports * max_diffusion_step + 1
    U = rnn_units
    layers = []
    for layer in range(num_rnn_layers):
        din = output_dim if layer == 0 else U
        D = din + U
        key, k1, k2 = jax.random.split(key, 3)
        layers.append(dict(
            w_ru=jax.random.normal(k1, (D * M, 2 * U), jnp.float32) * 0.1,
            b_ru=jnp.full((2 * U,), 1.0, jnp.float32),      # bias_start = 1.0
            w_c=jax.random.normal(k2, (D * M, U), jnp.float32) * 0.1,
            b_c=jnp.zeros((U,), jnp.float32),               # bias_start = 0.0
        ))
    key, kp = jax.random.split(key)
    proj = dict(
        weight=jax.random.normal(kp, (output_dim, U), jnp.float32) * 0.1,
        bias=jnp.zeros((output_dim,), jnp.float32))
    return layers, proj


def prepare_kernel_params(ref_layers, ref_proj, *, output_dim, rnn_units,
                          max_diffusion_step, num_supports,
                          compute_dtype=jnp.bfloat16):
    """Split / fuse reference gconv weights for the kernel.

    Reference row index of W_ru / W_c is d*M + m (d over [input feats, state
    feats], m over diffusion terms); W_ru columns are [r | u].  The x-side gate
    weights are fused into [r | u | c] columns; the h-side r|u weights are
    fused; the candidate h-side stays separate (it consumes the r*h chain).
    """
    U = rnn_units
    M = num_supports * max_diffusion_step + 1
    out_layers = []
    for layer, p in enumerate(ref_layers):
        din = output_dim if layer == 0 else U
        D = din + U
        w_ru = p["w_ru"].reshape(D, M, 2 * U).transpose(1, 0, 2)   # (M, D, 2U)
        w_c = p["w_c"].reshape(D, M, U).transpose(1, 0, 2)         # (M, D, U)
        wx_ruc = jnp.concatenate(
            [w_ru[:, :din, :U], w_ru[:, :din, U:], w_c[:, :din, :]], axis=-1)
        wh_ru = w_ru[:, din:, :]                                   # (M, U, 2U)
        wc_h = w_c[:, din:, :]                                     # (M, U, U)
        b_ruc = jnp.concatenate([p["b_ru"], p["b_c"]]).reshape(1, 3 * U)
        out_layers.append(dict(
            wx_ruc=wx_ruc.astype(compute_dtype),
            wh_ru=wh_ru.astype(compute_dtype),
            wc_h=wc_h.astype(compute_dtype),
            b_ruc=b_ruc.astype(jnp.float32)))
    proj = dict(
        w=ref_proj["weight"].T.astype(compute_dtype),              # (U, O)
        b=ref_proj["bias"].reshape(1, output_dim).astype(jnp.float32))
    return out_layers, proj


# ----------------------------------------------------------------------------
# Pure-JAX mirror of the PyTorch forward (correctness check only)
# ----------------------------------------------------------------------------
def reference_forward(inputs, hidden_state, ref_layers, ref_proj, supports, *,
                      num_nodes, rnn_units, output_dim, max_diffusion_step):
    B = inputs.shape[0]
    N, U, O, K = num_nodes, rnn_units, output_dim, max_diffusion_step
    S = supports.shape[0]
    M = S * K + 1
    hp = jax.lax.Precision.HIGHEST

    def gconv(inp, state, W, b, out_size):
        cat = jnp.concatenate([inp, state], axis=-1)                # (B, N, D)
        D = cat.shape[-1]
        x0 = cat.transpose(1, 2, 0).reshape(N, D * B)
        xs = [x0]
        for s in range(S):
            sm = supports[s]
            x1 = jnp.matmul(sm, x0, precision=hp)
            xs.append(x1)
            for _ in range(2, K + 1):
                x2 = 2.0 * jnp.matmul(sm, x1, precision=hp) - x0
                xs.append(x2)
                x1, x0 = x2, x1
        x = jnp.stack(xs)                                           # (M, N, D*B)
        x = x.reshape(M, N, D, B).transpose(3, 1, 2, 0).reshape(B * N, D * M)
        return (jnp.matmul(x, W, precision=hp) + b).reshape(B, N, out_size)

    output = inputs.reshape(B, N, O)
    hiddens = []
    for layer, p in enumerate(ref_layers):
        h = hidden_state[layer].reshape(B, N, U)
        ru = jax.nn.sigmoid(gconv(output, h, p["w_ru"], p["b_ru"], 2 * U))
        r, u = ru[..., :U], ru[..., U:]
        c = jnp.tanh(gconv(output, r * h, p["w_c"], p["b_c"], U))
        h_new = u * h + (1.0 - u) * c
        hiddens.append(h_new.reshape(B, N * U))
        output = h_new
    proj = (jnp.matmul(output.reshape(B * N, U), ref_proj["weight"].T,
                       precision=hp) + ref_proj["bias"])
    return proj.reshape(B, N * O), jnp.stack(hiddens)


# ----------------------------------------------------------------------------
if __name__ == "__main__":
    batch_size = 2
    num_nodes = 16
    rnn_units = 32
    output_dim = 1
    num_rnn_layers = 2
    max_diffusion_step = 2
    num_supports = 2          # dual_random_walk

    key = jax.random.PRNGKey(0)
    key, k_adj, k_in, k_h = jax.random.split(key, 4)

    adj = jax.random.uniform(k_adj, (num_nodes, num_nodes), jnp.float32)
    adj = adj + jnp.eye(num_nodes, dtype=jnp.float32)
    supports = build_supports(adj)

    ref_layers, ref_proj = init_reference_params(
        key, rnn_units=rnn_units, output_dim=output_dim,
        num_rnn_layers=num_rnn_layers, max_diffusion_step=max_diffusion_step,
        num_supports=num_supports)

    inputs = jax.random.normal(
        k_in, (batch_size, num_nodes * output_dim), jnp.float32)
    hidden_state = 0.1 * jax.random.normal(
        k_h, (num_rnn_layers, batch_size, num_nodes * rnn_units), jnp.float32)

    ref_out, ref_hidden = reference_forward(
        inputs, hidden_state, ref_layers, ref_proj, supports,
        num_nodes=num_nodes, rnn_units=rnn_units, output_dim=output_dim,
        max_diffusion_step=max_diffusion_step)

    model_cfg = dict(num_nodes=num_nodes, rnn_units=rnn_units,
                     output_dim=output_dim,
                     max_diffusion_step=max_diffusion_step)
    prep_cfg = dict(output_dim=output_dim, rnn_units=rnn_units,
                    max_diffusion_step=max_diffusion_step,
                    num_supports=num_supports)

    # 1) float32 run: tight structural / numeric check against the reference.
    params32 = prepare_kernel_params(ref_layers, ref_proj,
                                     compute_dtype=jnp.float32, **prep_cfg)
    fwd32 = jax.jit(functools.partial(decoder_sigma_forward,
                                      compute_dtype=jnp.float32, **model_cfg))
    out32, hid32 = fwd32(inputs, hidden_state, params32[0], params32[1],
                         supports)
    out32 = jax.block_until_ready(out32)
    hid32 = jax.block_until_ready(hid32)
    assert out32.shape == (batch_size, num_nodes * output_dim)
    assert hid32.shape == (num_rnn_layers, batch_size,
                           num_nodes * rnn_units)
    assert bool(jnp.all(jnp.isfinite(out32)))
    assert bool(jnp.all(jnp.isfinite(hid32)))
    assert bool(jnp.allclose(out32, ref_out, atol=1e-3, rtol=5e-3)), \
        float(jnp.max(jnp.abs(out32 - ref_out)))
    assert bool(jnp.allclose(hid32, ref_hidden, atol=1e-3, rtol=5e-3)), \
        float(jnp.max(jnp.abs(hid32 - ref_hidden)))

    # 2) bf16 MXU-operand run (recommended fast path), f32 accumulation;
    #    looser tolerance because matmul operands are rounded to bf16.
    params16 = prepare_kernel_params(ref_layers, ref_proj,
                                     compute_dtype=jnp.bfloat16, **prep_cfg)
    fwd16 = jax.jit(functools.partial(decoder_sigma_forward,
                                      compute_dtype=jnp.bfloat16, **model_cfg))
    out16, hid16 = fwd16(inputs, hidden_state, params16[0], params16[1],
                         supports)
    out16 = jax.block_until_ready(out16)
    hid16 = jax.block_until_ready(hid16)
    assert bool(jnp.all(jnp.isfinite(out16)))
    assert bool(jnp.all(jnp.isfinite(hid16)))
    assert bool(jnp.allclose(out16, ref_out, atol=7.5e-2, rtol=5e-2)), \
        float(jnp.max(jnp.abs(out16 - ref_out)))
    assert bool(jnp.allclose(hid16, ref_hidden, atol=7.5e-2, rtol=5e-2)), \
        float(jnp.max(jnp.abs(hid16 - ref_hidden)))

    print("KERNEL_OK")
</pallas_src>

<mosaic_0001>
module attributes {stable_mosaic.version = 11 : i64} {
  func.func @_decoder_sigma_kernel(%arg0: i32, %arg1: memref<2x16x1xf32, #tpu.memory_space<vmem>>, %arg2: memref<2x2x16x32xf32, #tpu.memory_space<vmem>>, %arg3: memref<2x16x16xf32, #tpu.memory_space<vmem>>, %arg4: memref<5x1x96xf32, #tpu.memory_space<vmem>>, %arg5: memref<5x32x64xf32, #tpu.memory_space<vmem>>, %arg6: memref<5x32x32xf32, #tpu.memory_space<vmem>>, %arg7: memref<1x96xf32, #tpu.memory_space<vmem>>, %arg8: memref<5x32x96xf32, #tpu.memory_space<vmem>>, %arg9: memref<5x32x64xf32, #tpu.memory_space<vmem>>, %arg10: memref<5x32x32xf32, #tpu.memory_space<vmem>>, %arg11: memref<1x96xf32, #tpu.memory_space<vmem>>, %arg12: memref<32x1xf32, #tpu.memory_space<vmem>>, %arg13: memref<1x1xf32, #tpu.memory_space<vmem>>, %arg14: memref<2x2x16x32xf32, #tpu.memory_space<vmem>>, %arg15: memref<2x16x1xf32, #tpu.memory_space<vmem>>) attributes {dimension_semantics = [#tpu.dimension_semantics<parallel>], iteration_bounds = array<i64: 1>, scalar_prefetch = 0 : i64, scratch_operands = 0 : i64, tpu.core_type = #tpu.core_type<tc>, window_params = [{transform_indices = @transform_0, window_bounds = array<i64: 2, 16, 1>}, {transform_indices = @transform_1, window_bounds = array<i64: 2, 2, 16, 32>}, {pipeline_mode = #tpu.pipeline_mode<synchronous>, transform_indices = @transform_2, window_bounds = array<i64: 2, 16, 16>}, {pipeline_mode = #tpu.pipeline_mode<synchronous>, transform_indices = @transform_3, window_bounds = array<i64: 5, 1, 96>}, {pipeline_mode = #tpu.pipeline_mode<synchronous>, transform_indices = @transform_4, window_bounds = array<i64: 5, 32, 64>}, {pipeline_mode = #tpu.pipeline_mode<synchronous>, transform_indices = @transform_5, window_bounds = array<i64: 5, 32, 32>}, {pipeline_mode = #tpu.pipeline_mode<synchronous>, transform_indices = @transform_6, window_bounds = array<i64: 1, 96>}, {pipeline_mode = #tpu.pipeline_mode<synchronous>, transform_indices = @transform_7, window_bounds = array<i64: 5, 32, 96>}, {pipeline_mode = #tpu.pipeline_mode<synchronous>, transform_indices = @transform_8, window_bounds = array<i64: 5, 32, 64>}, {pipeline_mode = #tpu.pipeline_mode<synchronous>, transform_indices = @transform_9, window_bounds = array<i64: 5, 32, 32>}, {pipeline_mode = #tpu.pipeline_mode<synchronous>, transform_indices = @transform_10, window_bounds = array<i64: 1, 96>}, {pipeline_mode = #tpu.pipeline_mode<synchronous>, transform_indices = @transform_11, window_bounds = array<i64: 32, 1>}, {pipeline_mode = #tpu.pipeline_mode<synchronous>, transform_indices = @transform_12, window_bounds = array<i64: 1, 1>}, {transform_indices = @transform_13, window_bounds = array<i64: 2, 2, 16, 32>}, {transform_indices = @transform_14, window_bounds = array<i64: 2, 16, 1>}]} {
    %c0 = arith.constant 0 : index
    %c0_0 = arith.constant 0 : index
    %c0_1 = arith.constant 0 : index
    %0 = vector.load %arg1[%c0, %c0_0, %c0_1] : memref<2x16x1xf32, #tpu.memory_space<vmem>>, vector<2x16x1xf32>
    %1 = vector.extract_strided_slice %0 {offsets = [0, 0, 0], sizes = [1, 16, 1], strides = [1, 1, 1]} : vector<2x16x1xf32> to vector<1x16x1xf32>
    %2 = vector.shape_cast %1 : vector<1x16x1xf32> to vector<16x1xf32>
    %3 = vector.extract_strided_slice %0 {offsets = [1, 0, 0], sizes = [1, 16, 1], strides = [1, 1, 1]} : vector<2x16x1xf32> to vector<1x16x1xf32>
    %4 = vector.shape_cast %3 : vector<1x16x1xf32> to vector<16x1xf32>
    %c0_2 = arith.constant 0 : index
    %c0_3 = arith.constant 0 : index
    %c0_4 = arith.constant 0 : index
    %c0_5 = arith.constant 0 : index
    %5 = vector.load %arg2[%c0_2, %c0_3, %c0_4, %c0_5] : memref<2x2x16x32xf32, #tpu.memory_space<vmem>>, vector<1x2x16x32xf32>
    %6 = vector.shape_cast %5 : vector<1x2x16x32xf32> to vector<2x16x32xf32>
    %7 = vector.shape_cast %6 : vector<2x16x32xf32> to vector<32x32xf32>
    %8 = vector.extract_strided_slice %6 {offsets = [0, 0, 0], sizes = [1, 16, 32], strides = [1, 1, 1]} : vector<2x16x32xf32> to vector<1x16x32xf32>
    %9 = vector.shape_cast %8 : vector<1x16x32xf32> to vector<16x32xf32>
    %10 = vector.extract_strided_slice %6 {offsets = [1, 0, 0], sizes = [1, 16, 32], strides = [1, 1, 1]} : vector<2x16x32xf32> to vector<1x16x32xf32>
    %11 = vector.shape_cast %10 : vector<1x16x32xf32> to vector<16x32xf32>
    %c0_6 = arith.constant 0 : index
    %c0_7 = arith.constant 0 : index
    %c0_8 = arith.constant 0 : index
    %12 = vector.load %arg4[%c0_6, %c0_7, %c0_8] : memref<5x1x96xf32, #tpu.memory_space<vmem>>, vector<1x1x96xf32>
    %13 = vector.shape_cast %12 : vector<1x1x96xf32> to vector<1x96xf32>
    %14 = tpu.concatenate %2, %4 in 0 : vector<16x1xf32>, vector<16x1xf32> -> vector<32x1xf32>
    %15 = vector.broadcast %14 : vector<32x1xf32> to vector<32x96xf32>
    %16 = vector.broadcast %13 : vector<1x96xf32> to vector<32x96xf32>
    %17 = arith.mulf %15, %16 : vector<32x96xf32>
    %c0_9 = arith.constant 0 : index
    %c0_10 = arith.constant 0 : index
    %c0_11 = arith.constant 0 : index
    %18 = vector.load %arg3[%c0_9, %c0_10, %c0_11] : memref<2x16x16xf32, #tpu.memory_space<vmem>>, vector<1x16x16xf32>
    %19 = vector.shape_cast %18 : vector<1x16x16xf32> to vector<16x16xf32>
    %cst = arith.constant dense<0.000000e+00> : vector<16x1xf32>
    %20 = tpu.matmul %19, %2, %cst {dimension_numbers = #tpu.dot_dimension_numbers<[1], [0], [0], [1], [0, 0, 1, 1], [], []>} : vector<16x16xf32>, vector<16x1xf32>, vector<16x1xf32> -> vector<16x1xf32>
    %cst_12 = arith.constant dense<0.000000e+00> : vector<16x1xf32>
    %21 = tpu.matmul %19, %4, %cst_12 {dimension_numbers = #tpu.dot_dimension_numbers<[1], [0], [0], [1], [0, 0, 1, 1], [], []>} : vector<16x16xf32>, vector<16x1xf32>, vector<16x1xf32> -> vector<16x1xf32>
    %c1 = arith.constant 1 : index
    %c0_13 = arith.constant 0 : index
    %c0_14 = arith.constant 0 : index
    %22 = vector.load %arg4[%c1, %c0_13, %c0_14] : memref<5x1x96xf32, #tpu.memory_space<vmem>>, vector<1x1x96xf32>
    %23 = vector.shape_cast %22 : vector<1x1x96xf32> to vector<1x96xf32>
    %24 = tpu.concatenate %20, %21 in 0 : vector<16x1xf32>, vector<16x1xf32> -> vector<32x1xf32>
    %25 = vector.broadcast %24 : vector<32x1xf32> to vector<32x96xf32>
    %26 = vector.broadcast %23 : vector<1x96xf32> to vector<32x96xf32>
    %27 = arith.mulf %25, %26 : vector<32x96xf32>
    %28 = arith.addf %17, %27 : vector<32x96xf32>
    %cst_15 = arith.constant dense<0.000000e+00> : vector<16x1xf32>
    %29 = tpu.matmul %19, %20, %cst_15 {dimension_numbers = #tpu.dot_dimension_numbers<[1], [0], [0], [1], [0, 0, 1, 1], [], []>} : vector<16x16xf32>, vector<16x1xf32>, vector<16x1xf32> -> vector<16x1xf32>
    %cst_16 = arith.constant 2.000000e+00 : f32
    %30 = vector.broadcast %cst_16 : f32 to vector<16x1xf32>
    %31 = arith.mulf %30, %29 : vector<16x1xf32>
    %32 = arith.subf %31, %2 : vector<16x1xf32>
    %cst_17 = arith.constant dense<0.000000e+00> : vector<16x1xf32>
    %33 = tpu.matmul %19, %21, %cst_17 {dimension_numbers = #tpu.dot_dimension_numbers<[1], [0], [0], [1], [0, 0, 1, 1], [], []>} : vector<16x16xf32>, vector<16x1xf32>, vector<16x1xf32> -> vector<16x1xf32>
    %cst_18 = arith.constant 2.000000e+00 : f32
    %34 = vector.broadcast %cst_18 : f32 to vector<16x1xf32>
    %35 = arith.mulf %34, %33 : vector<16x1xf32>
    %36 = arith.subf %35, %4 : vector<16x1xf32>
    %c2 = arith.constant 2 : index
    %c0_19 = arith.constant 0 : index
    %c0_20 = arith.constant 0 : index
    %37 = vector.load %arg4[%c2, %c0_19, %c0_20] : memref<5x1x96xf32, #tpu.memory_space<vmem>>, vector<1x1x96xf32>
    %38 = vector.shape_cast %37 : vector<1x1x96xf32> to vector<1x96xf32>
    %39 = tpu.concatenate %32, %36 in 0 : vector<16x1xf32>, vector<16x1xf32> -> vector<32x1xf32>
    %40 = vector.broadcast %39 : vector<32x1xf32> to vector<32x96xf32>
    %41 = vector.broadcast %38 : vector<1x96xf32> to vector<32x96xf32>
    %42 = arith.mulf %40, %41 : vector<32x96xf32>
    %43 = arith.addf %28, %42 : vector<32x96xf32>
    %c1_21 = arith.constant 1 : index
    %c0_22 = arith.constant 0 : index
    %c0_23 = arith.constant 0 : index
    %44 = vector.load %arg3[%c1_21, %c0_22, %c0_23] : memref<2x16x16xf32, #tpu.memory_space<vmem>>, vector<1x16x16xf32>
    %45 = vector.shape_cast %44 : vector<1x16x16xf32> to vector<16x16xf32>
    %cst_24 = arith.constant dense<0.000000e+00> : vector<16x1xf32>
    %46 = tpu.matmul %45, %20, %cst_24 {dimension_numbers = #tpu.dot_dimension_numbers<[1], [0], [0], [1], [0, 0, 1, 1], [], []>} : vector<16x16xf32>, vector<16x1xf32>, vector<16x1xf32> -> vector<16x1xf32>
    %cst_25 = arith.constant dense<0.000000e+00> : vector<16x1xf32>
    %47 = tpu.matmul %45, %21, %cst_25 {dimension_numbers = #tpu.dot_dimension_numbers<[1], [0], [0], [1], [0, 0, 1, 1], [], []>} : vector<16x16xf32>, vector<16x1xf32>, vector<16x1xf32> -> vector<16x1xf32>
    %c3 = arith.constant 3 : index
    %c0_26 = arith.constant 0 : index
    %c0_27 = arith.constant 0 : index
    %48 = vector.load %arg4[%c3, %c0_26, %c0_27] : memref<5x1x96xf32, #tpu.memory_space<vmem>>, vector<1x1x96xf32>
    %49 = vector.shape_cast %48 : vector<1x1x96xf32> to vector<1x96xf32>
    %50 = tpu.concatenate %46, %47 in 0 : vector<16x1xf32>, vector<16x1xf32> -> vector<32x1xf32>
    %51 = vector.broadcast %50 : vector<32x1xf32> to vector<32x96xf32>
    %52 = vector.broadcast %49 : vector<1x96xf32> to vector<32x96xf32>
    %53 = arith.mulf %51, %52 : vector<32x96xf32>
    %54 = arith.addf %43, %53 : vector<32x96xf32>
    %cst_28 = arith.constant dense<0.000000e+00> : vector<16x1xf32>
    %55 = tpu.matmul %45, %46, %cst_28 {dimension_numbers = #tpu.dot_dimension_numbers<[1], [0], [0], [1], [0, 0, 1, 1], [], []>} : vector<16x16xf32>, vector<16x1xf32>, vector<16x1xf32> -> vector<16x1xf32>
    %cst_29 = arith.constant 2.000000e+00 : f32
    %56 = vector.broadcast %cst_29 : f32 to vector<16x1xf32>
    %57 = arith.mulf %56, %55 : vector<16x1xf32>
    %58 = arith.subf %57, %20 : vector<16x1xf32>
    %cst_30 = arith.constant dense<0.000000e+00> : vector<16x1xf32>
    %59 = tpu.matmul %45, %47, %cst_30 {dimension_numbers = #tpu.dot_dimension_numbers<[1], [0], [0], [1], [0, 0, 1, 1], [], []>} : vector<16x16xf32>, vector<16x1xf32>, vector<16x1xf32> -> vector<16x1xf32>
    %cst_31 = arith.constant 2.000000e+00 : f32
    %60 = vector.broadcast %cst_31 : f32 to vector<16x1xf32>
    %61 = arith.mulf %60, %59 : vector<16x1xf32>
    %62 = arith.subf %61, %21 : vector<16x1xf32>
    %c4 = arith.constant 4 : index
    %c0_32 = arith.constant 0 : index
    %c0_33 = arith.constant 0 : index
    %63 = vector.load %arg4[%c4, %c0_32, %c0_33] : memref<5x1x96xf32, #tpu.memory_space<vmem>>, vector<1x1x96xf32>
    %64 = vector.shape_cast %63 : vector<1x1x96xf32> to vector<1x96xf32>
    %65 = tpu.concatenate %58, %62 in 0 : vector<16x1xf32>, vector<16x1xf32> -> vector<32x1xf32>
    %66 = vector.broadcast %65 : vector<32x1xf32> to vector<32x96xf32>
    %67 = vector.broadcast %64 : vector<1x96xf32> to vector<32x96xf32>
    %68 = arith.mulf %66, %67 : vector<32x96xf32>
    %69 = arith.addf %54, %68 : vector<32x96xf32>
    %c0_34 = arith.constant 0 : index
    %c0_35 = arith.constant 0 : index
    %70 = vector.load %arg7[%c0_34, %c0_35] : memref<1x96xf32, #tpu.memory_space<vmem>>, vector<1x96xf32>
    %71 = vector.broadcast %70 : vector<1x96xf32> to vector<32x96xf32>
    %72 = arith.addf %69, %71 : vector<32x96xf32>
    %c0_36 = arith.constant 0 : index
    %c0_37 = arith.constant 0 : index
    %c0_38 = arith.constant 0 : index
    %73 = vector.load %arg5[%c0_36, %c0_37, %c0_38] : memref<5x32x64xf32, #tpu.memory_space<vmem>>, vector<1x32x64xf32>
    %74 = vector.shape_cast %73 : vector<1x32x64xf32> to vector<32x64xf32>
    %75 = tpu.concatenate %9, %11 in 0 : vector<16x32xf32>, vector<16x32xf32> -> vector<32x32xf32>
    %cst_39 = arith.constant dense<0.000000e+00> : vector<32x64xf32>
    %76 = tpu.matmul %75, %74, %cst_39 {dimension_numbers = #tpu.dot_dimension_numbers<[1], [0], [0], [1], [0, 0, 1, 1], [], []>} : vector<32x32xf32>, vector<32x64xf32>, vector<32x64xf32> -> vector<32x64xf32>
    %c0_40 = arith.constant 0 : index
    %c0_41 = arith.constant 0 : index
    %c0_42 = arith.constant 0 : index
    %77 = vector.load %arg3[%c0_40, %c0_41, %c0_42] : memref<2x16x16xf32, #tpu.memory_space<vmem>>, vector<1x16x16xf32>
    %78 = vector.shape_cast %77 : vector<1x16x16xf32> to vector<16x16xf32>
    %cst_43 = arith.constant dense<0.000000e+00> : vector<16x32xf32>
    %79 = tpu.matmul %78, %9, %cst_43 {dimension_numbers = #tpu.dot_dimension_numbers<[1], [0], [0], [1], [0, 0, 1, 1], [], []>} : vector<16x16xf32>, vector<16x32xf32>, vector<16x32xf32> -> vector<16x32xf32>
    %cst_44 = arith.constant dense<0.000000e+00> : vector<16x32xf32>
    %80 = tpu.matmul %78, %11, %cst_44 {dimension_numbers = #tpu.dot_dimension_numbers<[1], [0], [0], [1], [0, 0, 1, 1], [], []>} : vector<16x16xf32>, vector<16x32xf32>, vector<16x32xf32> -> vector<16x32xf32>
    %c1_45 = arith.constant 1 : index
    %c0_46 = arith.constant 0 : index
    %c0_47 = arith.constant 0 : index
    %81 = vector.load %arg5[%c1_45, %c0_46, %c0_47] : memref<5x32x64xf32, #tpu.memory_space<vmem>>, vector<1x32x64xf32>
    %82 = vector.shape_cast %81 : vector<1x32x64xf32> to vector<32x64xf32>
    %83 = tpu.concatenate %79, %80 in 0 : vector<16x32xf32>, vector<16x32xf32> -> vector<32x32xf32>
    %cst_48 = arith.constant dense<0.000000e+00> : vector<32x64xf32>
    %84 = tpu.matmul %83, %82, %cst_48 {dimension_numbers = #tpu.dot_dimension_numbers<[1], [0], [0], [1], [0, 0, 1, 1], [], []>} : vector<32x32xf32>, vector<32x64xf32>, vector<32x64xf32> -> vector<32x64xf32>
    %85 = arith.addf %76, %84 : vector<32x64xf32>
    %cst_49 = arith.constant dense<0.000000e+00> : vector<16x32xf32>
    %86 = tpu.matmul %78, %79, %cst_49 {dimension_numbers = #tpu.dot_dimension_numbers<[1], [0], [0], [1], [0, 0, 1, 1], [], []>} : vector<16x16xf32>, vector<16x32xf32>, vector<16x32xf32> -> vector<16x32xf32>
    %cst_50 = arith.constant 2.000000e+00 : f32
    %87 = vector.broadcast %cst_50 : f32 to vector<16x32xf32>
    %88 = arith.mulf %87, %86 : vector<16x32xf32>
    %89 = arith.subf %88, %9 : vector<16x32xf32>
    %cst_51 = arith.constant dense<0.000000e+00> : vector<16x32xf32>
    %90 = tpu.matmul %78, %80, %cst_51 {dimension_numbers = #tpu.dot_dimension_numbers<[1], [0], [0], [1], [0, 0, 1, 1], [], []>} : vector<16x16xf32>, vector<16x32xf32>, vector<16x32xf32> -> vector<16x32xf32>
    %cst_52 = arith.constant 2.000000e+00 : f32
    %91 = vector.broadcast %cst_52 : f32 to vector<16x32xf32>
    %92 = arith.mulf %91, %90 : vector<16x32xf32>
    %93 = arith.subf %92, %11 : vector<16x32xf32>
    %c2_53 = arith.constant 2 : index
    %c0_54 = arith.constant 0 : index
    %c0_55 = arith.constant 0 : index
    %94 = vector.load %arg5[%c2_53, %c0_54, %c0_55] : memref<5x32x64xf32, #tpu.memory_space<vmem>>, vector<1x32x64xf32>
    %95 = vector.shape_cast %94 : vector<1x32x64xf32> to vector<32x64xf32>
    %96 = tpu.concatenate %89, %93 in 0 : vector<16x32xf32>, vector<16x32xf32> -> vector<32x32xf32>
    %cst_56 = arith.constant dense<0.000000e+00> : vector<32x64xf32>
    %97 = tpu.matmul %96, %95, %cst_56 {dimension_numbers = #tpu.dot_dimension_numbers<[1], [0], [0], [1], [0, 0, 1, 1], [], []>} : vector<32x32xf32>, vector<32x64xf32>, vector<32x64xf32> -> vector<32x64xf32>
    %98 = arith.addf %85, %97 : vector<32x64xf32>
    %c1_57 = arith.constant 1 : index
    %c0_58 = arith.constant 0 : index
    %c0_59 = arith.constant 0 : index
    %99 = vector.load %arg3[%c1_57, %c0_58, %c0_59] : memref<2x16x16xf32, #tpu.memory_space<vmem>>, vector<1x16x16xf32>
    %100 = vector.shape_cast %99 : vector<1x16x16xf32> to vector<16x16xf32>
    %cst_60 = arith.constant dense<0.000000e+00> : vector<16x32xf32>
    %101 = tpu.matmul %100, %79, %cst_60 {dimension_numbers = #tpu.dot_dimension_numbers<[1], [0], [0], [1], [0, 0, 1, 1], [], []>} : vector<16x16xf32>, vector<16x32xf32>, vector<16x32xf32> -> vector<16x32xf32>
    %cst_61 = arith.constant dense<0.000000e+00> : vector<16x32xf32>
    %102 = tpu.matmul %100, %80, %cst_61 {dimension_numbers = #tpu.dot_dimension_numbers<[1], [0], [0], [1], [0, 0, 1, 1], [], []>} : vector<16x16xf32>, vector<16x32xf32>, vector<16x32xf32> -> vector<16x32xf32>
    %c3_62 = arith.constant 3 : index
    %c0_63 = arith.constant 0 : index
    %c0_64 = arith.constant 0 : index
    %103 = vector.load %arg5[%c3_62, %c0_63, %c0_64] : memref<5x32x64xf32, #tpu.memory_space<vmem>>, vector<1x32x64xf32>
    %104 = vector.shape_cast %103 : vector<1x32x64xf32> to vector<32x64xf32>
    %105 = tpu.concatenate %101, %102 in 0 : vector<16x32xf32>, vector<16x32xf32> -> vector<32x32xf32>
    %cst_65 = arith.constant dense<0.000000e+00> : vector<32x64xf32>
    %106 = tpu.matmul %105, %104, %cst_65 {dimension_numbers = #tpu.dot_dimension_numbers<[1], [0], [0], [1], [0, 0, 1, 1], [], []>} : vector<32x32xf32>, vector<32x64xf32>, vector<32x64xf32> -> vector<32x64xf32>
    %107 = arith.addf %98, %106 : vector<32x64xf32>
    %cst_66 = arith.constant dense<0.000000e+00> : vector<16x32xf32>
    %108 = tpu.matmul %100, %101, %cst_66 {dimension_numbers = #tpu.dot_dimension_numbers<[1], [0], [0], [1], [0, 0, 1, 1], [], []>} : vector<16x16xf32>, vector<16x32xf32>, vector<16x32xf32> -> vector<16x32xf32>
    %cst_67 = arith.constant 2.000000e+00 : f32
    %109 = vector.broadcast %cst_67 : f32 to vector<16x32xf32>
    %110 = arith.mulf %109, %108 : vector<16x32xf32>
    %111 = arith.subf %110, %79 : vector<16x32xf32>
    %cst_68 = arith.constant dense<0.000000e+00> : vector<16x32xf32>
    %112 = tpu.matmul %100, %102, %cst_68 {dimension_numbers = #tpu.dot_dimension_numbers<[1], [0], [0], [1], [0, 0, 1, 1], [], []>} : vector<16x16xf32>, vector<16x32xf32>, vector<16x32xf32> -> vector<16x32xf32>
    %cst_69 = arith.constant 2.000000e+00 : f32
    %113 = vector.broadcast %cst_69 : f32 to vector<16x32xf32>
    %114 = arith.mulf %113, %112 : vector<16x32xf32>
    %115 = arith.subf %114, %80 : vector<16x32xf32>
    %c4_70 = arith.constant 4 : index
    %c0_71 = arith.constant 0 : index
    %c0_72 = arith.constant 0 : index
    %116 = vector.load %arg5[%c4_70, %c0_71, %c0_72] : memref<5x32x64xf32, #tpu.memory_space<vmem>>, vector<1x32x64xf32>
    %117 = vector.shape_cast %116 : vector<1x32x64xf32> to vector<32x64xf32>
    %118 = tpu.concatenate %111, %115 in 0 : vector<16x32xf32>, vector<16x32xf32> -> vector<32x32xf32>
    %cst_73 = arith.constant dense<0.000000e+00> : vector<32x64xf32>
    %119 = tpu.matmul %118, %117, %cst_73 {dimension_numbers = #tpu.dot_dimension_numbers<[1], [0], [0], [1], [0, 0, 1, 1], [], []>} : vector<32x32xf32>, vector<32x64xf32>, vector<32x64xf32> -> vector<32x64xf32>
    %120 = arith.addf %107, %119 : vector<32x64xf32>
    %121 = vector.extract_strided_slice %72 {offsets = [0, 0], sizes = [32, 32], strides = [1, 1]} : vector<32x96xf32> to vector<32x32xf32>
    %122 = vector.extract_strided_slice %120 {offsets = [0, 0], sizes = [32, 32], strides = [1, 1]} : vector<32x64xf32> to vector<32x32xf32>
    %123 = arith.addf %121, %122 : vector<32x32xf32>
    %124 = arith.negf %123 : vector<32x32xf32>
    %125 = math.exp %124 : vector<32x32xf32>
    %cst_74 = arith.constant 1.000000e+00 : f32
    %126 = vector.broadcast %cst_74 : f32 to vector<32x32xf32>
    %127 = arith.addf %126, %125 : vector<32x32xf32>
    %128 = arith.divf %126, %127 : vector<32x32xf32>
    %129 = vector.extract_strided_slice %72 {offsets = [0, 32], sizes = [32, 32], strides = [1, 1]} : vector<32x96xf32> to vector<32x32xf32>
    %130 = vector.extract_strided_slice %120 {offsets = [0, 32], sizes = [32, 32], strides = [1, 1]} : vector<32x64xf32> to vector<32x32xf32>
    %131 = arith.addf %129, %130 : vector<32x32xf32>
    %132 = arith.negf %131 : vector<32x32xf32>
    %133 = math.exp %132 : vector<32x32xf32>
    %cst_75 = arith.constant 1.000000e+00 : f32
    %134 = vector.broadcast %cst_75 : f32 to vector<32x32xf32>
    %135 = arith.addf %134, %133 : vector<32x32xf32>
    %136 = arith.divf %134, %135 : vector<32x32xf32>
    %137 = arith.mulf %128, %7 : vector<32x32xf32>
    %138 = vector.extract_strided_slice %137 {offsets = [0, 0], sizes = [16, 32], strides = [1, 1]} : vector<32x32xf32> to vector<16x32xf32>
    %139 = vector.extract_strided_slice %137 {offsets = [16, 0], sizes = [16, 32], strides = [1, 1]} : vector<32x32xf32> to vector<16x32xf32>
    %c0_76 = arith.constant 0 : index
    %c0_77 = arith.constant 0 : index
    %c0_78 = arith.constant 0 : index
    %140 = vector.load %arg6[%c0_76, %c0_77, %c0_78] : memref<5x32x32xf32, #tpu.memory_space<vmem>>, vector<1x32x32xf32>
    %141 = vector.shape_cast %140 : vector<1x32x32xf32> to vector<32x32xf32>
    %142 = tpu.concatenate %138, %139 in 0 : vector<16x32xf32>, vector<16x32xf32> -> vector<32x32xf32>
    %cst_79 = arith.constant dense<0.000000e+00> : vector<32x32xf32>
    %143 = tpu.matmul %142, %141, %cst_79 {dimension_numbers = #tpu.dot_dimension_numbers<[1], [0], [0], [1], [0, 0, 1, 1], [], []>} : vector<32x32xf32>, vector<32x32xf32>, vector<32x32xf32> -> vector<32x32xf32>
    %c0_80 = arith.constant 0 : index
    %c0_81 = arith.constant 0 : index
    %c0_82 = arith.constant 0 : index
    %144 = vector.load %arg3[%c0_80, %c0_81, %c0_82] : memref<2x16x16xf32, #tpu.memory_space<vmem>>, vector<1x16x16xf32>
    %145 = vector.shape_cast %144 : vector<1x16x16xf32> to vector<16x16xf32>
    %cst_83 = arith.constant dense<0.000000e+00> : vector<16x32xf32>
    %146 = tpu.matmul %145, %138, %cst_83 {dimension_numbers = #tpu.dot_dimension_numbers<[1], [0], [0], [1], [0, 0, 1, 1], [], []>} : vector<16x16xf32>, vector<16x32xf32>, vector<16x32xf32> -> vector<16x32xf32>
    %cst_84 = arith.constant dense<0.000000e+00> : vector<16x32xf32>
    %147 = tpu.matmul %145, %139, %cst_84 {dimension_numbers = #tpu.dot_dimension_numbers<[1], [0], [0], [1], [0, 0, 1, 1], [], []>} : vector<16x16xf32>, vector<16x32xf32>, vector<16x32xf32> -> vector<16x32xf32>
    %c1_85 = arith.constant 1 : index
    %c0_86 = arith.constant 0 : index
    %c0_87 = arith.constant 0 : index
    %148 = vector.load %arg6[%c1_85, %c0_86, %c0_87] : memref<5x32x32xf32, #tpu.memory_space<vmem>>, vector<1x32x32xf32>
    %149 = vector.shape_cast %148 : vector<1x32x32xf32> to vector<32x32xf32>
    %150 = tpu.concatenate %146, %147 in 0 : vector<16x32xf32>, vector<16x32xf32> -> vector<32x32xf32>
    %cst_88 = arith.constant dense<0.000000e+00> : vector<32x32xf32>
    %151 = tpu.matmul %150, %149, %cst_88 {dimension_numbers = #tpu.dot_dimension_numbers<[1], [0], [0], [1], [0, 0, 1, 1], [], []>} : vector<32x32xf32>, vector<32x32xf32>, vector<32x32xf32> -> vector<32x32xf32>
    %152 = arith.addf %143, %151 : vector<32x32xf32>
    %cst_89 = arith.constant dense<0.000000e+00> : vector<16x32xf32>
    %153 = tpu.matmul %145, %146, %cst_89 {dimension_numbers = #tpu.dot_dimension_numbers<[1], [0], [0], [1], [0, 0, 1, 1], [], []>} : vector<16x16xf32>, vector<16x32xf32>, vector<16x32xf32> -> vector<16x32xf32>
    %cst_90 = arith.constant 2.000000e+00 : f32
    %154 = vector.broadcast %cst_90 : f32 to vector<16x32xf32>
    %155 = arith.mulf %154, %153 : vector<16x32xf32>
    %156 = arith.subf %155, %138 : vector<16x32xf32>
    %cst_91 = arith.constant dense<0.000000e+00> : vector<16x32xf32>
    %157 = tpu.matmul %145, %147, %cst_91 {dimension_numbers = #tpu.dot_dimension_numbers<[1], [0], [0], [1], [0, 0, 1, 1], [], []>} : vector<16x16xf32>, vector<16x32xf32>, vector<16x32xf32> -> vector<16x32xf32>
    %cst_92 = arith.constant 2.000000e+00 : f32
    %158 = vector.broadcast %cst_92 : f32 to vector<16x32xf32>
    %159 = arith.mulf %158, %157 : vector<16x32xf32>
    %160 = arith.subf %159, %139 : vector<16x32xf32>
    %c2_93 = arith.constant 2 : index
    %c0_94 = arith.constant 0 : index
    %c0_95 = arith.constant 0 : index
    %161 = vector.load %arg6[%c2_93, %c0_94, %c0_95] : memref<5x32x32xf32, #tpu.memory_space<vmem>>, vector<1x32x32xf32>
    %162 = vector.shape_cast %161 : vector<1x32x32xf32> to vector<32x32xf32>
    %163 = tpu.concatenate %156, %160 in 0 : vector<16x32xf32>, vector<16x32xf32> -> vector<32x32xf32>
    %cst_96 = arith.constant dense<0.000000e+00> : vector<32x32xf32>
    %164 = tpu.matmul %163, %162, %cst_96 {dimension_numbers = #tpu.dot_dimension_numbers<[1], [0], [0], [1], [0, 0, 1, 1], [], []>} : vector<32x32xf32>, vector<32x32xf32>, vector<32x32xf32> -> vector<32x32xf32>
    %165 = arith.addf %152, %164 : vector<32x32xf32>
    %c1_97 = arith.constant 1 : index
    %c0_98 = arith.constant 0 : index
    %c0_99 = arith.constant 0 : index
    %166 = vector.load %arg3[%c1_97, %c0_98, %c0_99] : memref<2x16x16xf32, #tpu.memory_space<vmem>>, vector<1x16x16xf32>
    %167 = vector.shape_cast %166 : vector<1x16x16xf32> to vector<16x16xf32>
    %cst_100 = arith.constant dense<0.000000e+00> : vector<16x32xf32>
    %168 = tpu.matmul %167, %146, %cst_100 {dimension_numbers = #tpu.dot_dimension_numbers<[1], [0], [0], [1], [0, 0, 1, 1], [], []>} : vector<16x16xf32>, vector<16x32xf32>, vector<16x32xf32> -> vector<16x32xf32>
    %cst_101 = arith.constant dense<0.000000e+00> : vector<16x32xf32>
    %169 = tpu.matmul %167, %147, %cst_101 {dimension_numbers = #tpu.dot_dimension_numbers<[1], [0], [0], [1], [0, 0, 1, 1], [], []>} : vector<16x16xf32>, vector<16x32xf32>, vector<16x32xf32> -> vector<16x32xf32>
    %c3_102 = arith.constant 3 : index
    %c0_103 = arith.constant 0 : index
    %c0_104 = arith.constant 0 : index
    %170 = vector.load %arg6[%c3_102, %c0_103, %c0_104] : memref<5x32x32xf32, #tpu.memory_space<vmem>>, vector<1x32x32xf32>
    %171 = vector.shape_cast %170 : vector<1x32x32xf32> to vector<32x32xf32>
    %172 = tpu.concatenate %168, %169 in 0 : vector<16x32xf32>, vector<16x32xf32> -> vector<32x32xf32>
    %cst_105 = arith.constant dense<0.000000e+00> : vector<32x32xf32>
    %173 = tpu.matmul %172, %171, %cst_105 {dimension_numbers = #tpu.dot_dimension_numbers<[1], [0], [0], [1], [0, 0, 1, 1], [], []>} : vector<32x32xf32>, vector<32x32xf32>, vector<32x32xf32> -> vector<32x32xf32>
    %174 = arith.addf %165, %173 : vector<32x32xf32>
    %cst_106 = arith.constant dense<0.000000e+00> : vector<16x32xf32>
    %175 = tpu.matmul %167, %168, %cst_106 {dimension_numbers = #tpu.dot_dimension_numbers<[1], [0], [0], [1], [0, 0, 1, 1], [], []>} : vector<16x16xf32>, vector<16x32xf32>, vector<16x32xf32> -> vector<16x32xf32>
    %cst_107 = arith.constant 2.000000e+00 : f32
    %176 = vector.broadcast %cst_107 : f32 to vector<16x32xf32>
    %177 = arith.mulf %176, %175 : vector<16x32xf32>
    %178 = arith.subf %177, %146 : vector<16x32xf32>
    %cst_108 = arith.constant dense<0.000000e+00> : vector<16x32xf32>
    %179 = tpu.matmul %167, %169, %cst_108 {dimension_numbers = #tpu.dot_dimension_numbers<[1], [0], [0], [1], [0, 0, 1, 1], [], []>} : vector<16x16xf32>, vector<16x32xf32>, vector<16x32xf32> -> vector<16x32xf32>
    %cst_109 = arith.constant 2.000000e+00 : f32
    %180 = vector.broadcast %cst_109 : f32 to vector<16x32xf32>
    %181 = arith.mulf %180, %179 : vector<16x32xf32>
    %182 = arith.subf %181, %147 : vector<16x32xf32>
    %c4_110 = arith.constant 4 : index
    %c0_111 = arith.constant 0 : index
    %c0_112 = arith.constant 0 : index
    %183 = vector.load %arg6[%c4_110, %c0_111, %c0_112] : memref<5x32x32xf32, #tpu.memory_space<vmem>>, vector<1x32x32xf32>
    %184 = vector.shape_cast %183 : vector<1x32x32xf32> to vector<32x32xf32>
    %185 = tpu.concatenate %178, %182 in 0 : vector<16x32xf32>, vector<16x32xf32> -> vector<32x32xf32>
    %cst_113 = arith.constant dense<0.000000e+00> : vector<32x32xf32>
    %186 = tpu.matmul %185, %184, %cst_113 {dimension_numbers = #tpu.dot_dimension_numbers<[1], [0], [0], [1], [0, 0, 1, 1], [], []>} : vector<32x32xf32>, vector<32x32xf32>, vector<32x32xf32> -> vector<32x32xf32>
    %187 = arith.addf %174, %186 : vector<32x32xf32>
    %188 = vector.extract_strided_slice %72 {offsets = [0, 64], sizes = [32, 32], strides = [1, 1]} : vector<32x96xf32> to vector<32x32xf32>
    %189 = arith.addf %188, %187 : vector<32x32xf32>
    %190 = math.tanh %189 : vector<32x32xf32>
    %191 = arith.mulf %136, %7 : vector<32x32xf32>
    %cst_114 = arith.constant 1.000000e+00 : f32
    %192 = vector.broadcast %cst_114 : f32 to vector<32x32xf32>
    %193 = arith.subf %192, %136 : vector<32x32xf32>
    %194 = arith.mulf %193, %190 : vector<32x32xf32>
    %195 = arith.addf %191, %194 : vector<32x32xf32>
    %196 = vector.shape_cast %195 : vector<32x32xf32> to vector<2x16x32xf32>
    %c0_115 = arith.constant 0 : index
    %c0_116 = arith.constant 0 : index
    %c0_117 = arith.constant 0 : index
    %c0_118 = arith.constant 0 : index
    %197 = vector.load %arg14[%c0_115, %c0_116, %c0_117, %c0_118] : memref<2x2x16x32xf32, #tpu.memory_space<vmem>>, vector<1x2x16x32xf32>
    %198 = vector.shape_cast %197 : vector<1x2x16x32xf32> to vector<2x16x32xf32>
    %199 = vector.shape_cast %196 : vector<2x16x32xf32> to vector<1x2x16x32xf32>
    tpu.vector_store %arg14[%c0_115, %c0_116, %c0_117, %c0_118], %199 {strides = array<i32>} : memref<2x2x16x32xf32, #tpu.memory_space<vmem>>, vector<1x2x16x32xf32>,
    %200 = vector.extract_strided_slice %195 {offsets = [0, 0], sizes = [16, 32], strides = [1, 1]} : vector<32x32xf32> to vector<16x32xf32>
    %201 = vector.extract_strided_slice %195 {offsets = [16, 0], sizes = [16, 32], strides = [1, 1]} : vector<32x32xf32> to vector<16x32xf32>
    %c1_119 = arith.constant 1 : index
    %c0_120 = arith.constant 0 : index
    %c0_121 = arith.constant 0 : index
    %c0_122 = arith.constant 0 : index
    %202 = vector.load %arg2[%c1_119, %c0_120, %c0_121, %c0_122] : memref<2x2x16x32xf32, #tpu.memory_space<vmem>>, vector<1x2x16x32xf32>
    %203 = vector.shape_cast %202 : vector<1x2x16x32xf32> to vector<2x16x32xf32>
    %204 = vector.shape_cast %203 : vector<2x16x32xf32> to vector<32x32xf32>
    %205 = vector.extract_strided_slice %203 {offsets = [0, 0, 0], sizes = [1, 16, 32], strides = [1, 1, 1]} : vector<2x16x32xf32> to vector<1x16x32xf32>
    %206 = vector.shape_cast %205 : vector<1x16x32xf32> to vector<16x32xf32>
    %207 = vector.extract_strided_slice %203 {offsets = [1, 0, 0], sizes = [1, 16, 32], strides = [1, 1, 1]} : vector<2x16x32xf32> to vector<1x16x32xf32>
    %208 = vector.shape_cast %207 : vector<1x16x32xf32> to vector<16x32xf32>
    %c0_123 = arith.constant 0 : index
    %c0_124 = arith.constant 0 : index
    %c0_125 = arith.constant 0 : index
    %209 = vector.load %arg8[%c0_123, %c0_124, %c0_125] : memref<5x32x96xf32, #tpu.memory_space<vmem>>, vector<1x32x96xf32>
    %210 = vector.shape_cast %209 : vector<1x32x96xf32> to vector<32x96xf32>
    %211 = tpu.concatenate %200, %201 in 0 : vector<16x32xf32>, vector<16x32xf32> -> vector<32x32xf32>
    %cst_126 = arith.constant dense<0.000000e+00> : vector<32x96xf32>
    %212 = tpu.matmul %211, %210, %cst_126 {dimension_numbers = #tpu.dot_dimension_numbers<[1], [0], [0], [1], [0, 0, 1, 1], [], []>} : vector<32x32xf32>, vector<32x96xf32>, vector<32x96xf32> -> vector<32x96xf32>
    %c0_127 = arith.constant 0 : index
    %c0_128 = arith.constant 0 : index
    %c0_129 = arith.constant 0 : index
    %213 = vector.load %arg3[%c0_127, %c0_128, %c0_129] : memref<2x16x16xf32, #tpu.memory_space<vmem>>, vector<1x16x16xf32>
    %214 = vector.shape_cast %213 : vector<1x16x16xf32> to vector<16x16xf32>
    %cst_130 = arith.constant dense<0.000000e+00> : vector<16x32xf32>
    %215 = tpu.matmul %214, %200, %cst_130 {dimension_numbers = #tpu.dot_dimension_numbers<[1], [0], [0], [1], [0, 0, 1, 1], [], []>} : vector<16x16xf32>, vector<16x32xf32>, vector<16x32xf32> -> vector<16x32xf32>
    %cst_131 = arith.constant dense<0.000000e+00> : vector<16x32xf32>
    %216 = tpu.matmul %214, %201, %cst_131 {dimension_numbers = #tpu.dot_dimension_numbers<[1], [0], [0], [1], [0, 0, 1, 1], [], []>} : vector<16x16xf32>, vector<16x32xf32>, vector<16x32xf32> -> vector<16x32xf32>
    %c1_132 = arith.constant 1 : index
    %c0_133 = arith.constant 0 : index
    %c0_134 = arith.constant 0 : index
    %217 = vector.load %arg8[%c1_132, %c0_133, %c0_134] : memref<5x32x96xf32, #tpu.memory_space<vmem>>, vector<1x32x96xf32>
    %218 = vector.shape_cast %217 : vector<1x32x96xf32> to vector<32x96xf32>
    %219 = tpu.concatenate %215, %216 in 0 : vector<16x32xf32>, vector<16x32xf32> -> vector<32x32xf32>
    %cst_135 = arith.constant dense<0.000000e+00> : vector<32x96xf32>
    %220 = tpu.matmul %219, %218, %cst_135 {dimension_numbers = #tpu.dot_dimension_numbers<[1], [0], [0], [1], [0, 0, 1, 1], [], []>} : vector<32x32xf32>, vector<32x96xf32>, vector<32x96xf32> -> vector<32x96xf32>
    %221 = arith.addf %212, %220 : vector<32x96xf32>
    %cst_136 = arith.constant dense<0.000000e+00> : vector<16x32xf32>
    %222 = tpu.matmul %214, %215, %cst_136 {dimension_numbers = #tpu.dot_dimension_numbers<[1], [0], [0], [1], [0, 0, 1, 1], [], []>} : vector<16x16xf32>, vector<16x32xf32>, vector<16x32xf32> -> vector<16x32xf32>
    %cst_137 = arith.constant 2.000000e+00 : f32
    %223 = vector.broadcast %cst_137 : f32 to vector<16x32xf32>
    %224 = arith.mulf %223, %222 : vector<16x32xf32>
    %225 = arith.subf %224, %200 : vector<16x32xf32>
    %cst_138 = arith.constant dense<0.000000e+00> : vector<16x32xf32>
    %226 = tpu.matmul %214, %216, %cst_138 {dimension_numbers = #tpu.dot_dimension_numbers<[1], [0], [0], [1], [0, 0, 1, 1], [], []>} : vector<16x16xf32>, vector<16x32xf32>, vector<16x32xf32> -> vector<16x32xf32>
    %cst_139 = arith.constant 2.000000e+00 : f32
    %227 = vector.broadcast %cst_139 : f32 to vector<16x32xf32>
    %228 = arith.mulf %227, %226 : vector<16x32xf32>
    %229 = arith.subf %228, %201 : vector<16x32xf32>
    %c2_140 = arith.constant 2 : index
    %c0_141 = arith.constant 0 : index
    %c0_142 = arith.constant 0 : index
    %230 = vector.load %arg8[%c2_140, %c0_141, %c0_142] : memref<5x32x96xf32, #tpu.memory_space<vmem>>, vector<1x32x96xf32>
    %231 = vector.shape_cast %230 : vector<1x32x96xf32> to vector<32x96xf32>
    %232 = tpu.concatenate %225, %229 in 0 : vector<16x32xf32>, vector<16x32xf32> -> vector<32x32xf32>
    %cst_143 = arith.constant dense<0.000000e+00> : vector<32x96xf32>
    %233 = tpu.matmul %232, %231, %cst_143 {dimension_numbers = #tpu.dot_dimension_numbers<[1], [0], [0], [1], [0, 0, 1, 1], [], []>} : vector<32x32xf32>, vector<32x96xf32>, vector<32x96xf32> -> vector<32x96xf32>
    %234 = arith.addf %221, %233 : vector<32x96xf32>
    %c1_144 = arith.constant 1 : index
    %c0_145 = arith.constant 0 : index
    %c0_146 = arith.constant 0 : index
    %235 = vector.load %arg3[%c1_144, %c0_145, %c0_146] : memref<2x16x16xf32, #tpu.memory_space<vmem>>, vector<1x16x16xf32>
    %236 = vector.shape_cast %235 : vector<1x16x16xf32> to vector<16x16xf32>
    %cst_147 = arith.constant dense<0.000000e+00> : vector<16x32xf32>
    %237 = tpu.matmul %236, %215, %cst_147 {dimension_numbers = #tpu.dot_dimension_numbers<[1], [0], [0], [1], [0, 0, 1, 1], [], []>} : vector<16x16xf32>, vector<16x32xf32>, vector<16x32xf32> -> vector<16x32xf32>
    %cst_148 = arith.constant dense<0.000000e+00> : vector<16x32xf32>
    %238 = tpu.matmul %236, %216, %cst_148 {dimension_numbers = #tpu.dot_dimension_numbers<[1], [0], [0], [1], [0, 0, 1, 1], [], []>} : vector<16x16xf32>, vector<16x32xf32>, vector<16x32xf32> -> vector<16x32xf32>
    %c3_149 = arith.constant 3 : index
    %c0_150 = arith.constant 0 : index
    %c0_151 = arith.constant 0 : index
    %239 = vector.load %arg8[%c3_149, %c0_150, %c0_151] : memref<5x32x96xf32, #tpu.memory_space<vmem>>, vector<1x32x96xf32>
    %240 = vector.shape_cast %239 : vector<1x32x96xf32> to vector<32x96xf32>
    %241 = tpu.concatenate %237, %238 in 0 : vector<16x32xf32>, vector<16x32xf32> -> vector<32x32xf32>
    %cst_152 = arith.constant dense<0.000000e+00> : vector<32x96xf32>
    %242 = tpu.matmul %241, %240, %cst_152 {dimension_numbers = #tpu.dot_dimension_numbers<[1], [0], [0], [1], [0, 0, 1, 1], [], []>} : vector<32x32xf32>, vector<32x96xf32>, vector<32x96xf32> -> vector<32x96xf32>
    %243 = arith.addf %234, %242 : vector<32x96xf32>
    %cst_153 = arith.constant dense<0.000000e+00> : vector<16x32xf32>
    %244 = tpu.matmul %236, %237, %cst_153 {dimension_numbers = #tpu.dot_dimension_numbers<[1], [0], [0], [1], [0, 0, 1, 1], [], []>} : vector<16x16xf32>, vector<16x32xf32>, vector<16x32xf32> -> vector<16x32xf32>
    %cst_154 = arith.constant 2.000000e+00 : f32
    %245 = vector.broadcast %cst_154 : f32 to vector<16x32xf32>
    %246 = arith.mulf %245, %244 : vector<16x32xf32>
    %247 = arith.subf %246, %215 : vector<16x32xf32>
    %cst_155 = arith.constant dense<0.000000e+00> : vector<16x32xf32>
    %248 = tpu.matmul %236, %238, %cst_155 {dimension_numbers = #tpu.dot_dimension_numbers<[1], [0], [0], [1], [0, 0, 1, 1], [], []>} : vector<16x16xf32>, vector<16x32xf32>, vector<16x32xf32> -> vector<16x32xf32>
    %cst_156 = arith.constant 2.000000e+00 : f32
    %249 = vector.broadcast %cst_156 : f32 to vector<16x32xf32>
    %250 = arith.mulf %249, %248 : vector<16x32xf32>
    %251 = arith.subf %250, %216 : vector<16x32xf32>
    %c4_157 = arith.constant 4 : index
    %c0_158 = arith.constant 0 : index
    %c0_159 = arith.constant 0 : index
    %252 = vector.load %arg8[%c4_157, %c0_158, %c0_159] : memref<5x32x96xf32, #tpu.memory_space<vmem>>, vector<1x32x96xf32>
    %253 = vector.shape_cast %252 : vector<1x32x96xf32> to vector<32x96xf32>
    %254 = tpu.concatenate %247, %251 in 0 : vector<16x32xf32>, vector<16x32xf32> -> vector<32x32xf32>
    %cst_160 = arith.constant dense<0.000000e+00> : vector<32x96xf32>
    %255 = tpu.matmul %254, %253, %cst_160 {dimension_numbers = #tpu.dot_dimension_numbers<[1], [0], [0], [1], [0, 0, 1, 1], [], []>} : vector<32x32xf32>, vector<32x96xf32>, vector<32x96xf32> -> vector<32x96xf32>
    %256 = arith.addf %243, %255 : vector<32x96xf32>
    %c0_161 = arith.constant 0 : index
    %c0_162 = arith.constant 0 : index
    %257 = vector.load %arg11[%c0_161, %c0_162] : memref<1x96xf32, #tpu.memory_space<vmem>>, vector<1x96xf32>
    %258 = vector.broadcast %257 : vector<1x96xf32> to vector<32x96xf32>
    %259 = arith.addf %256, %258 : vector<32x96xf32>
    %c0_163 = arith.constant 0 : index
    %c0_164 = arith.constant 0 : index
    %c0_165 = arith.constant 0 : index
    %260 = vector.load %arg9[%c0_163, %c0_164, %c0_165] : memref<5x32x64xf32, #tpu.memory_space<vmem>>, vector<1x32x64xf32>
    %261 = vector.shape_cast %260 : vector<1x32x64xf32> to vector<32x64xf32>
    %262 = tpu.concatenate %206, %208 in 0 : vector<16x32xf32>, vector<16x32xf32> -> vector<32x32xf32>
    %cst_166 = arith.constant dense<0.000000e+00> : vector<32x64xf32>
    %263 = tpu.matmul %262, %261, %cst_166 {dimension_numbers = #tpu.dot_dimension_numbers<[1], [0], [0], [1], [0, 0, 1, 1], [], []>} : vector<32x32xf32>, vector<32x64xf32>, vector<32x64xf32> -> vector<32x64xf32>
    %c0_167 = arith.constant 0 : index
    %c0_168 = arith.constant 0 : index
    %c0_169 = arith.constant 0 : index
    %264 = vector.load %arg3[%c0_167, %c0_168, %c0_169] : memref<2x16x16xf32, #tpu.memory_space<vmem>>, vector<1x16x16xf32>
    %265 = vector.shape_cast %264 : vector<1x16x16xf32> to vector<16x16xf32>
    %cst_170 = arith.constant dense<0.000000e+00> : vector<16x32xf32>
    %266 = tpu.matmul %265, %206, %cst_170 {dimension_numbers = #tpu.dot_dimension_numbers<[1], [0], [0], [1], [0, 0, 1, 1], [], []>} : vector<16x16xf32>, vector<16x32xf32>, vector<16x32xf32> -> vector<16x32xf32>
    %cst_171 = arith.constant dense<0.000000e+00> : vector<16x32xf32>
    %267 = tpu.matmul %265, %208, %cst_171 {dimension_numbers = #tpu.dot_dimension_numbers<[1], [0], [0], [1], [0, 0, 1, 1], [], []>} : vector<16x16xf32>, vector<16x32xf32>, vector<16x32xf32> -> vector<16x32xf32>
    %c1_172 = arith.constant 1 : index
    %c0_173 = arith.constant 0 : index
    %c0_174 = arith.constant 0 : index
    %268 = vector.load %arg9[%c1_172, %c0_173, %c0_174] : memref<5x32x64xf32, #tpu.memory_space<vmem>>, vector<1x32x64xf32>
    %269 = vector.shape_cast %268 : vector<1x32x64xf32> to vector<32x64xf32>
    %270 = tpu.concatenate %266, %267 in 0 : vector<16x32xf32>, vector<16x32xf32> -> vector<32x32xf32>
    %cst_175 = arith.constant dense<0.000000e+00> : vector<32x64xf32>
    %271 = tpu.matmul %270, %269, %cst_175 {dimension_numbers = #tpu.dot_dimension_numbers<[1], [0], [0], [1], [0, 0, 1, 1], [], []>} : vector<32x32xf32>, vector<32x64xf32>, vector<32x64xf32> -> vector<32x64xf32>
    %272 = arith.addf %263, %271 : vector<32x64xf32>
    %cst_176 = arith.constant dense<0.000000e+00> : vector<16x32xf32>
    %273 = tpu.matmul %265, %266, %cst_176 {dimension_numbers = #tpu.dot_dimension_numbers<[1], [0], [0], [1], [0, 0, 1, 1], [], []>} : vector<16x16xf32>, vector<16x32xf32>, vector<16x32xf32> -> vector<16x32xf32>
    %cst_177 = arith.constant 2.000000e+00 : f32
    %274 = vector.broadcast %cst_177 : f32 to vector<16x32xf32>
    %275 = arith.mulf %274, %273 : vector<16x32xf32>
    %276 = arith.subf %275, %206 : vector<16x32xf32>
    %cst_178 = arith.constant dense<0.000000e+00> : vector<16x32xf32>
    %277 = tpu.matmul %265, %267, %cst_178 {dimension_numbers = #tpu.dot_dimension_numbers<[1], [0], [0], [1], [0, 0, 1, 1], [], []>} : vector<16x16xf32>, vector<16x32xf32>, vector<16x32xf32> -> vector<16x32xf32>
    %cst_179 = arith.constant 2.000000e+00 : f32
    %278 = vector.broadcast %cst_179 : f32 to vector<16x32xf32>
    %279 = arith.mulf %278, %277 : vector<16x32xf32>
    %280 = arith.subf %279, %208 : vector<16x32xf32>
    %c2_180 = arith.constant 2 : index
    %c0_181 = arith.constant 0 : index
    %c0_182 = arith.constant 0 : index
    %281 = vector.load %arg9[%c2_180, %c0_181, %c0_182] : memref<5x32x64xf32, #tpu.memory_space<vmem>>, vector<1x32x64xf32>
    %282 = vector.shape_cast %281 : vector<1x32x64xf32> to vector<32x64xf32>
    %283 = tpu.concatenate %276, %280 in 0 : vector<16x32xf32>, vector<16x32xf32> -> vector<32x32xf32>
    %cst_183 = arith.constant dense<0.000000e+00> : vector<32x64xf32>
    %284 = tpu.matmul %283, %282, %cst_183 {dimension_numbers = #tpu.dot_dimension_numbers<[1], [0], [0], [1], [0, 0, 1, 1], [], []>} : vector<32x32xf32>, vector<32x64xf32>, vector<32x64xf32> -> vector<32x64xf32>
    %285 = arith.addf %272, %284 : vector<32x64xf32>
    %c1_184 = arith.constant 1 : index
    %c0_185 = arith.constant 0 : index
    %c0_186 = arith.constant 0 : index
    %286 = vector.load %arg3[%c1_184, %c0_185, %c0_186] : memref<2x16x16xf32, #tpu.memory_space<vmem>>, vector<1x16x16xf32>
    %287 = vector.shape_cast %286 : vector<1x16x16xf32> to vector<16x16xf32>
    %cst_187 = arith.constant dense<0.000000e+00> : vector<16x32xf32>
    %288 = tpu.matmul %287, %266, %cst_187 {dimension_numbers = #tpu.dot_dimension_numbers<[1], [0], [0], [1], [0, 0, 1, 1], [], []>} : vector<16x16xf32>, vector<16x32xf32>, vector<16x32xf32> -> vector<16x32xf32>
    %cst_188 = arith.constant dense<0.000000e+00> : vector<16x32xf32>
    %289 = tpu.matmul %287, %267, %cst_188 {dimension_numbers = #tpu.dot_dimension_numbers<[1], [0], [0], [1], [0, 0, 1, 1], [], []>} : vector<16x16xf32>, vector<16x32xf32>, vector<16x32xf32> -> vector<16x32xf32>
    %c3_189 = arith.constant 3 : index
    %c0_190 = arith.constant 0 : index
    %c0_191 = arith.constant 0 : index
    %290 = vector.load %arg9[%c3_189, %c0_190, %c0_191] : memref<5x32x64xf32, #tpu.memory_space<vmem>>, vector<1x32x64xf32>
    %291 = vector.shape_cast %290 : vector<1x32x64xf32> to vector<32x64xf32>
    %292 = tpu.concatenate %288, %289 in 0 : vector<16x32xf32>, vector<16x32xf32> -> vector<32x32xf32>
    %cst_192 = arith.constant dense<0.000000e+00> : vector<32x64xf32>
    %293 = tpu.matmul %292, %291, %cst_192 {dimension_numbers = #tpu.dot_dimension_numbers<[1], [0], [0], [1], [0, 0, 1, 1], [], []>} : vector<32x32xf32>, vector<32x64xf32>, vector<32x64xf32> -> vector<32x64xf32>
    %294 = arith.addf %285, %293 : vector<32x64xf32>
    %cst_193 = arith.constant dense<0.000000e+00> : vector<16x32xf32>
    %295 = tpu.matmul %287, %288, %cst_193 {dimension_numbers = #tpu.dot_dimension_numbers<[1], [0], [0], [1], [0, 0, 1, 1], [], []>} : vector<16x16xf32>, vector<16x32xf32>, vector<16x32xf32> -> vector<16x32xf32>
    %cst_194 = arith.constant 2.000000e+00 : f32
    %296 = vector.broadcast %cst_194 : f32 to vector<16x32xf32>
    %297 = arith.mulf %296, %295 : vector<16x32xf32>
    %298 = arith.subf %297, %266 : vector<16x32xf32>
    %cst_195 = arith.constant dense<0.000000e+00> : vector<16x32xf32>
    %299 = tpu.matmul %287, %289, %cst_195 {dimension_numbers = #tpu.dot_dimension_numbers<[1], [0], [0], [1], [0, 0, 1, 1], [], []>} : vector<16x16xf32>, vector<16x32xf32>, vector<16x32xf32> -> vector<16x32xf32>
    %cst_196 = arith.constant 2.000000e+00 : f32
    %300 = vector.broadcast %cst_196 : f32 to vector<16x32xf32>
    %301 = arith.mulf %300, %299 : vector<16x32xf32>
    %302 = arith.subf %301, %267 : vector<16x32xf32>
    %c4_197 = arith.constant 4 : index
    %c0_198 = arith.constant 0 : index
    %c0_199 = arith.constant 0 : index
    %303 = vector.load %arg9[%c4_197, %c0_198, %c0_199] : memref<5x32x64xf32, #tpu.memory_space<vmem>>, vector<1x32x64xf32>
    %304 = vector.shape_cast %303 : vector<1x32x64xf32> to vector<32x64xf32>
    %305 = tpu.concatenate %298, %302 in 0 : vector<16x32xf32>, vector<16x32xf32> -> vector<32x32xf32>
    %cst_200 = arith.constant dense<0.000000e+00> : vector<32x64xf32>
    %306 = tpu.matmul %305, %304, %cst_200 {dimension_numbers = #tpu.dot_dimension_numbers<[1], [0], [0], [1], [0, 0, 1, 1], [], []>} : vector<32x32xf32>, vector<32x64xf32>, vector<32x64xf32> -> vector<32x64xf32>
    %307 = arith.addf %294, %306 : vector<32x64xf32>
    %308 = vector.extract_strided_slice %259 {offsets = [0, 0], sizes = [32, 32], strides = [1, 1]} : vector<32x96xf32> to vector<32x32xf32>
    %309 = vector.extract_strided_slice %307 {offsets = [0, 0], sizes = [32, 32], strides = [1, 1]} : vector<32x64xf32> to vector<32x32xf32>
    %310 = arith.addf %308, %309 : vector<32x32xf32>
    %311 = arith.negf %310 : vector<32x32xf32>
    %312 = math.exp %311 : vector<32x32xf32>
    %cst_201 = arith.constant 1.000000e+00 : f32
    %313 = vector.broadcast %cst_201 : f32 to vector<32x32xf32>
    %314 = arith.addf %313, %312 : vector<32x32xf32>
    %315 = arith.divf %313, %314 : vector<32x32xf32>
    %316 = vector.extract_strided_slice %259 {offsets = [0, 32], sizes = [32, 32], strides = [1, 1]} : vector<32x96xf32> to vector<32x32xf32>
    %317 = vector.extract_strided_slice %307 {offsets = [0, 32], sizes = [32, 32], strides = [1, 1]} : vector<32x64xf32> to vector<32x32xf32>
    %318 = arith.addf %316, %317 : vector<32x32xf32>
    %319 = arith.negf %318 : vector<32x32xf32>
    %320 = math.exp %319 : vector<32x32xf32>
    %cst_202 = arith.constant 1.000000e+00 : f32
    %321 = vector.broadcast %cst_202 : f32 to vector<32x32xf32>
    %322 = arith.addf %321, %320 : vector<32x32xf32>
    %323 = arith.divf %321, %322 : vector<32x32xf32>
    %324 = arith.mulf %315, %204 : vector<32x32xf32>
    %325 = vector.extract_strided_slice %324 {offsets = [0, 0], sizes = [16, 32], strides = [1, 1]} : vector<32x32xf32> to vector<16x32xf32>
    %326 = vector.extract_strided_slice %324 {offsets = [16, 0], sizes = [16, 32], strides = [1, 1]} : vector<32x32xf32> to vector<16x32xf32>
    %c0_203 = arith.constant 0 : index
    %c0_204 = arith.constant 0 : index
    %c0_205 = arith.constant 0 : index
    %327 = vector.load %arg10[%c0_203, %c0_204, %c0_205] : memref<5x32x32xf32, #tpu.memory_space<vmem>>, vector<1x32x32xf32>
    %328 = vector.shape_cast %327 : vector<1x32x32xf32> to vector<32x32xf32>
    %329 = tpu.concatenate %325, %326 in 0 : vector<16x32xf32>, vector<16x32xf32> -> vector<32x32xf32>
    %cst_206 = arith.constant dense<0.000000e+00> : vector<32x32xf32>
    %330 = tpu.matmul %329, %328, %cst_206 {dimension_numbers = #tpu.dot_dimension_numbers<[1], [0], [0], [1], [0, 0, 1, 1], [], []>} : vector<32x32xf32>, vector<32x32xf32>, vector<32x32xf32> -> vector<32x32xf32>
    %c0_207 = arith.constant 0 : index
    %c0_208 = arith.constant 0 : index
    %c0_209 = arith.constant 0 : index
    %331 = vector.load %arg3[%c0_207, %c0_208, %c0_209] : memref<2x16x16xf32, #tpu.memory_space<vmem>>, vector<1x16x16xf32>
    %332 = vector.shape_cast %331 : vector<1x16x16xf32> to vector<16x16xf32>
    %cst_210 = arith.constant dense<0.000000e+00> : vector<16x32xf32>
    %333 = tpu.matmul %332, %325, %cst_210 {dimension_numbers = #tpu.dot_dimension_numbers<[1], [0], [0], [1], [0, 0, 1, 1], [], []>} : vector<16x16xf32>, vector<16x32xf32>, vector<16x32xf32> -> vector<16x32xf32>
    %cst_211 = arith.constant dense<0.000000e+00> : vector<16x32xf32>
    %334 = tpu.matmul %332, %326, %cst_211 {dimension_numbers = #tpu.dot_dimension_numbers<[1], [0], [0], [1], [0, 0, 1, 1], [], []>} : vector<16x16xf32>, vector<16x32xf32>, vector<16x32xf32> -> vector<16x32xf32>
    %c1_212 = arith.constant 1 : index
    %c0_213 = arith.constant 0 : index
    %c0_214 = arith.constant 0 : index
    %335 = vector.load %arg10[%c1_212, %c0_213, %c0_214] : memref<5x32x32xf32, #tpu.memory_space<vmem>>, vector<1x32x32xf32>
    %336 = vector.shape_cast %335 : vector<1x32x32xf32> to vector<32x32xf32>
    %337 = tpu.concatenate %333, %334 in 0 : vector<16x32xf32>, vector<16x32xf32> -> vector<32x32xf32>
    %cst_215 = arith.constant dense<0.000000e+00> : vector<32x32xf32>
    %338 = tpu.matmul %337, %336, %cst_215 {dimension_numbers = #tpu.dot_dimension_numbers<[1], [0], [0], [1], [0, 0, 1, 1], [], []>} : vector<32x32xf32>, vector<32x32xf32>, vector<32x32xf32> -> vector<32x32xf32>
    %339 = arith.addf %330, %338 : vector<32x32xf32>
    %cst_216 = arith.constant dense<0.000000e+00> : vector<16x32xf32>
    %340 = tpu.matmul %332, %333, %cst_216 {dimension_numbers = #tpu.dot_dimension_numbers<[1], [0], [0], [1], [0, 0, 1, 1], [], []>} : vector<16x16xf32>, vector<16x32xf32>, vector<16x32xf32> -> vector<16x32xf32>
    %cst_217 = arith.constant 2.000000e+00 : f32
    %341 = vector.broadcast %cst_217 : f32 to vector<16x32xf32>
    %342 = arith.mulf %341, %340 : vector<16x32xf32>
    %343 = arith.subf %342, %325 : vector<16x32xf32>
    %cst_218 = arith.constant dense<0.000000e+00> : vector<16x32xf32>
    %344 = tpu.matmul %332, %334, %cst_218 {dimension_numbers = #tpu.dot_dimension_numbers<[1], [0], [0], [1], [0, 0, 1, 1], [], []>} : vector<16x16xf32>, vector<16x32xf32>, vector<16x32xf32> -> vector<16x32xf32>
    %cst_219 = arith.constant 2.000000e+00 : f32
    %345 = vector.broadcast %cst_219 : f32 to vector<16x32xf32>
    %346 = arith.mulf %345, %344 : vector<16x32xf32>
    %347 = arith.subf %346, %326 : vector<16x32xf32>
    %c2_220 = arith.constant 2 : index
    %c0_221 = arith.constant 0 : index
    %c0_222 = arith.constant 0 : index
    %348 = vector.load %arg10[%c2_220, %c0_221, %c0_222] : memref<5x32x32xf32, #tpu.memory_space<vmem>>, vector<1x32x32xf32>
    %349 = vector.shape_cast %348 : vector<1x32x32xf32> to vector<32x32xf32>
    %350 = tpu.concatenate %343, %347 in 0 : vector<16x32xf32>, vector<16x32xf32> -> vector<32x32xf32>
    %cst_223 = arith.constant dense<0.000000e+00> : vector<32x32xf32>
    %351 = tpu.matmul %350, %349, %cst_223 {dimension_numbers = #tpu.dot_dimension_numbers<[1], [0], [0], [1], [0, 0, 1, 1], [], []>} : vector<32x32xf32>, vector<32x32xf32>, vector<32x32xf32> -> vector<32x32xf32>
    %352 = arith.addf %339, %351 : vector<32x32xf32>
    %c1_224 = arith.constant 1 : index
    %c0_225 = arith.constant 0 : index
    %c0_226 = arith.constant 0 : index
    %353 = vector.load %arg3[%c1_224, %c0_225, %c0_226] : memref<2x16x16xf32, #tpu.memory_space<vmem>>, vector<1x16x16xf32>
    %354 = vector.shape_cast %353 : vector<1x16x16xf32> to vector<16x16xf32>
    %cst_227 = arith.constant dense<0.000000e+00> : vector<16x32xf32>
    %355 = tpu.matmul %354, %333, %cst_227 {dimension_numbers = #tpu.dot_dimension_numbers<[1], [0], [0], [1], [0, 0, 1, 1], [], []>} : vector<16x16xf32>, vector<16x32xf32>, vector<16x32xf32> -> vector<16x32xf32>
    %cst_228 = arith.constant dense<0.000000e+00> : vector<16x32xf32>
    %356 = tpu.matmul %354, %334, %cst_228 {dimension_numbers = #tpu.dot_dimension_numbers<[1], [0], [0], [1], [0, 0, 1, 1], [], []>} : vector<16x16xf32>, vector<16x32xf32>, vector<16x32xf32> -> vector<16x32xf32>
    %c3_229 = arith.constant 3 : index
    %c0_230 = arith.constant 0 : index
    %c0_231 = arith.constant 0 : index
    %357 = vector.load %arg10[%c3_229, %c0_230, %c0_231] : memref<5x32x32xf32, #tpu.memory_space<vmem>>, vector<1x32x32xf32>
    %358 = vector.shape_cast %357 : vector<1x32x32xf32> to vector<32x32xf32>
    %359 = tpu.concatenate %355, %356 in 0 : vector<16x32xf32>, vector<16x32xf32> -> vector<32x32xf32>
    %cst_232 = arith.constant dense<0.000000e+00> : vector<32x32xf32>
    %360 = tpu.matmul %359, %358, %cst_232 {dimension_numbers = #tpu.dot_dimension_numbers<[1], [0], [0], [1], [0, 0, 1, 1], [], []>} : vector<32x32xf32>, vector<32x32xf32>, vector<32x32xf32> -> vector<32x32xf32>
    %361 = arith.addf %352, %360 : vector<32x32xf32>
    %cst_233 = arith.constant dense<0.000000e+00> : vector<16x32xf32>
    %362 = tpu.matmul %354, %355, %cst_233 {dimension_numbers = #tpu.dot_dimension_numbers<[1], [0], [0], [1], [0, 0, 1, 1], [], []>} : vector<16x16xf32>, vector<16x32xf32>, vector<16x32xf32> -> vector<16x32xf32>
    %cst_234 = arith.constant 2.000000e+00 : f32
    %363 = vector.broadcast %cst_234 : f32 to vector<16x32xf32>
    %364 = arith.mulf %363, %362 : vector<16x32xf32>
    %365 = arith.subf %364, %333 : vector<16x32xf32>
    %cst_235 = arith.constant dense<0.000000e+00> : vector<16x32xf32>
    %366 = tpu.matmul %354, %356, %cst_235 {dimension_numbers = #tpu.dot_dimension_numbers<[1], [0], [0], [1], [0, 0, 1, 1], [], []>} : vector<16x16xf32>, vector<16x32xf32>, vector<16x32xf32> -> vector<16x32xf32>
    %cst_236 = arith.constant 2.000000e+00 : f32
    %367 = vector.broadcast %cst_236 : f32 to vector<16x32xf32>
    %368 = arith.mulf %367, %366 : vector<16x32xf32>
    %369 = arith.subf %368, %334 : vector<16x32xf32>
    %c4_237 = arith.constant 4 : index
    %c0_238 = arith.constant 0 : index
    %c0_239 = arith.constant 0 : index
    %370 = vector.load %arg10[%c4_237, %c0_238, %c0_239] : memref<5x32x32xf32, #tpu.memory_space<vmem>>, vector<1x32x32xf32>
    %371 = vector.shape_cast %370 : vector<1x32x32xf32> to vector<32x32xf32>
    %372 = tpu.concatenate %365, %369 in 0 : vector<16x32xf32>, vector<16x32xf32> -> vector<32x32xf32>
    %cst_240 = arith.constant dense<0.000000e+00> : vector<32x32xf32>
    %373 = tpu.matmul %372, %371, %cst_240 {dimension_numbers = #tpu.dot_dimension_numbers<[1], [0], [0], [1], [0, 0, 1, 1], [], []>} : vector<32x32xf32>, vector<32x32xf32>, vector<32x32xf32> -> vector<32x32xf32>
    %374 = arith.addf %361, %373 : vector<32x32xf32>
    %375 = vector.extract_strided_slice %259 {offsets = [0, 64], sizes = [32, 32], strides = [1, 1]} : vector<32x96xf32> to vector<32x32xf32>
    %376 = arith.addf %375, %374 : vector<32x32xf32>
    %377 = math.tanh %376 : vector<32x32xf32>
    %378 = arith.mulf %323, %204 : vector<32x32xf32>
    %cst_241 = arith.constant 1.000000e+00 : f32
    %379 = vector.broadcast %cst_241 : f32 to vector<32x32xf32>
    %380 = arith.subf %379, %323 : vector<32x32xf32>
    %381 = arith.mulf %380, %377 : vector<32x32xf32>
    %382 = arith.addf %378, %381 : vector<32x32xf32>
    %383 = vector.shape_cast %382 : vector<32x32xf32> to vector<2x16x32xf32>
    %c1_242 = arith.constant 1 : index
    %c0_243 = arith.constant 0 : index
    %c0_244 = arith.constant 0 : index
    %c0_245 = arith.constant 0 : index
    %384 = vector.load %arg14[%c1_242, %c0_243, %c0_244, %c0_245] : memref<2x2x16x32xf32, #tpu.memory_space<vmem>>, vector<1x2x16x32xf32>
    %385 = vector.shape_cast %384 : vector<1x2x16x32xf32> to vector<2x16x32xf32>
    %386 = vector.shape_cast %383 : vector<2x16x32xf32> to vector<1x2x16x32xf32>
    tpu.vector_store %arg14[%c1_242, %c0_243, %c0_244, %c0_245], %386 {strides = array<i32>} : memref<2x2x16x32xf32, #tpu.memory_space<vmem>>, vector<1x2x16x32xf32>,
    %c0_246 = arith.constant 0 : index
    %c0_247 = arith.constant 0 : index
    %387 = vector.load %arg12[%c0_246, %c0_247] : memref<32x1xf32, #tpu.memory_space<vmem>>, vector<32x1xf32>
    %cst_248 = arith.constant dense<0.000000e+00> : vector<32x1xf32>
    %388 = tpu.matmul %382, %387, %cst_248 {dimension_numbers = #tpu.dot_dimension_numbers<[1], [0], [0], [1], [0, 0, 1, 1], [], []>} : vector<32x32xf32>, vector<32x1xf32>, vector<32x1xf32> -> vector<32x1xf32>
    %c0_249 = arith.constant 0 : index
    %c0_250 = arith.constant 0 : index
    %389 = vector.load %arg13[%c0_249, %c0_250] : memref<1x1xf32, #tpu.memory_space<vmem>>, vector<1x1xf32>
    %390 = vector.broadcast %389 : vector<1x1xf32> to vector<32x1xf32>
    %391 = arith.addf %388, %390 : vector<32x1xf32>
    %392 = vector.shape_cast %391 : vector<32x1xf32> to vector<2x16x1xf32>
    %c0_251 = arith.constant 0 : index
    %c0_252 = arith.constant 0 : index
    %c0_253 = arith.constant 0 : index
    %393 = vector.load %arg15[%c0_251, %c0_252, %c0_253] : memref<2x16x1xf32, #tpu.memory_space<vmem>>, vector<2x16x1xf32>
    tpu.vector_store %arg15[%c0_251, %c0_252, %c0_253], %392 {strides = array<i32>} : memref<2x16x1xf32, #tpu.memory_space<vmem>>, vector<2x16x1xf32>,
    return
  }
  func.func @transform_0(%arg0: i32) -> (i32, i32, i32) {
    %c0_i32 = arith.constant 0 : i32
    %c0_i32_0 = arith.constant 0 : i32
    %c0_i32_1 = arith.constant 0 : i32
    return %arg0, %c0_i32, %c0_i32_0 : i32, i32, i32
  }
  func.func @transform_1(%arg0: i32) -> (i32, i32, i32, i32) {
    %c0_i32 = arith.constant 0 : i32
    %c0_i32_0 = arith.constant 0 : i32
    %c0_i32_1 = arith.constant 0 : i32
    %c0_i32_2 = arith.constant 0 : i32
    return %c0_i32, %arg0, %c0_i32_0, %c0_i32_1 : i32, i32, i32, i32
  }
  func.func @transform_2(%arg0: i32) -> (i32, i32, i32) {
    %c0_i32 = arith.constant 0 : i32
    %c0_i32_0 = arith.constant 0 : i32
    %c0_i32_1 = arith.constant 0 : i32
    %c0_i32_2 = arith.constant 0 : i32
    return %c0_i32, %c0_i32_0, %c0_i32_1 : i32, i32, i32
  }
  func.func @transform_3(%arg0: i32) -> (i32, i32, i32) {
    %c0_i32 = arith.constant 0 : i32
    %c0_i32_0 = arith.constant 0 : i32
    %c0_i32_1 = arith.constant 0 : i32
    %c0_i32_2 = arith.constant 0 : i32
    return %c0_i32, %c0_i32_0, %c0_i32_1 : i32, i32, i32
  }
  func.func @transform_4(%arg0: i32) -> (i32, i32, i32) {
    %c0_i32 = arith.constant 0 : i32
    %c0_i32_0 = arith.constant 0 : i32
    %c0_i32_1 = arith.constant 0 : i32
    %c0_i32_2 = arith.constant 0 : i32
    return %c0_i32, %c0_i32_0, %c0_i32_1 : i32, i32, i32
  }
  func.func @transform_5(%arg0: i32) -> (i32, i32, i32) {
    %c0_i32 = arith.constant 0 : i32
    %c0_i32_0 = arith.constant 0 : i32
    %c0_i32_1 = arith.constant 0 : i32
    %c0_i32_2 = arith.constant 0 : i32
    return %c0_i32, %c0_i32_0, %c0_i32_1 : i32, i32, i32
  }
  func.func @transform_6(%arg0: i32) -> (i32, i32) {
    %c0_i32 = arith.constant 0 : i32
    %c0_i32_0 = arith.constant 0 : i32
    %c0_i32_1 = arith.constant 0 : i32
    return %c0_i32, %c0_i32_0 : i32, i32
  }
  func.func @transform_7(%arg0: i32) -> (i32, i32, i32) {
    %c0_i32 = arith.constant 0 : i32
    %c0_i32_0 = arith.constant 0 : i32
    %c0_i32_1 = arith.constant 0 : i32
    %c0_i32_2 = arith.constant 0 : i32
    return %c0_i32, %c0_i32_0, %c0_i32_1 : i32, i32, i32
  }
  func.func @transform_8(%arg0: i32) -> (i32, i32, i32) {
    %c0_i32 = arith.constant 0 : i32
    %c0_i32_0 = arith.constant 0 : i32
    %c0_i32_1 = arith.constant 0 : i32
    %c0_i32_2 = arith.constant 0 : i32
    return %c0_i32, %c0_i32_0, %c0_i32_1 : i32, i32, i32
  }
  func.func @transform_9(%arg0: i32) -> (i32, i32, i32) {
    %c0_i32 = arith.constant 0 : i32
    %c0_i32_0 = arith.constant 0 : i32
    %c0_i32_1 = arith.constant 0 : i32
    %c0_i32_2 = arith.constant 0 : i32
    return %c0_i32, %c0_i32_0, %c0_i32_1 : i32, i32, i32
  }
  func.func @transform_10(%arg0: i32) -> (i32, i32) {
    %c0_i32 = arith.constant 0 : i32
    %c0_i32_0 = arith.constant 0 : i32
    %c0_i32_1 = arith.constant 0 : i32
    return %c0_i32, %c0_i32_0 : i32, i32
  }
  func.func @transform_11(%arg0: i32) -> (i32, i32) {
    %c0_i32 = arith.constant 0 : i32
    %c0_i32_0 = arith.constant 0 : i32
    %c0_i32_1 = arith.constant 0 : i32
    return %c0_i32, %c0_i32_0 : i32, i32
  }
  func.func @transform_12(%arg0: i32) -> (i32, i32) {
    %c0_i32 = arith.constant 0 : i32
    %c0_i32_0 = arith.constant 0 : i32
    %c0_i32_1 = arith.constant 0 : i32
    return %c0_i32, %c0_i32_0 : i32, i32
  }
  func.func @transform_13(%arg0: i32) -> (i32, i32, i32, i32) {
    %c0_i32 = arith.constant 0 : i32
    %c0_i32_0 = arith.constant 0 : i32
    %c0_i32_1 = arith.constant 0 : i32
    %c0_i32_2 = arith.constant 0 : i32
    return %c0_i32, %arg0, %c0_i32_0, %c0_i32_1 : i32, i32, i32, i32
  }
  func.func @transform_14(%arg0: i32) -> (i32, i32, i32) {
    %c0_i32 = arith.constant 0 : i32
    %c0_i32_0 = arith.constant 0 : i32
    %c0_i32_1 = arith.constant 0 : i32
    return %arg0, %c0_i32, %c0_i32_0 : i32, i32, i32
  }
}

</mosaic_0001>

<llo_original>
// kernel: decoder_sigma_forward.1
$region0: #{decoder_sigma_forward.1}
  #allocation0 [shape = 'u32[]', space=smem, size = 0x4, offset = 0x4, fixed_abs, tag = 'smem constant byte address 0x4 - core index']
  #allocation1 [shape = 'u32[144,128]{1,0:T(1,128)}', space=vmem, size = 0x12000, scoped, tag = 'internal scratch']
  #allocation2 [shape = 'f32[1,1]{1,0:T(1,128)S(1)}', space=vmem, size = 0x200, scoped, tag = 'scoped memory for decoder_sigma_forward.1']
  %s0 = inlined_call_operand.vmem [shape: f32[2,16,1], index: 0, kind: input, shape index: {}]
  %s1 = inlined_call_operand.vmem [shape: f32[2,2,16,32], index: 1, kind: input, shape index: {}, may-alias: {1,13}]
  %s2 = inlined_call_operand.vmem [shape: f32[2,16,16], index: 2, kind: input, shape index: {}]
  %s3 = inlined_call_operand.hbm [shape: f32[5,1,96], index: 3, kind: input, shape index: {}]
  %s4 = inlined_call_operand.vmem [shape: f32[5,32,64], index: 4, kind: input, shape index: {}]
  %s5 = inlined_call_operand.hbm [shape: f32[5,32,32], index: 5, kind: input, shape index: {}]
  %s6 = inlined_call_operand.hbm [shape: f32[1,96], index: 6, kind: input, shape index: {}]
  %s7 = inlined_call_operand.hbm [shape: f32[5,32,96], index: 7, kind: input, shape index: {}]
  %s8 = inlined_call_operand.hbm [shape: f32[5,32,64], index: 8, kind: input, shape index: {}]
  %s9 = inlined_call_operand.hbm [shape: f32[5,32,32], index: 9, kind: input, shape index: {}]
  %s10 = inlined_call_operand.hbm [shape: f32[1,96], index: 10, kind: input, shape index: {}]
  %s11 = inlined_call_operand.vmem [shape: f32[32,1], index: 11, kind: input, shape index: {}]
  %s12 = inlined_call_operand.<no memory space> [shape: f32[1,1], index: 12, kind: input, shape index: {}]
  %s13 = inlined_call_operand.vmem [shape: f32[2,2,16,32], index: 13, kind: output, shape index: {0}, may-alias: {1,13}]
  %s14 = inlined_call_operand.vmem [shape: f32[2,16,1], index: 14, kind: output, shape index: {1}]
  %15 = xla_tuple %s13, %s14
  %s16 = sld [smem:[#allocation0]]
  $region98: #{decoder_sigma_forward.1} parent=0
    _
  %s18 = ssub.s32 1, %s16
  %s19 = scalar_select 0, %s18, %s16
  %v20 = vstv %s12
  %21 = vst [vmem:[#allocation2] sm:$0x1] %v20
  $region1: #{decoder_sigma_forward.1} parent=0
    #allocation3 [shape = 'u8[2560]{0}', space=vmem, size = 0xc00, scoped, tag = 'input window, operand 3, single buffered']
    #allocation4 [shape = 's32[1]{0}', space=sflag, size = 0x4, scoped, tag = 'scoped memory for decoder_sigma_forward.1']
    #allocation5 [shape = 'u8[81920]{0}', space=vmem, size = 0x14000, scoped, tag = 'input window, operand 5, single buffered']
    #allocation6 [shape = 's32[1]{0}', space=sflag, size = 0x4, scoped, tag = 'scoped memory for decoder_sigma_forward.1']
    #allocation7 [shape = 'u8[512]{0}', space=vmem, size = 0x400, scoped, tag = 'input window, operand 6, single buffered']
    #allocation8 [shape = 'u8[81920]{0}', space=vmem, size = 0x14000, scoped, tag = 'input window, operand 7, single buffered']
    #allocation9 [shape = 's32[1]{0}', space=sflag, size = 0x4, scoped, tag = 'scoped memory for decoder_sigma_forward.1']
    #allocation10 [shape = 'u8[81920]{0}', space=vmem, size = 0x14000, scoped, tag = 'input window, operand 8, single buffered']
    #allocation11 [shape = 'u8[81920]{0}', space=vmem, size = 0x14000, scoped, tag = 'input window, operand 9, single buffered']
    #allocation12 [shape = 's32[1]{0}', space=sflag, size = 0x4, scoped, tag = 'scoped memory for decoder_sigma_forward.1']
    #allocation13 [shape = 'u8[512]{0}', space=vmem, size = 0x400, scoped, tag = 'input window, operand 10, single buffered']
    %22 = vsyncpa [#allocation4], 0
    %23 = vsyncpa [#allocation6], 0
    %24 = vsyncpa [#allocation9], 0
    %25 = vsyncpa [#allocation12], 0
    // Predicated region
    $region2: #{decoder_sigma_forward.1} parent=1 // pred_check
      _
    $region3: #{decoder_sigma_forward.1} parent=1 // pred_check_branch
      %27 = sbr.rel (0) target = $region5
    $region4: #{decoder_sigma_forward.1} parent=1 // pred_region
      _
    $region5: #{decoder_sigma_forward.1} parent=1 // pred_fallthru
      _
    // Predicated region
    $region6: #{decoder_sigma_forward.1} parent=1 // pred_check
      _
    $region7: #{decoder_sigma_forward.1} parent=1 // pred_check_branch
      %29 = sbr.rel (0) target = $region9
    $region8: #{decoder_sigma_forward.1} parent=1 // pred_region
      _
    $region9: #{decoder_sigma_forward.1} parent=1 // pred_fallthru
      _
    // Predicated region
    $region10: #{decoder_sigma_forward.1} parent=1 // pred_check
      _
    $region11: #{decoder_sigma_forward.1} parent=1 // pred_check_branch
      %31 = sbr.rel (0) target = $region13
    $region12: #{decoder_sigma_forward.1} parent=1 // pred_region
      _
    $region13: #{decoder_sigma_forward.1} parent=1 // pred_fallthru
      _
    // Predicated region
    $region14: #{decoder_sigma_forward.1} parent=1 // pred_check
      _
    $region15: #{decoder_sigma_forward.1} parent=1 // pred_check_branch
      %33 = sbr.rel (0) target = $region17
    $region16: #{decoder_sigma_forward.1} parent=1 // pred_region
      %s35 = ssub.s32 80, 80
      %36 = vsyncadd [#allocation4], %s35
      %s37 = sshll.u32 [#allocation3], 4
      %s38 = int_to_ptr.vmem [resolvable:$true] %s37
      %43 = dma.hbm_to_vmem [thread:$0]  %s3, 80, %s38, [#allocation4], 16, 16, 1
    $region17: #{decoder_sigma_forward.1} parent=1 // pred_fallthru
      _
    // Predicated region
    $region18: #{decoder_sigma_forward.1} parent=1 // pred_check
      _
    $region19: #{decoder_sigma_forward.1} parent=1 // pred_check_branch
      %45 = sbr.rel (0) target = $region21
    $region20: #{decoder_sigma_forward.1} parent=1 // pred_region
      _
    $region21: #{decoder_sigma_forward.1} parent=1 // pred_fallthru
      _
    // Predicated region
    $region22: #{decoder_sigma_forward.1} parent=1 // pred_check
      _
    $region23: #{decoder_sigma_forward.1} parent=1 // pred_check_branch
      %47 = sbr.rel (0) target = $region25
    $region24: #{decoder_sigma_forward.1} parent=1 // pred_region
      %s49 = ssub.s32 2560, 2560
      %50 = vsyncadd [#allocation6], %s49
      %s51 = sshll.u32 [#allocation5], 4
      %s52 = int_to_ptr.vmem [resolvable:$true] %s51
      %57 = dma.hbm_to_vmem [thread:$0]  %s5, 2560, %s52, [#allocation6], 128, 128, 8
    $region25: #{decoder_sigma_forward.1} parent=1 // pred_fallthru
      _
    // Predicated region
    $region26: #{decoder_sigma_forward.1} parent=1 // pred_check
      _
    $region27: #{decoder_sigma_forward.1} parent=1 // pred_check_branch
      %59 = sbr.rel (0) target = $region29
    $region28: #{decoder_sigma_forward.1} parent=1 // pred_region
      %s61 = ssub.s32 16, 16
      %62 = vsyncadd [#allocation6], %s61
      %s64 = sshll.u32 [#allocation7], 4
      %s65 = int_to_ptr.vmem [resolvable:$true] %s64
      %67 = dma.hbm_to_vmem [thread:$0]  %s6, 16, %s65, [#allocation6]
    $region29: #{decoder_sigma_forward.1} parent=1 // pred_fallthru
      _
    // Predicated region
    $region30: #{decoder_sigma_forward.1} parent=1 // pred_check
      _
    $region31: #{decoder_sigma_forward.1} parent=1 // pred_check_branch
      %69 = sbr.rel (0) target = $region33
    $region32: #{decoder_sigma_forward.1} parent=1 // pred_region
      %s71 = ssub.s32 2560, 2560
      %72 = vsyncadd [#allocation9], %s71
      %s73 = sshll.u32 [#allocation8], 4
      %s74 = int_to_ptr.vmem [resolvable:$true] %s73
      %79 = dma.hbm_to_vmem [thread:$0]  %s7, 2560, %s74, [#allocation9], 128, 128, 8
    $region33: #{decoder_sigma_forward.1} parent=1 // pred_fallthru
      _
    // Predicated region
    $region34: #{decoder_sigma_forward.1} parent=1 // pred_check
      _
    $region35: #{decoder_sigma_forward.1} parent=1 // pred_check_branch
      %81 = sbr.rel (0) target = $region37
    $region36: #{decoder_sigma_forward.1} parent=1 // pred_region
      %s83 = ssub.s32 2560, 2560
      %84 = vsyncadd [#allocation9], %s83
      %s85 = sshll.u32 [#allocation10], 4
      %s86 = int_to_ptr.vmem [resolvable:$true] %s85
      %91 = dma.hbm_to_vmem [thread:$0]  %s8, 2560, %s86, [#allocation9], 128, 128, 8
    $region37: #{decoder_sigma_forward.1} parent=1 // pred_fallthru
      _
    // Predicated region
    $region38: #{decoder_sigma_forward.1} parent=1 // pred_check
      _
    $region39: #{decoder_sigma_forward.1} parent=1 // pred_check_branch
      %93 = sbr.rel (0) target = $region41
    $region40: #{decoder_sigma_forward.1} parent=1 // pred_region
      %s95 = ssub.s32 2560, 2560
      %96 = vsyncadd [#allocation12], %s95
      %s97 = sshll.u32 [#allocation11], 4
      %s98 = int_to_ptr.vmem [resolvable:$true] %s97
      %103 = dma.hbm_to_vmem [thread:$0]  %s9, 2560, %s98, [#allocation12], 128, 128, 8
    $region41: #{decoder_sigma_forward.1} parent=1 // pred_fallthru
      _
    // Predicated region
    $region42: #{decoder_sigma_forward.1} parent=1 // pred_check
      _
    $region43: #{decoder_sigma_forward.1} parent=1 // pred_check_branch
      %105 = sbr.rel (0) target = $region45
    $region44: #{decoder_sigma_forward.1} parent=1 // pred_region
      %s107 = ssub.s32 16, 16
      %108 = vsyncadd [#allocation12], %s107
      %s110 = sshll.u32 [#allocation13], 4
      %s111 = int_to_ptr.vmem [resolvable:$true] %s110
      %113 = dma.hbm_to_vmem [thread:$0]  %s10, 16, %s111, [#allocation12]
    $region45: #{decoder_sigma_forward.1} parent=1 // pred_fallthru
      _
    // Predicated region
    $region46: #{decoder_sigma_forward.1} parent=1 // pred_check
      _
    $region47: #{decoder_sigma_forward.1} parent=1 // pred_check_branch
      %115 = sbr.rel (0) target = $region49
    $region48: #{decoder_sigma_forward.1} parent=1 // pred_region
      _
    $region49: #{decoder_sigma_forward.1} parent=1 // pred_fallthru
      _
    // Predicated region
    $region50: #{decoder_sigma_forward.1} parent=1 // pred_check
      _
    $region51: #{decoder_sigma_forward.1} parent=1 // pred_check_branch
      %117 = sbr.rel (0) target = $region53
    $region52: #{decoder_sigma_forward.1} parent=1 // pred_region
      _
    $region53: #{decoder_sigma_forward.1} parent=1 // pred_fallthru
      _
    // Predicated region
    $region54: #{decoder_sigma_forward.1} parent=1 // pred_check
      _
    $region55: #{decoder_sigma_forward.1} parent=1 // pred_check_branch
      %119 = sbr.rel (0) target = $region57
    $region56: #{decoder_sigma_forward.1} parent=1 // pred_region
      %120 = dma.done [#allocation4], 80
    $region57: #{decoder_sigma_forward.1} parent=1 // pred_fallthru
      _
    // Predicated region
    $region58: #{decoder_sigma_forward.1} parent=1 // pred_check
      _
    $region59: #{decoder_sigma_forward.1} parent=1 // pred_check_branch
      %122 = sbr.rel (0) target = $region61
    $region60: #{decoder_sigma_forward.1} parent=1 // pred_region
      %123 = dma.done [#allocation6], 2560
    $region61: #{decoder_sigma_forward.1} parent=1 // pred_fallthru
      _
    // Predicated region
    $region62: #{decoder_sigma_forward.1} parent=1 // pred_check
      _
    $region63: #{decoder_sigma_forward.1} parent=1 // pred_check_branch
      %125 = sbr.rel (0) target = $region65
    $region64: #{decoder_sigma_forward.1} parent=1 // pred_region
      %126 = dma.done [#allocation6], 16
    $region65: #{decoder_sigma_forward.1} parent=1 // pred_fallthru
      _
    // Predicated region
    $region66: #{decoder_sigma_forward.1} parent=1 // pred_check
      _
    $region67: #{decoder_sigma_forward.1} parent=1 // pred_check_branch
      %128 = sbr.rel (0) target = $region69
    $region68: #{decoder_sigma_forward.1} parent=1 // pred_region
      %129 = dma.done [#allocation9], 2560
    $region69: #{decoder_sigma_forward.1} parent=1 // pred_fallthru
      _
    // Predicated region
    $region70: #{decoder_sigma_forward.1} parent=1 // pred_check
      _
    $region71: #{decoder_sigma_forward.1} parent=1 // pred_check_branch
      %131 = sbr.rel (0) target = $region73
    $region72: #{decoder_sigma_forward.1} parent=1 // pred_region
      %132 = dma.done [#allocation9], 2560
    $region73: #{decoder_sigma_forward.1} parent=1 // pred_fallthru
      _
    // Predicated region
    $region74: #{decoder_sigma_forward.1} parent=1 // pred_check
      _
    $region75: #{decoder_sigma_forward.1} parent=1 // pred_check_branch
      %134 = sbr.rel (0) target = $region77
    $region76: #{decoder_sigma_forward.1} parent=1 // pred_region
      %135 = dma.done [#allocation12], 2560
    $region77: #{decoder_sigma_forward.1} parent=1 // pred_fallthru
      _
    // Predicated region
    $region78: #{decoder_sigma_forward.1} parent=1 // pred_check
      _
    $region79: #{decoder_sigma_forward.1} parent=1 // pred_check_branch
      %137 = sbr.rel (0) target = $region81
    $region80: #{decoder_sigma_forward.1} parent=1 // pred_region
      %138 = dma.done [#allocation12], 16
    $region81: #{decoder_sigma_forward.1} parent=1 // pred_fallthru
      _
    %v139 = vld [vmem:[%s0] sm:$0xff]
    %v140 = vld [vmem:[%s0 + $0x8] sm:$0xff]
    %v141 = vld [vmem:[%s0 + $0x10] sm:$0xff]
    %v142 = vld [vmem:[%s0 + $0x18] sm:$0xff]
    %v143 = vld [vmem:[%s1] sm:$0xff]
    %v144 = vld [vmem:[%s1 + $0x8] sm:$0xff]
    %v145 = vld [vmem:[%s1 + $0x10] sm:$0xff]
    %v146 = vld [vmem:[%s1 + $0x18] sm:$0xff]
    %v147 = vld [vmem:[#allocation3] sm:$0x1]
    %149 = vset.pattern.permute.xlu0 0
    %150 = vperm.xlu0 %149, %v139
    %v151 = vpop.permute.xlu0 %150
    %154 = vset.pattern.permute.xlu0 0
    %155 = vperm.xlu0 %154, %v140
    %v156 = vpop.permute.xlu0 %155
    %159 = vset.pattern.permute.xlu0 0
    %160 = vperm.xlu0 %159, %v141
    %v161 = vpop.permute.xlu0 %160
    %164 = vset.pattern.permute.xlu0 0
    %165 = vperm.xlu0 %164, %v142
    %v166 = vpop.permute.xlu0 %165
    %v169 = vlaneseq
    %v170 = vshrl.u32 %v169, 7
    %v171 = vsub.s32 0, %v170
    %v172 = vrot.slane %v147, %v171
    %v174 = vmul.f32 %v151, %v172
    %v175 = vmul.f32 %v156, %v172
    %v176 = vmul.f32 %v161, %v172
    %v177 = vmul.f32 %v166, %v172
    %v178 = vld [vmem:[%s2] sm:$0xff]
    %v179 = vld [vmem:[%s2 + $0x8] sm:$0xff]
    %vm180 = vcmask 130048
    %v182 = vsel %vm180, %v178, 0
    %v185 = vsel %vm180, %v179, 0
    %187 = vmatprep.subr.mxu0 0.0
    %188 = vmatpush1.msra.mxu0 %v139
    %189 = vmatprep.subr.mxu0 0.0
    %190 = vmatpush1.msra.mxu0 %v140
    %191 = vmatprep.subr.mxu0 0.0
    %192 = vmatpush1.msra.mxu0 0.0
    %193 = vmatprep.subr.mxu0 0.0
    %194 = vmatpush1.msra.mxu0 0.0
    %195 = vmatprep.subr.mxu0 0.0
    %196 = vmatpush1.msra.mxu0 0.0
    %197 = vmatprep.subr.mxu0 0.0
    %198 = vmatpush1.msra.mxu0 0.0
    %199 = vmatprep.subr.mxu0 0.0
    %200 = vmatpush1.msra.mxu0 0.0
    %201 = vmatprep.subr.mxu0 0.0
    %202 = vmatpush1.msra.mxu0 0.0
    %203 = vmatprep.subr.mxu0 0.0
    %204 = vmatpush1.msra.mxu0 0.0
    %205 = vmatprep.subr.mxu0 0.0
    %206 = vmatpush1.msra.mxu0 0.0
    %207 = vmatprep.subr.mxu0 0.0
    %208 = vmatpush1.msra.mxu0 0.0
    %209 = vmatprep.subr.mxu0 0.0
    %210 = vmatpush1.msra.mxu0 0.0
    %211 = vmatprep.subr.mxu0 0.0
    %212 = vmatpush1.msra.mxu0 0.0
    %213 = vmatprep.subr.mxu0 0.0
    %214 = vmatpush1.msra.mxu0 0.0
    %215 = vmatprep.subr.mxu0 0.0
    %216 = vmatpush1.msra.mxu0 0.0
    %217 = vmatprep.subr.mxu0 0.0
    %218 = vmatpush1.msra.mxu0 0.0
    %219 = vmatprep.subr.mxu0 0.0
    %220 = vmatpush1.msra.mxu0 0.0
    %221 = vmatprep.subr.mxu0 0.0
    %222 = vmatpush1.msra.mxu0 0.0
    %223 = vmatprep.subr.mxu0 0.0
    %224 = vmatpush1.msra.mxu0 0.0
    %225 = vmatprep.subr.mxu0 0.0
    %226 = vmatpush1.msra.mxu0 0.0
    %227 = vmatprep.subr.mxu0 0.0
    %228 = vmatpush1.msra.mxu0 0.0
    %229 = vmatprep.subr.mxu0 0.0
    %230 = vmatpush1.msra.mxu0 0.0
    %231 = vmatprep.subr.mxu0 0.0
    %232 = vmatpush1.msra.mxu0 0.0
    %233 = vmatprep.subr.mxu0 0.0
    %234 = vmatpush1.msra.mxu0 0.0
    %235 = vmatprep.subr.mxu0 0.0
    %236 = vmatpush1.msra.mxu0 0.0
    %237 = vmatprep.subr.mxu0 0.0
    %238 = vmatpush1.msra.mxu0 0.0
    %239 = vmatprep.subr.mxu0 0.0
    %240 = vmatpush1.msra.mxu0 0.0
    %241 = vmatprep.subr.mxu0 0.0
    %242 = vmatpush1.msra.mxu0 0.0
    %243 = vmatprep.subr.mxu0 0.0
    %244 = vmatpush1.msra.mxu0 0.0
    %245 = vmatprep.subr.mxu0 0.0
    %246 = vmatpush1.msra.mxu0 0.0
    %247 = vmatprep.subr.mxu0 0.0
    %248 = vmatpush1.msra.mxu0 0.0
    %249 = vmatprep.subr.mxu0 0.0
    %250 = vmatpush1.msra.mxu0 0.0
    %251 = vmatprep.mubr.f32.mxu0 0.0
    %252 = vmatmul.mubr.f32.gmra.mrb[0].mxu0 %v182
    %v253 = vpop.f32.mrb[0].mxu0
    %v254 = vadd.f32 0.0, %v253
    %v255 = vpop.f32.mrb[0].mxu0
    %256 = vmatprep.mubr.f32.mxu0 0.0
    %257 = vmatmul.mubr.f32.gmra.mrb[0].mxu0 %v185
    %v258 = vpop.f32.mrb[0].mxu0
    %v259 = vadd.f32 0.0, %v258
    %v260 = vpop.f32.mrb[0].mxu0
    %261 = vdwg.mxu0
    %262 = vmatprep.subr.mxu0 0.0
    %263 = vmatpush1.msra.mxu0 %v141
    %264 = vmatprep.subr.mxu0 0.0
    %265 = vmatpush1.msra.mxu0 %v142
    %266 = vmatprep.subr.mxu0 0.0
    %267 = vmatpush1.msra.mxu0 0.0
    %268 = vmatprep.subr.mxu0 0.0
    %269 = vmatpush1.msra.mxu0 0.0
    %270 = vmatprep.subr.mxu0 0.0
    %271 = vmatpush1.msra.mxu0 0.0
    %272 = vmatprep.subr.mxu0 0.0
    %273 = vmatpush1.msra.mxu0 0.0
    %274 = vmatprep.subr.mxu0 0.0
    %275 = vmatpush1.msra.mxu0 0.0
    %276 = vmatprep.subr.mxu0 0.0
    %277 = vmatpush1.msra.mxu0 0.0
    %278 = vmatprep.subr.mxu0 0.0
    %279 = vmatpush1.msra.mxu0 0.0
    %280 = vmatprep.subr.mxu0 0.0
    %281 = vmatpush1.msra.mxu0 0.0
    %282 = vmatprep.subr.mxu0 0.0
    %283 = vmatpush1.msra.mxu0 0.0
    %284 = vmatprep.subr.mxu0 0.0
    %285 = vmatpush1.msra.mxu0 0.0
    %286 = vmatprep.subr.mxu0 0.0
    %287 = vmatpush1.msra.mxu0 0.0
    %288 = vmatprep.subr.mxu0 0.0
    %289 = vmatpush1.msra.mxu0 0.0
    %290 = vmatprep.subr.mxu0 0.0
    %291 = vmatpush1.msra.mxu0 0.0
    %292 = vmatprep.subr.mxu0 0.0
    %293 = vmatpush1.msra.mxu0 0.0
    %294 = vmatprep.subr.mxu0 0.0
    %295 = vmatpush1.msra.mxu0 0.0
    %296 = vmatprep.subr.mxu0 0.0
    %297 = vmatpush1.msra.mxu0 0.0
    %298 = vmatprep.subr.mxu0 0.0
    %299 = vmatpush1.msra.mxu0 0.0
    %300 = vmatprep.subr.mxu0 0.0
    %301 = vmatpush1.msra.mxu0 0.0
    %302 = vmatprep.subr.mxu0 0.0
    %303 = vmatpush1.msra.mxu0 0.0
    %304 = vmatprep.subr.mxu0 0.0
    %305 = vmatpush1.msra.mxu0 0.0
    %306 = vmatprep.subr.mxu0 0.0
    %307 = vmatpush1.msra.mxu0 0.0
    %308 = vmatprep.subr.mxu0 0.0
    %309 = vmatpush1.msra.mxu0 0.0
    %310 = vmatprep.subr.mxu0 0.0
    %311 = vmatpush1.msra.mxu0 0.0
    %312 = vmatprep.subr.mxu0 0.0
    %313 = vmatpush1.msra.mxu0 0.0
    %314 = vmatprep.subr.mxu0 0.0
    %315 = vmatpush1.msra.mxu0 0.0
    %316 = vmatprep.subr.mxu0 0.0
    %317 = vmatpush1.msra.mxu0 0.0
    %318 = vmatprep.subr.mxu0 0.0
    %319 = vmatpush1.msra.mxu0 0.0
    %320 = vmatprep.subr.mxu0 0.0
    %321 = vmatpush1.msra.mxu0 0.0
    %322 = vmatprep.subr.mxu0 0.0
    %323 = vmatpush1.msra.mxu0 0.0
    %324 = vmatprep.subr.mxu0 0.0
    %325 = vmatpush1.msra.mxu0 0.0
    %326 = vmatprep.mubr.f32.mxu0 0.0
    %327 = vmatmul.mubr.f32.gmra.mrb[0].mxu0 %v182
    %v328 = vpop.f32.mrb[0].mxu0
    %v329 = vadd.f32 0.0, %v328
    %v330 = vpop.f32.mrb[0].mxu0
    %331 = vmatprep.mubr.f32.mxu0 0.0
    %332 = vmatmul.mubr.f32.gmra.mrb[0].mxu0 %v185
    %v333 = vpop.f32.mrb[0].mxu0
    %v334 = vadd.f32 0.0, %v333
    %v335 = vpop.f32.mrb[0].mxu0
    %336 = vdwg.mxu0
    %s337 = scalar_lea.vmem [#allocation3], 1
    %v338 = vld [vmem:[%s337] sm:$0x1]
    %340 = vset.pattern.permute.xlu0 0
    %341 = vperm.xlu0 %340, %v254
    %v342 = vpop.permute.xlu0 %341
    %345 = vset.pattern.permute.xlu0 0
    %346 = vperm.xlu0 %345, %v259
    %v347 = vpop.permute.xlu0 %346
    %350 = vset.pattern.permute.xlu0 0
    %351 = vperm.xlu0 %350, %v329
    %v352 = vpop.permute.xlu0 %351
    %355 = vset.pattern.permute.xlu0 0
    %356 = vperm.xlu0 %355, %v334
    %v357 = vpop.permute.xlu0 %356
    %v360 = vlaneseq
    %v361 = vshrl.u32 %v360, 7
    %v362 = vsub.s32 0, %v361
    %v363 = vrot.slane %v338, %v362
    %v365 = vmul.f32 %v342, %v363
    %v366 = vmul.f32 %v347, %v363
    %v367 = vmul.f32 %v352, %v363
    %v368 = vmul.f32 %v357, %v363
    %v369 = vadd.f32 %v174, %v365
    %v370 = vadd.f32 %v175, %v366
    %v371 = vadd.f32 %v176, %v367
    %v372 = vadd.f32 %v177, %v368
    %373 = vmatprep.subr.mxu0 0.0
    %374 = vmatpush1.msra.mxu0 %v254
    %375 = vmatprep.subr.mxu0 0.0
    %376 = vmatpush1.msra.mxu0 %v259
    %377 = vmatprep.subr.mxu0 0.0
    %378 = vmatpush1.msra.mxu0 0.0
    %379 = vmatprep.subr.mxu0 0.0
    %380 = vmatpush1.msra.mxu0 0.0
    %381 = vmatprep.subr.mxu0 0.0
    %382 = vmatpush1.msra.mxu0 0.0
    %383 = vmatprep.subr.mxu0 0.0
    %384 = vmatpush1.msra.mxu0 0.0
    %385 = vmatprep.subr.mxu0 0.0
    %386 = vmatpush1.msra.mxu0 0.0
    %387 = vmatprep.subr.mxu0 0.0
    %388 = vmatpush1.msra.mxu0 0.0
    %389 = vmatprep.subr.mxu0 0.0
    %390 = vmatpush1.msra.mxu0 0.0
    %391 = vmatprep.subr.mxu0 0.0
    %392 = vmatpush1.msra.mxu0 0.0
    %393 = vmatprep.subr.mxu0 0.0
    %394 = vmatpush1.msra.mxu0 0.0
    %395 = vmatprep.subr.mxu0 0.0
    %396 = vmatpush1.msra.mxu0 0.0
    %397 = vmatprep.subr.mxu0 0.0
    %398 = vmatpush1.msra.mxu0 0.0
    %399 = vmatprep.subr.mxu0 0.0
    %400 = vmatpush1.msra.mxu0 0.0
    %401 = vmatprep.subr.mxu0 0.0
    %402 = vmatpush1.msra.mxu0 0.0
    %403 = vmatprep.subr.mxu0 0.0
    %404 = vmatpush1.msra.mxu0 0.0
    %405 = vmatprep.subr.mxu0 0.0
    %406 = vmatpush1.msra.mxu0 0.0
    %407 = vmatprep.subr.mxu0 0.0
    %408 = vmatpush1.msra.mxu0 0.0
    %409 = vmatprep.subr.mxu0 0.0
    %410 = vmatpush1.msra.mxu0 0.0
    %411 = vmatprep.subr.mxu0 0.0
    %412 = vmatpush1.msra.mxu0 0.0
    %413 = vmatprep.subr.mxu0 0.0
    %414 = vmatpush1.msra.mxu0 0.0
    %415 = vmatprep.subr.mxu0 0.0
    %416 = vmatpush1.msra.mxu0 0.0
    %417 = vmatprep.subr.mxu0 0.0
    %418 = vmatpush1.msra.mxu0 0.0
    %419 = vmatprep.subr.mxu0 0.0
    %420 = vmatpush1.msra.mxu0 0.0
    %421 = vmatprep.subr.mxu0 0.0
    %422 = vmatpush1.msra.mxu0 0.0
    %423 = vmatprep.subr.mxu0 0.0
    %424 = vmatpush1.msra.mxu0 0.0
    %425 = vmatprep.subr.mxu0 0.0
    %426 = vmatpush1.msra.mxu0 0.0
    %427 = vmatprep.subr.mxu0 0.0
    %428 = vmatpush1.msra.mxu0 0.0
    %429 = vmatprep.subr.mxu0 0.0
    %430 = vmatpush1.msra.mxu0 0.0
    %431 = vmatprep.subr.mxu0 0.0
    %432 = vmatpush1.msra.mxu0 0.0
    %433 = vmatprep.subr.mxu0 0.0
    %434 = vmatpush1.msra.mxu0 0.0
    %435 = vmatprep.subr.mxu0 0.0
    %436 = vmatpush1.msra.mxu0 0.0
    %437 = vmatprep.mubr.f32.mxu0 0.0
    %438 = vmatmul.mubr.f32.gmra.mrb[0].mxu0 %v182
    %v439 = vpop.f32.mrb[0].mxu0
    %v440 = vadd.f32 0.0, %v439
    %v441 = vpop.f32.mrb[0].mxu0
    %442 = vmatprep.mubr.f32.mxu0 0.0
    %443 = vmatmul.mubr.f32.gmra.mrb[0].mxu0 %v185
    %v444 = vpop.f32.mrb[0].mxu0
    %v445 = vadd.f32 0.0, %v444
    %v446 = vpop.f32.mrb[0].mxu0
    %447 = vdwg.mxu0
    %v448 = vmul.f32 %v440, 2.0
    %v449 = vmul.f32 %v445, 2.0
    %v450 = vsub.f32 %v448, %v139
    %v451 = vsub.f32 %v449, %v140
    %452 = vmatprep.subr.mxu0 0.0
    %453 = vmatpush1.msra.mxu0 %v329
    %454 = vmatprep.subr.mxu0 0.0
    %455 = vmatpush1.msra.mxu0 %v334
    %456 = vmatprep.subr.mxu0 0.0
    %457 = vmatpush1.msra.mxu0 0.0
    %458 = vmatprep.subr.mxu0 0.0
    %459 = vmatpush1.msra.mxu0 0.0
    %460 = vmatprep.subr.mxu0 0.0
    %461 = vmatpush1.msra.mxu0 0.0
    %462 = vmatprep.subr.mxu0 0.0
    %463 = vmatpush1.msra.mxu0 0.0
    %464 = vmatprep.subr.mxu0 0.0
    %465 = vmatpush1.msra.mxu0 0.0
    %466 = vmatprep.subr.mxu0 0.0
    %467 = vmatpush1.msra.mxu0 0.0
    %468 = vmatprep.subr.mxu0 0.0
    %469 = vmatpush1.msra.mxu0 0.0
    %470 = vmatprep.subr.mxu0 0.0
    %471 = vmatpush1.msra.mxu0 0.0
    %472 = vmatprep.subr.mxu0 0.0
    %473 = vmatpush1.msra.mxu0 0.0
    %474 = vmatprep.subr.mxu0 0.0
    %475 = vmatpush1.msra.mxu0 0.0
    %476 = vmatprep.subr.mxu0 0.0
    %477 = vmatpush1.msra.mxu0 0.0
    %478 = vmatprep.subr.mxu0 0.0
    %479 = vmatpush1.msra.mxu0 0.0
    %480 = vmatprep.subr.mxu0 0.0
    %481 = vmatpush1.msra.mxu0 0.0
    %482 = vmatprep.subr.mxu0 0.0
    %483 = vmatpush1.msra.mxu0 0.0
    %484 = vmatprep.subr.mxu0 0.0
    %485 = vmatpush1.msra.mxu0 0.0
    %486 = vmatprep.subr.mxu0 0.0
    %487 = vmatpush1.msra.mxu0 0.0
    %488 = vmatprep.subr.mxu0 0.0
    %489 = vmatpush1.msra.mxu0 0.0
    %490 = vmatprep.subr.mxu0 0.0
    %491 = vmatpush1.msra.mxu0 0.0
    %492 = vmatprep.subr.mxu0 0.0
    %493 = vmatpush1.msra.mxu0 0.0
    %494 = vmatprep.subr.mxu0 0.0
    %495 = vmatpush1.msra.mxu0 0.0
    %496 = vmatprep.subr.mxu0 0.0
    %497 = vmatpush1.msra.mxu0 0.0
    %498 = vmatprep.subr.mxu0 0.0
    %499 = vmatpush1.msra.mxu0 0.0
    %500 = vmatprep.subr.mxu0 0.0
    %501 = vmatpush1.msra.mxu0 0.0
    %502 = vmatprep.subr.mxu0 0.0
    %503 = vmatpush1.msra.mxu0 0.0
    %504 = vmatprep.subr.mxu0 0.0
    %505 = vmatpush1.msra.mxu0 0.0
    %506 = vmatprep.subr.mxu0 0.0
    %507 = vmatpush1.msra.mxu0 0.0
    %508 = vmatprep.subr.mxu0 0.0
    %509 = vmatpush1.msra.mxu0 0.0
    %510 = vmatprep.subr.mxu0 0.0
    %511 = vmatpush1.msra.mxu0 0.0
    %512 = vmatprep.subr.mxu0 0.0
    %513 = vmatpush1.msra.mxu0 0.0
    %514 = vmatprep.subr.mxu0 0.0
    %515 = vmatpush1.msra.mxu0 0.0
    %516 = vmatprep.mubr.f32.mxu0 0.0
    %517 = vmatmul.mubr.f32.gmra.mrb[0].mxu0 %v182
    %v518 = vpop.f32.mrb[0].mxu0
    %v519 = vadd.f32 0.0, %v518
    %v520 = vpop.f32.mrb[0].mxu0
    %521 = vmatprep.mubr.f32.mxu0 0.0
    %522 = vmatmul.mubr.f32.gmra.mrb[0].mxu0 %v185
    %v523 = vpop.f32.mrb[0].mxu0
    %v524 = vadd.f32 0.0, %v523
    %v525 = vpop.f32.mrb[0].mxu0
    %526 = vdwg.mxu0
    %v527 = vmul.f32 %v519, 2.0
    %v528 = vmul.f32 %v524, 2.0
    %v529 = vsub.f32 %v527, %v141
    %v530 = vsub.f32 %v528, %v142
    %s531 = scalar_lea.vmem [#allocation3], 2
    %v532 = vld [vmem:[%s531] sm:$0x1]
    %534 = vset.pattern.permute.xlu0 0
    %535 = vperm.xlu0 %534, %v450
    %v536 = vpop.permute.xlu0 %535
    %539 = vset.pattern.permute.xlu0 0
    %540 = vperm.xlu0 %539, %v451
    %v541 = vpop.permute.xlu0 %540
    %544 = vset.pattern.permute.xlu0 0
    %545 = vperm.xlu0 %544, %v529
    %v546 = vpop.permute.xlu0 %545
    %549 = vset.pattern.permute.xlu0 0
    %550 = vperm.xlu0 %549, %v530
    %v551 = vpop.permute.xlu0 %550
    %v554 = vlaneseq
    %v555 = vshrl.u32 %v554, 7
    %v556 = vsub.s32 0, %v555
    %v557 = vrot.slane %v532, %v556
    %v559 = vmul.f32 %v536, %v557
    %v560 = vmul.f32 %v541, %v557
    %v561 = vmul.f32 %v546, %v557
    %v562 = vmul.f32 %v551, %v557
    %v563 = vadd.f32 %v369, %v559
    %v564 = vadd.f32 %v370, %v560
    %v565 = vadd.f32 %v371, %v561
    %v566 = vadd.f32 %v372, %v562
    %s567 = scalar_lea.vmem %s2, 16
    %v568 = vld [vmem:[%s567] sm:$0xff]
    %v569 = vld [vmem:[%s567 + $0x8] sm:$0xff]
    %v571 = vsel %vm180, %v568, 0
    %v574 = vsel %vm180, %v569, 0
    %576 = vmatprep.subr.mxu0 0.0
    %577 = vmatpush1.msra.mxu0 %v254
    %578 = vmatprep.subr.mxu0 0.0
    %579 = vmatpush1.msra.mxu0 %v259
    %580 = vmatprep.subr.mxu0 0.0
    %581 = vmatpush1.msra.mxu0 0.0
    %582 = vmatprep.subr.mxu0 0.0
    %583 = vmatpush1.msra.mxu0 0.0
    %584 = vmatprep.subr.mxu0 0.0
    %585 = vmatpush1.msra.mxu0 0.0
    %586 = vmatprep.subr.mxu0 0.0
    %587 = vmatpush1.msra.mxu0 0.0
    %588 = vmatprep.subr.mxu0 0.0
    %589 = vmatpush1.msra.mxu0 0.0
    %590 = vmatprep.subr.mxu0 0.0
    %591 = vmatpush1.msra.mxu0 0.0
    %592 = vmatprep.subr.mxu0 0.0
    %593 = vmatpush1.msra.mxu0 0.0
    %594 = vmatprep.subr.mxu0 0.0
    %595 = vmatpush1.msra.mxu0 0.0
    %596 = vmatprep.subr.mxu0 0.0
    %597 = vmatpush1.msra.mxu0 0.0
    %598 = vmatprep.subr.mxu0 0.0
    %599 = vmatpush1.msra.mxu0 0.0
    %600 = vmatprep.subr.mxu0 0.0
    %601 = vmatpush1.msra.mxu0 0.0
    %602 = vmatprep.subr.mxu0 0.0
    %603 = vmatpush1.msra.mxu0 0.0
    %604 = vmatprep.subr.mxu0 0.0
    %605 = vmatpush1.msra.mxu0 0.0
    %606 = vmatprep.subr.mxu0 0.0
    %607 = vmatpush1.msra.mxu0 0.0
    %608 = vmatprep.subr.mxu0 0.0
    %609 = vmatpush1.msra.mxu0 0.0
    %610 = vmatprep.subr.mxu0 0.0
    %611 = vmatpush1.msra.mxu0 0.0
    %612 = vmatprep.subr.mxu0 0.0
    %613 = vmatpush1.msra.mxu0 0.0
    %614 = vmatprep.subr.mxu0 0.0
    %615 = vmatpush1.msra.mxu0 0.0
    %616 = vmatprep.subr.mxu0 0.0
    %617 = vmatpush1.msra.mxu0 0.0
    %618 = vmatprep.subr.mxu0 0.0
    %619 = vmatpush1.msra.mxu0 0.0
    %620 = vmatprep.subr.mxu0 0.0
    %621 = vmatpush1.msra.mxu0 0.0
    %622 = vmatprep.subr.mxu0 0.0
    %623 = vmatpush1.msra.mxu0 0.0
    %624 = vmatprep.subr.mxu0 0.0
    %625 = vmatpush1.msra.mxu0 0.0
    %626 = vmatprep.subr.mxu0 0.0
    %627 = vmatpush1.msra.mxu0 0.0
    %628 = vmatprep.subr.mxu0 0.0
    %629 = vmatpush1.msra.mxu0 0.0
    %630 = vmatprep.subr.mxu0 0.0
    %631 = vmatpush1.msra.mxu0 0.0
    %632 = vmatprep.subr.mxu0 0.0
    %633 = vmatpush1.msra.mxu0 0.0
    %634 = vmatprep.subr.mxu0 0.0
    %635 = vmatpush1.msra.mxu0 0.0
    %636 = vmatprep.subr.mxu0 0.0
    %637 = vmatpush1.msra.mxu0 0.0
    %638 = vmatprep.subr.mxu0 0.0
    %639 = vmatpush1.msra.mxu0 0.0
    %640 = vmatprep.mubr.f32.mxu0 0.0
    %641 = vmatmul.mubr.f32.gmra.mrb[0].mxu0 %v571
    %v642 = vpop.f32.mrb[0].mxu0
    %v643 = vadd.f32 0.0, %v642
    %v644 = vpop.f32.mrb[0].mxu0
    %645 = vmatprep.mubr.f32.mxu0 0.0
    %646 = vmatmul.mubr.f32.gmra.mrb[0].mxu0 %v574
    %v647 = vpop.f32.mrb[0].mxu0
    %v648 = vadd.f32 0.0, %v647
    %v649 = vpop.f32.mrb[0].mxu0
    %650 = vdwg.mxu0
    %651 = vmatprep.subr.mxu0 0.0
    %652 = vmatpush1.msra.mxu0 %v329
    %653 = vmatprep.subr.mxu0 0.0
    %654 = vmatpush1.msra.mxu0 %v334
    %655 = vmatprep.subr.mxu0 0.0
    %656 = vmatpush1.msra.mxu0 0.0
    %657 = vmatprep.subr.mxu0 0.0
    %658 = vmatpush1.msra.mxu0 0.0
    %659 = vmatprep.subr.mxu0 0.0
    %660 = vmatpush1.msra.mxu0 0.0
    %661 = vmatprep.subr.mxu0 0.0
    %662 = vmatpush1.msra.mxu0 0.0
    %663 = vmatprep.subr.mxu0 0.0
    %664 = vmatpush1.msra.mxu0 0.0
    %665 = vmatprep.subr.mxu0 0.0
    %666 = vmatpush1.msra.mxu0 0.0
    %667 = vmatprep.subr.mxu0 0.0
    %668 = vmatpush1.msra.mxu0 0.0
    %669 = vmatprep.subr.mxu0 0.0
    %670 = vmatpush1.msra.mxu0 0.0
    %671 = vmatprep.subr.mxu0 0.0
    %672 = vmatpush1.msra.mxu0 0.0
    %673 = vmatprep.subr.mxu0 0.0
    %674 = vmatpush1.msra.mxu0 0.0
    %675 = vmatprep.subr.mxu0 0.0
    %676 = vmatpush1.msra.mxu0 0.0
    %677 = vmatprep.subr.mxu0 0.0
    %678 = vmatpush1.msra.mxu0 0.0
    %679 = vmatprep.subr.mxu0 0.0
    %680 = vmatpush1.msra.mxu0 0.0
    %681 = vmatprep.subr.mxu0 0.0
    %682 = vmatpush1.msra.mxu0 0.0
    %683 = vmatprep.subr.mxu0 0.0
    %684 = vmatpush1.msra.mxu0 0.0
    %685 = vmatprep.subr.mxu0 0.0
    %686 = vmatpush1.msra.mxu0 0.0
    %687 = vmatprep.subr.mxu0 0.0
    %688 = vmatpush1.msra.mxu0 0.0
    %689 = vmatprep.subr.mxu0 0.0
    %690 = vmatpush1.msra.mxu0 0.0
    %691 = vmatprep.subr.mxu0 0.0
    %692 = vmatpush1.msra.mxu0 0.0
    %693 = vmatprep.subr.mxu0 0.0
    %694 = vmatpush1.msra.mxu0 0.0
    %695 = vmatprep.subr.mxu0 0.0
    %696 = vmatpush1.msra.mxu0 0.0
    %697 = vmatprep.subr.mxu0 0.0
    %698 = vmatpush1.msra.mxu0 0.0
    %699 = vmatprep.subr.mxu0 0.0
    %700 = vmatpush1.msra.mxu0 0.0
    %701 = vmatprep.subr.mxu0 0.0
    %702 = vmatpush1.msra.mxu0 0.0
    %703 = vmatprep.subr.mxu0 0.0
    %704 = vmatpush1.msra.mxu0 0.0
    %705 = vmatprep.subr.mxu0 0.0
    %706 = vmatpush1.msra.mxu0 0.0
    %707 = vmatprep.subr.mxu0 0.0
    %708 = vmatpush1.msra.mxu0 0.0
    %709 = vmatprep.subr.mxu0 0.0
    %710 = vmatpush1.msra.mxu0 0.0
    %711 = vmatprep.subr.mxu0 0.0
    %712 = vmatpush1.msra.mxu0 0.0
    %713 = vmatprep.subr.mxu0 0.0
    %714 = vmatpush1.msra.mxu0 0.0
    %715 = vmatprep.mubr.f32.mxu0 0.0
    %716 = vmatmul.mubr.f32.gmra.mrb[0].mxu0 %v571
    %v717 = vpop.f32.mrb[0].mxu0
    %v718 = vadd.f32 0.0, %v717
    %v719 = vpop.f32.mrb[0].mxu0
    %720 = vmatprep.mubr.f32.mxu0 0.0
    %721 = vmatmul.mubr.f32.gmra.mrb[0].mxu0 %v574
    %v722 = vpop.f32.mrb[0].mxu0
    %v723 = vadd.f32 0.0, %v722
    %v724 = vpop.f32.mrb[0].mxu0
    %725 = vdwg.mxu0
    %s726 = scalar_lea.vmem [#allocation3], 3
    %v727 = vld [vmem:[%s726] sm:$0x1]
    %729 = vset.pattern.permute.xlu0 0
    %730 = vperm.xlu0 %729, %v643
    %v731 = vpop.permute.xlu0 %730
    %734 = vset.pattern.permute.xlu0 0
    %735 = vperm.xlu0 %734, %v648
    %v736 = vpop.permute.xlu0 %735
    %739 = vset.pattern.permute.xlu0 0
    %740 = vperm.xlu0 %739, %v718
    %v741 = vpop.permute.xlu0 %740
    %744 = vset.pattern.permute.xlu0 0
    %745 = vperm.xlu0 %744, %v723
    %v746 = vpop.permute.xlu0 %745
    %v749 = vlaneseq
    %v750 = vshrl.u32 %v749, 7
    %v751 = vsub.s32 0, %v750
    %v752 = vrot.slane %v727, %v751
    %v754 = vmul.f32 %v731, %v752
    %v755 = vmul.f32 %v736, %v752
    %v756 = vmul.f32 %v741, %v752
    %v757 = vmul.f32 %v746, %v752
    %v758 = vadd.f32 %v563, %v754
    %v759 = vadd.f32 %v564, %v755
    %v760 = vadd.f32 %v565, %v756
    %v761 = vadd.f32 %v566, %v757
    %762 = vmatprep.subr.mxu0 0.0
    %763 = vmatpush1.msra.mxu0 %v643
    %764 = vmatprep.subr.mxu0 0.0
    %765 = vmatpush1.msra.mxu0 %v648
    %766 = vmatprep.subr.mxu0 0.0
    %767 = vmatpush1.msra.mxu0 0.0
    %768 = vmatprep.subr.mxu0 0.0
    %769 = vmatpush1.msra.mxu0 0.0
    %770 = vmatprep.subr.mxu0 0.0
    %771 = vmatpush1.msra.mxu0 0.0
    %772 = vmatprep.subr.mxu0 0.0
    %773 = vmatpush1.msra.mxu0 0.0
    %774 = vmatprep.subr.mxu0 0.0
    %775 = vmatpush1.msra.mxu0 0.0
    %776 = vmatprep.subr.mxu0 0.0
    %777 = vmatpush1.msra.mxu0 0.0
    %778 = vmatprep.subr.mxu0 0.0
    %779 = vmatpush1.msra.mxu0 0.0
    %780 = vmatprep.subr.mxu0 0.0
    %781 = vmatpush1.msra.mxu0 0.0
    %782 = vmatprep.subr.mxu0 0.0
    %783 = vmatpush1.msra.mxu0 0.0
    %784 = vmatprep.subr.mxu0 0.0
    %785 = vmatpush1.msra.mxu0 0.0
    %786 = vmatprep.subr.mxu0 0.0
    %787 = vmatpush1.msra.mxu0 0.0
    %788 = vmatprep.subr.mxu0 0.0
    %789 = vmatpush1.msra.mxu0 0.0
    %790 = vmatprep.subr.mxu0 0.0
    %791 = vmatpush1.msra.mxu0 0.0
    %792 = vmatprep.subr.mxu0 0.0
    %793 = vmatpush1.msra.mxu0 0.0
    %794 = vmatprep.subr.mxu0 0.0
    %795 = vmatpush1.msra.mxu0 0.0
    %796 = vmatprep.subr.mxu0 0.0
    %797 = vmatpush1.msra.mxu0 0.0
    %798 = vmatprep.subr.mxu0 0.0
    %799 = vmatpush1.msra.mxu0 0.0
    %800 = vmatprep.subr.mxu0 0.0
    %801 = vmatpush1.msra.mxu0 0.0
    %802 = vmatprep.subr.mxu0 0.0
    %803 = vmatpush1.msra.mxu0 0.0
    %804 = vmatprep.subr.mxu0 0.0
    %805 = vmatpush1.msra.mxu0 0.0
    %806 = vmatprep.subr.mxu0 0.0
    %807 = vmatpush1.msra.mxu0 0.0
    %808 = vmatprep.subr.mxu0 0.0
    %809 = vmatpush1.msra.mxu0 0.0
    %810 = vmatprep.subr.mxu0 0.0
    %811 = vmatpush1.msra.mxu0 0.0
    %812 = vmatprep.subr.mxu0 0.0
    %813 = vmatpush1.msra.mxu0 0.0
    %814 = vmatprep.subr.mxu0 0.0
    %815 = vmatpush1.msra.mxu0 0.0
    %816 = vmatprep.subr.mxu0 0.0
    %817 = vmatpush1.msra.mxu0 0.0
    %818 = vmatprep.subr.mxu0 0.0
    %819 = vmatpush1.msra.mxu0 0.0
    %820 = vmatprep.subr.mxu0 0.0
    %821 = vmatpush1.msra.mxu0 0.0
    %822 = vmatprep.subr.mxu0 0.0
    %823 = vmatpush1.msra.mxu0 0.0
    %824 = vmatprep.subr.mxu0 0.0
    %825 = vmatpush1.msra.mxu0 0.0
    %826 = vmatprep.mubr.f32.mxu0 0.0
    %827 = vmatmul.mubr.f32.gmra.mrb[0].mxu0 %v571
    %v828 = vpop.f32.mrb[0].mxu0
    %v829 = vadd.f32 0.0, %v828
    %v830 = vpop.f32.mrb[0].mxu0
    %831 = vmatprep.mubr.f32.mxu0 0.0
    %832 = vmatmul.mubr.f32.gmra.mrb[0].mxu0 %v574
    %v833 = vpop.f32.mrb[0].mxu0
    %v834 = vadd.f32 0.0, %v833
    %v835 = vpop.f32.mrb[0].mxu0
    %836 = vdwg.mxu0
    %v837 = vmul.f32 %v829, 2.0
    %v838 = vmul.f32 %v834, 2.0
    %v839 = vsub.f32 %v837, %v254
    %v840 = vsub.f32 %v838, %v259
    %841 = vmatprep.subr.mxu0 0.0
    %842 = vmatpush1.msra.mxu0 %v718
    %843 = vmatprep.subr.mxu0 0.0
    %844 = vmatpush1.msra.mxu0 %v723
    %845 = vmatprep.subr.mxu0 0.0
    %846 = vmatpush1.msra.mxu0 0.0
    %847 = vmatprep.subr.mxu0 0.0
    %848 = vmatpush1.msra.mxu0 0.0
    %849 = vmatprep.subr.mxu0 0.0
    %850 = vmatpush1.msra.mxu0 0.0
    %851 = vmatprep.subr.mxu0 0.0
    %852 = vmatpush1.msra.mxu0 0.0
    %853 = vmatprep.subr.mxu0 0.0
    %854 = vmatpush1.msra.mxu0 0.0
    %855 = vmatprep.subr.mxu0 0.0
    %856 = vmatpush1.msra.mxu0 0.0
    %857 = vmatprep.subr.mxu0 0.0
    %858 = vmatpush1.msra.mxu0 0.0
    %859 = vmatprep.subr.mxu0 0.0
    %860 = vmatpush1.msra.mxu0 0.0
    %861 = vmatprep.subr.mxu0 0.0
    %862 = vmatpush1.msra.mxu0 0.0
    %863 = vmatprep.subr.mxu0 0.0
    %864 = vmatpush1.msra.mxu0 0.0
    %865 = vmatprep.subr.mxu0 0.0
    %866 = vmatpush1.msra.mxu0 0.0
    %867 = vmatprep.subr.mxu0 0.0
    %868 = vmatpush1.msra.mxu0 0.0
    %869 = vmatprep.subr.mxu0 0.0
    %870 = vmatpush1.msra.mxu0 0.0
    %871 = vmatprep.subr.mxu0 0.0
    %872 = vmatpush1.msra.mxu0 0.0
    %873 = vmatprep.subr.mxu0 0.0
    %874 = vmatpush1.msra.mxu0 0.0
    %875 = vmatprep.subr.mxu0 0.0
    %876 = vmatpush1.msra.mxu0 0.0
    %877 = vmatprep.subr.mxu0 0.0
    %878 = vmatpush1.msra.mxu0 0.0
    %879 = vmatprep.subr.mxu0 0.0
    %880 = vmatpush1.msra.mxu0 0.0
    %881 = vmatprep.subr.mxu0 0.0
    %882 = vmatpush1.msra.mxu0 0.0
    %883 = vmatprep.subr.mxu0 0.0
    %884 = vmatpush1.msra.mxu0 0.0
    %885 = vmatprep.subr.mxu0 0.0
    %886 = vmatpush1.msra.mxu0 0.0
    %887 = vmatprep.subr.mxu0 0.0
    %888 = vmatpush1.msra.mxu0 0.0
    %889 = vmatprep.subr.mxu0 0.0
    %890 = vmatpush1.msra.mxu0 0.0
    %891 = vmatprep.subr.mxu0 0.0
    %892 = vmatpush1.msra.mxu0 0.0
    %893 = vmatprep.subr.mxu0 0.0
    %894 = vmatpush1.msra.mxu0 0.0
    %895 = vmatprep.subr.mxu0 0.0
    %896 = vmatpush1.msra.mxu0 0.0
    %897 = vmatprep.subr.mxu0 0.0
    %898 = vmatpush1.msra.mxu0 0.0
    %899 = vmatprep.subr.mxu0 0.0
    %900 = vmatpush1.msra.mxu0 0.0
    %901 = vmatprep.subr.mxu0 0.0
    %902 = vmatpush1.msra.mxu0 0.0
    %903 = vmatprep.subr.mxu0 0.0
    %904 = vmatpush1.msra.mxu0 0.0
    %905 = vmatprep.mubr.f32.mxu0 0.0
    %906 = vmatmul.mubr.f32.gmra.mrb[0].mxu0 %v571
    %v907 = vpop.f32.mrb[0].mxu0
    %v908 = vadd.f32 0.0, %v907
    %v909 = vpop.f32.mrb[0].mxu0
    %910 = vmatprep.mubr.f32.mxu0 0.0
    %911 = vmatmul.mubr.f32.gmra.mrb[0].mxu0 %v574
    %v912 = vpop.f32.mrb[0].mxu0
    %v913 = vadd.f32 0.0, %v912
    %v914 = vpop.f32.mrb[0].mxu0
    %915 = vdwg.mxu0
    %v916 = vmul.f32 %v908, 2.0
    %v917 = vmul.f32 %v913, 2.0
    %v918 = vsub.f32 %v916, %v329
    %v919 = vsub.f32 %v917, %v334
    %s920 = scalar_lea.vmem [#allocation3], 4
    %v921 = vld [vmem:[%s920] sm:$0x1]
    %923 = vset.pattern.permute.xlu0 0
    %924 = vperm.xlu0 %923, %v839
    %v925 = vpop.permute.xlu0 %924
    %928 = vset.pattern.permute.xlu0 0
    %929 = vperm.xlu0 %928, %v840
    %v930 = vpop.permute.xlu0 %929
    %933 = vset.pattern.permute.xlu0 0
    %934 = vperm.xlu0 %933, %v918
    %v935 = vpop.permute.xlu0 %934
    %938 = vset.pattern.permute.xlu0 0
    %939 = vperm.xlu0 %938, %v919
    %v940 = vpop.permute.xlu0 %939
    %v943 = vlaneseq
    %v944 = vshrl.u32 %v943, 7
    %v945 = vsub.s32 0, %v944
    %v946 = vrot.slane %v921, %v945
    %v948 = vmul.f32 %v925, %v946
    %v949 = vmul.f32 %v930, %v946
    %v950 = vmul.f32 %v935, %v946
    %v951 = vmul.f32 %v940, %v946
    %v952 = vadd.f32 %v758, %v948
    %v953 = vadd.f32 %v759, %v949
    %v954 = vadd.f32 %v760, %v950
    %v955 = vadd.f32 %v761, %v951
    %v956 = vld [vmem:[#allocation7] sm:$0x1]
    %v958 = vlaneseq
    %v959 = vshrl.u32 %v958, 7
    %v960 = vsub.s32 0, %v959
    %v961 = vrot.slane %v956, %v960
    %v963 = vadd.f32 %v952, %v961
    %v964 = vadd.f32 %v953, %v961
    %v965 = vadd.f32 %v954, %v961
    %v966 = vadd.f32 %v955, %v961
    %v967 = vld [vmem:[%s4] sm:$0xff]
    %v968 = vld [vmem:[%s4 + $0x8] sm:$0xff]
    %v969 = vld [vmem:[%s4 + $0x10] sm:$0xff]
    %v970 = vld [vmem:[%s4 + $0x18] sm:$0xff]
    %971 = vmatprep.subr.mxu0 0.0
    %972 = vmatpush1.msra.mxu0 %v143
    %973 = vmatprep.subr.mxu0 0.0
    %974 = vmatpush1.msra.mxu0 %v144
    %975 = vmatprep.subr.mxu0 0.0
    %976 = vmatpush1.msra.mxu0 0.0
    %977 = vmatprep.subr.mxu0 0.0
    %978 = vmatpush1.msra.mxu0 0.0
    %979 = vmatprep.subr.mxu0 0.0
    %980 = vmatpush1.msra.mxu0 0.0
    %981 = vmatprep.subr.mxu0 0.0
    %982 = vmatpush1.msra.mxu0 0.0
    %983 = vmatprep.subr.mxu0 0.0
    %984 = vmatpush1.msra.mxu0 0.0
    %985 = vmatprep.subr.mxu0 0.0
    %986 = vmatpush1.msra.mxu0 0.0
    %987 = vmatprep.subr.mxu0 0.0
    %988 = vmatpush1.msra.mxu0 0.0
    %989 = vmatprep.subr.mxu0 0.0
    %990 = vmatpush1.msra.mxu0 0.0
    %991 = vmatprep.subr.mxu0 0.0
    %992 = vmatpush1.msra.mxu0 0.0
    %993 = vmatprep.subr.mxu0 0.0
    %994 = vmatpush1.msra.mxu0 0.0
    %995 = vmatprep.subr.mxu0 0.0
    %996 = vmatpush1.msra.mxu0 0.0
    %997 = vmatprep.subr.mxu0 0.0
    %998 = vmatpush1.msra.mxu0 0.0
    %999 = vmatprep.subr.mxu0 0.0
    %1000 = vmatpush1.msra.mxu0 0.0
    %1001 = vmatprep.subr.mxu0 0.0
    %1002 = vmatpush1.msra.mxu0 0.0
    %1003 = vmatprep.subr.mxu0 0.0
    %1004 = vmatpush1.msra.mxu0 0.0
    %1005 = vmatprep.subr.mxu0 0.0
    %1006 = vmatpush1.msra.mxu0 0.0
    %1007 = vmatprep.subr.mxu0 0.0
    %1008 = vmatpush1.msra.mxu0 0.0
    %1009 = vmatprep.subr.mxu0 0.0
    %1010 = vmatpush1.msra.mxu0 0.0
    %1011 = vmatprep.subr.mxu0 0.0
    %1012 = vmatpush1.msra.mxu0 0.0
    %1013 = vmatprep.subr.mxu0 0.0
    %1014 = vmatpush1.msra.mxu0 0.0
    %1015 = vmatprep.subr.mxu0 0.0
    %1016 = vmatpush1.msra.mxu0 0.0
    %1017 = vmatprep.subr.mxu0 0.0
    %1018 = vmatpush1.msra.mxu0 0.0
    %1019 = vmatprep.subr.mxu0 0.0
    %1020 = vmatpush1.msra.mxu0 0.0
    %1021 = vmatprep.subr.mxu0 0.0
    %1022 = vmatpush1.msra.mxu0 0.0
    %1023 = vmatprep.subr.mxu0 0.0
    %1024 = vmatpush1.msra.mxu0 0.0
    %1025 = vmatprep.subr.mxu0 0.0
    %1026 = vmatpush1.msra.mxu0 0.0
    %1027 = vmatprep.subr.mxu0 0.0
    %1028 = vmatpush1.msra.mxu0 0.0
    %1029 = vmatprep.subr.mxu0 0.0
    %1030 = vmatpush1.msra.mxu0 0.0
    %1031 = vmatprep.subr.mxu0 0.0
    %1032 = vmatpush1.msra.mxu0 0.0
    %1033 = vmatprep.subr.mxu0 0.0
    %1034 = vmatpush1.msra.mxu0 0.0
    %1035 = vmatprep.mubr.f32.mxu0 0.0
    %1036 = vmatmul.mubr.f32.gmra.mrb[0].mxu0 %v182
    %v1037 = vpop.f32.mrb[0].mxu0
    %v1038 = vadd.f32 0.0, %v1037
    %v1039 = vpop.f32.mrb[0].mxu0
    %1040 = vmatprep.mubr.f32.mxu0 0.0
    %1041 = vmatmul.mubr.f32.gmra.mrb[0].mxu0 %v185
    %v1042 = vpop.f32.mrb[0].mxu0
    %v1043 = vadd.f32 0.0, %v1042
    %v1044 = vpop.f32.mrb[0].mxu0
    %1045 = vdwg.mxu0
    %1046 = vmatprep.subr.mxu0 0.0
    %1047 = vmatpush1.msra.mxu0 %v145
    %1048 = vmatprep.subr.mxu0 0.0
    %1049 = vmatpush1.msra.mxu0 %v146
    %1050 = vmatprep.subr.mxu0 0.0
    %1051 = vmatpush1.msra.mxu0 0.0
    %1052 = vmatprep.subr.mxu0 0.0
    %1053 = vmatpush1.msra.mxu0 0.0
    %1054 = vmatprep.subr.mxu0 0.0
    %1055 = vmatpush1.msra.mxu0 0.0
    %1056 = vmatprep.subr.mxu0 0.0
    %1057 = vmatpush1.msra.mxu0 0.0
    %1058 = vmatprep.subr.mxu0 0.0
    %1059 = vmatpush1.msra.mxu0 0.0
    %1060 = vmatprep.subr.mxu0 0.0
    %1061 = vmatpush1.msra.mxu0 0.0
    %1062 = vmatprep.subr.mxu0 0.0
    %1063 = vmatpush1.msra.mxu0 0.0
    %1064 = vmatprep.subr.mxu0 0.0
    %1065 = vmatpush1.msra.mxu0 0.0
    %1066 = vmatprep.subr.mxu0 0.0
    %1067 = vmatpush1.msra.mxu0 0.0
    %1068 = vmatprep.subr.mxu0 0.0
    %1069 = vmatpush1.msra.mxu0 0.0
    %1070 = vmatprep.subr.mxu0 0.0
    %1071 = vmatpush1.msra.mxu0 0.0
    %1072 = vmatprep.subr.mxu0 0.0
    %1073 = vmatpush1.msra.mxu0 0.0
    %1074 = vmatprep.subr.mxu0 0.0
    %1075 = vmatpush1.msra.mxu0 0.0
    %1076 = vmatprep.subr.mxu0 0.0
    %1077 = vmatpush1.msra.mxu0 0.0
    %1078 = vmatprep.subr.mxu0 0.0
    %1079 = vmatpush1.msra.mxu0 0.0
    %1080 = vmatprep.subr.mxu0 0.0
    %1081 = vmatpush1.msra.mxu0 0.0
    %1082 = vmatprep.subr.mxu0 0.0
    %1083 = vmatpush1.msra.mxu0 0.0
    %1084 = vmatprep.subr.mxu0 0.0
    %1085 = vmatpush1.msra.mxu0 0.0
    %1086 = vmatprep.subr.mxu0 0.0
    %1087 = vmatpush1.msra.mxu0 0.0
    %1088 = vmatprep.subr.mxu0 0.0
    %1089 = vmatpush1.msra.mxu0 0.0
    %1090 = vmatprep.subr.mxu0 0.0
    %1091 = vmatpush1.msra.mxu0 0.0
    %1092 = vmatprep.subr.mxu0 0.0
    %1093 = vmatpush1.msra.mxu0 0.0
    %1094 = vmatprep.subr.mxu0 0.0
    %1095 = vmatpush1.msra.mxu0 0.0
    %1096 = vmatprep.subr.mxu0 0.0
    %1097 = vmatpush1.msra.mxu0 0.0
    %1098 = vmatprep.subr.mxu0 0.0
    %1099 = vmatpush1.msra.mxu0 0.0
    %1100 = vmatprep.subr.mxu0 0.0
    %1101 = vmatpush1.msra.mxu0 0.0
    %1102 = vmatprep.subr.mxu0 0.0
    %1103 = vmatpush1.msra.mxu0 0.0
    %1104 = vmatprep.subr.mxu0 0.0
    %1105 = vmatpush1.msra.mxu0 0.0
    %1106 = vmatprep.subr.mxu0 0.0
    %1107 = vmatpush1.msra.mxu0 0.0
    %1108 = vmatprep.subr.mxu0 0.0
    %1109 = vmatpush1.msra.mxu0 0.0
    %1110 = vmatprep.mubr.f32.mxu0 0.0
    %1111 = vmatmul.mubr.f32.gmra.mrb[0].mxu0 %v182
    %v1112 = vpop.f32.mrb[0].mxu0
    %v1113 = vadd.f32 0.0, %v1112
    %v1114 = vpop.f32.mrb[0].mxu0
    %1115 = vmatprep.mubr.f32.mxu0 0.0
    %1116 = vmatmul.mubr.f32.gmra.mrb[0].mxu0 %v185
    %v1117 = vpop.f32.mrb[0].mxu0
    %v1118 = vadd.f32 0.0, %v1117
    %v1119 = vpop.f32.mrb[0].mxu0
    %1120 = vdwg.mxu0
    %s1121 = scalar_lea.vmem %s4, 32
    %v1122 = vld [vmem:[%s1121] sm:$0xff]
    %v1123 = vld [vmem:[%s1121 + $0x8] sm:$0xff]
    %v1124 = vld [vmem:[%s1121 + $0x10] sm:$0xff]
    %v1125 = vld [vmem:[%s1121 + $0x18] sm:$0xff]
    %vm1126 = vcmask 261120
    %v1128 = vsel %vm1126, %v1038, 0
    %v1131 = vsel %vm1126, %v1043, 0
    %v1134 = vsel %vm1126, %v1113, 0
    %v1137 = vsel %vm1126, %v1118, 0
    %1139 = vmatprep.subr.mxu0 0.0
    %1140 = vmatpush1.msra.mxu0 %v1122
    %1141 = vmatprep.subr.mxu0 0.0
    %1142 = vmatpush1.msra.mxu0 %v1123
    %1143 = vmatprep.subr.mxu0 0.0
    %1144 = vmatpush1.msra.mxu0 %v1124
    %1145 = vmatprep.subr.mxu0 0.0
    %1146 = vmatpush1.msra.mxu0 %v1125
    %1147 = vmatprep.subr.mxu0 0.0
    %1148 = vmatpush1.msra.mxu0 0.0
    %1149 = vmatprep.subr.mxu0 0.0
    %1150 = vmatpush1.msra.mxu0 0.0
    %1151 = vmatprep.subr.mxu0 0.0
    %1152 = vmatpush1.msra.mxu0 0.0
    %1153 = vmatprep.subr.mxu0 0.0
    %1154 = vmatpush1.msra.mxu0 0.0
    %1155 = vmatprep.subr.mxu0 0.0
    %1156 = vmatpush1.msra.mxu0 0.0
    %1157 = vmatprep.subr.mxu0 0.0
    %1158 = vmatpush1.msra.mxu0 0.0
    %1159 = vmatprep.subr.mxu0 0.0
    %1160 = vmatpush1.msra.mxu0 0.0
    %1161 = vmatprep.subr.mxu0 0.0
    %1162 = vmatpush1.msra.mxu0 0.0
    %1163 = vmatprep.subr.mxu0 0.0
    %1164 = vmatpush1.msra.mxu0 0.0
    %1165 = vmatprep.subr.mxu0 0.0
    %1166 = vmatpush1.msra.mxu0 0.0
    %1167 = vmatprep.subr.mxu0 0.0
    %1168 = vmatpush1.msra.mxu0 0.0
    %1169 = vmatprep.subr.mxu0 0.0
    %1170 = vmatpush1.msra.mxu0 0.0
    %1171 = vmatprep.subr.mxu0 0.0
    %1172 = vmatpush1.msra.mxu0 0.0
    %1173 = vmatprep.subr.mxu0 0.0
    %1174 = vmatpush1.msra.mxu0 0.0
    %1175 = vmatprep.subr.mxu0 0.0
    %1176 = vmatpush1.msra.mxu0 0.0
    %1177 = vmatprep.subr.mxu0 0.0
    %1178 = vmatpush1.msra.mxu0 0.0
    %1179 = vmatprep.subr.mxu0 0.0
    %1180 = vmatpush1.msra.mxu0 0.0
    %1181 = vmatprep.subr.mxu0 0.0
    %1182 = vmatpush1.msra.mxu0 0.0
    %1183 = vmatprep.subr.mxu0 0.0
    %1184 = vmatpush1.msra.mxu0 0.0
    %1185 = vmatprep.subr.mxu0 0.0
    %1186 = vmatpush1.msra.mxu0 0.0
    %1187 = vmatprep.subr.mxu0 0.0
    %1188 = vmatpush1.msra.mxu0 0.0
    %1189 = vmatprep.subr.mxu0 0.0
    %1190 = vmatpush1.msra.mxu0 0.0
    %1191 = vmatprep.subr.mxu0 0.0
    %1192 = vmatpush1.msra.mxu0 0.0
    %1193 = vmatprep.subr.mxu0 0.0
    %1194 = vmatpush1.msra.mxu0 0.0
    %1195 = vmatprep.subr.mxu0 0.0
    %1196 = vmatpush1.msra.mxu0 0.0
    %1197 = vmatprep.subr.mxu0 0.0
    %1198 = vmatpush1.msra.mxu0 0.0
    %1199 = vmatprep.subr.mxu0 0.0
    %1200 = vmatpush1.msra.mxu0 0.0
    %1201 = vmatprep.subr.mxu0 0.0
    %1202 = vmatpush1.msra.mxu0 0.0
    %1203 = vmatprep.mubr.f32.mxu0 0.0
    %1204 = vmatmul.mubr.f32.gmra.mrb[0].mxu0 %v1128
    %v1205 = vpop.f32.mrb[0].mxu0
    %v1206 = vadd.f32 0.0, %v1205
    %v1207 = vpop.f32.mrb[0].mxu0
    %1208 = vmatprep.mubr.f32.mxu0 0.0
    %1209 = vmatmul.mubr.f32.gmra.mrb[0].mxu0 %v1131
    %v1210 = vpop.f32.mrb[0].mxu0
    %v1211 = vadd.f32 0.0, %v1210
    %v1212 = vpop.f32.mrb[0].mxu0
    %1213 = vmatprep.mubr.f32.mxu0 0.0
    %1214 = vmatmul.mubr.f32.gmra.mrb[0].mxu0 %v1134
    %v1215 = vpop.f32.mrb[0].mxu0
    %v1216 = vadd.f32 0.0, %v1215
    %v1217 = vpop.f32.mrb[0].mxu0
    %1218 = vmatprep.mubr.f32.mxu0 0.0
    %1219 = vmatmul.mubr.f32.gmra.mrb[0].mxu0 %v1137
    %v1220 = vpop.f32.mrb[0].mxu0
    %v1221 = vadd.f32 0.0, %v1220
    %v1222 = vpop.f32.mrb[0].mxu0
    %1223 = vdwg.mxu0
    %v1225 = vsel %vm1126, %v143, 0
    %v1228 = vsel %vm1126, %v144, 0
    %v1231 = vsel %vm1126, %v145, 0
    %v1234 = vsel %vm1126, %v146, 0
    %1236 = vmatprep.subr.mxu0 0.0
    %1237 = vmatpush1.msra.mxu0 %v967
    %1238 = vmatprep.subr.mxu0 0.0
    %1239 = vmatpush1.msra.mxu0 %v968
    %1240 = vmatprep.subr.mxu0 0.0
    %1241 = vmatpush1.msra.mxu0 %v969
    %1242 = vmatprep.subr.mxu0 0.0
    %1243 = vmatpush1.msra.mxu0 %v970
    %1244 = vmatprep.subr.mxu0 0.0
    %1245 = vmatpush1.msra.mxu0 0.0
    %1246 = vmatprep.subr.mxu0 0.0
    %1247 = vmatpush1.msra.mxu0 0.0
    %1248 = vmatprep.subr.mxu0 0.0
    %1249 = vmatpush1.msra.mxu0 0.0
    %1250 = vmatprep.subr.mxu0 0.0
    %1251 = vmatpush1.msra.mxu0 0.0
    %1252 = vmatprep.subr.mxu0 0.0
    %1253 = vmatpush1.msra.mxu0 0.0
    %1254 = vmatprep.subr.mxu0 0.0
    %1255 = vmatpush1.msra.mxu0 0.0
    %1256 = vmatprep.subr.mxu0 0.0
    %1257 = vmatpush1.msra.mxu0 0.0
    %1258 = vmatprep.subr.mxu0 0.0
    %1259 = vmatpush1.msra.mxu0 0.0
    %1260 = vmatprep.subr.mxu0 0.0
    %1261 = vmatpush1.msra.mxu0 0.0
    %1262 = vmatprep.subr.mxu0 0.0
    %1263 = vmatpush1.msra.mxu0 0.0
    %1264 = vmatprep.subr.mxu0 0.0
    %1265 = vmatpush1.msra.mxu0 0.0
    %1266 = vmatprep.subr.mxu0 0.0
    %1267 = vmatpush1.msra.mxu0 0.0
    %1268 = vmatprep.subr.mxu0 0.0
    %1269 = vmatpush1.msra.mxu0 0.0
    %1270 = vmatprep.subr.mxu0 0.0
    %1271 = vmatpush1.msra.mxu0 0.0
    %1272 = vmatprep.subr.mxu0 0.0
    %1273 = vmatpush1.msra.mxu0 0.0
    %1274 = vmatprep.subr.mxu0 0.0
    %1275 = vmatpush1.msra.mxu0 0.0
    %1276 = vmatprep.subr.mxu0 0.0
    %1277 = vmatpush1.msra.mxu0 0.0
    %1278 = vmatprep.subr.mxu0 0.0
    %1279 = vmatpush1.msra.mxu0 0.0
    %1280 = vmatprep.subr.mxu0 0.0
    %1281 = vmatpush1.msra.mxu0 0.0
    %1282 = vmatprep.subr.mxu0 0.0
    %1283 = vmatpush1.msra.mxu0 0.0
    %1284 = vmatprep.subr.mxu0 0.0
    %1285 = vmatpush1.msra.mxu0 0.0
    %1286 = vmatprep.subr.mxu0 0.0
    %1287 = vmatpush1.msra.mxu0 0.0
    %1288 = vmatprep.subr.mxu0 0.0
    %1289 = vmatpush1.msra.mxu0 0.0
    %1290 = vmatprep.subr.mxu0 0.0
    %1291 = vmatpush1.msra.mxu0 0.0
    %1292 = vmatprep.subr.mxu0 0.0
    %1293 = vmatpush1.msra.mxu0 0.0
    %1294 = vmatprep.subr.mxu0 0.0
    %1295 = vmatpush1.msra.mxu0 0.0
    %1296 = vmatprep.subr.mxu0 0.0
    %1297 = vmatpush1.msra.mxu0 0.0
    %1298 = vmatprep.subr.mxu0 0.0
    %1299 = vmatpush1.msra.mxu0 0.0
    %1300 = vmatprep.mubr.f32.mxu0 0.0
    %1301 = vmatmul.mubr.f32.gmra.mrb[0].mxu0 %v1225
    %v1302 = vpop.f32.mrb[0].mxu0
    %v1303 = vadd.f32 %v1206, %v1302
    %v1304 = vpop.f32.mrb[0].mxu0
    %1305 = vmatprep.mubr.f32.mxu0 0.0
    %1306 = vmatmul.mubr.f32.gmra.mrb[0].mxu0 %v1228
    %v1307 = vpop.f32.mrb[0].mxu0
    %v1308 = vadd.f32 %v1211, %v1307
    %v1309 = vpop.f32.mrb[0].mxu0
    %1310 = vmatprep.mubr.f32.mxu0 0.0
    %1311 = vmatmul.mubr.f32.gmra.mrb[0].mxu0 %v1231
    %v1312 = vpop.f32.mrb[0].mxu0
    %v1313 = vadd.f32 %v1216, %v1312
    %v1314 = vpop.f32.mrb[0].mxu0
    %1315 = vmatprep.mubr.f32.mxu0 0.0
    %1316 = vmatmul.mubr.f32.gmra.mrb[0].mxu0 %v1234
    %v1317 = vpop.f32.mrb[0].mxu0
    %v1318 = vadd.f32 %v1221, %v1317
    %v1319 = vpop.f32.mrb[0].mxu0
    %1320 = vdwg.mxu0
    %1321 = vmatprep.subr.mxu0 0.0
    %1322 = vmatpush1.msra.mxu0 %v1038
    %1323 = vmatprep.subr.mxu0 0.0
    %1324 = vmatpush1.msra.mxu0 %v1043
    %1325 = vmatprep.subr.mxu0 0.0
    %1326 = vmatpush1.msra.mxu0 0.0
    %1327 = vmatprep.subr.mxu0 0.0
    %1328 = vmatpush1.msra.mxu0 0.0
    %1329 = vmatprep.subr.mxu0 0.0
    %1330 = vmatpush1.msra.mxu0 0.0
    %1331 = vmatprep.subr.mxu0 0.0
    %1332 = vmatpush1.msra.mxu0 0.0
    %1333 = vmatprep.subr.mxu0 0.0
    %1334 = vmatpush1.msra.mxu0 0.0
    %1335 = vmatprep.subr.mxu0 0.0
    %1336 = vmatpush1.msra.mxu0 0.0
    %1337 = vmatprep.subr.mxu0 0.0
    %1338 = vmatpush1.msra.mxu0 0.0
    %1339 = vmatprep.subr.mxu0 0.0
    %1340 = vmatpush1.msra.mxu0 0.0
    %1341 = vmatprep.subr.mxu0 0.0
    %1342 = vmatpush1.msra.mxu0 0.0
    %1343 = vmatprep.subr.mxu0 0.0
    %1344 = vmatpush1.msra.mxu0 0.0
    %1345 = vmatprep.subr.mxu0 0.0
    %1346 = vmatpush1.msra.mxu0 0.0
    %1347 = vmatprep.subr.mxu0 0.0
    %1348 = vmatpush1.msra.mxu0 0.0
    %1349 = vmatprep.subr.mxu0 0.0
    %1350 = vmatpush1.msra.mxu0 0.0
    %1351 = vmatprep.subr.mxu0 0.0
    %1352 = vmatpush1.msra.mxu0 0.0
    %1353 = vmatprep.subr.mxu0 0.0
    %1354 = vmatpush1.msra.mxu0 0.0
    %1355 = vmatprep.subr.mxu0 0.0
    %1356 = vmatpush1.msra.mxu0 0.0
    %1357 = vmatprep.subr.mxu0 0.0
    %1358 = vmatpush1.msra.mxu0 0.0
    %1359 = vmatprep.subr.mxu0 0.0
    %1360 = vmatpush1.msra.mxu0 0.0
    %1361 = vmatprep.subr.mxu0 0.0
    %1362 = vmatpush1.msra.mxu0 0.0
    %1363 = vmatprep.subr.mxu0 0.0
    %1364 = vmatpush1.msra.mxu0 0.0
    %1365 = vmatprep.subr.mxu0 0.0
    %1366 = vmatpush1.msra.mxu0 0.0
    %1367 = vmatprep.subr.mxu0 0.0
    %1368 = vmatpush1.msra.mxu0 0.0
    %1369 = vmatprep.subr.mxu0 0.0
    %1370 = vmatpush1.msra.mxu0 0.0
    %1371 = vmatprep.subr.mxu0 0.0
    %1372 = vmatpush1.msra.mxu0 0.0
    %1373 = vmatprep.subr.mxu0 0.0
    %1374 = vmatpush1.msra.mxu0 0.0
    %1375 = vmatprep.subr.mxu0 0.0
    %1376 = vmatpush1.msra.mxu0 0.0
    %1377 = vmatprep.subr.mxu0 0.0
    %1378 = vmatpush1.msra.mxu0 0.0
    %1379 = vmatprep.subr.mxu0 0.0
    %1380 = vmatpush1.msra.mxu0 0.0
    %1381 = vmatprep.subr.mxu0 0.0
    %1382 = vmatpush1.msra.mxu0 0.0
    %1383 = vmatprep.subr.mxu0 0.0
    %1384 = vmatpush1.msra.mxu0 0.0
    %1385 = vmatprep.mubr.f32.mxu0 0.0
    %1386 = vmatmul.mubr.f32.gmra.mrb[0].mxu0 %v182
    %v1387 = vpop.f32.mrb[0].mxu0
    %v1388 = vadd.f32 0.0, %v1387
    %v1389 = vpop.f32.mrb[0].mxu0
    %1390 = vmatprep.mubr.f32.mxu0 0.0
    %1391 = vmatmul.mubr.f32.gmra.mrb[0].mxu0 %v185
    %v1392 = vpop.f32.mrb[0].mxu0
    %v1393 = vadd.f32 0.0, %v1392
    %v1394 = vpop.f32.mrb[0].mxu0
    %1395 = vdwg.mxu0
    %v1396 = vmul.f32 %v1388, 2.0
    %v1397 = vmul.f32 %v1393, 2.0
    %v1398 = vsub.f32 %v1396, %v143
    %v1399 = vsub.f32 %v1397, %v144
    %1400 = vmatprep.subr.mxu0 0.0
    %1401 = vmatpush1.msra.mxu0 %v1113
    %1402 = vmatprep.subr.mxu0 0.0
    %1403 = vmatpush1.msra.mxu0 %v1118
    %1404 = vmatprep.subr.mxu0 0.0
    %1405 = vmatpush1.msra.mxu0 0.0
    %1406 = vmatprep.subr.mxu0 0.0
    %1407 = vmatpush1.msra.mxu0 0.0
    %1408 = vmatprep.subr.mxu0 0.0
    %1409 = vmatpush1.msra.mxu0 0.0
    %1410 = vmatprep.subr.mxu0 0.0
    %1411 = vmatpush1.msra.mxu0 0.0
    %1412 = vmatprep.subr.mxu0 0.0
    %1413 = vmatpush1.msra.mxu0 0.0
    %1414 = vmatprep.subr.mxu0 0.0
    %1415 = vmatpush1.msra.mxu0 0.0
    %1416 = vmatprep.subr.mxu0 0.0
    %1417 = vmatpush1.msra.mxu0 0.0
    %1418 = vmatprep.subr.mxu0 0.0
    %1419 = vmatpush1.msra.mxu0 0.0
    %1420 = vmatprep.subr.mxu0 0.0
    %1421 = vmatpush1.msra.mxu0 0.0
    %1422 = vmatprep.subr.mxu0 0.0
    %1423 = vmatpush1.msra.mxu0 0.0
    %1424 = vmatprep.subr.mxu0 0.0
    %1425 = vmatpush1.msra.mxu0 0.0
    %1426 = vmatprep.subr.mxu0 0.0
    %1427 = vmatpush1.msra.mxu0 0.0
    %1428 = vmatprep.subr.mxu0 0.0
    %1429 = vmatpush1.msra.mxu0 0.0
    %1430 = vmatprep.subr.mxu0 0.0
    %1431 = vmatpush1.msra.mxu0 0.0
    %1432 = vmatprep.subr.mxu0 0.0
    %1433 = vmatpush1.msra.mxu0 0.0
    %1434 = vmatprep.subr.mxu0 0.0
    %1435 = vmatpush1.msra.mxu0 0.0
    %1436 = vmatprep.subr.mxu0 0.0
    %1437 = vmatpush1.msra.mxu0 0.0
    %1438 = vmatprep.subr.mxu0 0.0
    %1439 = vmatpush1.msra.mxu0 0.0
    %1440 = vmatprep.subr.mxu0 0.0
    %1441 = vmatpush1.msra.mxu0 0.0
    %1442 = vmatprep.subr.mxu0 0.0
    %1443 = vmatpush1.msra.mxu0 0.0
    %1444 = vmatprep.subr.mxu0 0.0
    %1445 = vmatpush1.msra.mxu0 0.0
    %1446 = vmatprep.subr.mxu0 0.0
    %1447 = vmatpush1.msra.mxu0 0.0
    %1448 = vmatprep.subr.mxu0 0.0
    %1449 = vmatpush1.msra.mxu0 0.0
    %1450 = vmatprep.subr.mxu0 0.0
    %1451 = vmatpush1.msra.mxu0 0.0
    %1452 = vmatprep.subr.mxu0 0.0
    %1453 = vmatpush1.msra.mxu0 0.0
    %1454 = vmatprep.subr.mxu0 0.0
    %1455 = vmatpush1.msra.mxu0 0.0
    %1456 = vmatprep.subr.mxu0 0.0
    %1457 = vmatpush1.msra.mxu0 0.0
    %1458 = vmatprep.subr.mxu0 0.0
    %1459 = vmatpush1.msra.mxu0 0.0
    %1460 = vmatprep.subr.mxu0 0.0
    %1461 = vmatpush1.msra.mxu0 0.0
    %1462 = vmatprep.subr.mxu0 0.0
    %1463 = vmatpush1.msra.mxu0 0.0
    %1464 = vmatprep.mubr.f32.mxu0 0.0
    %1465 = vmatmul.mubr.f32.gmra.mrb[0].mxu0 %v182
    %v1466 = vpop.f32.mrb[0].mxu0
    %v1467 = vadd.f32 0.0, %v1466
    %v1468 = vpop.f32.mrb[0].mxu0
    %1469 = vmatprep.mubr.f32.mxu0 0.0
    %1470 = vmatmul.mubr.f32.gmra.mrb[0].mxu0 %v185
    %v1471 = vpop.f32.mrb[0].mxu0
    %v1472 = vadd.f32 0.0, %v1471
    %v1473 = vpop.f32.mrb[0].mxu0
    %1474 = vdwg.mxu0
    %v1475 = vmul.f32 %v1467, 2.0
    %v1476 = vmul.f32 %v1472, 2.0
    %v1477 = vsub.f32 %v1475, %v145
    %v1478 = vsub.f32 %v1476, %v146
    %s1479 = scalar_lea.vmem %s4, 64
    %v1480 = vld [vmem:[%s1479] sm:$0xff]
    %v1481 = vld [vmem:[%s1479 + $0x8] sm:$0xff]
    %v1482 = vld [vmem:[%s1479 + $0x10] sm:$0xff]
    %v1483 = vld [vmem:[%s1479 + $0x18] sm:$0xff]
    %v1485 = vsel %vm1126, %v1398, 0
    %v1488 = vsel %vm1126, %v1399, 0
    %v1491 = vsel %vm1126, %v1477, 0
    %v1494 = vsel %vm1126, %v1478, 0
    %1496 = vmatprep.subr.mxu0 0.0
    %1497 = vmatpush1.msra.mxu0 %v1480
    %1498 = vmatprep.subr.mxu0 0.0
    %1499 = vmatpush1.msra.mxu0 %v1481
    %1500 = vmatprep.subr.mxu0 0.0
    %1501 = vmatpush1.msra.mxu0 %v1482
    %1502 = vmatprep.subr.mxu0 0.0
    %1503 = vmatpush1.msra.mxu0 %v1483
    %1504 = vmatprep.subr.mxu0 0.0
    %1505 = vmatpush1.msra.mxu0 0.0
    %1506 = vmatprep.subr.mxu0 0.0
    %1507 = vmatpush1.msra.mxu0 0.0
    %1508 = vmatprep.subr.mxu0 0.0
    %1509 = vmatpush1.msra.mxu0 0.0
    %1510 = vmatprep.subr.mxu0 0.0
    %1511 = vmatpush1.msra.mxu0 0.0
    %1512 = vmatprep.subr.mxu0 0.0
    %1513 = vmatpush1.msra.mxu0 0.0
    %1514 = vmatprep.subr.mxu0 0.0
    %1515 = vmatpush1.msra.mxu0 0.0
    %1516 = vmatprep.subr.mxu0 0.0
    %1517 = vmatpush1.msra.mxu0 0.0
    %1518 = vmatprep.subr.mxu0 0.0
    %1519 = vmatpush1.msra.mxu0 0.0
    %1520 = vmatprep.subr.mxu0 0.0
    %1521 = vmatpush1.msra.mxu0 0.0
    %1522 = vmatprep.subr.mxu0 0.0
    %1523 = vmatpush1.msra.mxu0 0.0
    %1524 = vmatprep.subr.mxu0 0.0
    %1525 = vmatpush1.msra.mxu0 0.0
    %1526 = vmatprep.subr.mxu0 0.0
    %1527 = vmatpush1.msra.mxu0 0.0
    %1528 = vmatprep.subr.mxu0 0.0
    %1529 = vmatpush1.msra.mxu0 0.0
    %1530 = vmatprep.subr.mxu0 0.0
    %1531 = vmatpush1.msra.mxu0 0.0
    %1532 = vmatprep.subr.mxu0 0.0
    %1533 = vmatpush1.msra.mxu0 0.0
    %1534 = vmatprep.subr.mxu0 0.0
    %1535 = vmatpush1.msra.mxu0 0.0
    %1536 = vmatprep.subr.mxu0 0.0
    %1537 = vmatpush1.msra.mxu0 0.0
    %1538 = vmatprep.subr.mxu0 0.0
    %1539 = vmatpush1.msra.mxu0 0.0
    %1540 = vmatprep.subr.mxu0 0.0
    %1541 = vmatpush1.msra.mxu0 0.0
    %1542 = vmatprep.subr.mxu0 0.0
    %1543 = vmatpush1.msra.mxu0 0.0
    %1544 = vmatprep.subr.mxu0 0.0
    %1545 = vmatpush1.msra.mxu0 0.0
    %1546 = vmatprep.subr.mxu0 0.0
    %1547 = vmatpush1.msra.mxu0 0.0
    %1548 = vmatprep.subr.mxu0 0.0
    %1549 = vmatpush1.msra.mxu0 0.0
    %1550 = vmatprep.subr.mxu0 0.0
    %1551 = vmatpush1.msra.mxu0 0.0
    %1552 = vmatprep.subr.mxu0 0.0
    %1553 = vmatpush1.msra.mxu0 0.0
    %1554 = vmatprep.subr.mxu0 0.0
    %1555 = vmatpush1.msra.mxu0 0.0
    %1556 = vmatprep.subr.mxu0 0.0
    %1557 = vmatpush1.msra.mxu0 0.0
    %1558 = vmatprep.subr.mxu0 0.0
    %1559 = vmatpush1.msra.mxu0 0.0
    %1560 = vmatprep.mubr.f32.mxu0 0.0
    %1561 = vmatmul.mubr.f32.gmra.mrb[0].mxu0 %v1485
    %v1562 = vpop.f32.mrb[0].mxu0
    %v1563 = vadd.f32 0.0, %v1562
    %v1564 = vpop.f32.mrb[0].mxu0
    %1565 = vmatprep.mubr.f32.mxu0 0.0
    %1566 = vmatmul.mubr.f32.gmra.mrb[0].mxu0 %v1488
    %v1567 = vpop.f32.mrb[0].mxu0
    %v1568 = vadd.f32 0.0, %v1567
    %v1569 = vpop.f32.mrb[0].mxu0
    %1570 = vmatprep.mubr.f32.mxu0 0.0
    %1571 = vmatmul.mubr.f32.gmra.mrb[0].mxu0 %v1491
    %v1572 = vpop.f32.mrb[0].mxu0
    %v1573 = vadd.f32 0.0, %v1572
    %v1574 = vpop.f32.mrb[0].mxu0
    %1575 = vmatprep.mubr.f32.mxu0 0.0
    %1576 = vmatmul.mubr.f32.gmra.mrb[0].mxu0 %v1494
    %v1577 = vpop.f32.mrb[0].mxu0
    %v1578 = vadd.f32 0.0, %v1577
    %v1579 = vpop.f32.mrb[0].mxu0
    %1580 = vdwg.mxu0
    %v1581 = vadd.f32 %v1303, %v1563
    %v1582 = vadd.f32 %v1308, %v1568
    %v1583 = vadd.f32 %v1313, %v1573
    %v1584 = vadd.f32 %v1318, %v1578
    %1585 = vmatprep.subr.mxu0 0.0
    %1586 = vmatpush1.msra.mxu0 %v1038
    %1587 = vmatprep.subr.mxu0 0.0
    %1588 = vmatpush1.msra.mxu0 %v1043
    %1589 = vmatprep.subr.mxu0 0.0
    %1590 = vmatpush1.msra.mxu0 0.0
    %1591 = vmatprep.subr.mxu0 0.0
    %1592 = vmatpush1.msra.mxu0 0.0
    %1593 = vmatprep.subr.mxu0 0.0
    %1594 = vmatpush1.msra.mxu0 0.0
    %1595 = vmatprep.subr.mxu0 0.0
    %1596 = vmatpush1.msra.mxu0 0.0
    %1597 = vmatprep.subr.mxu0 0.0
    %1598 = vmatpush1.msra.mxu0 0.0
    %1599 = vmatprep.subr.mxu0 0.0
    %1600 = vmatpush1.msra.mxu0 0.0
    %1601 = vmatprep.subr.mxu0 0.0
    %1602 = vmatpush1.msra.mxu0 0.0
    %1603 = vmatprep.subr.mxu0 0.0
    %1604 = vmatpush1.msra.mxu0 0.0
    %1605 = vmatprep.subr.mxu0 0.0
    %1606 = vmatpush1.msra.mxu0 0.0
    %1607 = vmatprep.subr.mxu0 0.0
    %1608 = vmatpush1.msra.mxu0 0.0
    %1609 = vmatprep.subr.mxu0 0.0
    %1610 = vmatpush1.msra.mxu0 0.0
    %1611 = vmatprep.subr.mxu0 0.0
    %1612 = vmatpush1.msra.mxu0 0.0
    %1613 = vmatprep.subr.mxu0 0.0
    %1614 = vmatpush1.msra.mxu0 0.0
    %1615 = vmatprep.subr.mxu0 0.0
    %1616 = vmatpush1.msra.mxu0 0.0
    %1617 = vmatprep.subr.mxu0 0.0
    %1618 = vmatpush1.msra.mxu0 0.0
    %1619 = vmatprep.subr.mxu0 0.0
    %1620 = vmatpush1.msra.mxu0 0.0
    %1621 = vmatprep.subr.mxu0 0.0
    %1622 = vmatpush1.msra.mxu0 0.0
    %1623 = vmatprep.subr.mxu0 0.0
    %1624 = vmatpush1.msra.mxu0 0.0
    %1625 = vmatprep.subr.mxu0 0.0
    %1626 = vmatpush1.msra.mxu0 0.0
    %1627 = vmatprep.subr.mxu0 0.0
    %1628 = vmatpush1.msra.mxu0 0.0
    %1629 = vmatprep.subr.mxu0 0.0
    %1630 = vmatpush1.msra.mxu0 0.0
    %1631 = vmatprep.subr.mxu0 0.0
    %1632 = vmatpush1.msra.mxu0 0.0
    %1633 = vmatprep.subr.mxu0 0.0
    %1634 = vmatpush1.msra.mxu0 0.0
    %1635 = vmatprep.subr.mxu0 0.0
    %1636 = vmatpush1.msra.mxu0 0.0
    %1637 = vmatprep.subr.mxu0 0.0
    %1638 = vmatpush1.msra.mxu0 0.0
    %1639 = vmatprep.subr.mxu0 0.0
    %1640 = vmatpush1.msra.mxu0 0.0
    %1641 = vmatprep.subr.mxu0 0.0
    %1642 = vmatpush1.msra.mxu0 0.0
    %1643 = vmatprep.subr.mxu0 0.0
    %1644 = vmatpush1.msra.mxu0 0.0
    %1645 = vmatprep.subr.mxu0 0.0
    %1646 = vmatpush1.msra.mxu0 0.0
    %1647 = vmatprep.subr.mxu0 0.0
    %1648 = vmatpush1.msra.mxu0 0.0
    %1649 = vmatprep.mubr.f32.mxu0 0.0
    %1650 = vmatmul.mubr.f32.gmra.mrb[0].mxu0 %v571
    %v1651 = vpop.f32.mrb[0].mxu0
    %v1652 = vadd.f32 0.0, %v1651
    %v1653 = vpop.f32.mrb[0].mxu0
    %1654 = vmatprep.mubr.f32.mxu0 0.0
    %1655 = vmatmul.mubr.f32.gmra.mrb[0].mxu0 %v574
    %v1656 = vpop.f32.mrb[0].mxu0
    %v1657 = vadd.f32 0.0, %v1656
    %v1658 = vpop.f32.mrb[0].mxu0
    %1659 = vdwg.mxu0
    %1660 = vmatprep.subr.mxu0 0.0
    %1661 = vmatpush1.msra.mxu0 %v1113
    %1662 = vmatprep.subr.mxu0 0.0
    %1663 = vmatpush1.msra.mxu0 %v1118
    %1664 = vmatprep.subr.mxu0 0.0
    %1665 = vmatpush1.msra.mxu0 0.0
    %1666 = vmatprep.subr.mxu0 0.0
    %1667 = vmatpush1.msra.mxu0 0.0
    %1668 = vmatprep.subr.mxu0 0.0
    %1669 = vmatpush1.msra.mxu0 0.0
    %1670 = vmatprep.subr.mxu0 0.0
    %1671 = vmatpush1.msra.mxu0 0.0
    %1672 = vmatprep.subr.mxu0 0.0
    %1673 = vmatpush1.msra.mxu0 0.0
    %1674 = vmatprep.subr.mxu0 0.0
    %1675 = vmatpush1.msra.mxu0 0.0
    %1676 = vmatprep.subr.mxu0 0.0
    %1677 = vmatpush1.msra.mxu0 0.0
    %1678 = vmatprep.subr.mxu0 0.0
    %1679 = vmatpush1.msra.mxu0 0.0
    %1680 = vmatprep.subr.mxu0 0.0
    %1681 = vmatpush1.msra.mxu0 0.0
    %1682 = vmatprep.subr.mxu0 0.0
    %1683 = vmatpush1.msra.mxu0 0.0
    %1684 = vmatprep.subr.mxu0 0.0
    %1685 = vmatpush1.msra.mxu0 0.0
    %1686 = vmatprep.subr.mxu0 0.0
    %1687 = vmatpush1.msra.mxu0 0.0
    %1688 = vmatprep.subr.mxu0 0.0
    %1689 = vmatpush1.msra.mxu0 0.0
    %1690 = vmatprep.subr.mxu0 0.0
    %1691 = vmatpush1.msra.mxu0 0.0
    %1692 = vmatprep.subr.mxu0 0.0
    %1693 = vmatpush1.msra.mxu0 0.0
    %1694 = vmatprep.subr.mxu0 0.0
    %1695 = vmatpush1.msra.mxu0 0.0
    %1696 = vmatprep.subr.mxu0 0.0
    %1697 = vmatpush1.msra.mxu0 0.0
    %1698 = vmatprep.subr.mxu0 0.0
    %1699 = vmatpush1.msra.mxu0 0.0
    %1700 = vmatprep.subr.mxu0 0.0
    %1701 = vmatpush1.msra.mxu0 0.0
    %1702 = vmatprep.subr.mxu0 0.0
    %1703 = vmatpush1.msra.mxu0 0.0
    %1704 = vmatprep.subr.mxu0 0.0
    %1705 = vmatpush1.msra.mxu0 0.0
    %1706 = vmatprep.subr.mxu0 0.0
    %1707 = vmatpush1.msra.mxu0 0.0
    %1708 = vmatprep.subr.mxu0 0.0
    %1709 = vmatpush1.msra.mxu0 0.0
    %1710 = vmatprep.subr.mxu0 0.0
    %1711 = vmatpush1.msra.mxu0 0.0
    %1712 = vmatprep.subr.mxu0 0.0
    %1713 = vmatpush1.msra.mxu0 0.0
    %1714 = vmatprep.subr.mxu0 0.0
    %1715 = vmatpush1.msra.mxu0 0.0
    %1716 = vmatprep.subr.mxu0 0.0
    %1717 = vmatpush1.msra.mxu0 0.0
    %1718 = vmatprep.subr.mxu0 0.0
    %1719 = vmatpush1.msra.mxu0 0.0
    %1720 = vmatprep.subr.mxu0 0.0
    %1721 = vmatpush1.msra.mxu0 0.0
    %1722 = vmatprep.subr.mxu0 0.0
    %1723 = vmatpush1.msra.mxu0 0.0
    %1724 = vmatprep.mubr.f32.mxu0 0.0
    %1725 = vmatmul.mubr.f32.gmra.mrb[0].mxu0 %v571
    %v1726 = vpop.f32.mrb[0].mxu0
    %v1727 = vadd.f32 0.0, %v1726
    %v1728 = vpop.f32.mrb[0].mxu0
    %1729 = vmatprep.mubr.f32.mxu0 0.0
    %1730 = vmatmul.mubr.f32.gmra.mrb[0].mxu0 %v574
    %v1731 = vpop.f32.mrb[0].mxu0
    %v1732 = vadd.f32 0.0, %v1731
    %v1733 = vpop.f32.mrb[0].mxu0
    %1734 = vdwg.mxu0
    %s1735 = scalar_lea.vmem %s4, 96
    %v1736 = vld [vmem:[%s1735] sm:$0xff]
    %v1737 = vld [vmem:[%s1735 + $0x8] sm:$0xff]
    %v1738 = vld [vmem:[%s1735 + $0x10] sm:$0xff]
    %v1739 = vld [vmem:[%s1735 + $0x18] sm:$0xff]
    %v1741 = vsel %vm1126, %v1652, 0
    %v1744 = vsel %vm1126, %v1657, 0
    %v1747 = vsel %vm1126, %v1727, 0
    %v1750 = vsel %vm1126, %v1732, 0
    %1752 = vmatprep.subr.mxu0 0.0
    %1753 = vmatpush1.msra.mxu0 %v1736
    %1754 = vmatprep.subr.mxu0 0.0
    %1755 = vmatpush1.msra.mxu0 %v1737
    %1756 = vmatprep.subr.mxu0 0.0
    %1757 = vmatpush1.msra.mxu0 %v1738
    %1758 = vmatprep.subr.mxu0 0.0
    %1759 = vmatpush1.msra.mxu0 %v1739
    %1760 = vmatprep.subr.mxu0 0.0
    %1761 = vmatpush1.msra.mxu0 0.0
    %1762 = vmatprep.subr.mxu0 0.0
    %1763 = vmatpush1.msra.mxu0 0.0
    %1764 = vmatprep.subr.mxu0 0.0
    %1765 = vmatpush1.msra.mxu0 0.0
    %1766 = vmatprep.subr.mxu0 0.0
    %1767 = vmatpush1.msra.mxu0 0.0
    %1768 = vmatprep.subr.mxu0 0.0
    %1769 = vmatpush1.msra.mxu0 0.0
    %1770 = vmatprep.subr.mxu0 0.0
    %1771 = vmatpush1.msra.mxu0 0.0
    %1772 = vmatprep.subr.mxu0 0.0
    %1773 = vmatpush1.msra.mxu0 0.0
    %1774 = vmatprep.subr.mxu0 0.0
    %1775 = vmatpush1.msra.mxu0 0.0
    %1776 = vmatprep.subr.mxu0 0.0
    %1777 = vmatpush1.msra.mxu0 0.0
    %1778 = vmatprep.subr.mxu0 0.0
    %1779 = vmatpush1.msra.mxu0 0.0
    %1780 = vmatprep.subr.mxu0 0.0
    %1781 = vmatpush1.msra.mxu0 0.0
    %1782 = vmatprep.subr.mxu0 0.0
    %1783 = vmatpush1.msra.mxu0 0.0
    %1784 = vmatprep.subr.mxu0 0.0
    %1785 = vmatpush1.msra.mxu0 0.0
    %1786 = vmatprep.subr.mxu0 0.0
    %1787 = vmatpush1.msra.mxu0 0.0
    %1788 = vmatprep.subr.mxu0 0.0
    %1789 = vmatpush1.msra.mxu0 0.0
    %1790 = vmatprep.subr.mxu0 0.0
    %1791 = vmatpush1.msra.mxu0 0.0
    %1792 = vmatprep.subr.mxu0 0.0
    %1793 = vmatpush1.msra.mxu0 0.0
    %1794 = vmatprep.subr.mxu0 0.0
    %1795 = vmatpush1.msra.mxu0 0.0
    %1796 = vmatprep.subr.mxu0 0.0
    %1797 = vmatpush1.msra.mxu0 0.0
    %1798 = vmatprep.subr.mxu0 0.0
    %1799 = vmatpush1.msra.mxu0 0.0
    %1800 = vmatprep.subr.mxu0 0.0
    %1801 = vmatpush1.msra.mxu0 0.0
    %1802 = vmatprep.subr.mxu0 0.0
    %1803 = vmatpush1.msra.mxu0 0.0
    %1804 = vmatprep.subr.mxu0 0.0
    %1805 = vmatpush1.msra.mxu0 0.0
    %1806 = vmatprep.subr.mxu0 0.0
    %1807 = vmatpush1.msra.mxu0 0.0
    %1808 = vmatprep.subr.mxu0 0.0
    %1809 = vmatpush1.msra.mxu0 0.0
    %1810 = vmatprep.subr.mxu0 0.0
    %1811 = vmatpush1.msra.mxu0 0.0
    %1812 = vmatprep.subr.mxu0 0.0
    %1813 = vmatpush1.msra.mxu0 0.0
    %1814 = vmatprep.subr.mxu0 0.0
    %1815 = vmatpush1.msra.mxu0 0.0
    %1816 = vmatprep.mubr.f32.mxu0 0.0
    %1817 = vmatmul.mubr.f32.gmra.mrb[0].mxu0 %v1741
    %v1818 = vpop.f32.mrb[0].mxu0
    %v1819 = vadd.f32 0.0, %v1818
    %v1820 = vpop.f32.mrb[0].mxu0
    %1821 = vmatprep.mubr.f32.mxu0 0.0
    %1822 = vmatmul.mubr.f32.gmra.mrb[0].mxu0 %v1744
    %v1823 = vpop.f32.mrb[0].mxu0
    %v1824 = vadd.f32 0.0, %v1823
    %v1825 = vpop.f32.mrb[0].mxu0
    %1826 = vmatprep.mubr.f32.mxu0 0.0
    %1827 = vmatmul.mubr.f32.gmra.mrb[0].mxu0 %v1747
    %v1828 = vpop.f32.mrb[0].mxu0
    %v1829 = vadd.f32 0.0, %v1828
    %v1830 = vpop.f32.mrb[0].mxu0
    %1831 = vmatprep.mubr.f32.mxu0 0.0
    %1832 = vmatmul.mubr.f32.gmra.mrb[0].mxu0 %v1750
    %v1833 = vpop.f32.mrb[0].mxu0
    %v1834 = vadd.f32 0.0, %v1833
    %v1835 = vpop.f32.mrb[0].mxu0
    %1836 = vdwg.mxu0
    %v1837 = vadd.f32 %v1581, %v1819
    %v1838 = vadd.f32 %v1582, %v1824
    %v1839 = vadd.f32 %v1583, %v1829
    %v1840 = vadd.f32 %v1584, %v1834
    %1841 = vmatprep.subr.mxu0 0.0
    %1842 = vmatpush1.msra.mxu0 %v1652
    %1843 = vmatprep.subr.mxu0 0.0
    %1844 = vmatpush1.msra.mxu0 %v1657
    %1845 = vmatprep.subr.mxu0 0.0
    %1846 = vmatpush1.msra.mxu0 0.0
    %1847 = vmatprep.subr.mxu0 0.0
    %1848 = vmatpush1.msra.mxu0 0.0
    %1849 = vmatprep.subr.mxu0 0.0
    %1850 = vmatpush1.msra.mxu0 0.0
    %1851 = vmatprep.subr.mxu0 0.0
    %1852 = vmatpush1.msra.mxu0 0.0
    %1853 = vmatprep.subr.mxu0 0.0
    %1854 = vmatpush1.msra.mxu0 0.0
    %1855 = vmatprep.subr.mxu0 0.0
    %1856 = vmatpush1.msra.mxu0 0.0
    %1857 = vmatprep.subr.mxu0 0.0
    %1858 = vmatpush1.msra.mxu0 0.0
    %1859 = vmatprep.subr.mxu0 0.0
    %1860 = vmatpush1.msra.mxu0 0.0
    %1861 = vmatprep.subr.mxu0 0.0
    %1862 = vmatpush1.msra.mxu0 0.0
    %1863 = vmatprep.subr.mxu0 0.0
    %1864 = vmatpush1.msra.mxu0 0.0
    %1865 = vmatprep.subr.mxu0 0.0
    %1866 = vmatpush1.msra.mxu0 0.0
    %1867 = vmatprep.subr.mxu0 0.0
    %1868 = vmatpush1.msra.mxu0 0.0
    %1869 = vmatprep.subr.mxu0 0.0
    %1870 = vmatpush1.msra.mxu0 0.0
    %1871 = vmatprep.subr.mxu0 0.0
    %1872 = vmatpush1.msra.mxu0 0.0
    %1873 = vmatprep.subr.mxu0 0.0
    %1874 = vmatpush1.msra.mxu0 0.0
    %1875 = vmatprep.subr.mxu0 0.0
    %1876 = vmatpush1.msra.mxu0 0.0
    %1877 = vmatprep.subr.mxu0 0.0
    %1878 = vmatpush1.msra.mxu0 0.0
    %1879 = vmatprep.subr.mxu0 0.0
    %1880 = vmatpush1.msra.mxu0 0.0
    %1881 = vmatprep.subr.mxu0 0.0
    %1882 = vmatpush1.msra.mxu0 0.0
    %1883 = vmatprep.subr.mxu0 0.0
    %1884 = vmatpush1.msra.mxu0 0.0
    %1885 = vmatprep.subr.mxu0 0.0
    %1886 = vmatpush1.msra.mxu0 0.0
    %1887 = vmatprep.subr.mxu0 0.0
    %1888 = vmatpush1.msra.mxu0 0.0
    %1889 = vmatprep.subr.mxu0 0.0
    %1890 = vmatpush1.msra.mxu0 0.0
    %1891 = vmatprep.subr.mxu0 0.0
    %1892 = vmatpush1.msra.mxu0 0.0
    %1893 = vmatprep.subr.mxu0 0.0
    %1894 = vmatpush1.msra.mxu0 0.0
    %1895 = vmatprep.subr.mxu0 0.0
    %1896 = vmatpush1.msra.mxu0 0.0
    %1897 = vmatprep.subr.mxu0 0.0
    %1898 = vmatpush1.msra.mxu0 0.0
    %1899 = vmatprep.subr.mxu0 0.0
    %1900 = vmatpush1.msra.mxu0 0.0
    %1901 = vmatprep.subr.mxu0 0.0
    %1902 = vmatpush1.msra.mxu0 0.0
    %1903 = vmatprep.subr.mxu0 0.0
    %1904 = vmatpush1.msra.mxu0 0.0
    %1905 = vmatprep.mubr.f32.mxu0 0.0
    %1906 = vmatmul.mubr.f32.gmra.mrb[0].mxu0 %v571
    %v1907 = vpop.f32.mrb[0].mxu0
    %v1908 = vadd.f32 0.0, %v1907
    %v1909 = vpop.f32.mrb[0].mxu0
    %1910 = vmatprep.mubr.f32.mxu0 0.0
    %1911 = vmatmul.mubr.f32.gmra.mrb[0].mxu0 %v574
    %v1912 = vpop.f32.mrb[0].mxu0
    %v1913 = vadd.f32 0.0, %v1912
    %v1914 = vpop.f32.mrb[0].mxu0
    %1915 = vdwg.mxu0
    %v1916 = vmul.f32 %v1908, 2.0
    %v1917 = vmul.f32 %v1913, 2.0
    %v1918 = vsub.f32 %v1916, %v1038
    %v1919 = vsub.f32 %v1917, %v1043
    %1920 = vmatprep.subr.mxu0 0.0
    %1921 = vmatpush1.msra.mxu0 %v1727
    %1922 = vmatprep.subr.mxu0 0.0
    %1923 = vmatpush1.msra.mxu0 %v1732
    %1924 = vmatprep.subr.mxu0 0.0
    %1925 = vmatpush1.msra.mxu0 0.0
    %1926 = vmatprep.subr.mxu0 0.0
    %1927 = vmatpush1.msra.mxu0 0.0
    %1928 = vmatprep.subr.mxu0 0.0
    %1929 = vmatpush1.msra.mxu0 0.0
    %1930 = vmatprep.subr.mxu0 0.0
    %1931 = vmatpush1.msra.mxu0 0.0
    %1932 = vmatprep.subr.mxu0 0.0
    %1933 = vmatpush1.msra.mxu0 0.0
    %1934 = vmatprep.subr.mxu0 0.0
    %1935 = vmatpush1.msra.mxu0 0.0
    %1936 = vmatprep.subr.mxu0 0.0
    %1937 = vmatpush1.msra.mxu0 0.0
    %1938 = vmatprep.subr.mxu0 0.0
    %1939 = vmatpush1.msra.mxu0 0.0
    %1940 = vmatprep.subr.mxu0 0.0
    %1941 = vmatpush1.msra.mxu0 0.0
    %1942 = vmatprep.subr.mxu0 0.0
    %1943 = vmatpush1.msra.mxu0 0.0
    %1944 = vmatprep.subr.mxu0 0.0
    %1945 = vmatpush1.msra.mxu0 0.0
    %1946 = vmatprep.subr.mxu0 0.0
    %1947 = vmatpush1.msra.mxu0 0.0
    %1948 = vmatprep.subr.mxu0 0.0
    %1949 = vmatpush1.msra.mxu0 0.0
    %1950 = vmatprep.subr.mxu0 0.0
    %1951 = vmatpush1.msra.mxu0 0.0
    %1952 = vmatprep.subr.mxu0 0.0
    %1953 = vmatpush1.msra.mxu0 0.0
    %1954 = vmatprep.subr.mxu0 0.0
    %1955 = vmatpush1.msra.mxu0 0.0
    %1956 = vmatprep.subr.mxu0 0.0
    %1957 = vmatpush1.msra.mxu0 0.0
    %1958 = vmatprep.subr.mxu0 0.0
    %1959 = vmatpush1.msra.mxu0 0.0
    %1960 = vmatprep.subr.mxu0 0.0
    %1961 = vmatpush1.msra.mxu0 0.0
    %1962 = vmatprep.subr.mxu0 0.0
    %1963 = vmatpush1.msra.mxu0 0.0
    %1964 = vmatprep.subr.mxu0 0.0
    %1965 = vmatpush1.msra.mxu0 0.0
    %1966 = vmatprep.subr.mxu0 0.0
    %1967 = vmatpush1.msra.mxu0 0.0
    %1968 = vmatprep.subr.mxu0 0.0
    %1969 = vmatpush1.msra.mxu0 0.0
    %1970 = vmatprep.subr.mxu0 0.0
    %1971 = vmatpush1.msra.mxu0 0.0
    %1972 = vmatprep.subr.mxu0 0.0
    %1973 = vmatpush1.msra.mxu0 0.0
    %1974 = vmatprep.subr.mxu0 0.0
    %1975 = vmatpush1.msra.mxu0 0.0
    %1976 = vmatprep.subr.mxu0 0.0
    %1977 = vmatpush1.msra.mxu0 0.0
    %1978 = vmatprep.subr.mxu0 0.0
    %1979 = vmatpush1.msra.mxu0 0.0
    %1980 = vmatprep.subr.mxu0 0.0
    %1981 = vmatpush1.msra.mxu0 0.0
    %1982 = vmatprep.subr.mxu0 0.0
    %1983 = vmatpush1.msra.mxu0 0.0
    %1984 = vmatprep.mubr.f32.mxu0 0.0
    %1985 = vmatmul.mubr.f32.gmra.mrb[0].mxu0 %v571
    %v1986 = vpop.f32.mrb[0].mxu0
    %v1987 = vadd.f32 0.0, %v1986
    %v1988 = vpop.f32.mrb[0].mxu0
    %1989 = vmatprep.mubr.f32.mxu0 0.0
    %1990 = vmatmul.mubr.f32.gmra.mrb[0].mxu0 %v574
    %v1991 = vpop.f32.mrb[0].mxu0
    %v1992 = vadd.f32 0.0, %v1991
    %v1993 = vpop.f32.mrb[0].mxu0
    %1994 = vdwg.mxu0
    %v1995 = vmul.f32 %v1987, 2.0
    %v1996 = vmul.f32 %v1992, 2.0
    %v1997 = vsub.f32 %v1995, %v1113
    %v1998 = vsub.f32 %v1996, %v1118
    %s1999 = scalar_lea.vmem %s4, 128
    %v2000 = vld [vmem:[%s1999] sm:$0xff]
    %v2001 = vld [vmem:[%s1999 + $0x8] sm:$0xff]
    %v2002 = vld [vmem:[%s1999 + $0x10] sm:$0xff]
    %v2003 = vld [vmem:[%s1999 + $0x18] sm:$0xff]
    %v2005 = vsel %vm1126, %v1918, 0
    %v2008 = vsel %vm1126, %v1919, 0
    %v2011 = vsel %vm1126, %v1997, 0
    %v2014 = vsel %vm1126, %v1998, 0
    %2016 = vmatprep.subr.mxu0 0.0
    %2017 = vmatpush1.msra.mxu0 %v2000
    %2018 = vmatprep.subr.mxu0 0.0
    %2019 = vmatpush1.msra.mxu0 %v2001
    %2020 = vmatprep.subr.mxu0 0.0
    %2021 = vmatpush1.msra.mxu0 %v2002
    %2022 = vmatprep.subr.mxu0 0.0
    %2023 = vmatpush1.msra.mxu0 %v2003
    %2024 = vmatprep.subr.mxu0 0.0
    %2025 = vmatpush1.msra.mxu0 0.0
    %2026 = vmatprep.subr.mxu0 0.0
    %2027 = vmatpush1.msra.mxu0 0.0
    %2028 = vmatprep.subr.mxu0 0.0
    %2029 = vmatpush1.msra.mxu0 0.0
    %2030 = vmatprep.subr.mxu0 0.0
    %2031 = vmatpush1.msra.mxu0 0.0
    %2032 = vmatprep.subr.mxu0 0.0
    %2033 = vmatpush1.msra.mxu0 0.0
    %2034 = vmatprep.subr.mxu0 0.0
    %2035 = vmatpush1.msra.mxu0 0.0
    %2036 = vmatprep.subr.mxu0 0.0
    %2037 = vmatpush1.msra.mxu0 0.0
    %2038 = vmatprep.subr.mxu0 0.0
    %2039 = vmatpush1.msra.mxu0 0.0
    %2040 = vmatprep.subr.mxu0 0.0
    %2041 = vmatpush1.msra.mxu0 0.0
    %2042 = vmatprep.subr.mxu0 0.0
    %2043 = vmatpush1.msra.mxu0 0.0
    %2044 = vmatprep.subr.mxu0 0.0
    %2045 = vmatpush1.msra.mxu0 0.0
    %2046 = vmatprep.subr.mxu0 0.0
    %2047 = vmatpush1.msra.mxu0 0.0
    %2048 = vmatprep.subr.mxu0 0.0
    %2049 = vmatpush1.msra.mxu0 0.0
    %2050 = vmatprep.subr.mxu0 0.0
    %2051 = vmatpush1.msra.mxu0 0.0
    %2052 = vmatprep.subr.mxu0 0.0
    %2053 = vmatpush1.msra.mxu0 0.0
    %2054 = vmatprep.subr.mxu0 0.0
    %2055 = vmatpush1.msra.mxu0 0.0
    %2056 = vmatprep.subr.mxu0 0.0
    %2057 = vmatpush1.msra.mxu0 0.0
    %2058 = vmatprep.subr.mxu0 0.0
    %2059 = vmatpush1.msra.mxu0 0.0
    %2060 = vmatprep.subr.mxu0 0.0
    %2061 = vmatpush1.msra.mxu0 0.0
    %2062 = vmatprep.subr.mxu0 0.0
    %2063 = vmatpush1.msra.mxu0 0.0
    %2064 = vmatprep.subr.mxu0 0.0
    %2065 = vmatpush1.msra.mxu0 0.0
    %2066 = vmatprep.subr.mxu0 0.0
    %2067 = vmatpush1.msra.mxu0 0.0
    %2068 = vmatprep.subr.mxu0 0.0
    %2069 = vmatpush1.msra.mxu0 0.0
    %2070 = vmatprep.subr.mxu0 0.0
    %2071 = vmatpush1.msra.mxu0 0.0
    %2072 = vmatprep.subr.mxu0 0.0
    %2073 = vmatpush1.msra.mxu0 0.0
    %2074 = vmatprep.subr.mxu0 0.0
    %2075 = vmatpush1.msra.mxu0 0.0
    %2076 = vmatprep.subr.mxu0 0.0
    %2077 = vmatpush1.msra.mxu0 0.0
    %2078 = vmatprep.subr.mxu0 0.0
    %2079 = vmatpush1.msra.mxu0 0.0
    %2080 = vmatprep.mubr.f32.mxu0 0.0
    %2081 = vmatmul.mubr.f32.gmra.mrb[0].mxu0 %v2005
    %v2082 = vpop.f32.mrb[0].mxu0
    %v2083 = vadd.f32 0.0, %v2082
    %v2084 = vpop.f32.mrb[0].mxu0
    %2085 = vmatprep.mubr.f32.mxu0 0.0
    %2086 = vmatmul.mubr.f32.gmra.mrb[0].mxu0 %v2008
    %v2087 = vpop.f32.mrb[0].mxu0
    %v2088 = vadd.f32 0.0, %v2087
    %v2089 = vpop.f32.mrb[0].mxu0
    %2090 = vmatprep.mubr.f32.mxu0 0.0
    %2091 = vmatmul.mubr.f32.gmra.mrb[0].mxu0 %v2011
    %v2092 = vpop.f32.mrb[0].mxu0
    %v2093 = vadd.f32 0.0, %v2092
    %v2094 = vpop.f32.mrb[0].mxu0
    %2095 = vmatprep.mubr.f32.mxu0 0.0
    %2096 = vmatmul.mubr.f32.gmra.mrb[0].mxu0 %v2014
    %v2097 = vpop.f32.mrb[0].mxu0
    %v2098 = vadd.f32 0.0, %v2097
    %v2099 = vpop.f32.mrb[0].mxu0
    %2100 = vdwg.mxu0
    %v2101 = vadd.f32 %v1837, %v2083
    %v2102 = vadd.f32 %v1838, %v2088
    %v2103 = vadd.f32 %v1839, %v2093
    %v2104 = vadd.f32 %v1840, %v2098
    %v2105 = vadd.f32 %v963, %v2101
    %v2106 = vadd.f32 %v964, %v2102
    %v2107 = vadd.f32 %v965, %v2103
    %v2108 = vadd.f32 %v966, %v2104
    %v2109 = vxor.u32 %v2105, 2147483648
    %v2110 = vxor.u32 %v2106, 2147483648
    %v2111 = vxor.u32 %v2107, 2147483648
    %v2112 = vxor.u32 %v2108, 2147483648
    %v2113 = vmul.f32 %v2109, 1.442695
    %v2114 = vpow.pop %v2113
    %v2115 = vmul.f32 %v2110, 1.442695
    %v2116 = vpow.pop %v2115
    %v2117 = vmul.f32 %v2111, 1.442695
    %v2118 = vpow.pop %v2117
    %v2119 = vmul.f32 %v2112, 1.442695
    %v2120 = vpow.pop %v2119
    %v2121 = vadd.f32 %v2114, 1.0
    %v2122 = vadd.f32 %v2116, 1.0
    %v2123 = vadd.f32 %v2118, 1.0
    %v2124 = vadd.f32 %v2120, 1.0
    %v2125 = vrcp.pop %v2121
    %v2126 = vmul.f32 1.0, %v2125
    %v2127 = vrcp.pop %v2122
    %v2128 = vmul.f32 1.0, %v2127
    %v2129 = vrcp.pop %v2123
    %v2130 = vmul.f32 1.0, %v2129
    %v2131 = vrcp.pop %v2124
    %v2132 = vmul.f32 1.0, %v2131
    %v2133 = vmul.f32 %v2126, %v143
    %v2134 = vmul.f32 %v2128, %v144
    %v2135 = vmul.f32 %v2130, %v145
    %v2136 = vmul.f32 %v2132, %v146
    %v2137 = vld [vmem:[#allocation5] sm:$0xff]
    %v2138 = vld [vmem:[#allocation5 + $0x8] sm:$0xff]
    %v2139 = vld [vmem:[#allocation5 + $0x10] sm:$0xff]
    %v2140 = vld [vmem:[#allocation5 + $0x18] sm:$0xff]
    %2141 = vmatprep.subr.mxu0 0.0
    %2142 = vmatpush1.msra.mxu0 %v2133
    %2143 = vmatprep.subr.mxu0 0.0
    %2144 = vmatpush1.msra.mxu0 %v2134
    %2145 = vmatprep.subr.mxu0 0.0
    %2146 = vmatpush1.msra.mxu0 0.0
    %2147 = vmatprep.subr.mxu0 0.0
    %2148 = vmatpush1.msra.mxu0 0.0
    %2149 = vmatprep.subr.mxu0 0.0
    %2150 = vmatpush1.msra.mxu0 0.0
    %2151 = vmatprep.subr.mxu0 0.0
    %2152 = vmatpush1.msra.mxu0 0.0
    %2153 = vmatprep.subr.mxu0 0.0
    %2154 = vmatpush1.msra.mxu0 0.0
    %2155 = vmatprep.subr.mxu0 0.0
    %2156 = vmatpush1.msra.mxu0 0.0
    %2157 = vmatprep.subr.mxu0 0.0
    %2158 = vmatpush1.msra.mxu0 0.0
    %2159 = vmatprep.subr.mxu0 0.0
    %2160 = vmatpush1.msra.mxu0 0.0
    %2161 = vmatprep.subr.mxu0 0.0
    %2162 = vmatpush1.msra.mxu0 0.0
    %2163 = vmatprep.subr.mxu0 0.0
    %2164 = vmatpush1.msra.mxu0 0.0
    %2165 = vmatprep.subr.mxu0 0.0
    %2166 = vmatpush1.msra.mxu0 0.0
    %2167 = vmatprep.subr.mxu0 0.0
    %2168 = vmatpush1.msra.mxu0 0.0
    %2169 = vmatprep.subr.mxu0 0.0
    %2170 = vmatpush1.msra.mxu0 0.0
    %2171 = vmatprep.subr.mxu0 0.0
    %2172 = vmatpush1.msra.mxu0 0.0
    %2173 = vmatprep.subr.mxu0 0.0
    %2174 = vmatpush1.msra.mxu0 0.0
    %2175 = vmatprep.subr.mxu0 0.0
    %2176 = vmatpush1.msra.mxu0 0.0
    %2177 = vmatprep.subr.mxu0 0.0
    %2178 = vmatpush1.msra.mxu0 0.0
    %2179 = vmatprep.subr.mxu0 0.0
    %2180 = vmatpush1.msra.mxu0 0.0
    %2181 = vmatprep.subr.mxu0 0.0
    %2182 = vmatpush1.msra.mxu0 0.0
    %2183 = vmatprep.subr.mxu0 0.0
    %2184 = vmatpush1.msra.mxu0 0.0
    %2185 = vmatprep.subr.mxu0 0.0
    %2186 = vmatpush1.msra.mxu0 0.0
    %2187 = vmatprep.subr.mxu0 0.0
    %2188 = vmatpush1.msra.mxu0 0.0
    %2189 = vmatprep.subr.mxu0 0.0
    %2190 = vmatpush1.msra.mxu0 0.0
    %2191 = vmatprep.subr.mxu0 0.0
    %2192 = vmatpush1.msra.mxu0 0.0
    %2193 = vmatprep.subr.mxu0 0.0
    %2194 = vmatpush1.msra.mxu0 0.0
    %2195 = vmatprep.subr.mxu0 0.0
    %2196 = vmatpush1.msra.mxu0 0.0
    %2197 = vmatprep.subr.mxu0 0.0
    %2198 = vmatpush1.msra.mxu0 0.0
    %2199 = vmatprep.subr.mxu0 0.0
    %2200 = vmatpush1.msra.mxu0 0.0
    %2201 = vmatprep.subr.mxu0 0.0
    %2202 = vmatpush1.msra.mxu0 0.0
    %2203 = vmatprep.subr.mxu0 0.0
    %2204 = vmatpush1.msra.mxu0 0.0
    %2205 = vmatprep.mubr.f32.mxu0 0.0
    %2206 = vmatmul.mubr.f32.gmra.mrb[0].mxu0 %v182
    %v2207 = vpop.f32.mrb[0].mxu0
    %v2208 = vadd.f32 0.0, %v2207
    %v2209 = vpop.f32.mrb[0].mxu0
    %2210 = vmatprep.mubr.f32.mxu0 0.0
    %2211 = vmatmul.mubr.f32.gmra.mrb[0].mxu0 %v185
    %v2212 = vpop.f32.mrb[0].mxu0
    %v2213 = vadd.f32 0.0, %v2212
    %v2214 = vpop.f32.mrb[0].mxu0
    %2215 = vdwg.mxu0
    %2216 = vmatprep.subr.mxu0 0.0
    %2217 = vmatpush1.msra.mxu0 %v2135
    %2218 = vmatprep.subr.mxu0 0.0
    %2219 = vmatpush1.msra.mxu0 %v2136
    %2220 = vmatprep.subr.mxu0 0.0
    %2221 = vmatpush1.msra.mxu0 0.0
    %2222 = vmatprep.subr.mxu0 0.0
    %2223 = vmatpush1.msra.mxu0 0.0
    %2224 = vmatprep.subr.mxu0 0.0
    %2225 = vmatpush1.msra.mxu0 0.0
    %2226 = vmatprep.subr.mxu0 0.0
    %2227 = vmatpush1.msra.mxu0 0.0
    %2228 = vmatprep.subr.mxu0 0.0
    %2229 = vmatpush1.msra.mxu0 0.0
    %2230 = vmatprep.subr.mxu0 0.0
    %2231 = vmatpush1.msra.mxu0 0.0
    %2232 = vmatprep.subr.mxu0 0.0
    %2233 = vmatpush1.msra.mxu0 0.0
    %2234 = vmatprep.subr.mxu0 0.0
    %2235 = vmatpush1.msra.mxu0 0.0
    %2236 = vmatprep.subr.mxu0 0.0
    %2237 = vmatpush1.msra.mxu0 0.0
    %2238 = vmatprep.subr.mxu0 0.0
    %2239 = vmatpush1.msra.mxu0 0.0
    %2240 = vmatprep.subr.mxu0 0.0
    %2241 = vmatpush1.msra.mxu0 0.0
    %2242 = vmatprep.subr.mxu0 0.0
    %2243 = vmatpush1.msra.mxu0 0.0
    %2244 = vmatprep.subr.mxu0 0.0
    %2245 = vmatpush1.msra.mxu0 0.0
    %2246 = vmatprep.subr.mxu0 0.0
    %2247 = vmatpush1.msra.mxu0 0.0
    %2248 = vmatprep.subr.mxu0 0.0
    %2249 = vmatpush1.msra.mxu0 0.0
    %2250 = vmatprep.subr.mxu0 0.0
    %2251 = vmatpush1.msra.mxu0 0.0
    %2252 = vmatprep.subr.mxu0 0.0
    %2253 = vmatpush1.msra.mxu0 0.0
    %2254 = vmatprep.subr.mxu0 0.0
    %2255 = vmatpush1.msra.mxu0 0.0
    %2256 = vmatprep.subr.mxu0 0.0
    %2257 = vmatpush1.msra.mxu0 0.0
    %2258 = vmatprep.subr.mxu0 0.0
    %2259 = vmatpush1.msra.mxu0 0.0
    %2260 = vmatprep.subr.mxu0 0.0
    %2261 = vmatpush1.msra.mxu0 0.0
    %2262 = vmatprep.subr.mxu0 0.0
    %2263 = vmatpush1.msra.mxu0 0.0
    %2264 = vmatprep.subr.mxu0 0.0
    %2265 = vmatpush1.msra.mxu0 0.0
    %2266 = vmatprep.subr.mxu0 0.0
    %2267 = vmatpush1.msra.mxu0 0.0
    %2268 = vmatprep.subr.mxu0 0.0
    %2269 = vmatpush1.msra.mxu0 0.0
    %2270 = vmatprep.subr.mxu0 0.0
    %2271 = vmatpush1.msra.mxu0 0.0
    %2272 = vmatprep.subr.mxu0 0.0
    %2273 = vmatpush1.msra.mxu0 0.0
    %2274 = vmatprep.subr.mxu0 0.0
    %2275 = vmatpush1.msra.mxu0 0.0
    %2276 = vmatprep.subr.mxu0 0.0
    %2277 = vmatpush1.msra.mxu0 0.0
    %2278 = vmatprep.subr.mxu0 0.0
    %2279 = vmatpush1.msra.mxu0 0.0
    %2280 = vmatprep.mubr.f32.mxu0 0.0
    %2281 = vmatmul.mubr.f32.gmra.mrb[0].mxu0 %v182
    %v2282 = vpop.f32.mrb[0].mxu0
    %v2283 = vadd.f32 0.0, %v2282
    %v2284 = vpop.f32.mrb[0].mxu0
    %2285 = vmatprep.mubr.f32.mxu0 0.0
    %2286 = vmatmul.mubr.f32.gmra.mrb[0].mxu0 %v185
    %v2287 = vpop.f32.mrb[0].mxu0
    %v2288 = vadd.f32 0.0, %v2287
    %v2289 = vpop.f32.mrb[0].mxu0
    %2290 = vdwg.mxu0
    %s2291 = scalar_lea.vmem [#allocation5], 32
    %v2292 = vld [vmem:[%s2291] sm:$0xff]
    %v2293 = vld [vmem:[%s2291 + $0x8] sm:$0xff]
    %v2294 = vld [vmem:[%s2291 + $0x10] sm:$0xff]
    %v2295 = vld [vmem:[%s2291 + $0x18] sm:$0xff]
    %v2297 = vsel %vm1126, %v2208, 0
    %v2300 = vsel %vm1126, %v2213, 0
    %v2303 = vsel %vm1126, %v2283, 0
    %v2306 = vsel %vm1126, %v2288, 0
    %2308 = vmatprep.subr.mxu0 0.0
    %2309 = vmatpush1.msra.mxu0 %v2292
    %2310 = vmatprep.subr.mxu0 0.0
    %2311 = vmatpush1.msra.mxu0 %v2293
    %2312 = vmatprep.subr.mxu0 0.0
    %2313 = vmatpush1.msra.mxu0 %v2294
    %2314 = vmatprep.subr.mxu0 0.0
    %2315 = vmatpush1.msra.mxu0 %v2295
    %2316 = vmatprep.subr.mxu0 0.0
    %2317 = vmatpush1.msra.mxu0 0.0
    %2318 = vmatprep.subr.mxu0 0.0
    %2319 = vmatpush1.msra.mxu0 0.0
    %2320 = vmatprep.subr.mxu0 0.0
    %2321 = vmatpush1.msra.mxu0 0.0
    %2322 = vmatprep.subr.mxu0 0.0
    %2323 = vmatpush1.msra.mxu0 0.0
    %2324 = vmatprep.subr.mxu0 0.0
    %2325 = vmatpush1.msra.mxu0 0.0
    %2326 = vmatprep.subr.mxu0 0.0
    %2327 = vmatpush1.msra.mxu0 0.0
    %2328 = vmatprep.subr.mxu0 0.0
    %2329 = vmatpush1.msra.mxu0 0.0
    %2330 = vmatprep.subr.mxu0 0.0
    %2331 = vmatpush1.msra.mxu0 0.0
    %2332 = vmatprep.subr.mxu0 0.0
    %2333 = vmatpush1.msra.mxu0 0.0
    %2334 = vmatprep.subr.mxu0 0.0
    %2335 = vmatpush1.msra.mxu0 0.0
    %2336 = vmatprep.subr.mxu0 0.0
    %2337 = vmatpush1.msra.mxu0 0.0
    %2338 = vmatprep.subr.mxu0 0.0
    %2339 = vmatpush1.msra.mxu0 0.0
    %2340 = vmatprep.subr.mxu0 0.0
    %2341 = vmatpush1.msra.mxu0 0.0
    %2342 = vmatprep.subr.mxu0 0.0
    %2343 = vmatpush1.msra.mxu0 0.0
    %2344 = vmatprep.subr.mxu0 0.0
    %2345 = vmatpush1.msra.mxu0 0.0
    %2346 = vmatprep.subr.mxu0 0.0
    %2347 = vmatpush1.msra.mxu0 0.0
    %2348 = vmatprep.subr.mxu0 0.0
    %2349 = vmatpush1.msra.mxu0 0.0
    %2350 = vmatprep.subr.mxu0 0.0
    %2351 = vmatpush1.msra.mxu0 0.0
    %2352 = vmatprep.subr.mxu0 0.0
    %2353 = vmatpush1.msra.mxu0 0.0
    %2354 = vmatprep.subr.mxu0 0.0
    %2355 = vmatpush1.msra.mxu0 0.0
    %2356 = vmatprep.subr.mxu0 0.0
    %2357 = vmatpush1.msra.mxu0 0.0
    %2358 = vmatprep.subr.mxu0 0.0
    %2359 = vmatpush1.msra.mxu0 0.0
    %2360 = vmatprep.subr.mxu0 0.0
    %2361 = vmatpush1.msra.mxu0 0.0
    %2362 = vmatprep.subr.mxu0 0.0
    %2363 = vmatpush1.msra.mxu0 0.0
    %2364 = vmatprep.subr.mxu0 0.0
    %2365 = vmatpush1.msra.mxu0 0.0
    %2366 = vmatprep.subr.mxu0 0.0
    %2367 = vmatpush1.msra.mxu0 0.0
    %2368 = vmatprep.subr.mxu0 0.0
    %2369 = vmatpush1.msra.mxu0 0.0
    %2370 = vmatprep.subr.mxu0 0.0
    %2371 = vmatpush1.msra.mxu0 0.0
    %2372 = vmatprep.mubr.f32.mxu0 0.0
    %2373 = vmatmul.mubr.f32.gmra.mrb[0].mxu0 %v2297
    %v2374 = vpop.f32.mrb[0].mxu0
    %v2375 = vadd.f32 0.0, %v2374
    %v2376 = vpop.f32.mrb[0].mxu0
    %2377 = vmatprep.mubr.f32.mxu0 0.0
    %2378 = vmatmul.mubr.f32.gmra.mrb[0].mxu0 %v2300
    %v2379 = vpop.f32.mrb[0].mxu0
    %v2380 = vadd.f32 0.0, %v2379
    %v2381 = vpop.f32.mrb[0].mxu0
    %2382 = vmatprep.mubr.f32.mxu0 0.0
    %2383 = vmatmul.mubr.f32.gmra.mrb[0].mxu0 %v2303
    %v2384 = vpop.f32.mrb[0].mxu0
    %v2385 = vadd.f32 0.0, %v2384
    %v2386 = vpop.f32.mrb[0].mxu0
    %2387 = vmatprep.mubr.f32.mxu0 0.0
    %2388 = vmatmul.mubr.f32.gmra.mrb[0].mxu0 %v2306
    %v2389 = vpop.f32.mrb[0].mxu0
    %v2390 = vadd.f32 0.0, %v2389
    %v2391 = vpop.f32.mrb[0].mxu0
    %2392 = vdwg.mxu0
    %v2394 = vsel %vm1126, %v2133, 0
    %v2397 = vsel %vm1126, %v2134, 0
    %v2400 = vsel %vm1126, %v2135, 0
    %v2403 = vsel %vm1126, %v2136, 0
    %2405 = vmatprep.subr.mxu0 0.0
    %2406 = vmatpush1.msra.mxu0 %v2137
    %2407 = vmatprep.subr.mxu0 0.0
    %2408 = vmatpush1.msra.mxu0 %v2138
    %2409 = vmatprep.subr.mxu0 0.0
    %2410 = vmatpush1.msra.mxu0 %v2139
    %2411 = vmatprep.subr.mxu0 0.0
    %2412 = vmatpush1.msra.mxu0 %v2140
    %2413 = vmatprep.subr.mxu0 0.0
    %2414 = vmatpush1.msra.mxu0 0.0
    %2415 = vmatprep.subr.mxu0 0.0
    %2416 = vmatpush1.msra.mxu0 0.0
    %2417 = vmatprep.subr.mxu0 0.0
    %2418 = vmatpush1.msra.mxu0 0.0
    %2419 = vmatprep.subr.mxu0 0.0
    %2420 = vmatpush1.msra.mxu0 0.0
    %2421 = vmatprep.subr.mxu0 0.0
    %2422 = vmatpush1.msra.mxu0 0.0
    %2423 = vmatprep.subr.mxu0 0.0
    %2424 = vmatpush1.msra.mxu0 0.0
    %2425 = vmatprep.subr.mxu0 0.0
    %2426 = vmatpush1.msra.mxu0 0.0
    %2427 = vmatprep.subr.mxu0 0.0
    %2428 = vmatpush1.msra.mxu0 0.0
    %2429 = vmatprep.subr.mxu0 0.0
    %2430 = vmatpush1.msra.mxu0 0.0
    %2431 = vmatprep.subr.mxu0 0.0
    %2432 = vmatpush1.msra.mxu0 0.0
    %2433 = vmatprep.subr.mxu0 0.0
    %2434 = vmatpush1.msra.mxu0 0.0
    %2435 = vmatprep.subr.mxu0 0.0
    %2436 = vmatpush1.msra.mxu0 0.0
    %2437 = vmatprep.subr.mxu0 0.0
    %2438 = vmatpush1.msra.mxu0 0.0
    %2439 = vmatprep.subr.mxu0 0.0
    %2440 = vmatpush1.msra.mxu0 0.0
    %2441 = vmatprep.subr.mxu0 0.0
    %2442 = vmatpush1.msra.mxu0 0.0
    %2443 = vmatprep.subr.mxu0 0.0
    %2444 = vmatpush1.msra.mxu0 0.0
    %2445 = vmatprep.subr.mxu0 0.0
    %2446 = vmatpush1.msra.mxu0 0.0
    %2447 = vmatprep.subr.mxu0 0.0
    %2448 = vmatpush1.msra.mxu0 0.0
    %2449 = vmatprep.subr.mxu0 0.0
    %2450 = vmatpush1.msra.mxu0 0.0
    %2451 = vmatprep.subr.mxu0 0.0
    %2452 = vmatpush1.msra.mxu0 0.0
    %2453 = vmatprep.subr.mxu0 0.0
    %2454 = vmatpush1.msra.mxu0 0.0
    %2455 = vmatprep.subr.mxu0 0.0
    %2456 = vmatpush1.msra.mxu0 0.0
    %2457 = vmatprep.subr.mxu0 0.0
    %2458 = vmatpush1.msra.mxu0 0.0
    %2459 = vmatprep.subr.mxu0 0.0
    %2460 = vmatpush1.msra.mxu0 0.0
    %2461 = vmatprep.subr.mxu0 0.0
    %2462 = vmatpush1.msra.mxu0 0.0
    %2463 = vmatprep.subr.mxu0 0.0
    %2464 = vmatpush1.msra.mxu0 0.0
    %2465 = vmatprep.subr.mxu0 0.0
    %2466 = vmatpush1.msra.mxu0 0.0
    %2467 = vmatprep.subr.mxu0 0.0
    %2468 = vmatpush1.msra.mxu0 0.0
    %2469 = vmatprep.mubr.f32.mxu0 0.0
    %2470 = vmatmul.mubr.f32.gmra.mrb[0].mxu0 %v2394
    %v2471 = vpop.f32.mrb[0].mxu0
    %v2472 = vadd.f32 %v2375, %v2471
    %v2473 = vpop.f32.mrb[0].mxu0
    %2474 = vmatprep.mubr.f32.mxu0 0.0
    %2475 = vmatmul.mubr.f32.gmra.mrb[0].mxu0 %v2397
    %v2476 = vpop.f32.mrb[0].mxu0
    %v2477 = vadd.f32 %v2380, %v2476
    %v2478 = vpop.f32.mrb[0].mxu0
    %2479 = vmatprep.mubr.f32.mxu0 0.0
    %2480 = vmatmul.mubr.f32.gmra.mrb[0].mxu0 %v2400
    %v2481 = vpop.f32.mrb[0].mxu0
    %v2482 = vadd.f32 %v2385, %v2481
    %v2483 = vpop.f32.mrb[0].mxu0
    %2484 = vmatprep.mubr.f32.mxu0 0.0
    %2485 = vmatmul.mubr.f32.gmra.mrb[0].mxu0 %v2403
    %v2486 = vpop.f32.mrb[0].mxu0
    %v2487 = vadd.f32 %v2390, %v2486
    %v2488 = vpop.f32.mrb[0].mxu0
    %2489 = vdwg.mxu0
    %2490 = vmatprep.subr.mxu0 0.0
    %2491 = vmatpush1.msra.mxu0 %v2208
    %2492 = vmatprep.subr.mxu0 0.0
    %2493 = vmatpush1.msra.mxu0 %v2213
    %2494 = vmatprep.subr.mxu0 0.0
    %2495 = vmatpush1.msra.mxu0 0.0
    %2496 = vmatprep.subr.mxu0 0.0
    %2497 = vmatpush1.msra.mxu0 0.0
    %2498 = vmatprep.subr.mxu0 0.0
    %2499 = vmatpush1.msra.mxu0 0.0
    %2500 = vmatprep.subr.mxu0 0.0
    %2501 = vmatpush1.msra.mxu0 0.0
    %2502 = vmatprep.subr.mxu0 0.0
    %2503 = vmatpush1.msra.mxu0 0.0
    %2504 = vmatprep.subr.mxu0 0.0
    %2505 = vmatpush1.msra.mxu0 0.0
    %2506 = vmatprep.subr.mxu0 0.0
    %2507 = vmatpush1.msra.mxu0 0.0
    %2508 = vmatprep.subr.mxu0 0.0
    %2509 = vmatpush1.msra.mxu0 0.0
    %2510 = vmatprep.subr.mxu0 0.0
    %2511 = vmatpush1.msra.mxu0 0.0
    %2512 = vmatprep.subr.mxu0 0.0
    %2513 = vmatpush1.msra.mxu0 0.0
    %2514 = vmatprep.subr.mxu0 0.0
    %2515 = vmatpush1.msra.mxu0 0.0
    %2516 = vmatprep.subr.mxu0 0.0
    %2517 = vmatpush1.msra.mxu0 0.0
    %2518 = vmatprep.subr.mxu0 0.0
    %2519 = vmatpush1.msra.mxu0 0.0
    %2520 = vmatprep.subr.mxu0 0.0
    %2521 = vmatpush1.msra.mxu0 0.0
    %2522 = vmatprep.subr.mxu0 0.0
    %2523 = vmatpush1.msra.mxu0 0.0
    %2524 = vmatprep.subr.mxu0 0.0
    %2525 = vmatpush1.msra.mxu0 0.0
    %2526 = vmatprep.subr.mxu0 0.0
    %2527 = vmatpush1.msra.mxu0 0.0
    %2528 = vmatprep.subr.mxu0 0.0
    %2529 = vmatpush1.msra.mxu0 0.0
    %2530 = vmatprep.subr.mxu0 0.0
    %2531 = vmatpush1.msra.mxu0 0.0
    %2532 = vmatprep.subr.mxu0 0.0
    %2533 = vmatpush1.msra.mxu0 0.0
    %2534 = vmatprep.subr.mxu0 0.0
    %2535 = vmatpush1.msra.mxu0 0.0
    %2536 = vmatprep.subr.mxu0 0.0
    %2537 = vmatpush1.msra.mxu0 0.0
    %2538 = vmatprep.subr.mxu0 0.0
    %2539 = vmatpush1.msra.mxu0 0.0
    %2540 = vmatprep.subr.mxu0 0.0
    %2541 = vmatpush1.msra.mxu0 0.0
    %2542 = vmatprep.subr.mxu0 0.0
    %2543 = vmatpush1.msra.mxu0 0.0
    %2544 = vmatprep.subr.mxu0 0.0
    %2545 = vmatpush1.msra.mxu0 0.0
    %2546 = vmatprep.subr.mxu0 0.0
    %2547 = vmatpush1.msra.mxu0 0.0
    %2548 = vmatprep.subr.mxu0 0.0
    %2549 = vmatpush1.msra.mxu0 0.0
    %2550 = vmatprep.subr.mxu0 0.0
    %2551 = vmatpush1.msra.mxu0 0.0
    %2552 = vmatprep.subr.mxu0 0.0
    %2553 = vmatpush1.msra.mxu0 0.0
    %2554 = vmatprep.mubr.f32.mxu0 0.0
    %2555 = vmatmul.mubr.f32.gmra.mrb[0].mxu0 %v182
    %v2556 = vpop.f32.mrb[0].mxu0
    %v2557 = vadd.f32 0.0, %v2556
    %v2558 = vpop.f32.mrb[0].mxu0
    %2559 = vmatprep.mubr.f32.mxu0 0.0
    %2560 = vmatmul.mubr.f32.gmra.mrb[0].mxu0 %v185
    %v2561 = vpop.f32.mrb[0].mxu0
    %v2562 = vadd.f32 0.0, %v2561
    %v2563 = vpop.f32.mrb[0].mxu0
    %2564 = vdwg.mxu0
    %v2565 = vmul.f32 %v2557, 2.0
    %v2566 = vmul.f32 %v2562, 2.0
    %v2567 = vsub.f32 %v2565, %v2133
    %v2568 = vsub.f32 %v2566, %v2134
    %2569 = vmatprep.subr.mxu0 0.0
    %2570 = vmatpush1.msra.mxu0 %v2283
    %2571 = vmatprep.subr.mxu0 0.0
    %2572 = vmatpush1.msra.mxu0 %v2288
    %2573 = vmatprep.subr.mxu0 0.0
    %2574 = vmatpush1.msra.mxu0 0.0
    %2575 = vmatprep.subr.mxu0 0.0
    %2576 = vmatpush1.msra.mxu0 0.0
    %2577 = vmatprep.subr.mxu0 0.0
    %2578 = vmatpush1.msra.mxu0 0.0
    %2579 = vmatprep.subr.mxu0 0.0
    %2580 = vmatpush1.msra.mxu0 0.0
    %2581 = vmatprep.subr.mxu0 0.0
    %2582 = vmatpush1.msra.mxu0 0.0
    %2583 = vmatprep.subr.mxu0 0.0
    %2584 = vmatpush1.msra.mxu0 0.0
    %2585 = vmatprep.subr.mxu0 0.0
    %2586 = vmatpush1.msra.mxu0 0.0
    %2587 = vmatprep.subr.mxu0 0.0
    %2588 = vmatpush1.msra.mxu0 0.0
    %2589 = vmatprep.subr.mxu0 0.0
    %2590 = vmatpush1.msra.mxu0 0.0
    %2591 = vmatprep.subr.mxu0 0.0
    %2592 = vmatpush1.msra.mxu0 0.0
    %2593 = vmatprep.subr.mxu0 0.0
    %2594 = vmatpush1.msra.mxu0 0.0
    %2595 = vmatprep.subr.mxu0 0.0
    %2596 = vmatpush1.msra.mxu0 0.0
    %2597 = vmatprep.subr.mxu0 0.0
    %2598 = vmatpush1.msra.mxu0 0.0
    %2599 = vmatprep.subr.mxu0 0.0
    %2600 = vmatpush1.msra.mxu0 0.0
    %2601 = vmatprep.subr.mxu0 0.0
    %2602 = vmatpush1.msra.mxu0 0.0
    %2603 = vmatprep.subr.mxu0 0.0
    %2604 = vmatpush1.msra.mxu0 0.0
    %2605 = vmatprep.subr.mxu0 0.0
    %2606 = vmatpush1.msra.mxu0 0.0
    %2607 = vmatprep.subr.mxu0 0.0
    %2608 = vmatpush1.msra.mxu0 0.0
    %2609 = vmatprep.subr.mxu0 0.0
    %2610 = vmatpush1.msra.mxu0 0.0
    %2611 = vmatprep.subr.mxu0 0.0
    %2612 = vmatpush1.msra.mxu0 0.0
    %2613 = vmatprep.subr.mxu0 0.0
    %2614 = vmatpush1.msra.mxu0 0.0
    %2615 = vmatprep.subr.mxu0 0.0
    %2616 = vmatpush1.msra.mxu0 0.0
    %2617 = vmatprep.subr.mxu0 0.0
    %2618 = vmatpush1.msra.mxu0 0.0
    %2619 = vmatprep.subr.mxu0 0.0
    %2620 = vmatpush1.msra.mxu0 0.0
    %2621 = vmatprep.subr.mxu0 0.0
    %2622 = vmatpush1.msra.mxu0 0.0
    %2623 = vmatprep.subr.mxu0 0.0
    %2624 = vmatpush1.msra.mxu0 0.0
    %2625 = vmatprep.subr.mxu0 0.0
    %2626 = vmatpush1.msra.mxu0 0.0
    %2627 = vmatprep.subr.mxu0 0.0
    %2628 = vmatpush1.msra.mxu0 0.0
    %2629 = vmatprep.subr.mxu0 0.0
    %2630 = vmatpush1.msra.mxu0 0.0
    %2631 = vmatprep.subr.mxu0 0.0
    %2632 = vmatpush1.msra.mxu0 0.0
    %2633 = vmatprep.mubr.f32.mxu0 0.0
    %2634 = vmatmul.mubr.f32.gmra.mrb[0].mxu0 %v182
    %v2635 = vpop.f32.mrb[0].mxu0
    %v2636 = vadd.f32 0.0, %v2635
    %v2637 = vpop.f32.mrb[0].mxu0
    %2638 = vmatprep.mubr.f32.mxu0 0.0
    %2639 = vmatmul.mubr.f32.gmra.mrb[0].mxu0 %v185
    %v2640 = vpop.f32.mrb[0].mxu0
    %v2641 = vadd.f32 0.0, %v2640
    %v2642 = vpop.f32.mrb[0].mxu0
    %2643 = vdwg.mxu0
    %v2644 = vmul.f32 %v2636, 2.0
    %v2645 = vmul.f32 %v2641, 2.0
    %v2646 = vsub.f32 %v2644, %v2135
    %v2647 = vsub.f32 %v2645, %v2136
    %s2648 = scalar_lea.vmem [#allocation5], 64
    %v2649 = vld [vmem:[%s2648] sm:$0xff]
    %v2650 = vld [vmem:[%s2648 + $0x8] sm:$0xff]
    %v2651 = vld [vmem:[%s2648 + $0x10] sm:$0xff]
    %v2652 = vld [vmem:[%s2648 + $0x18] sm:$0xff]
    %v2654 = vsel %vm1126, %v2567, 0
    %v2657 = vsel %vm1126, %v2568, 0
    %v2660 = vsel %vm1126, %v2646, 0
    %v2663 = vsel %vm1126, %v2647, 0
    %2665 = vmatprep.subr.mxu0 0.0
    %2666 = vmatpush1.msra.mxu0 %v2649
    %2667 = vmatprep.subr.mxu0 0.0
    %2668 = vmatpush1.msra.mxu0 %v2650
    %2669 = vmatprep.subr.mxu0 0.0
    %2670 = vmatpush1.msra.mxu0 %v2651
    %2671 = vmatprep.subr.mxu0 0.0
    %2672 = vmatpush1.msra.mxu0 %v2652
    %2673 = vmatprep.subr.mxu0 0.0
    %2674 = vmatpush1.msra.mxu0 0.0
    %2675 = vmatprep.subr.mxu0 0.0
    %2676 = vmatpush1.msra.mxu0 0.0
    %2677 = vmatprep.subr.mxu0 0.0
    %2678 = vmatpush1.msra.mxu0 0.0
    %2679 = vmatprep.subr.mxu0 0.0
    %2680 = vmatpush1.msra.mxu0 0.0
    %2681 = vmatprep.subr.mxu0 0.0
    %2682 = vmatpush1.msra.mxu0 0.0
    %2683 = vmatprep.subr.mxu0 0.0
    %2684 = vmatpush1.msra.mxu0 0.0
    %2685 = vmatprep.subr.mxu0 0.0
    %2686 = vmatpush1.msra.mxu0 0.0
    %2687 = vmatprep.subr.mxu0 0.0
    %2688 = vmatpush1.msra.mxu0 0.0
    %2689 = vmatprep.subr.mxu0 0.0
    %2690 = vmatpush1.msra.mxu0 0.0
    %2691 = vmatprep.subr.mxu0 0.0
    %2692 = vmatpush1.msra.mxu0 0.0
    %2693 = vmatprep.subr.mxu0 0.0
    %2694 = vmatpush1.msra.mxu0 0.0
    %2695 = vmatprep.subr.mxu0 0.0
    %2696 = vmatpush1.msra.mxu0 0.0
    %2697 = vmatprep.subr.mxu0 0.0
    %2698 = vmatpush1.msra.mxu0 0.0
    %2699 = vmatprep.subr.mxu0 0.0
    %2700 = vmatpush1.msra.mxu0 0.0
    %2701 = vmatprep.subr.mxu0 0.0
    %2702 = vmatpush1.msra.mxu0 0.0
    %2703 = vmatprep.subr.mxu0 0.0
    %2704 = vmatpush1.msra.mxu0 0.0
    %2705 = vmatprep.subr.mxu0 0.0
    %2706 = vmatpush1.msra.mxu0 0.0
    %2707 = vmatprep.subr.mxu0 0.0
    %2708 = vmatpush1.msra.mxu0 0.0
    %2709 = vmatprep.subr.mxu0 0.0
    %2710 = vmatpush1.msra.mxu0 0.0
    %2711 = vmatprep.subr.mxu0 0.0
    %2712 = vmatpush1.msra.mxu0 0.0
    %2713 = vmatprep.subr.mxu0 0.0
    %2714 = vmatpush1.msra.mxu0 0.0
    %2715 = vmatprep.subr.mxu0 0.0
    %2716 = vmatpush1.msra.mxu0 0.0
    %2717 = vmatprep.subr.mxu0 0.0
    %2718 = vmatpush1.msra.mxu0 0.0
    %2719 = vmatprep.subr.mxu0 0.0
    %2720 = vmatpush1.msra.mxu0 0.0
    %2721 = vmatprep.subr.mxu0 0.0
    %2722 = vmatpush1.msra.mxu0 0.0
    %2723 = vmatprep.subr.mxu0 0.0
    %2724 = vmatpush1.msra.mxu0 0.0
    %2725 = vmatprep.subr.mxu0 0.0
    %2726 = vmatpush1.msra.mxu0 0.0
    %2727 = vmatprep.subr.mxu0 0.0
    %2728 = vmatpush1.msra.mxu0 0.0
    %2729 = vmatprep.mubr.f32.mxu0 0.0
    %2730 = vmatmul.mubr.f32.gmra.mrb[0].mxu0 %v2654
    %v2731 = vpop.f32.mrb[0].mxu0
    %v2732 = vadd.f32 0.0, %v2731
    %v2733 = vpop.f32.mrb[0].mxu0
    %2734 = vmatprep.mubr.f32.mxu0 0.0
    %2735 = vmatmul.mubr.f32.gmra.mrb[0].mxu0 %v2657
    %v2736 = vpop.f32.mrb[0].mxu0
    %v2737 = vadd.f32 0.0, %v2736
    %v2738 = vpop.f32.mrb[0].mxu0
    %2739 = vmatprep.mubr.f32.mxu0 0.0
    %2740 = vmatmul.mubr.f32.gmra.mrb[0].mxu0 %v2660
    %v2741 = vpop.f32.mrb[0].mxu0
    %v2742 = vadd.f32 0.0, %v2741
    %v2743 = vpop.f32.mrb[0].mxu0
    %2744 = vmatprep.mubr.f32.mxu0 0.0
    %2745 = vmatmul.mubr.f32.gmra.mrb[0].mxu0 %v2663
    %v2746 = vpop.f32.mrb[0].mxu0
    %v2747 = vadd.f32 0.0, %v2746
    %v2748 = vpop.f32.mrb[0].mxu0
    %2749 = vdwg.mxu0
    %v2750 = vadd.f32 %v2472, %v2732
    %v2751 = vadd.f32 %v2477, %v2737
    %v2752 = vadd.f32 %v2482, %v2742
    %v2753 = vadd.f32 %v2487, %v2747
    %2754 = vmatprep.subr.mxu0 0.0
    %2755 = vmatpush1.msra.mxu0 %v2208
    %2756 = vmatprep.subr.mxu0 0.0
    %2757 = vmatpush1.msra.mxu0 %v2213
    %2758 = vmatprep.subr.mxu0 0.0
    %2759 = vmatpush1.msra.mxu0 0.0
    %2760 = vmatprep.subr.mxu0 0.0
    %2761 = vmatpush1.msra.mxu0 0.0
    %2762 = vmatprep.subr.mxu0 0.0
    %2763 = vmatpush1.msra.mxu0 0.0
    %2764 = vmatprep.subr.mxu0 0.0
    %2765 = vmatpush1.msra.mxu0 0.0
    %2766 = vmatprep.subr.mxu0 0.0
    %2767 = vmatpush1.msra.mxu0 0.0
    %2768 = vmatprep.subr.mxu0 0.0
    %2769 = vmatpush1.msra.mxu0 0.0
    %2770 = vmatprep.subr.mxu0 0.0
    %2771 = vmatpush1.msra.mxu0 0.0
    %2772 = vmatprep.subr.mxu0 0.0
    %2773 = vmatpush1.msra.mxu0 0.0
    %2774 = vmatprep.subr.mxu0 0.0
    %2775 = vmatpush1.msra.mxu0 0.0
    %2776 = vmatprep.subr.mxu0 0.0
    %2777 = vmatpush1.msra.mxu0 0.0
    %2778 = vmatprep.subr.mxu0 0.0
    %2779 = vmatpush1.msra.mxu0 0.0
    %2780 = vmatprep.subr.mxu0 0.0
    %2781 = vmatpush1.msra.mxu0 0.0
    %2782 = vmatprep.subr.mxu0 0.0
    %2783 = vmatpush1.msra.mxu0 0.0
    %2784 = vmatprep.subr.mxu0 0.0
    %2785 = vmatpush1.msra.mxu0 0.0
    %2786 = vmatprep.subr.mxu0 0.0
    %2787 = vmatpush1.msra.mxu0 0.0
    %2788 = vmatprep.subr.mxu0 0.0
    %2789 = vmatpush1.msra.mxu0 0.0
    %2790 = vmatprep.subr.mxu0 0.0
    %2791 = vmatpush1.msra.mxu0 0.0
    %2792 = vmatprep.subr.mxu0 0.0
    %2793 = vmatpush1.msra.mxu0 0.0
    %2794 = vmatprep.subr.mxu0 0.0
    %2795 = vmatpush1.msra.mxu0 0.0
    %2796 = vmatprep.subr.mxu0 0.0
    %2797 = vmatpush1.msra.mxu0 0.0
    %2798 = vmatprep.subr.mxu0 0.0
    %2799 = vmatpush1.msra.mxu0 0.0
    %2800 = vmatprep.subr.mxu0 0.0
    %2801 = vmatpush1.msra.mxu0 0.0
    %2802 = vmatprep.subr.mxu0 0.0
    %2803 = vmatpush1.msra.mxu0 0.0
    %2804 = vmatprep.subr.mxu0 0.0
    %2805 = vmatpush1.msra.mxu0 0.0
    %2806 = vmatprep.subr.mxu0 0.0
    %2807 = vmatpush1.msra.mxu0 0.0
    %2808 = vmatprep.subr.mxu0 0.0
    %2809 = vmatpush1.msra.mxu0 0.0
    %2810 = vmatprep.subr.mxu0 0.0
    %2811 = vmatpush1.msra.mxu0 0.0
    %2812 = vmatprep.subr.mxu0 0.0
    %2813 = vmatpush1.msra.mxu0 0.0
    %2814 = vmatprep.subr.mxu0 0.0
    %2815 = vmatpush1.msra.mxu0 0.0
    %2816 = vmatprep.subr.mxu0 0.0
    %2817 = vmatpush1.msra.mxu0 0.0
    %2818 = vmatprep.mubr.f32.mxu0 0.0
    %2819 = vmatmul.mubr.f32.gmra.mrb[0].mxu0 %v571
    %v2820 = vpop.f32.mrb[0].mxu0
    %v2821 = vadd.f32 0.0, %v2820
    %v2822 = vpop.f32.mrb[0].mxu0
    %2823 = vmatprep.mubr.f32.mxu0 0.0
    %2824 = vmatmul.mubr.f32.gmra.mrb[0].mxu0 %v574
    %v2825 = vpop.f32.mrb[0].mxu0
    %v2826 = vadd.f32 0.0, %v2825
    %v2827 = vpop.f32.mrb[0].mxu0
    %2828 = vdwg.mxu0
    %2829 = vmatprep.subr.mxu0 0.0
    %2830 = vmatpush1.msra.mxu0 %v2283
    %2831 = vmatprep.subr.mxu0 0.0
    %2832 = vmatpush1.msra.mxu0 %v2288
    %2833 = vmatprep.subr.mxu0 0.0
    %2834 = vmatpush1.msra.mxu0 0.0
    %2835 = vmatprep.subr.mxu0 0.0
    %2836 = vmatpush1.msra.mxu0 0.0
    %2837 = vmatprep.subr.mxu0 0.0
    %2838 = vmatpush1.msra.mxu0 0.0
    %2839 = vmatprep.subr.mxu0 0.0
    %2840 = vmatpush1.msra.mxu0 0.0
    %2841 = vmatprep.subr.mxu0 0.0
    %2842 = vmatpush1.msra.mxu0 0.0
    %2843 = vmatprep.subr.mxu0 0.0
    %2844 = vmatpush1.msra.mxu0 0.0
    %2845 = vmatprep.subr.mxu0 0.0
    %2846 = vmatpush1.msra.mxu0 0.0
    %2847 = vmatprep.subr.mxu0 0.0
    %2848 = vmatpush1.msra.mxu0 0.0
    %2849 = vmatprep.subr.mxu0 0.0
    %2850 = vmatpush1.msra.mxu0 0.0
    %2851 = vmatprep.subr.mxu0 0.0
    %2852 = vmatpush1.msra.mxu0 0.0
    %2853 = vmatprep.subr.mxu0 0.0
    %2854 = vmatpush1.msra.mxu0 0.0
    %2855 = vmatprep.subr.mxu0 0.0
    %2856 = vmatpush1.msra.mxu0 0.0
    %2857 = vmatprep.subr.mxu0 0.0
    %2858 = vmatpush1.msra.mxu0 0.0
    %2859 = vmatprep.subr.mxu0 0.0
    %2860 = vmatpush1.msra.mxu0 0.0
    %2861 = vmatprep.subr.mxu0 0.0
    %2862 = vmatpush1.msra.mxu0 0.0
    %2863 = vmatprep.subr.mxu0 0.0
    %2864 = vmatpush1.msra.mxu0 0.0
    %2865 = vmatprep.subr.mxu0 0.0
    %2866 = vmatpush1.msra.mxu0 0.0
    %2867 = vmatprep.subr.mxu0 0.0
    %2868 = vmatpush1.msra.mxu0 0.0
    %2869 = vmatprep.subr.mxu0 0.0
    %2870 = vmatpush1.msra.mxu0 0.0
    %2871 = vmatprep.subr.mxu0 0.0
    %2872 = vmatpush1.msra.mxu0 0.0
    %2873 = vmatprep.subr.mxu0 0.0
    %2874 = vmatpush1.msra.mxu0 0.0
    %2875 = vmatprep.subr.mxu0 0.0
    %2876 = vmatpush1.msra.mxu0 0.0
    %2877 = vmatprep.subr.mxu0 0.0
    %2878 = vmatpush1.msra.mxu0 0.0
    %2879 = vmatprep.subr.mxu0 0.0
    %2880 = vmatpush1.msra.mxu0 0.0
    %2881 = vmatprep.subr.mxu0 0.0
    %2882 = vmatpush1.msra.mxu0 0.0
    %2883 = vmatprep.subr.mxu0 0.0
    %2884 = vmatpush1.msra.mxu0 0.0
    %2885 = vmatprep.subr.mxu0 0.0
    %2886 = vmatpush1.msra.mxu0 0.0
    %2887 = vmatprep.subr.mxu0 0.0
    %2888 = vmatpush1.msra.mxu0 0.0
    %2889 = vmatprep.subr.mxu0 0.0
    %2890 = vmatpush1.msra.mxu0 0.0
    %2891 = vmatprep.subr.mxu0 0.0
    %2892 = vmatpush1.msra.mxu0 0.0
    %2893 = vmatprep.mubr.f32.mxu0 0.0
    %2894 = vmatmul.mubr.f32.gmra.mrb[0].mxu0 %v571
    %v2895 = vpop.f32.mrb[0].mxu0
    %v2896 = vadd.f32 0.0, %v2895
    %v2897 = vpop.f32.mrb[0].mxu0
    %2898 = vmatprep.mubr.f32.mxu0 0.0
    %2899 = vmatmul.mubr.f32.gmra.mrb[0].mxu0 %v574
    %v2900 = vpop.f32.mrb[0].mxu0
    %v2901 = vadd.f32 0.0, %v2900
    %v2902 = vpop.f32.mrb[0].mxu0
    %2903 = vdwg.mxu0
    %s2904 = scalar_lea.vmem [#allocation5], 96
    %v2905 = vld [vmem:[%s2904] sm:$0xff]
    %v2906 = vld [vmem:[%s2904 + $0x8] sm:$0xff]
    %v2907 = vld [vmem:[%s2904 + $0x10] sm:$0xff]
    %v2908 = vld [vmem:[%s2904 + $0x18] sm:$0xff]
    %v2910 = vsel %vm1126, %v2821, 0
    %v2913 = vsel %vm1126, %v2826, 0
    %v2916 = vsel %vm1126, %v2896, 0
    %v2919 = vsel %vm1126, %v2901, 0
    %2921 = vmatprep.subr.mxu0 0.0
    %2922 = vmatpush1.msra.mxu0 %v2905
    %2923 = vmatprep.subr.mxu0 0.0
    %2924 = vmatpush1.msra.mxu0 %v2906
    %2925 = vmatprep.subr.mxu0 0.0
    %2926 = vmatpush1.msra.mxu0 %v2907
    %2927 = vmatprep.subr.mxu0 0.0
    %2928 = vmatpush1.msra.mxu0 %v2908
    %2929 = vmatprep.subr.mxu0 0.0
    %2930 = vmatpush1.msra.mxu0 0.0
    %2931 = vmatprep.subr.mxu0 0.0
    %2932 = vmatpush1.msra.mxu0 0.0
    %2933 = vmatprep.subr.mxu0 0.0
    %2934 = vmatpush1.msra.mxu0 0.0
    %2935 = vmatprep.subr.mxu0 0.0
    %2936 = vmatpush1.msra.mxu0 0.0
    %2937 = vmatprep.subr.mxu0 0.0
    %2938 = vmatpush1.msra.mxu0 0.0
    %2939 = vmatprep.subr.mxu0 0.0
    %2940 = vmatpush1.msra.mxu0 0.0
    %2941 = vmatprep.subr.mxu0 0.0
    %2942 = vmatpush1.msra.mxu0 0.0
    %2943 = vmatprep.subr.mxu0 0.0
    %2944 = vmatpush1.msra.mxu0 0.0
    %2945 = vmatprep.subr.mxu0 0.0
    %2946 = vmatpush1.msra.mxu0 0.0
    %2947 = vmatprep.subr.mxu0 0.0
    %2948 = vmatpush1.msra.mxu0 0.0
    %2949 = vmatprep.subr.mxu0 0.0
    %2950 = vmatpush1.msra.mxu0 0.0
    %2951 = vmatprep.subr.mxu0 0.0
    %2952 = vmatpush1.msra.mxu0 0.0
    %2953 = vmatprep.subr.mxu0 0.0
    %2954 = vmatpush1.msra.mxu0 0.0
    %2955 = vmatprep.subr.mxu0 0.0
    %2956 = vmatpush1.msra.mxu0 0.0
    %2957 = vmatprep.subr.mxu0 0.0
    %2958 = vmatpush1.msra.mxu0 0.0
    %2959 = vmatprep.subr.mxu0 0.0
    %2960 = vmatpush1.msra.mxu0 0.0
    %2961 = vmatprep.subr.mxu0 0.0
    %2962 = vmatpush1.msra.mxu0 0.0
    %2963 = vmatprep.subr.mxu0 0.0
    %2964 = vmatpush1.msra.mxu0 0.0
    %2965 = vmatprep.subr.mxu0 0.0
    %2966 = vmatpush1.msra.mxu0 0.0
    %2967 = vmatprep.subr.mxu0 0.0
    %2968 = vmatpush1.msra.mxu0 0.0
    %2969 = vmatprep.subr.mxu0 0.0
    %2970 = vmatpush1.msra.mxu0 0.0
    %2971 = vmatprep.subr.mxu0 0.0
    %2972 = vmatpush1.msra.mxu0 0.0
    %2973 = vmatprep.subr.mxu0 0.0
    %2974 = vmatpush1.msra.mxu0 0.0
    %2975 = vmatprep.subr.mxu0 0.0
    %2976 = vmatpush1.msra.mxu0 0.0
    %2977 = vmatprep.subr.mxu0 0.0
    %2978 = vmatpush1.msra.mxu0 0.0
    %2979 = vmatprep.subr.mxu0 0.0
    %2980 = vmatpush1.msra.mxu0 0.0
    %2981 = vmatprep.subr.mxu0 0.0
    %2982 = vmatpush1.msra.mxu0 0.0
    %2983 = vmatprep.subr.mxu0 0.0
    %2984 = vmatpush1.msra.mxu0 0.0
    %2985 = vmatprep.mubr.f32.mxu0 0.0
    %2986 = vmatmul.mubr.f32.gmra.mrb[0].mxu0 %v2910
    %v2987 = vpop.f32.mrb[0].mxu0
    %v2988 = vadd.f32 0.0, %v2987
    %v2989 = vpop.f32.mrb[0].mxu0
    %2990 = vmatprep.mubr.f32.mxu0 0.0
    %2991 = vmatmul.mubr.f32.gmra.mrb[0].mxu0 %v2913
    %v2992 = vpop.f32.mrb[0].mxu0
    %v2993 = vadd.f32 0.0, %v2992
    %v2994 = vpop.f32.mrb[0].mxu0
    %2995 = vmatprep.mubr.f32.mxu0 0.0
    %2996 = vmatmul.mubr.f32.gmra.mrb[0].mxu0 %v2916
    %v2997 = vpop.f32.mrb[0].mxu0
    %v2998 = vadd.f32 0.0, %v2997
    %v2999 = vpop.f32.mrb[0].mxu0
    %3000 = vmatprep.mubr.f32.mxu0 0.0
    %3001 = vmatmul.mubr.f32.gmra.mrb[0].mxu0 %v2919
    %v3002 = vpop.f32.mrb[0].mxu0
    %v3003 = vadd.f32 0.0, %v3002
    %v3004 = vpop.f32.mrb[0].mxu0
    %3005 = vdwg.mxu0
    %v3006 = vadd.f32 %v2750, %v2988
    %v3007 = vadd.f32 %v2751, %v2993
    %v3008 = vadd.f32 %v2752, %v2998
    %v3009 = vadd.f32 %v2753, %v3003
    %3010 = vmatprep.subr.mxu0 0.0
    %3011 = vmatpush1.msra.mxu0 %v2821
    %3012 = vmatprep.subr.mxu0 0.0
    %3013 = vmatpush1.msra.mxu0 %v2826
    %3014 = vmatprep.subr.mxu0 0.0
    %3015 = vmatpush1.msra.mxu0 0.0
    %3016 = vmatprep.subr.mxu0 0.0
    %3017 = vmatpush1.msra.mxu0 0.0
    %3018 = vmatprep.subr.mxu0 0.0
    %3019 = vmatpush1.msra.mxu0 0.0
    %3020 = vmatprep.subr.mxu0 0.0
    %3021 = vmatpush1.msra.mxu0 0.0
    %3022 = vmatprep.subr.mxu0 0.0
    %3023 = vmatpush1.msra.mxu0 0.0
    %3024 = vmatprep.subr.mxu0 0.0
    %3025 = vmatpush1.msra.mxu0 0.0
    %3026 = vmatprep.subr.mxu0 0.0
    %3027 = vmatpush1.msra.mxu0 0.0
    %3028 = vmatprep.subr.mxu0 0.0
    %3029 = vmatpush1.msra.mxu0 0.0
    %3030 = vmatprep.subr.mxu0 0.0
    %3031 = vmatpush1.msra.mxu0 0.0
    %3032 = vmatprep.subr.mxu0 0.0
    %3033 = vmatpush1.msra.mxu0 0.0
    %3034 = vmatprep.subr.mxu0 0.0
    %3035 = vmatpush1.msra.mxu0 0.0
    %3036 = vmatprep.subr.mxu0 0.0
    %3037 = vmatpush1.msra.mxu0 0.0
    %3038 = vmatprep.subr.mxu0 0.0
    %3039 = vmatpush1.msra.mxu0 0.0
    %3040 = vmatprep.subr.mxu0 0.0
    %3041 = vmatpush1.msra.mxu0 0.0
    %3042 = vmatprep.subr.mxu0 0.0
    %3043 = vmatpush1.msra.mxu0 0.0
    %3044 = vmatprep.subr.mxu0 0.0
    %3045 = vmatpush1.msra.mxu0 0.0
    %3046 = vmatprep.subr.mxu0 0.0
    %3047 = vmatpush1.msra.mxu0 0.0
    %3048 = vmatprep.subr.mxu0 0.0
    %3049 = vmatpush1.msra.mxu0 0.0
    %3050 = vmatprep.subr.mxu0 0.0
    %3051 = vmatpush1.msra.mxu0 0.0
    %3052 = vmatprep.subr.mxu0 0.0
    %3053 = vmatpush1.msra.mxu0 0.0
    %3054 = vmatprep.subr.mxu0 0.0
    %3055 = vmatpush1.msra.mxu0 0.0
    %3056 = vmatprep.subr.mxu0 0.0
    %3057 = vmatpush1.msra.mxu0 0.0
    %3058 = vmatprep.subr.mxu0 0.0
    %3059 = vmatpush1.msra.mxu0 0.0
    %3060 = vmatprep.subr.mxu0 0.0
    %3061 = vmatpush1.msra.mxu0 0.0
    %3062 = vmatprep.subr.mxu0 0.0
    %3063 = vmatpush1.msra.mxu0 0.0
    %3064 = vmatprep.subr.mxu0 0.0
    %3065 = vmatpush1.msra.mxu0 0.0
    %3066 = vmatprep.subr.mxu0 0.0
    %3067 = vmatpush1.msra.mxu0 0.0
    %3068 = vmatprep.subr.mxu0 0.0
    %3069 = vmatpush1.msra.mxu0 0.0
    %3070 = vmatprep.subr.mxu0 0.0
    %3071 = vmatpush1.msra.mxu0 0.0
    %3072 = vmatprep.subr.mxu0 0.0
    %3073 = vmatpush1.msra.mxu0 0.0
    %3074 = vmatprep.mubr.f32.mxu0 0.0
    %3075 = vmatmul.mubr.f32.gmra.mrb[0].mxu0 %v571
    %v3076 = vpop.f32.mrb[0].mxu0
    %v3077 = vadd.f32 0.0, %v3076
    %v3078 = vpop.f32.mrb[0].mxu0
    %3079 = vmatprep.mubr.f32.mxu0 0.0
    %3080 = vmatmul.mubr.f32.gmra.mrb[0].mxu0 %v574
    %v3081 = vpop.f32.mrb[0].mxu0
    %v3082 = vadd.f32 0.0, %v3081
    %v3083 = vpop.f32.mrb[0].mxu0
    %3084 = vdwg.mxu0
    %v3085 = vmul.f32 %v3077, 2.0
    %v3086 = vmul.f32 %v3082, 2.0
    %v3087 = vsub.f32 %v3085, %v2208
    %v3088 = vsub.f32 %v3086, %v2213
    %3089 = vmatprep.subr.mxu0 0.0
    %3090 = vmatpush1.msra.mxu0 %v2896
    %3091 = vmatprep.subr.mxu0 0.0
    %3092 = vmatpush1.msra.mxu0 %v2901
    %3093 = vmatprep.subr.mxu0 0.0
    %3094 = vmatpush1.msra.mxu0 0.0
    %3095 = vmatprep.subr.mxu0 0.0
    %3096 = vmatpush1.msra.mxu0 0.0
    %3097 = vmatprep.subr.mxu0 0.0
    %3098 = vmatpush1.msra.mxu0 0.0
    %3099 = vmatprep.subr.mxu0 0.0
    %3100 = vmatpush1.msra.mxu0 0.0
    %3101 = vmatprep.subr.mxu0 0.0
    %3102 = vmatpush1.msra.mxu0 0.0
    %3103 = vmatprep.subr.mxu0 0.0
    %3104 = vmatpush1.msra.mxu0 0.0
    %3105 = vmatprep.subr.mxu0 0.0
    %3106 = vmatpush1.msra.mxu0 0.0
    %3107 = vmatprep.subr.mxu0 0.0
    %3108 = vmatpush1.msra.mxu0 0.0
    %3109 = vmatprep.subr.mxu0 0.0
    %3110 = vmatpush1.msra.mxu0 0.0
    %3111 = vmatprep.subr.mxu0 0.0
    %3112 = vmatpush1.msra.mxu0 0.0
    %3113 = vmatprep.subr.mxu0 0.0
    %3114 = vmatpush1.msra.mxu0 0.0
    %3115 = vmatprep.subr.mxu0 0.0
    %3116 = vmatpush1.msra.mxu0 0.0
    %3117 = vmatprep.subr.mxu0 0.0
    %3118 = vmatpush1.msra.mxu0 0.0
    %3119 = vmatprep.subr.mxu0 0.0
    %3120 = vmatpush1.msra.mxu0 0.0
    %3121 = vmatprep.subr.mxu0 0.0
    %3122 = vmatpush1.msra.mxu0 0.0
    %3123 = vmatprep.subr.mxu0 0.0
    %3124 = vmatpush1.msra.mxu0 0.0
    %3125 = vmatprep.subr.mxu0 0.0
    %3126 = vmatpush1.msra.mxu0 0.0
    %3127 = vmatprep.subr.mxu0 0.0
    %3128 = vmatpush1.msra.mxu0 0.0
    %3129 = vmatprep.subr.mxu0 0.0
    %3130 = vmatpush1.msra.mxu0 0.0
    %3131 = vmatprep.subr.mxu0 0.0
    %3132 = vmatpush1.msra.mxu0 0.0
    %3133 = vmatprep.subr.mxu0 0.0
    %3134 = vmatpush1.msra.mxu0 0.0
    %3135 = vmatprep.subr.mxu0 0.0
    %3136 = vmatpush1.msra.mxu0 0.0
    %3137 = vmatprep.subr.mxu0 0.0
    %3138 = vmatpush1.msra.mxu0 0.0
    %3139 = vmatprep.subr.mxu0 0.0
    %3140 = vmatpush1.msra.mxu0 0.0
    %3141 = vmatprep.subr.mxu0 0.0
    %3142 = vmatpush1.msra.mxu0 0.0
    %3143 = vmatprep.subr.mxu0 0.0
    %3144 = vmatpush1.msra.mxu0 0.0
    %3145 = vmatprep.subr.mxu0 0.0
    %3146 = vmatpush1.msra.mxu0 0.0
    %3147 = vmatprep.subr.mxu0 0.0
    %3148 = vmatpush1.msra.mxu0 0.0
    %3149 = vmatprep.subr.mxu0 0.0
    %3150 = vmatpush1.msra.mxu0 0.0
    %3151 = vmatprep.subr.mxu0 0.0
    %3152 = vmatpush1.msra.mxu0 0.0
    %3153 = vmatprep.mubr.f32.mxu0 0.0
    %3154 = vmatmul.mubr.f32.gmra.mrb[0].mxu0 %v571
    %v3155 = vpop.f32.mrb[0].mxu0
    %v3156 = vadd.f32 0.0, %v3155
    %v3157 = vpop.f32.mrb[0].mxu0
    %3158 = vmatprep.mubr.f32.mxu0 0.0
    %3159 = vmatmul.mubr.f32.gmra.mrb[0].mxu0 %v574
    %v3160 = vpop.f32.mrb[0].mxu0
    %v3161 = vadd.f32 0.0, %v3160
    %v3162 = vpop.f32.mrb[0].mxu0
    %3163 = vdwg.mxu0
    %v3164 = vmul.f32 %v3156, 2.0
    %v3165 = vmul.f32 %v3161, 2.0
    %v3166 = vsub.f32 %v3164, %v2283
    %v3167 = vsub.f32 %v3165, %v2288
    %s3168 = scalar_lea.vmem [#allocation5], 128
    %v3169 = vld [vmem:[%s3168] sm:$0xff]
    %v3170 = vld [vmem:[%s3168 + $0x8] sm:$0xff]
    %v3171 = vld [vmem:[%s3168 + $0x10] sm:$0xff]
    %v3172 = vld [vmem:[%s3168 + $0x18] sm:$0xff]
    %v3174 = vsel %vm1126, %v3087, 0
    %v3177 = vsel %vm1126, %v3088, 0
    %v3180 = vsel %vm1126, %v3166, 0
    %v3183 = vsel %vm1126, %v3167, 0
    %3185 = vmatprep.subr.mxu0 0.0
    %3186 = vmatpush1.msra.mxu0 %v3169
    %3187 = vmatprep.subr.mxu0 0.0
    %3188 = vmatpush1.msra.mxu0 %v3170
    %3189 = vmatprep.subr.mxu0 0.0
    %3190 = vmatpush1.msra.mxu0 %v3171
    %3191 = vmatprep.subr.mxu0 0.0
    %3192 = vmatpush1.msra.mxu0 %v3172
    %3193 = vmatprep.subr.mxu0 0.0
    %3194 = vmatpush1.msra.mxu0 0.0
    %3195 = vmatprep.subr.mxu0 0.0
    %3196 = vmatpush1.msra.mxu0 0.0
    %3197 = vmatprep.subr.mxu0 0.0
    %3198 = vmatpush1.msra.mxu0 0.0
    %3199 = vmatprep.subr.mxu0 0.0
    %3200 = vmatpush1.msra.mxu0 0.0
    %3201 = vmatprep.subr.mxu0 0.0
    %3202 = vmatpush1.msra.mxu0 0.0
    %3203 = vmatprep.subr.mxu0 0.0
    %3204 = vmatpush1.msra.mxu0 0.0
    %3205 = vmatprep.subr.mxu0 0.0
    %3206 = vmatpush1.msra.mxu0 0.0
    %3207 = vmatprep.subr.mxu0 0.0
    %3208 = vmatpush1.msra.mxu0 0.0
    %3209 = vmatprep.subr.mxu0 0.0
    %3210 = vmatpush1.msra.mxu0 0.0
    %3211 = vmatprep.subr.mxu0 0.0
    %3212 = vmatpush1.msra.mxu0 0.0
    %3213 = vmatprep.subr.mxu0 0.0
    %3214 = vmatpush1.msra.mxu0 0.0
    %3215 = vmatprep.subr.mxu0 0.0
    %3216 = vmatpush1.msra.mxu0 0.0
    %3217 = vmatprep.subr.mxu0 0.0
    %3218 = vmatpush1.msra.mxu0 0.0
    %3219 = vmatprep.subr.mxu0 0.0
    %3220 = vmatpush1.msra.mxu0 0.0
    %3221 = vmatprep.subr.mxu0 0.0
    %3222 = vmatpush1.msra.mxu0 0.0
    %3223 = vmatprep.subr.mxu0 0.0
    %3224 = vmatpush1.msra.mxu0 0.0
    %3225 = vmatprep.subr.mxu0 0.0
    %3226 = vmatpush1.msra.mxu0 0.0
    %3227 = vmatprep.subr.mxu0 0.0
    %3228 = vmatpush1.msra.mxu0 0.0
    %3229 = vmatprep.subr.mxu0 0.0
    %3230 = vmatpush1.msra.mxu0 0.0
    %3231 = vmatprep.subr.mxu0 0.0
    %3232 = vmatpush1.msra.mxu0 0.0
    %3233 = vmatprep.subr.mxu0 0.0
    %3234 = vmatpush1.msra.mxu0 0.0
    %3235 = vmatprep.subr.mxu0 0.0
    %3236 = vmatpush1.msra.mxu0 0.0
    %3237 = vmatprep.subr.mxu0 0.0
    %3238 = vmatpush1.msra.mxu0 0.0
    %3239 = vmatprep.subr.mxu0 0.0
    %3240 = vmatpush1.msra.mxu0 0.0
    %3241 = vmatprep.subr.mxu0 0.0
    %3242 = vmatpush1.msra.mxu0 0.0
    %3243 = vmatprep.subr.mxu0 0.0
    %3244 = vmatpush1.msra.mxu0 0.0
    %3245 = vmatprep.subr.mxu0 0.0
    %3246 = vmatpush1.msra.mxu0 0.0
    %3247 = vmatprep.subr.mxu0 0.0
    %3248 = vmatpush1.msra.mxu0 0.0
    %3249 = vmatprep.mubr.f32.mxu0 0.0
    %3250 = vmatmul.mubr.f32.gmra.mrb[0].mxu0 %v3174
    %v3251 = vpop.f32.mrb[0].mxu0
    %v3252 = vadd.f32 0.0, %v3251
    %v3253 = vpop.f32.mrb[0].mxu0
    %3254 = vmatprep.mubr.f32.mxu0 0.0
    %3255 = vmatmul.mubr.f32.gmra.mrb[0].mxu0 %v3177
    %v3256 = vpop.f32.mrb[0].mxu0
    %v3257 = vadd.f32 0.0, %v3256
    %v3258 = vpop.f32.mrb[0].mxu0
    %3259 = vmatprep.mubr.f32.mxu0 0.0
    %3260 = vmatmul.mubr.f32.gmra.mrb[0].mxu0 %v3180
    %v3261 = vpop.f32.mrb[0].mxu0
    %v3262 = vadd.f32 0.0, %v3261
    %v3263 = vpop.f32.mrb[0].mxu0
    %3264 = vmatprep.mubr.f32.mxu0 0.0
    %3265 = vmatmul.mubr.f32.gmra.mrb[0].mxu0 %v3183
    %v3266 = vpop.f32.mrb[0].mxu0
    %v3267 = vadd.f32 0.0, %v3266
    %v3268 = vpop.f32.mrb[0].mxu0
    %3269 = vdwg.mxu0
    %v3270 = vadd.f32 %v3006, %v3252
    %v3271 = vadd.f32 %v3007, %v3257
    %v3272 = vadd.f32 %v3008, %v3262
    %v3273 = vadd.f32 %v3009, %v3267
    %3278 = vrot.lane.b32.xlu0 %v3270, 64
    %v3279 = vpop.permute.xlu0 %3278
    %3280 = vrot.lane.b32.xlu0 %v3271, 64
    %v3281 = vpop.permute.xlu0 %3280
    %3282 = vrot.lane.b32.xlu0 %v3272, 64
    %v3283 = vpop.permute.xlu0 %3282
    %3284 = vrot.lane.b32.xlu0 %v3273, 64
    %v3285 = vpop.permute.xlu0 %3284
    %v3290 = vadd.f32 %v963, %v3279
    %v3291 = vadd.f32 %v964, %v3281
    %v3292 = vadd.f32 %v965, %v3283
    %v3293 = vadd.f32 %v966, %v3285
    %v3294 = vtanh.pop %v3290
    %v3295 = vtanh.pop %v3291
    %v3296 = vtanh.pop %v3292
    %v3297 = vtanh.pop %v3293
    %3298 = vrot.lane.b32.xlu0 %v143, 32
    %v3299 = vpop.permute.xlu0 %3298
    %3300 = vrot.lane.b32.xlu0 %v144, 32
    %v3301 = vpop.permute.xlu0 %3300
    %3302 = vrot.lane.b32.xlu0 %v145, 32
    %v3303 = vpop.permute.xlu0 %3302
    %3304 = vrot.lane.b32.xlu0 %v146, 32
    %v3305 = vpop.permute.xlu0 %3304
    %v3310 = vmul.f32 %v2126, %v3299
    %v3311 = vmul.f32 %v2128, %v3301
    %v3312 = vmul.f32 %v2130, %v3303
    %v3313 = vmul.f32 %v2132, %v3305
    %v3314 = vsub.f32 1.0, %v2126
    %v3315 = vsub.f32 1.0, %v2128
    %v3316 = vsub.f32 1.0, %v2130
    %v3317 = vsub.f32 1.0, %v2132
    %3322 = vrot.lane.b32.xlu0 %v3294, 96
    %v3323 = vpop.permute.xlu0 %3322
    %3324 = vrot.lane.b32.xlu0 %v3295, 96
    %v3325 = vpop.permute.xlu0 %3324
    %3326 = vrot.lane.b32.xlu0 %v3296, 96
    %v3327 = vpop.permute.xlu0 %3326
    %3328 = vrot.lane.b32.xlu0 %v3297, 96
    %v3329 = vpop.permute.xlu0 %3328
    %v3334 = vmul.f32 %v3314, %v3323
    %v3335 = vmul.f32 %v3315, %v3325
    %v3336 = vmul.f32 %v3316, %v3327
    %v3337 = vmul.f32 %v3317, %v3329
    %v3338 = vadd.f32 %v3310, %v3334
    %v3339 = vadd.f32 %v3311, %v3335
    %v3340 = vadd.f32 %v3312, %v3336
    %v3341 = vadd.f32 %v3313, %v3337
    %3346 = vrot.lane.b32.xlu0 %v3338, 96
    %v3347 = vpop.permute.xlu0 %3346
    %3348 = vrot.lane.b32.xlu0 %v3339, 96
    %v3349 = vpop.permute.xlu0 %3348
    %3350 = vrot.lane.b32.xlu0 %v3340, 96
    %v3351 = vpop.permute.xlu0 %3350
    %3352 = vrot.lane.b32.xlu0 %v3341, 96
    %v3353 = vpop.permute.xlu0 %3352
    %3358 = vst.msk [vmem:[%s13] sm:$0xff] %vm1126, %v3347
    %3359 = vst.msk [vmem:[%s13 + $0x8] sm:$0xff] %vm1126, %v3349
    %3360 = vst.msk [vmem:[%s13 + $0x10] sm:$0xff] %vm1126, %v3351
    %3361 = vst.msk [vmem:[%s13 + $0x18] sm:$0xff] %vm1126, %v3353
    %s3362 = scalar_lea.vmem %s1, 32
    %v3363 = vld [vmem:[%s3362] sm:$0xff]
    %v3364 = vld [vmem:[%s3362 + $0x8] sm:$0xff]
    %v3365 = vld [vmem:[%s3362 + $0x10] sm:$0xff]
    %v3366 = vld [vmem:[%s3362 + $0x18] sm:$0xff]
    %v3367 = vld [vmem:[#allocation8] sm:$0xff]
    %v3368 = vld [vmem:[#allocation8 + $0x8] sm:$0xff]
    %v3369 = vld [vmem:[#allocation8 + $0x10] sm:$0xff]
    %v3370 = vld [vmem:[#allocation8 + $0x18] sm:$0xff]
    %v3371 = vld [vmem:[%s2] sm:$0xff]
    %v3372 = vld [vmem:[%s2 + $0x8] sm:$0xff]
    %v3374 = vsel %vm180, %v3371, 0
    %v3377 = vsel %vm180, %v3372, 0
    %3379 = vmatprep.subr.mxu0 0.0
    %3380 = vmatpush1.msra.mxu0 %v3347
    %3381 = vmatprep.subr.mxu0 0.0
    %3382 = vmatpush1.msra.mxu0 %v3349
    %3383 = vmatprep.subr.mxu0 0.0
    %3384 = vmatpush1.msra.mxu0 0.0
    %3385 = vmatprep.subr.mxu0 0.0
    %3386 = vmatpush1.msra.mxu0 0.0
    %3387 = vmatprep.subr.mxu0 0.0
    %3388 = vmatpush1.msra.mxu0 0.0
    %3389 = vmatprep.subr.mxu0 0.0
    %3390 = vmatpush1.msra.mxu0 0.0
    %3391 = vmatprep.subr.mxu0 0.0
    %3392 = vmatpush1.msra.mxu0 0.0
    %3393 = vmatprep.subr.mxu0 0.0
    %3394 = vmatpush1.msra.mxu0 0.0
    %3395 = vmatprep.subr.mxu0 0.0
    %3396 = vmatpush1.msra.mxu0 0.0
    %3397 = vmatprep.subr.mxu0 0.0
    %3398 = vmatpush1.msra.mxu0 0.0
    %3399 = vmatprep.subr.mxu0 0.0
    %3400 = vmatpush1.msra.mxu0 0.0
    %3401 = vmatprep.subr.mxu0 0.0
    %3402 = vmatpush1.msra.mxu0 0.0
    %3403 = vmatprep.subr.mxu0 0.0
    %3404 = vmatpush1.msra.mxu0 0.0
    %3405 = vmatprep.subr.mxu0 0.0
    %3406 = vmatpush1.msra.mxu0 0.0
    %3407 = vmatprep.subr.mxu0 0.0
    %3408 = vmatpush1.msra.mxu0 0.0
    %3409 = vmatprep.subr.mxu0 0.0
    %3410 = vmatpush1.msra.mxu0 0.0
    %3411 = vmatprep.subr.mxu0 0.0
    %3412 = vmatpush1.msra.mxu0 0.0
    %3413 = vmatprep.subr.mxu0 0.0
    %3414 = vmatpush1.msra.mxu0 0.0
    %3415 = vmatprep.subr.mxu0 0.0
    %3416 = vmatpush1.msra.mxu0 0.0
    %3417 = vmatprep.subr.mxu0 0.0
    %3418 = vmatpush1.msra.mxu0 0.0
    %3419 = vmatprep.subr.mxu0 0.0
    %3420 = vmatpush1.msra.mxu0 0.0
    %3421 = vmatprep.subr.mxu0 0.0
    %3422 = vmatpush1.msra.mxu0 0.0
    %3423 = vmatprep.subr.mxu0 0.0
    %3424 = vmatpush1.msra.mxu0 0.0
    %3425 = vmatprep.subr.mxu0 0.0
    %3426 = vmatpush1.msra.mxu0 0.0
    %3427 = vmatprep.subr.mxu0 0.0
    %3428 = vmatpush1.msra.mxu0 0.0
    %3429 = vmatprep.subr.mxu0 0.0
    %3430 = vmatpush1.msra.mxu0 0.0
    %3431 = vmatprep.subr.mxu0 0.0
    %3432 = vmatpush1.msra.mxu0 0.0
    %3433 = vmatprep.subr.mxu0 0.0
    %3434 = vmatpush1.msra.mxu0 0.0
    %3435 = vmatprep.subr.mxu0 0.0
    %3436 = vmatpush1.msra.mxu0 0.0
    %3437 = vmatprep.subr.mxu0 0.0
    %3438 = vmatpush1.msra.mxu0 0.0
    %3439 = vmatprep.subr.mxu0 0.0
    %3440 = vmatpush1.msra.mxu0 0.0
    %3441 = vmatprep.subr.mxu0 0.0
    %3442 = vmatpush1.msra.mxu0 0.0
    %3443 = vmatprep.mubr.f32.mxu0 0.0
    %3444 = vmatmul.mubr.f32.gmra.mrb[0].mxu0 %v3374
    %v3445 = vpop.f32.mrb[0].mxu0
    %v3446 = vadd.f32 0.0, %v3445
    %v3447 = vpop.f32.mrb[0].mxu0
    %3448 = vmatprep.mubr.f32.mxu0 0.0
    %3449 = vmatmul.mubr.f32.gmra.mrb[0].mxu0 %v3377
    %v3450 = vpop.f32.mrb[0].mxu0
    %v3451 = vadd.f32 0.0, %v3450
    %v3452 = vpop.f32.mrb[0].mxu0
    %3453 = vdwg.mxu0
    %3454 = vmatprep.subr.mxu0 0.0
    %3455 = vmatpush1.msra.mxu0 %v3351
    %3456 = vmatprep.subr.mxu0 0.0
    %3457 = vmatpush1.msra.mxu0 %v3353
    %3458 = vmatprep.subr.mxu0 0.0
    %3459 = vmatpush1.msra.mxu0 0.0
    %3460 = vmatprep.subr.mxu0 0.0
    %3461 = vmatpush1.msra.mxu0 0.0
    %3462 = vmatprep.subr.mxu0 0.0
    %3463 = vmatpush1.msra.mxu0 0.0
    %3464 = vmatprep.subr.mxu0 0.0
    %3465 = vmatpush1.msra.mxu0 0.0
    %3466 = vmatprep.subr.mxu0 0.0
    %3467 = vmatpush1.msra.mxu0 0.0
    %3468 = vmatprep.subr.mxu0 0.0
    %3469 = vmatpush1.msra.mxu0 0.0
    %3470 = vmatprep.subr.mxu0 0.0
    %3471 = vmatpush1.msra.mxu0 0.0
    %3472 = vmatprep.subr.mxu0 0.0
    %3473 = vmatpush1.msra.mxu0 0.0
    %3474 = vmatprep.subr.mxu0 0.0
    %3475 = vmatpush1.msra.mxu0 0.0
    %3476 = vmatprep.subr.mxu0 0.0
    %3477 = vmatpush1.msra.mxu0 0.0
    %3478 = vmatprep.subr.mxu0 0.0
    %3479 = vmatpush1.msra.mxu0 0.0
    %3480 = vmatprep.subr.mxu0 0.0
    %3481 = vmatpush1.msra.mxu0 0.0
    %3482 = vmatprep.subr.mxu0 0.0
    %3483 = vmatpush1.msra.mxu0 0.0
    %3484 = vmatprep.subr.mxu0 0.0
    %3485 = vmatpush1.msra.mxu0 0.0
    %3486 = vmatprep.subr.mxu0 0.0
    %3487 = vmatpush1.msra.mxu0 0.0
    %3488 = vmatprep.subr.mxu0 0.0
    %3489 = vmatpush1.msra.mxu0 0.0
    %3490 = vmatprep.subr.mxu0 0.0
    %3491 = vmatpush1.msra.mxu0 0.0
    %3492 = vmatprep.subr.mxu0 0.0
    %3493 = vmatpush1.msra.mxu0 0.0
    %3494 = vmatprep.subr.mxu0 0.0
    %3495 = vmatpush1.msra.mxu0 0.0
    %3496 = vmatprep.subr.mxu0 0.0
    %3497 = vmatpush1.msra.mxu0 0.0
    %3498 = vmatprep.subr.mxu0 0.0
    %3499 = vmatpush1.msra.mxu0 0.0
    %3500 = vmatprep.subr.mxu0 0.0
    %3501 = vmatpush1.msra.mxu0 0.0
    %3502 = vmatprep.subr.mxu0 0.0
    %3503 = vmatpush1.msra.mxu0 0.0
    %3504 = vmatprep.subr.mxu0 0.0
    %3505 = vmatpush1.msra.mxu0 0.0
    %3506 = vmatprep.subr.mxu0 0.0
    %3507 = vmatpush1.msra.mxu0 0.0
    %3508 = vmatprep.subr.mxu0 0.0
    %3509 = vmatpush1.msra.mxu0 0.0
    %3510 = vmatprep.subr.mxu0 0.0
    %3511 = vmatpush1.msra.mxu0 0.0
    %3512 = vmatprep.subr.mxu0 0.0
    %3513 = vmatpush1.msra.mxu0 0.0
    %3514 = vmatprep.subr.mxu0 0.0
    %3515 = vmatpush1.msra.mxu0 0.0
    %3516 = vmatprep.subr.mxu0 0.0
    %3517 = vmatpush1.msra.mxu0 0.0
    %3518 = vmatprep.mubr.f32.mxu0 0.0
    %3519 = vmatmul.mubr.f32.gmra.mrb[0].mxu0 %v3374
    %v3520 = vpop.f32.mrb[0].mxu0
    %v3521 = vadd.f32 0.0, %v3520
    %v3522 = vpop.f32.mrb[0].mxu0
    %3523 = vmatprep.mubr.f32.mxu0 0.0
    %3524 = vmatmul.mubr.f32.gmra.mrb[0].mxu0 %v3377
    %v3525 = vpop.f32.mrb[0].mxu0
    %v3526 = vadd.f32 0.0, %v3525
    %v3527 = vpop.f32.mrb[0].mxu0
    %3528 = vdwg.mxu0
    %s3529 = scalar_lea.vmem [#allocation8], 32
    %v3530 = vld [vmem:[%s3529] sm:$0xff]
    %v3531 = vld [vmem:[%s3529 + $0x8] sm:$0xff]
    %v3532 = vld [vmem:[%s3529 + $0x10] sm:$0xff]
    %v3533 = vld [vmem:[%s3529 + $0x18] sm:$0xff]
    %v3535 = vsel %vm1126, %v3446, 0
    %v3538 = vsel %vm1126, %v3451, 0
    %v3541 = vsel %vm1126, %v3521, 0
    %v3544 = vsel %vm1126, %v3526, 0
    %3546 = vmatprep.subr.mxu0 0.0
    %3547 = vmatpush1.msra.mxu0 %v3530
    %3548 = vmatprep.subr.mxu0 0.0
    %3549 = vmatpush1.msra.mxu0 %v3531
    %3550 = vmatprep.subr.mxu0 0.0
    %3551 = vmatpush1.msra.mxu0 %v3532
    %3552 = vmatprep.subr.mxu0 0.0
    %3553 = vmatpush1.msra.mxu0 %v3533
    %3554 = vmatprep.subr.mxu0 0.0
    %3555 = vmatpush1.msra.mxu0 0.0
    %3556 = vmatprep.subr.mxu0 0.0
    %3557 = vmatpush1.msra.mxu0 0.0
    %3558 = vmatprep.subr.mxu0 0.0
    %3559 = vmatpush1.msra.mxu0 0.0
    %3560 = vmatprep.subr.mxu0 0.0
    %3561 = vmatpush1.msra.mxu0 0.0
    %3562 = vmatprep.subr.mxu0 0.0
    %3563 = vmatpush1.msra.mxu0 0.0
    %3564 = vmatprep.subr.mxu0 0.0
    %3565 = vmatpush1.msra.mxu0 0.0
    %3566 = vmatprep.subr.mxu0 0.0
    %3567 = vmatpush1.msra.mxu0 0.0
    %3568 = vmatprep.subr.mxu0 0.0
    %3569 = vmatpush1.msra.mxu0 0.0
    %3570 = vmatprep.subr.mxu0 0.0
    %3571 = vmatpush1.msra.mxu0 0.0
    %3572 = vmatprep.subr.mxu0 0.0
    %3573 = vmatpush1.msra.mxu0 0.0
    %3574 = vmatprep.subr.mxu0 0.0
    %3575 = vmatpush1.msra.mxu0 0.0
    %3576 = vmatprep.subr.mxu0 0.0
    %3577 = vmatpush1.msra.mxu0 0.0
    %3578 = vmatprep.subr.mxu0 0.0
    %3579 = vmatpush1.msra.mxu0 0.0
    %3580 = vmatprep.subr.mxu0 0.0
    %3581 = vmatpush1.msra.mxu0 0.0
    %3582 = vmatprep.subr.mxu0 0.0
    %3583 = vmatpush1.msra.mxu0 0.0
    %3584 = vmatprep.subr.mxu0 0.0
    %3585 = vmatpush1.msra.mxu0 0.0
    %3586 = vmatprep.subr.mxu0 0.0
    %3587 = vmatpush1.msra.mxu0 0.0
    %3588 = vmatprep.subr.mxu0 0.0
    %3589 = vmatpush1.msra.mxu0 0.0
    %3590 = vmatprep.subr.mxu0 0.0
    %3591 = vmatpush1.msra.mxu0 0.0
    %3592 = vmatprep.subr.mxu0 0.0
    %3593 = vmatpush1.msra.mxu0 0.0
    %3594 = vmatprep.subr.mxu0 0.0
    %3595 = vmatpush1.msra.mxu0 0.0
    %3596 = vmatprep.subr.mxu0 0.0
    %3597 = vmatpush1.msra.mxu0 0.0
    %3598 = vmatprep.subr.mxu0 0.0
    %3599 = vmatpush1.msra.mxu0 0.0
    %3600 = vmatprep.subr.mxu0 0.0
    %3601 = vmatpush1.msra.mxu0 0.0
    %3602 = vmatprep.subr.mxu0 0.0
    %3603 = vmatpush1.msra.mxu0 0.0
    %3604 = vmatprep.subr.mxu0 0.0
    %3605 = vmatpush1.msra.mxu0 0.0
    %3606 = vmatprep.subr.mxu0 0.0
    %3607 = vmatpush1.msra.mxu0 0.0
    %3608 = vmatprep.subr.mxu0 0.0
    %3609 = vmatpush1.msra.mxu0 0.0
    %3610 = vmatprep.mubr.f32.mxu0 0.0
    %3611 = vmatmul.mubr.f32.gmra.mrb[0].mxu0 %v3535
    %v3612 = vpop.f32.mrb[0].mxu0
    %v3613 = vadd.f32 0.0, %v3612
    %v3614 = vpop.f32.mrb[0].mxu0
    %3615 = vmatprep.mubr.f32.mxu0 0.0
    %3616 = vmatmul.mubr.f32.gmra.mrb[0].mxu0 %v3538
    %v3617 = vpop.f32.mrb[0].mxu0
    %v3618 = vadd.f32 0.0, %v3617
    %v3619 = vpop.f32.mrb[0].mxu0
    %3620 = vmatprep.mubr.f32.mxu0 0.0
    %3621 = vmatmul.mubr.f32.gmra.mrb[0].mxu0 %v3541
    %v3622 = vpop.f32.mrb[0].mxu0
    %v3623 = vadd.f32 0.0, %v3622
    %v3624 = vpop.f32.mrb[0].mxu0
    %3625 = vmatprep.mubr.f32.mxu0 0.0
    %3626 = vmatmul.mubr.f32.gmra.mrb[0].mxu0 %v3544
    %v3627 = vpop.f32.mrb[0].mxu0
    %v3628 = vadd.f32 0.0, %v3627
    %v3629 = vpop.f32.mrb[0].mxu0
    %3630 = vdwg.mxu0
    %v3631 = vsel %vm1126, %v3347, 0
    %v3633 = vsel %vm1126, %v3349, 0
    %v3635 = vsel %vm1126, %v3351, 0
    %v3637 = vsel %vm1126, %v3353, 0
    %3639 = vmatprep.subr.mxu0 0.0
    %3640 = vmatpush1.msra.mxu0 %v3367
    %3641 = vmatprep.subr.mxu0 0.0
    %3642 = vmatpush1.msra.mxu0 %v3368
    %3643 = vmatprep.subr.mxu0 0.0
    %3644 = vmatpush1.msra.mxu0 %v3369
    %3645 = vmatprep.subr.mxu0 0.0
    %3646 = vmatpush1.msra.mxu0 %v3370
    %3647 = vmatprep.subr.mxu0 0.0
    %3648 = vmatpush1.msra.mxu0 0.0
    %3649 = vmatprep.subr.mxu0 0.0
    %3650 = vmatpush1.msra.mxu0 0.0
    %3651 = vmatprep.subr.mxu0 0.0
    %3652 = vmatpush1.msra.mxu0 0.0
    %3653 = vmatprep.subr.mxu0 0.0
    %3654 = vmatpush1.msra.mxu0 0.0
    %3655 = vmatprep.subr.mxu0 0.0
    %3656 = vmatpush1.msra.mxu0 0.0
    %3657 = vmatprep.subr.mxu0 0.0
    %3658 = vmatpush1.msra.mxu0 0.0
    %3659 = vmatprep.subr.mxu0 0.0
    %3660 = vmatpush1.msra.mxu0 0.0
    %3661 = vmatprep.subr.mxu0 0.0
    %3662 = vmatpush1.msra.mxu0 0.0
    %3663 = vmatprep.subr.mxu0 0.0
    %3664 = vmatpush1.msra.mxu0 0.0
    %3665 = vmatprep.subr.mxu0 0.0
    %3666 = vmatpush1.msra.mxu0 0.0
    %3667 = vmatprep.subr.mxu0 0.0
    %3668 = vmatpush1.msra.mxu0 0.0
    %3669 = vmatprep.subr.mxu0 0.0
    %3670 = vmatpush1.msra.mxu0 0.0
    %3671 = vmatprep.subr.mxu0 0.0
    %3672 = vmatpush1.msra.mxu0 0.0
    %3673 = vmatprep.subr.mxu0 0.0
    %3674 = vmatpush1.msra.mxu0 0.0
    %3675 = vmatprep.subr.mxu0 0.0
    %3676 = vmatpush1.msra.mxu0 0.0
    %3677 = vmatprep.subr.mxu0 0.0
    %3678 = vmatpush1.msra.mxu0 0.0
    %3679 = vmatprep.subr.mxu0 0.0
    %3680 = vmatpush1.msra.mxu0 0.0
    %3681 = vmatprep.subr.mxu0 0.0
    %3682 = vmatpush1.msra.mxu0 0.0
    %3683 = vmatprep.subr.mxu0 0.0
    %3684 = vmatpush1.msra.mxu0 0.0
    %3685 = vmatprep.subr.mxu0 0.0
    %3686 = vmatpush1.msra.mxu0 0.0
    %3687 = vmatprep.subr.mxu0 0.0
    %3688 = vmatpush1.msra.mxu0 0.0
    %3689 = vmatprep.subr.mxu0 0.0
    %3690 = vmatpush1.msra.mxu0 0.0
    %3691 = vmatprep.subr.mxu0 0.0
    %3692 = vmatpush1.msra.mxu0 0.0
    %3693 = vmatprep.subr.mxu0 0.0
    %3694 = vmatpush1.msra.mxu0 0.0
    %3695 = vmatprep.subr.mxu0 0.0
    %3696 = vmatpush1.msra.mxu0 0.0
    %3697 = vmatprep.subr.mxu0 0.0
    %3698 = vmatpush1.msra.mxu0 0.0
    %3699 = vmatprep.subr.mxu0 0.0
    %3700 = vmatpush1.msra.mxu0 0.0
    %3701 = vmatprep.subr.mxu0 0.0
    %3702 = vmatpush1.msra.mxu0 0.0
    %3703 = vmatprep.mubr.f32.mxu0 0.0
    %3704 = vmatmul.mubr.f32.gmra.mrb[0].mxu0 %v3631
    %v3705 = vpop.f32.mrb[0].mxu0
    %v3706 = vadd.f32 %v3613, %v3705
    %v3707 = vpop.f32.mrb[0].mxu0
    %3708 = vmatprep.mubr.f32.mxu0 0.0
    %3709 = vmatmul.mubr.f32.gmra.mrb[0].mxu0 %v3633
    %v3710 = vpop.f32.mrb[0].mxu0
    %v3711 = vadd.f32 %v3618, %v3710
    %v3712 = vpop.f32.mrb[0].mxu0
    %3713 = vmatprep.mubr.f32.mxu0 0.0
    %3714 = vmatmul.mubr.f32.gmra.mrb[0].mxu0 %v3635
    %v3715 = vpop.f32.mrb[0].mxu0
    %v3716 = vadd.f32 %v3623, %v3715
    %v3717 = vpop.f32.mrb[0].mxu0
    %3718 = vmatprep.mubr.f32.mxu0 0.0
    %3719 = vmatmul.mubr.f32.gmra.mrb[0].mxu0 %v3637
    %v3720 = vpop.f32.mrb[0].mxu0
    %v3721 = vadd.f32 %v3628, %v3720
    %v3722 = vpop.f32.mrb[0].mxu0
    %3723 = vdwg.mxu0
    %3724 = vmatprep.subr.mxu0 0.0
    %3725 = vmatpush1.msra.mxu0 %v3446
    %3726 = vmatprep.subr.mxu0 0.0
    %3727 = vmatpush1.msra.mxu0 %v3451
    %3728 = vmatprep.subr.mxu0 0.0
    %3729 = vmatpush1.msra.mxu0 0.0
    %3730 = vmatprep.subr.mxu0 0.0
    %3731 = vmatpush1.msra.mxu0 0.0
    %3732 = vmatprep.subr.mxu0 0.0
    %3733 = vmatpush1.msra.mxu0 0.0
    %3734 = vmatprep.subr.mxu0 0.0
    %3735 = vmatpush1.msra.mxu0 0.0
    %3736 = vmatprep.subr.mxu0 0.0
    %3737 = vmatpush1.msra.mxu0 0.0
    %3738 = vmatprep.subr.mxu0 0.0
    %3739 = vmatpush1.msra.mxu0 0.0
    %3740 = vmatprep.subr.mxu0 0.0
    %3741 = vmatpush1.msra.mxu0 0.0
    %3742 = vmatprep.subr.mxu0 0.0
    %3743 = vmatpush1.msra.mxu0 0.0
    %3744 = vmatprep.subr.mxu0 0.0
    %3745 = vmatpush1.msra.mxu0 0.0
    %3746 = vmatprep.subr.mxu0 0.0
    %3747 = vmatpush1.msra.mxu0 0.0
    %3748 = vmatprep.subr.mxu0 0.0
    %3749 = vmatpush1.msra.mxu0 0.0
    %3750 = vmatprep.subr.mxu0 0.0
    %3751 = vmatpush1.msra.mxu0 0.0
    %3752 = vmatprep.subr.mxu0 0.0
    %3753 = vmatpush1.msra.mxu0 0.0
    %3754 = vmatprep.subr.mxu0 0.0
    %3755 = vmatpush1.msra.mxu0 0.0
    %3756 = vmatprep.subr.mxu0 0.0
    %3757 = vmatpush1.msra.mxu0 0.0
    %3758 = vmatprep.subr.mxu0 0.0
    %3759 = vmatpush1.msra.mxu0 0.0
    %3760 = vmatprep.subr.mxu0 0.0
    %3761 = vmatpush1.msra.mxu0 0.0
    %3762 = vmatprep.subr.mxu0 0.0
    %3763 = vmatpush1.msra.mxu0 0.0
    %3764 = vmatprep.subr.mxu0 0.0
    %3765 = vmatpush1.msra.mxu0 0.0
    %3766 = vmatprep.subr.mxu0 0.0
    %3767 = vmatpush1.msra.mxu0 0.0
    %3768 = vmatprep.subr.mxu0 0.0
    %3769 = vmatpush1.msra.mxu0 0.0
    %3770 = vmatprep.subr.mxu0 0.0
    %3771 = vmatpush1.msra.mxu0 0.0
    %3772 = vmatprep.subr.mxu0 0.0
    %3773 = vmatpush1.msra.mxu0 0.0
    %3774 = vmatprep.subr.mxu0 0.0
    %3775 = vmatpush1.msra.mxu0 0.0
    %3776 = vmatprep.subr.mxu0 0.0
    %3777 = vmatpush1.msra.mxu0 0.0
    %3778 = vmatprep.subr.mxu0 0.0
    %3779 = vmatpush1.msra.mxu0 0.0
    %3780 = vmatprep.subr.mxu0 0.0
    %3781 = vmatpush1.msra.mxu0 0.0
    %3782 = vmatprep.subr.mxu0 0.0
    %3783 = vmatpush1.msra.mxu0 0.0
    %3784 = vmatprep.subr.mxu0 0.0
    %3785 = vmatpush1.msra.mxu0 0.0
    %3786 = vmatprep.subr.mxu0 0.0
    %3787 = vmatpush1.msra.mxu0 0.0
    %3788 = vmatprep.mubr.f32.mxu0 0.0
    %3789 = vmatmul.mubr.f32.gmra.mrb[0].mxu0 %v3374
    %v3790 = vpop.f32.mrb[0].mxu0
    %v3791 = vadd.f32 0.0, %v3790
    %v3792 = vpop.f32.mrb[0].mxu0
    %3793 = vmatprep.mubr.f32.mxu0 0.0
    %3794 = vmatmul.mubr.f32.gmra.mrb[0].mxu0 %v3377
    %v3795 = vpop.f32.mrb[0].mxu0
    %v3796 = vadd.f32 0.0, %v3795
    %v3797 = vpop.f32.mrb[0].mxu0
    %3798 = vdwg.mxu0
    %v3799 = vmul.f32 %v3791, 2.0
    %v3800 = vmul.f32 %v3796, 2.0
    %v3801 = vsub.f32 %v3799, %v3347
    %v3802 = vsub.f32 %v3800, %v3349
    %3803 = vmatprep.subr.mxu0 0.0
    %3804 = vmatpush1.msra.mxu0 %v3521
    %3805 = vmatprep.subr.mxu0 0.0
    %3806 = vmatpush1.msra.mxu0 %v3526
    %3807 = vmatprep.subr.mxu0 0.0
    %3808 = vmatpush1.msra.mxu0 0.0
    %3809 = vmatprep.subr.mxu0 0.0
    %3810 = vmatpush1.msra.mxu0 0.0
    %3811 = vmatprep.subr.mxu0 0.0
    %3812 = vmatpush1.msra.mxu0 0.0
    %3813 = vmatprep.subr.mxu0 0.0
    %3814 = vmatpush1.msra.mxu0 0.0
    %3815 = vmatprep.subr.mxu0 0.0
    %3816 = vmatpush1.msra.mxu0 0.0
    %3817 = vmatprep.subr.mxu0 0.0
    %3818 = vmatpush1.msra.mxu0 0.0
    %3819 = vmatprep.subr.mxu0 0.0
    %3820 = vmatpush1.msra.mxu0 0.0
    %3821 = vmatprep.subr.mxu0 0.0
    %3822 = vmatpush1.msra.mxu0 0.0
    %3823 = vmatprep.subr.mxu0 0.0
    %3824 = vmatpush1.msra.mxu0 0.0
    %3825 = vmatprep.subr.mxu0 0.0
    %3826 = vmatpush1.msra.mxu0 0.0
    %3827 = vmatprep.subr.mxu0 0.0
    %3828 = vmatpush1.msra.mxu0 0.0
    %3829 = vmatprep.subr.mxu0 0.0
    %3830 = vmatpush1.msra.mxu0 0.0
    %3831 = vmatprep.subr.mxu0 0.0
    %3832 = vmatpush1.msra.mxu0 0.0
    %3833 = vmatprep.subr.mxu0 0.0
    %3834 = vmatpush1.msra.mxu0 0.0
    %3835 = vmatprep.subr.mxu0 0.0
    %3836 = vmatpush1.msra.mxu0 0.0
    %3837 = vmatprep.subr.mxu0 0.0
    %3838 = vmatpush1.msra.mxu0 0.0
    %3839 = vmatprep.subr.mxu0 0.0
    %3840 = vmatpush1.msra.mxu0 0.0
    %3841 = vmatprep.subr.mxu0 0.0
    %3842 = vmatpush1.msra.mxu0 0.0
    %3843 = vmatprep.subr.mxu0 0.0
    %3844 = vmatpush1.msra.mxu0 0.0
    %3845 = vmatprep.subr.mxu0 0.0
    %3846 = vmatpush1.msra.mxu0 0.0
    %3847 = vmatprep.subr.mxu0 0.0
    %3848 = vmatpush1.msra.mxu0 0.0
    %3849 = vmatprep.subr.mxu0 0.0
    %3850 = vmatpush1.msra.mxu0 0.0
    %3851 = vmatprep.subr.mxu0 0.0
    %3852 = vmatpush1.msra.mxu0 0.0
    %3853 = vmatprep.subr.mxu0 0.0
    %3854 = vmatpush1.msra.mxu0 0.0
    %3855 = vmatprep.subr.mxu0 0.0
    %3856 = vmatpush1.msra.mxu0 0.0
    %3857 = vmatprep.subr.mxu0 0.0
    %3858 = vmatpush1.msra.mxu0 0.0
    %3859 = vmatprep.subr.mxu0 0.0
    %3860 = vmatpush1.msra.mxu0 0.0
    %3861 = vmatprep.subr.mxu0 0.0
    %3862 = vmatpush1.msra.mxu0 0.0
    %3863 = vmatprep.subr.mxu0 0.0
    %3864 = vmatpush1.msra.mxu0 0.0
    %3865 = vmatprep.subr.mxu0 0.0
    %3866 = vmatpush1.msra.mxu0 0.0
    %3867 = vmatprep.mubr.f32.mxu0 0.0
    %3868 = vmatmul.mubr.f32.gmra.mrb[0].mxu0 %v3374
    %v3869 = vpop.f32.mrb[0].mxu0
    %v3870 = vadd.f32 0.0, %v3869
    %v3871 = vpop.f32.mrb[0].mxu0
    %3872 = vmatprep.mubr.f32.mxu0 0.0
    %3873 = vmatmul.mubr.f32.gmra.mrb[0].mxu0 %v3377
    %v3874 = vpop.f32.mrb[0].mxu0
    %v3875 = vadd.f32 0.0, %v3874
    %v3876 = vpop.f32.mrb[0].mxu0
    %3877 = vdwg.mxu0
    %v3878 = vmul.f32 %v3870, 2.0
    %v3879 = vmul.f32 %v3875, 2.0
    %v3880 = vsub.f32 %v3878, %v3351
    %v3881 = vsub.f32 %v3879, %v3353
    %s3882 = scalar_lea.vmem [#allocation8], 64
    %v3883 = vld [vmem:[%s3882] sm:$0xff]
    %v3884 = vld [vmem:[%s3882 + $0x8] sm:$0xff]
    %v3885 = vld [vmem:[%s3882 + $0x10] sm:$0xff]
    %v3886 = vld [vmem:[%s3882 + $0x18] sm:$0xff]
    %v3888 = vsel %vm1126, %v3801, 0
    %v3891 = vsel %vm1126, %v3802, 0
    %v3894 = vsel %vm1126, %v3880, 0
    %v3897 = vsel %vm1126, %v3881, 0
    %3899 = vmatprep.subr.mxu0 0.0
    %3900 = vmatpush1.msra.mxu0 %v3883
    %3901 = vmatprep.subr.mxu0 0.0
    %3902 = vmatpush1.msra.mxu0 %v3884
    %3903 = vmatprep.subr.mxu0 0.0
    %3904 = vmatpush1.msra.mxu0 %v3885
    %3905 = vmatprep.subr.mxu0 0.0
    %3906 = vmatpush1.msra.mxu0 %v3886
    %3907 = vmatprep.subr.mxu0 0.0
    %3908 = vmatpush1.msra.mxu0 0.0
    %3909 = vmatprep.subr.mxu0 0.0
    %3910 = vmatpush1.msra.mxu0 0.0
    %3911 = vmatprep.subr.mxu0 0.0
    %3912 = vmatpush1.msra.mxu0 0.0
    %3913 = vmatprep.subr.mxu0 0.0
    %3914 = vmatpush1.msra.mxu0 0.0
    %3915 = vmatprep.subr.mxu0 0.0
    %3916 = vmatpush1.msra.mxu0 0.0
    %3917 = vmatprep.subr.mxu0 0.0
    %3918 = vmatpush1.msra.mxu0 0.0
    %3919 = vmatprep.subr.mxu0 0.0
    %3920 = vmatpush1.msra.mxu0 0.0
    %3921 = vmatprep.subr.mxu0 0.0
    %3922 = vmatpush1.msra.mxu0 0.0
    %3923 = vmatprep.subr.mxu0 0.0
    %3924 = vmatpush1.msra.mxu0 0.0
    %3925 = vmatprep.subr.mxu0 0.0
    %3926 = vmatpush1.msra.mxu0 0.0
    %3927 = vmatprep.subr.mxu0 0.0
    %3928 = vmatpush1.msra.mxu0 0.0
    %3929 = vmatprep.subr.mxu0 0.0
    %3930 = vmatpush1.msra.mxu0 0.0
    %3931 = vmatprep.subr.mxu0 0.0
    %3932 = vmatpush1.msra.mxu0 0.0
    %3933 = vmatprep.subr.mxu0 0.0
    %3934 = vmatpush1.msra.mxu0 0.0
    %3935 = vmatprep.subr.mxu0 0.0
    %3936 = vmatpush1.msra.mxu0 0.0
    %3937 = vmatprep.subr.mxu0 0.0
    %3938 = vmatpush1.msra.mxu0 0.0
    %3939 = vmatprep.subr.mxu0 0.0
    %3940 = vmatpush1.msra.mxu0 0.0
    %3941 = vmatprep.subr.mxu0 0.0
    %3942 = vmatpush1.msra.mxu0 0.0
    %3943 = vmatprep.subr.mxu0 0.0
    %3944 = vmatpush1.msra.mxu0 0.0
    %3945 = vmatprep.subr.mxu0 0.0
    %3946 = vmatpush1.msra.mxu0 0.0
    %3947 = vmatprep.subr.mxu0 0.0
    %3948 = vmatpush1.msra.mxu0 0.0
    %3949 = vmatprep.subr.mxu0 0.0
    %3950 = vmatpush1.msra.mxu0 0.0
    %3951 = vmatprep.subr.mxu0 0.0
    %3952 = vmatpush1.msra.mxu0 0.0
    %3953 = vmatprep.subr.mxu0 0.0
    %3954 = vmatpush1.msra.mxu0 0.0
    %3955 = vmatprep.subr.mxu0 0.0
    %3956 = vmatpush1.msra.mxu0 0.0
    %3957 = vmatprep.subr.mxu0 0.0
    %3958 = vmatpush1.msra.mxu0 0.0
    %3959 = vmatprep.subr.mxu0 0.0
    %3960 = vmatpush1.msra.mxu0 0.0
    %3961 = vmatprep.subr.mxu0 0.0
    %3962 = vmatpush1.msra.mxu0 0.0
    %3963 = vmatprep.mubr.f32.mxu0 0.0
    %3964 = vmatmul.mubr.f32.gmra.mrb[0].mxu0 %v3888
    %v3965 = vpop.f32.mrb[0].mxu0
    %v3966 = vadd.f32 0.0, %v3965
    %v3967 = vpop.f32.mrb[0].mxu0
    %3968 = vmatprep.mubr.f32.mxu0 0.0
    %3969 = vmatmul.mubr.f32.gmra.mrb[0].mxu0 %v3891
    %v3970 = vpop.f32.mrb[0].mxu0
    %v3971 = vadd.f32 0.0, %v3970
    %v3972 = vpop.f32.mrb[0].mxu0
    %3973 = vmatprep.mubr.f32.mxu0 0.0
    %3974 = vmatmul.mubr.f32.gmra.mrb[0].mxu0 %v3894
    %v3975 = vpop.f32.mrb[0].mxu0
    %v3976 = vadd.f32 0.0, %v3975
    %v3977 = vpop.f32.mrb[0].mxu0
    %3978 = vmatprep.mubr.f32.mxu0 0.0
    %3979 = vmatmul.mubr.f32.gmra.mrb[0].mxu0 %v3897
    %v3980 = vpop.f32.mrb[0].mxu0
    %v3981 = vadd.f32 0.0, %v3980
    %v3982 = vpop.f32.mrb[0].mxu0
    %3983 = vdwg.mxu0
    %v3984 = vadd.f32 %v3706, %v3966
    %v3985 = vadd.f32 %v3711, %v3971
    %v3986 = vadd.f32 %v3716, %v3976
    %v3987 = vadd.f32 %v3721, %v3981
    %v3988 = vld [vmem:[%s567] sm:$0xff]
    %v3989 = vld [vmem:[%s567 + $0x8] sm:$0xff]
    %v3991 = vsel %vm180, %v3988, 0
    %v3994 = vsel %vm180, %v3989, 0
    %3996 = vmatprep.subr.mxu0 0.0
    %3997 = vmatpush1.msra.mxu0 %v3446
    %3998 = vmatprep.subr.mxu0 0.0
    %3999 = vmatpush1.msra.mxu0 %v3451
    %4000 = vmatprep.subr.mxu0 0.0
    %4001 = vmatpush1.msra.mxu0 0.0
    %4002 = vmatprep.subr.mxu0 0.0
    %4003 = vmatpush1.msra.mxu0 0.0
    %4004 = vmatprep.subr.mxu0 0.0
    %4005 = vmatpush1.msra.mxu0 0.0
    %4006 = vmatprep.subr.mxu0 0.0
    %4007 = vmatpush1.msra.mxu0 0.0
    %4008 = vmatprep.subr.mxu0 0.0
    %4009 = vmatpush1.msra.mxu0 0.0
    %4010 = vmatprep.subr.mxu0 0.0
    %4011 = vmatpush1.msra.mxu0 0.0
    %4012 = vmatprep.subr.mxu0 0.0
    %4013 = vmatpush1.msra.mxu0 0.0
    %4014 = vmatprep.subr.mxu0 0.0
    %4015 = vmatpush1.msra.mxu0 0.0
    %4016 = vmatprep.subr.mxu0 0.0
    %4017 = vmatpush1.msra.mxu0 0.0
    %4018 = vmatprep.subr.mxu0 0.0
    %4019 = vmatpush1.msra.mxu0 0.0
    %4020 = vmatprep.subr.mxu0 0.0
    %4021 = vmatpush1.msra.mxu0 0.0
    %4022 = vmatprep.subr.mxu0 0.0
    %4023 = vmatpush1.msra.mxu0 0.0
    %4024 = vmatprep.subr.mxu0 0.0
    %4025 = vmatpush1.msra.mxu0 0.0
    %4026 = vmatprep.subr.mxu0 0.0
    %4027 = vmatpush1.msra.mxu0 0.0
    %4028 = vmatprep.subr.mxu0 0.0
    %4029 = vmatpush1.msra.mxu0 0.0
    %4030 = vmatprep.subr.mxu0 0.0
    %4031 = vmatpush1.msra.mxu0 0.0
    %4032 = vmatprep.subr.mxu0 0.0
    %4033 = vmatpush1.msra.mxu0 0.0
    %4034 = vmatprep.subr.mxu0 0.0
    %4035 = vmatpush1.msra.mxu0 0.0
    %4036 = vmatprep.subr.mxu0 0.0
    %4037 = vmatpush1.msra.mxu0 0.0
    %4038 = vmatprep.subr.mxu0 0.0
    %4039 = vmatpush1.msra.mxu0 0.0
    %4040 = vmatprep.subr.mxu0 0.0
    %4041 = vmatpush1.msra.mxu0 0.0
    %4042 = vmatprep.subr.mxu0 0.0
    %4043 = vmatpush1.msra.mxu0 0.0
    %4044 = vmatprep.subr.mxu0 0.0
    %4045 = vmatpush1.msra.mxu0 0.0
    %4046 = vmatprep.subr.mxu0 0.0
    %4047 = vmatpush1.msra.mxu0 0.0
    %4048 = vmatprep.subr.mxu0 0.0
    %4049 = vmatpush1.msra.mxu0 0.0
    %4050 = vmatprep.subr.mxu0 0.0
    %4051 = vmatpush1.msra.mxu0 0.0
    %4052 = vmatprep.subr.mxu0 0.0
    %4053 = vmatpush1.msra.mxu0 0.0
    %4054 = vmatprep.subr.mxu0 0.0
    %4055 = vmatpush1.msra.mxu0 0.0
    %4056 = vmatprep.subr.mxu0 0.0
    %4057 = vmatpush1.msra.mxu0 0.0
    %4058 = vmatprep.subr.mxu0 0.0
    %4059 = vmatpush1.msra.mxu0 0.0
    %4060 = vmatprep.mubr.f32.mxu0 0.0
    %4061 = vmatmul.mubr.f32.gmra.mrb[0].mxu0 %v3991
    %v4062 = vpop.f32.mrb[0].mxu0
    %v4063 = vadd.f32 0.0, %v4062
    %v4064 = vpop.f32.mrb[0].mxu0
    %4065 = vmatprep.mubr.f32.mxu0 0.0
    %4066 = vmatmul.mubr.f32.gmra.mrb[0].mxu0 %v3994
    %v4067 = vpop.f32.mrb[0].mxu0
    %v4068 = vadd.f32 0.0, %v4067
    %v4069 = vpop.f32.mrb[0].mxu0
    %4070 = vdwg.mxu0
    %4071 = vmatprep.subr.mxu0 0.0
    %4072 = vmatpush1.msra.mxu0 %v3521
    %4073 = vmatprep.subr.mxu0 0.0
    %4074 = vmatpush1.msra.mxu0 %v3526
    %4075 = vmatprep.subr.mxu0 0.0
    %4076 = vmatpush1.msra.mxu0 0.0
    %4077 = vmatprep.subr.mxu0 0.0
    %4078 = vmatpush1.msra.mxu0 0.0
    %4079 = vmatprep.subr.mxu0 0.0
    %4080 = vmatpush1.msra.mxu0 0.0
    %4081 = vmatprep.subr.mxu0 0.0
    %4082 = vmatpush1.msra.mxu0 0.0
    %4083 = vmatprep.subr.mxu0 0.0
    %4084 = vmatpush1.msra.mxu0 0.0
    %4085 = vmatprep.subr.mxu0 0.0
    %4086 = vmatpush1.msra.mxu0 0.0
    %4087 = vmatprep.subr.mxu0 0.0
    %4088 = vmatpush1.msra.mxu0 0.0
    %4089 = vmatprep.subr.mxu0 0.0
    %4090 = vmatpush1.msra.mxu0 0.0
    %4091 = vmatprep.subr.mxu0 0.0
    %4092 = vmatpush1.msra.mxu0 0.0
    %4093 = vmatprep.subr.mxu0 0.0
    %4094 = vmatpush1.msra.mxu0 0.0
    %4095 = vmatprep.subr.mxu0 0.0
    %4096 = vmatpush1.msra.mxu0 0.0
    %4097 = vmatprep.subr.mxu0 0.0
    %4098 = vmatpush1.msra.mxu0 0.0
    %4099 = vmatprep.subr.mxu0 0.0
    %4100 = vmatpush1.msra.mxu0 0.0
    %4101 = vmatprep.subr.mxu0 0.0
    %4102 = vmatpush1.msra.mxu0 0.0
    %4103 = vmatprep.subr.mxu0 0.0
    %4104 = vmatpush1.msra.mxu0 0.0
    %4105 = vmatprep.subr.mxu0 0.0
    %4106 = vmatpush1.msra.mxu0 0.0
    %4107 = vmatprep.subr.mxu0 0.0
    %4108 = vmatpush1.msra.mxu0 0.0
    %4109 = vmatprep.subr.mxu0 0.0
    %4110 = vmatpush1.msra.mxu0 0.0
    %4111 = vmatprep.subr.mxu0 0.0
    %4112 = vmatpush1.msra.mxu0 0.0
    %4113 = vmatprep.subr.mxu0 0.0
    %4114 = vmatpush1.msra.mxu0 0.0
    %4115 = vmatprep.subr.mxu0 0.0
    %4116 = vmatpush1.msra.mxu0 0.0
    %4117 = vmatprep.subr.mxu0 0.0
    %4118 = vmatpush1.msra.mxu0 0.0
    %4119 = vmatprep.subr.mxu0 0.0
    %4120 = vmatpush1.msra.mxu0 0.0
    %4121 = vmatprep.subr.mxu0 0.0
    %4122 = vmatpush1.msra.mxu0 0.0
    %4123 = vmatprep.subr.mxu0 0.0
    %4124 = vmatpush1.msra.mxu0 0.0
    %4125 = vmatprep.subr.mxu0 0.0
    %4126 = vmatpush1.msra.mxu0 0.0
    %4127 = vmatprep.subr.mxu0 0.0
    %4128 = vmatpush1.msra.mxu0 0.0
    %4129 = vmatprep.subr.mxu0 0.0
    %4130 = vmatpush1.msra.mxu0 0.0
    %4131 = vmatprep.subr.mxu0 0.0
    %4132 = vmatpush1.msra.mxu0 0.0
    %4133 = vmatprep.subr.mxu0 0.0
    %4134 = vmatpush1.msra.mxu0 0.0
    %4135 = vmatprep.mubr.f32.mxu0 0.0
    %4136 = vmatmul.mubr.f32.gmra.mrb[0].mxu0 %v3991
    %v4137 = vpop.f32.mrb[0].mxu0
    %v4138 = vadd.f32 0.0, %v4137
    %v4139 = vpop.f32.mrb[0].mxu0
    %4140 = vmatprep.mubr.f32.mxu0 0.0
    %4141 = vmatmul.mubr.f32.gmra.mrb[0].mxu0 %v3994
    %v4142 = vpop.f32.mrb[0].mxu0
    %v4143 = vadd.f32 0.0, %v4142
    %v4144 = vpop.f32.mrb[0].mxu0
    %4145 = vdwg.mxu0
    %s4146 = scalar_lea.vmem [#allocation8], 96
    %v4147 = vld [vmem:[%s4146] sm:$0xff]
    %v4148 = vld [vmem:[%s4146 + $0x8] sm:$0xff]
    %v4149 = vld [vmem:[%s4146 + $0x10] sm:$0xff]
    %v4150 = vld [vmem:[%s4146 + $0x18] sm:$0xff]
    %v4152 = vsel %vm1126, %v4063, 0
    %v4155 = vsel %vm1126, %v4068, 0
    %v4158 = vsel %vm1126, %v4138, 0
    %v4161 = vsel %vm1126, %v4143, 0
    %4163 = vmatprep.subr.mxu0 0.0
    %4164 = vmatpush1.msra.mxu0 %v4147
    %4165 = vmatprep.subr.mxu0 0.0
    %4166 = vmatpush1.msra.mxu0 %v4148
    %4167 = vmatprep.subr.mxu0 0.0
    %4168 = vmatpush1.msra.mxu0 %v4149
    %4169 = vmatprep.subr.mxu0 0.0
    %4170 = vmatpush1.msra.mxu0 %v4150
    %4171 = vmatprep.subr.mxu0 0.0
    %4172 = vmatpush1.msra.mxu0 0.0
    %4173 = vmatprep.subr.mxu0 0.0
    %4174 = vmatpush1.msra.mxu0 0.0
    %4175 = vmatprep.subr.mxu0 0.0
    %4176 = vmatpush1.msra.mxu0 0.0
    %4177 = vmatprep.subr.mxu0 0.0
    %4178 = vmatpush1.msra.mxu0 0.0
    %4179 = vmatprep.subr.mxu0 0.0
    %4180 = vmatpush1.msra.mxu0 0.0
    %4181 = vmatprep.subr.mxu0 0.0
    %4182 = vmatpush1.msra.mxu0 0.0
    %4183 = vmatprep.subr.mxu0 0.0
    %4184 = vmatpush1.msra.mxu0 0.0
    %4185 = vmatprep.subr.mxu0 0.0
    %4186 = vmatpush1.msra.mxu0 0.0
    %4187 = vmatprep.subr.mxu0 0.0
    %4188 = vmatpush1.msra.mxu0 0.0
    %4189 = vmatprep.subr.mxu0 0.0
    %4190 = vmatpush1.msra.mxu0 0.0
    %4191 = vmatprep.subr.mxu0 0.0
    %4192 = vmatpush1.msra.mxu0 0.0
    %4193 = vmatprep.subr.mxu0 0.0
    %4194 = vmatpush1.msra.mxu0 0.0
    %4195 = vmatprep.subr.mxu0 0.0
    %4196 = vmatpush1.msra.mxu0 0.0
    %4197 = vmatprep.subr.mxu0 0.0
    %4198 = vmatpush1.msra.mxu0 0.0
    %4199 = vmatprep.subr.mxu0 0.0
    %4200 = vmatpush1.msra.mxu0 0.0
    %4201 = vmatprep.subr.mxu0 0.0
    %4202 = vmatpush1.msra.mxu0 0.0
    %4203 = vmatprep.subr.mxu0 0.0
    %4204 = vmatpush1.msra.mxu0 0.0
    %4205 = vmatprep.subr.mxu0 0.0
    %4206 = vmatpush1.msra.mxu0 0.0
    %4207 = vmatprep.subr.mxu0 0.0
    %4208 = vmatpush1.msra.mxu0 0.0
    %4209 = vmatprep.subr.mxu0 0.0
    %4210 = vmatpush1.msra.mxu0 0.0
    %4211 = vmatprep.subr.mxu0 0.0
    %4212 = vmatpush1.msra.mxu0 0.0
    %4213 = vmatprep.subr.mxu0 0.0
    %4214 = vmatpush1.msra.mxu0 0.0
    %4215 = vmatprep.subr.mxu0 0.0
    %4216 = vmatpush1.msra.mxu0 0.0
    %4217 = vmatprep.subr.mxu0 0.0
    %4218 = vmatpush1.msra.mxu0 0.0
    %4219 = vmatprep.subr.mxu0 0.0
    %4220 = vmatpush1.msra.mxu0 0.0
    %4221 = vmatprep.subr.mxu0 0.0
    %4222 = vmatpush1.msra.mxu0 0.0
    %4223 = vmatprep.subr.mxu0 0.0
    %4224 = vmatpush1.msra.mxu0 0.0
    %4225 = vmatprep.subr.mxu0 0.0
    %4226 = vmatpush1.msra.mxu0 0.0
    %4227 = vmatprep.mubr.f32.mxu0 0.0
    %4228 = vmatmul.mubr.f32.gmra.mrb[0].mxu0 %v4152
    %v4229 = vpop.f32.mrb[0].mxu0
    %v4230 = vadd.f32 0.0, %v4229
    %v4231 = vpop.f32.mrb[0].mxu0
    %4232 = vmatprep.mubr.f32.mxu0 0.0
    %4233 = vmatmul.mubr.f32.gmra.mrb[0].mxu0 %v4155
    %v4234 = vpop.f32.mrb[0].mxu0
    %v4235 = vadd.f32 0.0, %v4234
    %v4236 = vpop.f32.mrb[0].mxu0
    %4237 = vmatprep.mubr.f32.mxu0 0.0
    %4238 = vmatmul.mubr.f32.gmra.mrb[0].mxu0 %v4158
    %v4239 = vpop.f32.mrb[0].mxu0
    %v4240 = vadd.f32 0.0, %v4239
    %v4241 = vpop.f32.mrb[0].mxu0
    %4242 = vmatprep.mubr.f32.mxu0 0.0
    %4243 = vmatmul.mubr.f32.gmra.mrb[0].mxu0 %v4161
    %v4244 = vpop.f32.mrb[0].mxu0
    %v4245 = vadd.f32 0.0, %v4244
    %v4246 = vpop.f32.mrb[0].mxu0
    %4247 = vdwg.mxu0
    %v4248 = vadd.f32 %v3984, %v4230
    %v4249 = vadd.f32 %v3985, %v4235
    %v4250 = vadd.f32 %v3986, %v4240
    %v4251 = vadd.f32 %v3987, %v4245
    %4252 = vmatprep.subr.mxu0 0.0
    %4253 = vmatpush1.msra.mxu0 %v4063
    %4254 = vmatprep.subr.mxu0 0.0
    %4255 = vmatpush1.msra.mxu0 %v4068
    %4256 = vmatprep.subr.mxu0 0.0
    %4257 = vmatpush1.msra.mxu0 0.0
    %4258 = vmatprep.subr.mxu0 0.0
    %4259 = vmatpush1.msra.mxu0 0.0
    %4260 = vmatprep.subr.mxu0 0.0
    %4261 = vmatpush1.msra.mxu0 0.0
    %4262 = vmatprep.subr.mxu0 0.0
    %4263 = vmatpush1.msra.mxu0 0.0
    %4264 = vmatprep.subr.mxu0 0.0
    %4265 = vmatpush1.msra.mxu0 0.0
    %4266 = vmatprep.subr.mxu0 0.0
    %4267 = vmatpush1.msra.mxu0 0.0
    %4268 = vmatprep.subr.mxu0 0.0
    %4269 = vmatpush1.msra.mxu0 0.0
    %4270 = vmatprep.subr.mxu0 0.0
    %4271 = vmatpush1.msra.mxu0 0.0
    %4272 = vmatprep.subr.mxu0 0.0
    %4273 = vmatpush1.msra.mxu0 0.0
    %4274 = vmatprep.subr.mxu0 0.0
    %4275 = vmatpush1.msra.mxu0 0.0
    %4276 = vmatprep.subr.mxu0 0.0
    %4277 = vmatpush1.msra.mxu0 0.0
    %4278 = vmatprep.subr.mxu0 0.0
    %4279 = vmatpush1.msra.mxu0 0.0
    %4280 = vmatprep.subr.mxu0 0.0
    %4281 = vmatpush1.msra.mxu0 0.0
    %4282 = vmatprep.subr.mxu0 0.0
    %4283 = vmatpush1.msra.mxu0 0.0
    %4284 = vmatprep.subr.mxu0 0.0
    %4285 = vmatpush1.msra.mxu0 0.0
    %4286 = vmatprep.subr.mxu0 0.0
    %4287 = vmatpush1.msra.mxu0 0.0
    %4288 = vmatprep.subr.mxu0 0.0
    %4289 = vmatpush1.msra.mxu0 0.0
    %4290 = vmatprep.subr.mxu0 0.0
    %4291 = vmatpush1.msra.mxu0 0.0
    %4292 = vmatprep.subr.mxu0 0.0
    %4293 = vmatpush1.msra.mxu0 0.0
    %4294 = vmatprep.subr.mxu0 0.0
    %4295 = vmatpush1.msra.mxu0 0.0
    %4296 = vmatprep.subr.mxu0 0.0
    %4297 = vmatpush1.msra.mxu0 0.0
    %4298 = vmatprep.subr.mxu0 0.0
    %4299 = vmatpush1.msra.mxu0 0.0
    %4300 = vmatprep.subr.mxu0 0.0
    %4301 = vmatpush1.msra.mxu0 0.0
    %4302 = vmatprep.subr.mxu0 0.0
    %4303 = vmatpush1.msra.mxu0 0.0
    %4304 = vmatprep.subr.mxu0 0.0
    %4305 = vmatpush1.msra.mxu0 0.0
    %4306 = vmatprep.subr.mxu0 0.0
    %4307 = vmatpush1.msra.mxu0 0.0
    %4308 = vmatprep.subr.mxu0 0.0
    %4309 = vmatpush1.msra.mxu0 0.0
    %4310 = vmatprep.subr.mxu0 0.0
    %4311 = vmatpush1.msra.mxu0 0.0
    %4312 = vmatprep.subr.mxu0 0.0
    %4313 = vmatpush1.msra.mxu0 0.0
    %4314 = vmatprep.subr.mxu0 0.0
    %4315 = vmatpush1.msra.mxu0 0.0
    %4316 = vmatprep.mubr.f32.mxu0 0.0
    %4317 = vmatmul.mubr.f32.gmra.mrb[0].mxu0 %v3991
    %v4318 = vpop.f32.mrb[0].mxu0
    %v4319 = vadd.f32 0.0, %v4318
    %v4320 = vpop.f32.mrb[0].mxu0
    %4321 = vmatprep.mubr.f32.mxu0 0.0
    %4322 = vmatmul.mubr.f32.gmra.mrb[0].mxu0 %v3994
    %v4323 = vpop.f32.mrb[0].mxu0
    %v4324 = vadd.f32 0.0, %v4323
    %v4325 = vpop.f32.mrb[0].mxu0
    %4326 = vdwg.mxu0
    %v4327 = vmul.f32 %v4319, 2.0
    %v4328 = vmul.f32 %v4324, 2.0
    %v4329 = vsub.f32 %v4327, %v3446
    %v4330 = vsub.f32 %v4328, %v3451
    %4331 = vmatprep.subr.mxu0 0.0
    %4332 = vmatpush1.msra.mxu0 %v4138
    %4333 = vmatprep.subr.mxu0 0.0
    %4334 = vmatpush1.msra.mxu0 %v4143
    %4335 = vmatprep.subr.mxu0 0.0
    %4336 = vmatpush1.msra.mxu0 0.0
    %4337 = vmatprep.subr.mxu0 0.0
    %4338 = vmatpush1.msra.mxu0 0.0
    %4339 = vmatprep.subr.mxu0 0.0
    %4340 = vmatpush1.msra.mxu0 0.0
    %4341 = vmatprep.subr.mxu0 0.0
    %4342 = vmatpush1.msra.mxu0 0.0
    %4343 = vmatprep.subr.mxu0 0.0
    %4344 = vmatpush1.msra.mxu0 0.0
    %4345 = vmatprep.subr.mxu0 0.0
    %4346 = vmatpush1.msra.mxu0 0.0
    %4347 = vmatprep.subr.mxu0 0.0
    %4348 = vmatpush1.msra.mxu0 0.0
    %4349 = vmatprep.subr.mxu0 0.0
    %4350 = vmatpush1.msra.mxu0 0.0
    %4351 = vmatprep.subr.mxu0 0.0
    %4352 = vmatpush1.msra.mxu0 0.0
    %4353 = vmatprep.subr.mxu0 0.0
    %4354 = vmatpush1.msra.mxu0 0.0
    %4355 = vmatprep.subr.mxu0 0.0
    %4356 = vmatpush1.msra.mxu0 0.0
    %4357 = vmatprep.subr.mxu0 0.0
    %4358 = vmatpush1.msra.mxu0 0.0
    %4359 = vmatprep.subr.mxu0 0.0
    %4360 = vmatpush1.msra.mxu0 0.0
    %4361 = vmatprep.subr.mxu0 0.0
    %4362 = vmatpush1.msra.mxu0 0.0
    %4363 = vmatprep.subr.mxu0 0.0
    %4364 = vmatpush1.msra.mxu0 0.0
    %4365 = vmatprep.subr.mxu0 0.0
    %4366 = vmatpush1.msra.mxu0 0.0
    %4367 = vmatprep.subr.mxu0 0.0
    %4368 = vmatpush1.msra.mxu0 0.0
    %4369 = vmatprep.subr.mxu0 0.0
    %4370 = vmatpush1.msra.mxu0 0.0
    %4371 = vmatprep.subr.mxu0 0.0
    %4372 = vmatpush1.msra.mxu0 0.0
    %4373 = vmatprep.subr.mxu0 0.0
    %4374 = vmatpush1.msra.mxu0 0.0
    %4375 = vmatprep.subr.mxu0 0.0
    %4376 = vmatpush1.msra.mxu0 0.0
    %4377 = vmatprep.subr.mxu0 0.0
    %4378 = vmatpush1.msra.mxu0 0.0
    %4379 = vmatprep.subr.mxu0 0.0
    %4380 = vmatpush1.msra.mxu0 0.0
    %4381 = vmatprep.subr.mxu0 0.0
    %4382 = vmatpush1.msra.mxu0 0.0
    %4383 = vmatprep.subr.mxu0 0.0
    %4384 = vmatpush1.msra.mxu0 0.0
    %4385 = vmatprep.subr.mxu0 0.0
    %4386 = vmatpush1.msra.mxu0 0.0
    %4387 = vmatprep.subr.mxu0 0.0
    %4388 = vmatpush1.msra.mxu0 0.0
    %4389 = vmatprep.subr.mxu0 0.0
    %4390 = vmatpush1.msra.mxu0 0.0
    %4391 = vmatprep.subr.mxu0 0.0
    %4392 = vmatpush1.msra.mxu0 0.0
    %4393 = vmatprep.subr.mxu0 0.0
    %4394 = vmatpush1.msra.mxu0 0.0
    %4395 = vmatprep.mubr.f32.mxu0 0.0
    %4396 = vmatmul.mubr.f32.gmra.mrb[0].mxu0 %v3991
    %v4397 = vpop.f32.mrb[0].mxu0
    %v4398 = vadd.f32 0.0, %v4397
    %v4399 = vpop.f32.mrb[0].mxu0
    %4400 = vmatprep.mubr.f32.mxu0 0.0
    %4401 = vmatmul.mubr.f32.gmra.mrb[0].mxu0 %v3994
    %v4402 = vpop.f32.mrb[0].mxu0
    %v4403 = vadd.f32 0.0, %v4402
    %v4404 = vpop.f32.mrb[0].mxu0
    %4405 = vdwg.mxu0
    %v4406 = vmul.f32 %v4398, 2.0
    %v4407 = vmul.f32 %v4403, 2.0
    %v4408 = vsub.f32 %v4406, %v3521
    %v4409 = vsub.f32 %v4407, %v3526
    %s4410 = scalar_lea.vmem [#allocation8], 128
    %v4411 = vld [vmem:[%s4410] sm:$0xff]
    %v4412 = vld [vmem:[%s4410 + $0x8] sm:$0xff]
    %v4413 = vld [vmem:[%s4410 + $0x10] sm:$0xff]
    %v4414 = vld [vmem:[%s4410 + $0x18] sm:$0xff]
    %v4416 = vsel %vm1126, %v4329, 0
    %v4419 = vsel %vm1126, %v4330, 0
    %v4422 = vsel %vm1126, %v4408, 0
    %v4425 = vsel %vm1126, %v4409, 0
    %4427 = vmatprep.subr.mxu0 0.0
    %4428 = vmatpush1.msra.mxu0 %v4411
    %4429 = vmatprep.subr.mxu0 0.0
    %4430 = vmatpush1.msra.mxu0 %v4412
    %4431 = vmatprep.subr.mxu0 0.0
    %4432 = vmatpush1.msra.mxu0 %v4413
    %4433 = vmatprep.subr.mxu0 0.0
    %4434 = vmatpush1.msra.mxu0 %v4414
    %4435 = vmatprep.subr.mxu0 0.0
    %4436 = vmatpush1.msra.mxu0 0.0
    %4437 = vmatprep.subr.mxu0 0.0
    %4438 = vmatpush1.msra.mxu0 0.0
    %4439 = vmatprep.subr.mxu0 0.0
    %4440 = vmatpush1.msra.mxu0 0.0
    %4441 = vmatprep.subr.mxu0 0.0
    %4442 = vmatpush1.msra.mxu0 0.0
    %4443 = vmatprep.subr.mxu0 0.0
    %4444 = vmatpush1.msra.mxu0 0.0
    %4445 = vmatprep.subr.mxu0 0.0
    %4446 = vmatpush1.msra.mxu0 0.0
    %4447 = vmatprep.subr.mxu0 0.0
    %4448 = vmatpush1.msra.mxu0 0.0
    %4449 = vmatprep.subr.mxu0 0.0
    %4450 = vmatpush1.msra.mxu0 0.0
    %4451 = vmatprep.subr.mxu0 0.0
    %4452 = vmatpush1.msra.mxu0 0.0
    %4453 = vmatprep.subr.mxu0 0.0
    %4454 = vmatpush1.msra.mxu0 0.0
    %4455 = vmatprep.subr.mxu0 0.0
    %4456 = vmatpush1.msra.mxu0 0.0
    %4457 = vmatprep.subr.mxu0 0.0
    %4458 = vmatpush1.msra.mxu0 0.0
    %4459 = vmatprep.subr.mxu0 0.0
    %4460 = vmatpush1.msra.mxu0 0.0
    %4461 = vmatprep.subr.mxu0 0.0
    %4462 = vmatpush1.msra.mxu0 0.0
    %4463 = vmatprep.subr.mxu0 0.0
    %4464 = vmatpush1.msra.mxu0 0.0
    %4465 = vmatprep.subr.mxu0 0.0
    %4466 = vmatpush1.msra.mxu0 0.0
    %4467 = vmatprep.subr.mxu0 0.0
    %4468 = vmatpush1.msra.mxu0 0.0
    %4469 = vmatprep.subr.mxu0 0.0
    %4470 = vmatpush1.msra.mxu0 0.0
    %4471 = vmatprep.subr.mxu0 0.0
    %4472 = vmatpush1.msra.mxu0 0.0
    %4473 = vmatprep.subr.mxu0 0.0
    %4474 = vmatpush1.msra.mxu0 0.0
    %4475 = vmatprep.subr.mxu0 0.0
    %4476 = vmatpush1.msra.mxu0 0.0
    %4477 = vmatprep.subr.mxu0 0.0
    %4478 = vmatpush1.msra.mxu0 0.0
    %4479 = vmatprep.subr.mxu0 0.0
    %4480 = vmatpush1.msra.mxu0 0.0
    %4481 = vmatprep.subr.mxu0 0.0
    %4482 = vmatpush1.msra.mxu0 0.0
    %4483 = vmatprep.subr.mxu0 0.0
    %4484 = vmatpush1.msra.mxu0 0.0
    %4485 = vmatprep.subr.mxu0 0.0
    %4486 = vmatpush1.msra.mxu0 0.0
    %4487 = vmatprep.subr.mxu0 0.0
    %4488 = vmatpush1.msra.mxu0 0.0
    %4489 = vmatprep.subr.mxu0 0.0
    %4490 = vmatpush1.msra.mxu0 0.0
    %4491 = vmatprep.mubr.f32.mxu0 0.0
    %4492 = vmatmul.mubr.f32.gmra.mrb[0].mxu0 %v4416
    %v4493 = vpop.f32.mrb[0].mxu0
    %v4494 = vadd.f32 0.0, %v4493
    %v4495 = vpop.f32.mrb[0].mxu0
    %4496 = vmatprep.mubr.f32.mxu0 0.0
    %4497 = vmatmul.mubr.f32.gmra.mrb[0].mxu0 %v4419
    %v4498 = vpop.f32.mrb[0].mxu0
    %v4499 = vadd.f32 0.0, %v4498
    %v4500 = vpop.f32.mrb[0].mxu0
    %4501 = vmatprep.mubr.f32.mxu0 0.0
    %4502 = vmatmul.mubr.f32.gmra.mrb[0].mxu0 %v4422
    %v4503 = vpop.f32.mrb[0].mxu0
    %v4504 = vadd.f32 0.0, %v4503
    %v4505 = vpop.f32.mrb[0].mxu0
    %4506 = vmatprep.mubr.f32.mxu0 0.0
    %4507 = vmatmul.mubr.f32.gmra.mrb[0].mxu0 %v4425
    %v4508 = vpop.f32.mrb[0].mxu0
    %v4509 = vadd.f32 0.0, %v4508
    %v4510 = vpop.f32.mrb[0].mxu0
    %4511 = vdwg.mxu0
    %v4512 = vadd.f32 %v4248, %v4494
    %v4513 = vadd.f32 %v4249, %v4499
    %v4514 = vadd.f32 %v4250, %v4504
    %v4515 = vadd.f32 %v4251, %v4509
    %v4516 = vld [vmem:[#allocation13] sm:$0x1]
    %v4518 = vlaneseq
    %v4519 = vshrl.u32 %v4518, 7
    %v4520 = vsub.s32 0, %v4519
    %v4521 = vrot.slane %v4516, %v4520
    %v4523 = vadd.f32 %v4512, %v4521
    %v4524 = vadd.f32 %v4513, %v4521
    %v4525 = vadd.f32 %v4514, %v4521
    %v4526 = vadd.f32 %v4515, %v4521
    %v4527 = vld [vmem:[#allocation10] sm:$0xff]
    %v4528 = vld [vmem:[#allocation10 + $0x8] sm:$0xff]
    %v4529 = vld [vmem:[#allocation10 + $0x10] sm:$0xff]
    %v4530 = vld [vmem:[#allocation10 + $0x18] sm:$0xff]
    %4531 = vmatprep.subr.mxu0 0.0
    %4532 = vmatpush1.msra.mxu0 %v3363
    %4533 = vmatprep.subr.mxu0 0.0
    %4534 = vmatpush1.msra.mxu0 %v3364
    %4535 = vmatprep.subr.mxu0 0.0
    %4536 = vmatpush1.msra.mxu0 0.0
    %4537 = vmatprep.subr.mxu0 0.0
    %4538 = vmatpush1.msra.mxu0 0.0
    %4539 = vmatprep.subr.mxu0 0.0
    %4540 = vmatpush1.msra.mxu0 0.0
    %4541 = vmatprep.subr.mxu0 0.0
    %4542 = vmatpush1.msra.mxu0 0.0
    %4543 = vmatprep.subr.mxu0 0.0
    %4544 = vmatpush1.msra.mxu0 0.0
    %4545 = vmatprep.subr.mxu0 0.0
    %4546 = vmatpush1.msra.mxu0 0.0
    %4547 = vmatprep.subr.mxu0 0.0
    %4548 = vmatpush1.msra.mxu0 0.0
    %4549 = vmatprep.subr.mxu0 0.0
    %4550 = vmatpush1.msra.mxu0 0.0
    %4551 = vmatprep.subr.mxu0 0.0
    %4552 = vmatpush1.msra.mxu0 0.0
    %4553 = vmatprep.subr.mxu0 0.0
    %4554 = vmatpush1.msra.mxu0 0.0
    %4555 = vmatprep.subr.mxu0 0.0
    %4556 = vmatpush1.msra.mxu0 0.0
    %4557 = vmatprep.subr.mxu0 0.0
    %4558 = vmatpush1.msra.mxu0 0.0
    %4559 = vmatprep.subr.mxu0 0.0
    %4560 = vmatpush1.msra.mxu0 0.0
    %4561 = vmatprep.subr.mxu0 0.0
    %4562 = vmatpush1.msra.mxu0 0.0
    %4563 = vmatprep.subr.mxu0 0.0
    %4564 = vmatpush1.msra.mxu0 0.0
    %4565 = vmatprep.subr.mxu0 0.0
    %4566 = vmatpush1.msra.mxu0 0.0
    %4567 = vmatprep.subr.mxu0 0.0
    %4568 = vmatpush1.msra.mxu0 0.0
    %4569 = vmatprep.subr.mxu0 0.0
    %4570 = vmatpush1.msra.mxu0 0.0
    %4571 = vmatprep.subr.mxu0 0.0
    %4572 = vmatpush1.msra.mxu0 0.0
    %4573 = vmatprep.subr.mxu0 0.0
    %4574 = vmatpush1.msra.mxu0 0.0
    %4575 = vmatprep.subr.mxu0 0.0
    %4576 = vmatpush1.msra.mxu0 0.0
    %4577 = vmatprep.subr.mxu0 0.0
    %4578 = vmatpush1.msra.mxu0 0.0
    %4579 = vmatprep.subr.mxu0 0.0
    %4580 = vmatpush1.msra.mxu0 0.0
    %4581 = vmatprep.subr.mxu0 0.0
    %4582 = vmatpush1.msra.mxu0 0.0
    %4583 = vmatprep.subr.mxu0 0.0
    %4584 = vmatpush1.msra.mxu0 0.0
    %4585 = vmatprep.subr.mxu0 0.0
    %4586 = vmatpush1.msra.mxu0 0.0
    %4587 = vmatprep.subr.mxu0 0.0
    %4588 = vmatpush1.msra.mxu0 0.0
    %4589 = vmatprep.subr.mxu0 0.0
    %4590 = vmatpush1.msra.mxu0 0.0
    %4591 = vmatprep.subr.mxu0 0.0
    %4592 = vmatpush1.msra.mxu0 0.0
    %4593 = vmatprep.subr.mxu0 0.0
    %4594 = vmatpush1.msra.mxu0 0.0
    %4595 = vmatprep.mubr.f32.mxu0 0.0
    %4596 = vmatmul.mubr.f32.gmra.mrb[0].mxu0 %v3374
    %v4597 = vpop.f32.mrb[0].mxu0
    %v4598 = vadd.f32 0.0, %v4597
    %v4599 = vpop.f32.mrb[0].mxu0
    %4600 = vmatprep.mubr.f32.mxu0 0.0
    %4601 = vmatmul.mubr.f32.gmra.mrb[0].mxu0 %v3377
    %v4602 = vpop.f32.mrb[0].mxu0
    %v4603 = vadd.f32 0.0, %v4602
    %v4604 = vpop.f32.mrb[0].mxu0
    %4605 = vdwg.mxu0
    %4606 = vmatprep.subr.mxu0 0.0
    %4607 = vmatpush1.msra.mxu0 %v3365
    %4608 = vmatprep.subr.mxu0 0.0
    %4609 = vmatpush1.msra.mxu0 %v3366
    %4610 = vmatprep.subr.mxu0 0.0
    %4611 = vmatpush1.msra.mxu0 0.0
    %4612 = vmatprep.subr.mxu0 0.0
    %4613 = vmatpush1.msra.mxu0 0.0
    %4614 = vmatprep.subr.mxu0 0.0
    %4615 = vmatpush1.msra.mxu0 0.0
    %4616 = vmatprep.subr.mxu0 0.0
    %4617 = vmatpush1.msra.mxu0 0.0
    %4618 = vmatprep.subr.mxu0 0.0
    %4619 = vmatpush1.msra.mxu0 0.0
    %4620 = vmatprep.subr.mxu0 0.0
    %4621 = vmatpush1.msra.mxu0 0.0
    %4622 = vmatprep.subr.mxu0 0.0
    %4623 = vmatpush1.msra.mxu0 0.0
    %4624 = vmatprep.subr.mxu0 0.0
    %4625 = vmatpush1.msra.mxu0 0.0
    %4626 = vmatprep.subr.mxu0 0.0
    %4627 = vmatpush1.msra.mxu0 0.0
    %4628 = vmatprep.subr.mxu0 0.0
    %4629 = vmatpush1.msra.mxu0 0.0
    %4630 = vmatprep.subr.mxu0 0.0
    %4631 = vmatpush1.msra.mxu0 0.0
    %4632 = vmatprep.subr.mxu0 0.0
    %4633 = vmatpush1.msra.mxu0 0.0
    %4634 = vmatprep.subr.mxu0 0.0
    %4635 = vmatpush1.msra.mxu0 0.0
    %4636 = vmatprep.subr.mxu0 0.0
    %4637 = vmatpush1.msra.mxu0 0.0
    %4638 = vmatprep.subr.mxu0 0.0
    %4639 = vmatpush1.msra.mxu0 0.0
    %4640 = vmatprep.subr.mxu0 0.0
    %4641 = vmatpush1.msra.mxu0 0.0
    %4642 = vmatprep.subr.mxu0 0.0
    %4643 = vmatpush1.msra.mxu0 0.0
    %4644 = vmatprep.subr.mxu0 0.0
    %4645 = vmatpush1.msra.mxu0 0.0
    %4646 = vmatprep.subr.mxu0 0.0
    %4647 = vmatpush1.msra.mxu0 0.0
    %4648 = vmatprep.subr.mxu0 0.0
    %4649 = vmatpush1.msra.mxu0 0.0
    %4650 = vmatprep.subr.mxu0 0.0
    %4651 = vmatpush1.msra.mxu0 0.0
    %4652 = vmatprep.subr.mxu0 0.0
    %4653 = vmatpush1.msra.mxu0 0.0
    %4654 = vmatprep.subr.mxu0 0.0
    %4655 = vmatpush1.msra.mxu0 0.0
    %4656 = vmatprep.subr.mxu0 0.0
    %4657 = vmatpush1.msra.mxu0 0.0
    %4658 = vmatprep.subr.mxu0 0.0
    %4659 = vmatpush1.msra.mxu0 0.0
    %4660 = vmatprep.subr.mxu0 0.0
    %4661 = vmatpush1.msra.mxu0 0.0
    %4662 = vmatprep.subr.mxu0 0.0
    %4663 = vmatpush1.msra.mxu0 0.0
    %4664 = vmatprep.subr.mxu0 0.0
    %4665 = vmatpush1.msra.mxu0 0.0
    %4666 = vmatprep.subr.mxu0 0.0
    %4667 = vmatpush1.msra.mxu0 0.0
    %4668 = vmatprep.subr.mxu0 0.0
    %4669 = vmatpush1.msra.mxu0 0.0
    %4670 = vmatprep.mubr.f32.mxu0 0.0
    %4671 = vmatmul.mubr.f32.gmra.mrb[0].mxu0 %v3374
    %v4672 = vpop.f32.mrb[0].mxu0
    %v4673 = vadd.f32 0.0, %v4672
    %v4674 = vpop.f32.mrb[0].mxu0
    %4675 = vmatprep.mubr.f32.mxu0 0.0
    %4676 = vmatmul.mubr.f32.gmra.mrb[0].mxu0 %v3377
    %v4677 = vpop.f32.mrb[0].mxu0
    %v4678 = vadd.f32 0.0, %v4677
    %v4679 = vpop.f32.mrb[0].mxu0
    %4680 = vdwg.mxu0
    %s4681 = scalar_lea.vmem [#allocation10], 32
    %v4682 = vld [vmem:[%s4681] sm:$0xff]
    %v4683 = vld [vmem:[%s4681 + $0x8] sm:$0xff]
    %v4684 = vld [vmem:[%s4681 + $0x10] sm:$0xff]
    %v4685 = vld [vmem:[%s4681 + $0x18] sm:$0xff]
    %v4687 = vsel %vm1126, %v4598, 0
    %v4690 = vsel %vm1126, %v4603, 0
    %v4693 = vsel %vm1126, %v4673, 0
    %v4696 = vsel %vm1126, %v4678, 0
    %4698 = vmatprep.subr.mxu0 0.0
    %4699 = vmatpush1.msra.mxu0 %v4682
    %4700 = vmatprep.subr.mxu0 0.0
    %4701 = vmatpush1.msra.mxu0 %v4683
    %4702 = vmatprep.subr.mxu0 0.0
    %4703 = vmatpush1.msra.mxu0 %v4684
    %4704 = vmatprep.subr.mxu0 0.0
    %4705 = vmatpush1.msra.mxu0 %v4685
    %4706 = vmatprep.subr.mxu0 0.0
    %4707 = vmatpush1.msra.mxu0 0.0
    %4708 = vmatprep.subr.mxu0 0.0
    %4709 = vmatpush1.msra.mxu0 0.0
    %4710 = vmatprep.subr.mxu0 0.0
    %4711 = vmatpush1.msra.mxu0 0.0
    %4712 = vmatprep.subr.mxu0 0.0
    %4713 = vmatpush1.msra.mxu0 0.0
    %4714 = vmatprep.subr.mxu0 0.0
    %4715 = vmatpush1.msra.mxu0 0.0
    %4716 = vmatprep.subr.mxu0 0.0
    %4717 = vmatpush1.msra.mxu0 0.0
    %4718 = vmatprep.subr.mxu0 0.0
    %4719 = vmatpush1.msra.mxu0 0.0
    %4720 = vmatprep.subr.mxu0 0.0
    %4721 = vmatpush1.msra.mxu0 0.0
    %4722 = vmatprep.subr.mxu0 0.0
    %4723 = vmatpush1.msra.mxu0 0.0
    %4724 = vmatprep.subr.mxu0 0.0
    %4725 = vmatpush1.msra.mxu0 0.0
    %4726 = vmatprep.subr.mxu0 0.0
    %4727 = vmatpush1.msra.mxu0 0.0
    %4728 = vmatprep.subr.mxu0 0.0
    %4729 = vmatpush1.msra.mxu0 0.0
    %4730 = vmatprep.subr.mxu0 0.0
    %4731 = vmatpush1.msra.mxu0 0.0
    %4732 = vmatprep.subr.mxu0 0.0
    %4733 = vmatpush1.msra.mxu0 0.0
    %4734 = vmatprep.subr.mxu0 0.0
    %4735 = vmatpush1.msra.mxu0 0.0
    %4736 = vmatprep.subr.mxu0 0.0
    %4737 = vmatpush1.msra.mxu0 0.0
    %4738 = vmatprep.subr.mxu0 0.0
    %4739 = vmatpush1.msra.mxu0 0.0
    %4740 = vmatprep.subr.mxu0 0.0
    %4741 = vmatpush1.msra.mxu0 0.0
    %4742 = vmatprep.subr.mxu0 0.0
    %4743 = vmatpush1.msra.mxu0 0.0
    %4744 = vmatprep.subr.mxu0 0.0
    %4745 = vmatpush1.msra.mxu0 0.0
    %4746 = vmatprep.subr.mxu0 0.0
    %4747 = vmatpush1.msra.mxu0 0.0
    %4748 = vmatprep.subr.mxu0 0.0
    %4749 = vmatpush1.msra.mxu0 0.0
    %4750 = vmatprep.subr.mxu0 0.0
    %4751 = vmatpush1.msra.mxu0 0.0
    %4752 = vmatprep.subr.mxu0 0.0
    %4753 = vmatpush1.msra.mxu0 0.0
    %4754 = vmatprep.subr.mxu0 0.0
    %4755 = vmatpush1.msra.mxu0 0.0
    %4756 = vmatprep.subr.mxu0 0.0
    %4757 = vmatpush1.msra.mxu0 0.0
    %4758 = vmatprep.subr.mxu0 0.0
    %4759 = vmatpush1.msra.mxu0 0.0
    %4760 = vmatprep.subr.mxu0 0.0
    %4761 = vmatpush1.msra.mxu0 0.0
    %4762 = vmatprep.mubr.f32.mxu0 0.0
    %4763 = vmatmul.mubr.f32.gmra.mrb[0].mxu0 %v4687
    %v4764 = vpop.f32.mrb[0].mxu0
    %v4765 = vadd.f32 0.0, %v4764
    %v4766 = vpop.f32.mrb[0].mxu0
    %4767 = vmatprep.mubr.f32.mxu0 0.0
    %4768 = vmatmul.mubr.f32.gmra.mrb[0].mxu0 %v4690
    %v4769 = vpop.f32.mrb[0].mxu0
    %v4770 = vadd.f32 0.0, %v4769
    %v4771 = vpop.f32.mrb[0].mxu0
    %4772 = vmatprep.mubr.f32.mxu0 0.0
    %4773 = vmatmul.mubr.f32.gmra.mrb[0].mxu0 %v4693
    %v4774 = vpop.f32.mrb[0].mxu0
    %v4775 = vadd.f32 0.0, %v4774
    %v4776 = vpop.f32.mrb[0].mxu0
    %4777 = vmatprep.mubr.f32.mxu0 0.0
    %4778 = vmatmul.mubr.f32.gmra.mrb[0].mxu0 %v4696
    %v4779 = vpop.f32.mrb[0].mxu0
    %v4780 = vadd.f32 0.0, %v4779
    %v4781 = vpop.f32.mrb[0].mxu0
    %4782 = vdwg.mxu0
    %v4784 = vsel %vm1126, %v3363, 0
    %v4787 = vsel %vm1126, %v3364, 0
    %v4790 = vsel %vm1126, %v3365, 0
    %v4793 = vsel %vm1126, %v3366, 0
    %4795 = vmatprep.subr.mxu0 0.0
    %4796 = vmatpush1.msra.mxu0 %v4527
    %4797 = vmatprep.subr.mxu0 0.0
    %4798 = vmatpush1.msra.mxu0 %v4528
    %4799 = vmatprep.subr.mxu0 0.0
    %4800 = vmatpush1.msra.mxu0 %v4529
    %4801 = vmatprep.subr.mxu0 0.0
    %4802 = vmatpush1.msra.mxu0 %v4530
    %4803 = vmatprep.subr.mxu0 0.0
    %4804 = vmatpush1.msra.mxu0 0.0
    %4805 = vmatprep.subr.mxu0 0.0
    %4806 = vmatpush1.msra.mxu0 0.0
    %4807 = vmatprep.subr.mxu0 0.0
    %4808 = vmatpush1.msra.mxu0 0.0
    %4809 = vmatprep.subr.mxu0 0.0
    %4810 = vmatpush1.msra.mxu0 0.0
    %4811 = vmatprep.subr.mxu0 0.0
    %4812 = vmatpush1.msra.mxu0 0.0
    %4813 = vmatprep.subr.mxu0 0.0
    %4814 = vmatpush1.msra.mxu0 0.0
    %4815 = vmatprep.subr.mxu0 0.0
    %4816 = vmatpush1.msra.mxu0 0.0
    %4817 = vmatprep.subr.mxu0 0.0
    %4818 = vmatpush1.msra.mxu0 0.0
    %4819 = vmatprep.subr.mxu0 0.0
    %4820 = vmatpush1.msra.mxu0 0.0
    %4821 = vmatprep.subr.mxu0 0.0
    %4822 = vmatpush1.msra.mxu0 0.0
    %4823 = vmatprep.subr.mxu0 0.0
    %4824 = vmatpush1.msra.mxu0 0.0
    %4825 = vmatprep.subr.mxu0 0.0
    %4826 = vmatpush1.msra.mxu0 0.0
    %4827 = vmatprep.subr.mxu0 0.0
    %4828 = vmatpush1.msra.mxu0 0.0
    %4829 = vmatprep.subr.mxu0 0.0
    %4830 = vmatpush1.msra.mxu0 0.0
    %4831 = vmatprep.subr.mxu0 0.0
    %4832 = vmatpush1.msra.mxu0 0.0
    %4833 = vmatprep.subr.mxu0 0.0
    %4834 = vmatpush1.msra.mxu0 0.0
    %4835 = vmatprep.subr.mxu0 0.0
    %4836 = vmatpush1.msra.mxu0 0.0
    %4837 = vmatprep.subr.mxu0 0.0
    %4838 = vmatpush1.msra.mxu0 0.0
    %4839 = vmatprep.subr.mxu0 0.0
    %4840 = vmatpush1.msra.mxu0 0.0
    %4841 = vmatprep.subr.mxu0 0.0
    %4842 = vmatpush1.msra.mxu0 0.0
    %4843 = vmatprep.subr.mxu0 0.0
    %4844 = vmatpush1.msra.mxu0 0.0
    %4845 = vmatprep.subr.mxu0 0.0
    %4846 = vmatpush1.msra.mxu0 0.0
    %4847 = vmatprep.subr.mxu0 0.0
    %4848 = vmatpush1.msra.mxu0 0.0
    %4849 = vmatprep.subr.mxu0 0.0
    %4850 = vmatpush1.msra.mxu0 0.0
    %4851 = vmatprep.subr.mxu0 0.0
    %4852 = vmatpush1.msra.mxu0 0.0
    %4853 = vmatprep.subr.mxu0 0.0
    %4854 = vmatpush1.msra.mxu0 0.0
    %4855 = vmatprep.subr.mxu0 0.0
    %4856 = vmatpush1.msra.mxu0 0.0
    %4857 = vmatprep.subr.mxu0 0.0
    %4858 = vmatpush1.msra.mxu0 0.0
    %4859 = vmatprep.mubr.f32.mxu0 0.0
    %4860 = vmatmul.mubr.f32.gmra.mrb[0].mxu0 %v4784
    %v4861 = vpop.f32.mrb[0].mxu0
    %v4862 = vadd.f32 %v4765, %v4861
    %v4863 = vpop.f32.mrb[0].mxu0
    %4864 = vmatprep.mubr.f32.mxu0 0.0
    %4865 = vmatmul.mubr.f32.gmra.mrb[0].mxu0 %v4787
    %v4866 = vpop.f32.mrb[0].mxu0
    %v4867 = vadd.f32 %v4770, %v4866
    %v4868 = vpop.f32.mrb[0].mxu0
    %4869 = vmatprep.mubr.f32.mxu0 0.0
    %4870 = vmatmul.mubr.f32.gmra.mrb[0].mxu0 %v4790
    %v4871 = vpop.f32.mrb[0].mxu0
    %v4872 = vadd.f32 %v4775, %v4871
    %v4873 = vpop.f32.mrb[0].mxu0
    %4874 = vmatprep.mubr.f32.mxu0 0.0
    %4875 = vmatmul.mubr.f32.gmra.mrb[0].mxu0 %v4793
    %v4876 = vpop.f32.mrb[0].mxu0
    %v4877 = vadd.f32 %v4780, %v4876
    %v4878 = vpop.f32.mrb[0].mxu0
    %4879 = vdwg.mxu0
    %4880 = vmatprep.subr.mxu0 0.0
    %4881 = vmatpush1.msra.mxu0 %v4598
    %4882 = vmatprep.subr.mxu0 0.0
    %4883 = vmatpush1.msra.mxu0 %v4603
    %4884 = vmatprep.subr.mxu0 0.0
    %4885 = vmatpush1.msra.mxu0 0.0
    %4886 = vmatprep.subr.mxu0 0.0
    %4887 = vmatpush1.msra.mxu0 0.0
    %4888 = vmatprep.subr.mxu0 0.0
    %4889 = vmatpush1.msra.mxu0 0.0
    %4890 = vmatprep.subr.mxu0 0.0
    %4891 = vmatpush1.msra.mxu0 0.0
    %4892 = vmatprep.subr.mxu0 0.0
    %4893 = vmatpush1.msra.mxu0 0.0
    %4894 = vmatprep.subr.mxu0 0.0
    %4895 = vmatpush1.msra.mxu0 0.0
    %4896 = vmatprep.subr.mxu0 0.0
    %4897 = vmatpush1.msra.mxu0 0.0
    %4898 = vmatprep.subr.mxu0 0.0
    %4899 = vmatpush1.msra.mxu0 0.0
    %4900 = vmatprep.subr.mxu0 0.0
    %4901 = vmatpush1.msra.mxu0 0.0
    %4902 = vmatprep.subr.mxu0 0.0
    %4903 = vmatpush1.msra.mxu0 0.0
    %4904 = vmatprep.subr.mxu0 0.0
    %4905 = vmatpush1.msra.mxu0 0.0
    %4906 = vmatprep.subr.mxu0 0.0
    %4907 = vmatpush1.msra.mxu0 0.0
    %4908 = vmatprep.subr.mxu0 0.0
    %4909 = vmatpush1.msra.mxu0 0.0
    %4910 = vmatprep.subr.mxu0 0.0
    %4911 = vmatpush1.msra.mxu0 0.0
    %4912 = vmatprep.subr.mxu0 0.0
    %4913 = vmatpush1.msra.mxu0 0.0
    %4914 = vmatprep.subr.mxu0 0.0
    %4915 = vmatpush1.msra.mxu0 0.0
    %4916 = vmatprep.subr.mxu0 0.0
    %4917 = vmatpush1.msra.mxu0 0.0
    %4918 = vmatprep.subr.mxu0 0.0
    %4919 = vmatpush1.msra.mxu0 0.0
    %4920 = vmatprep.subr.mxu0 0.0
    %4921 = vmatpush1.msra.mxu0 0.0
    %4922 = vmatprep.subr.mxu0 0.0
    %4923 = vmatpush1.msra.mxu0 0.0
    %4924 = vmatprep.subr.mxu0 0.0
    %4925 = vmatpush1.msra.mxu0 0.0
    %4926 = vmatprep.subr.mxu0 0.0
    %4927 = vmatpush1.msra.mxu0 0.0
    %4928 = vmatprep.subr.mxu0 0.0
    %4929 = vmatpush1.msra.mxu0 0.0
    %4930 = vmatprep.subr.mxu0 0.0
    %4931 = vmatpush1.msra.mxu0 0.0
    %4932 = vmatprep.subr.mxu0 0.0
    %4933 = vmatpush1.msra.mxu0 0.0
    %4934 = vmatprep.subr.mxu0 0.0
    %4935 = vmatpush1.msra.mxu0 0.0
    %4936 = vmatprep.subr.mxu0 0.0
    %4937 = vmatpush1.msra.mxu0 0.0
    %4938 = vmatprep.subr.mxu0 0.0
    %4939 = vmatpush1.msra.mxu0 0.0
    %4940 = vmatprep.subr.mxu0 0.0
    %4941 = vmatpush1.msra.mxu0 0.0
    %4942 = vmatprep.subr.mxu0 0.0
    %4943 = vmatpush1.msra.mxu0 0.0
    %4944 = vmatprep.mubr.f32.mxu0 0.0
    %4945 = vmatmul.mubr.f32.gmra.mrb[0].mxu0 %v3374
    %v4946 = vpop.f32.mrb[0].mxu0
    %v4947 = vadd.f32 0.0, %v4946
    %v4948 = vpop.f32.mrb[0].mxu0
    %4949 = vmatprep.mubr.f32.mxu0 0.0
    %4950 = vmatmul.mubr.f32.gmra.mrb[0].mxu0 %v3377
    %v4951 = vpop.f32.mrb[0].mxu0
    %v4952 = vadd.f32 0.0, %v4951
    %v4953 = vpop.f32.mrb[0].mxu0
    %4954 = vdwg.mxu0
    %v4955 = vmul.f32 %v4947, 2.0
    %v4956 = vmul.f32 %v4952, 2.0
    %v4957 = vsub.f32 %v4955, %v3363
    %v4958 = vsub.f32 %v4956, %v3364
    %4959 = vmatprep.subr.mxu0 0.0
    %4960 = vmatpush1.msra.mxu0 %v4673
    %4961 = vmatprep.subr.mxu0 0.0
    %4962 = vmatpush1.msra.mxu0 %v4678
    %4963 = vmatprep.subr.mxu0 0.0
    %4964 = vmatpush1.msra.mxu0 0.0
    %4965 = vmatprep.subr.mxu0 0.0
    %4966 = vmatpush1.msra.mxu0 0.0
    %4967 = vmatprep.subr.mxu0 0.0
    %4968 = vmatpush1.msra.mxu0 0.0
    %4969 = vmatprep.subr.mxu0 0.0
    %4970 = vmatpush1.msra.mxu0 0.0
    %4971 = vmatprep.subr.mxu0 0.0
    %4972 = vmatpush1.msra.mxu0 0.0
    %4973 = vmatprep.subr.mxu0 0.0
    %4974 = vmatpush1.msra.mxu0 0.0
    %4975 = vmatprep.subr.mxu0 0.0
    %4976 = vmatpush1.msra.mxu0 0.0
    %4977 = vmatprep.subr.mxu0 0.0
    %4978 = vmatpush1.msra.mxu0 0.0
    %4979 = vmatprep.subr.mxu0 0.0
    %4980 = vmatpush1.msra.mxu0 0.0
    %4981 = vmatprep.subr.mxu0 0.0
    %4982 = vmatpush1.msra.mxu0 0.0
    %4983 = vmatprep.subr.mxu0 0.0
    %4984 = vmatpush1.msra.mxu0 0.0
    %4985 = vmatprep.subr.mxu0 0.0
    %4986 = vmatpush1.msra.mxu0 0.0
    %4987 = vmatprep.subr.mxu0 0.0
    %4988 = vmatpush1.msra.mxu0 0.0
    %4989 = vmatprep.subr.mxu0 0.0
    %4990 = vmatpush1.msra.mxu0 0.0
    %4991 = vmatprep.subr.mxu0 0.0
    %4992 = vmatpush1.msra.mxu0 0.0
    %4993 = vmatprep.subr.mxu0 0.0
    %4994 = vmatpush1.msra.mxu0 0.0
    %4995 = vmatprep.subr.mxu0 0.0
    %4996 = vmatpush1.msra.mxu0 0.0
    %4997 = vmatprep.subr.mxu0 0.0
    %4998 = vmatpush1.msra.mxu0 0.0
    %4999 = vmatprep.subr.mxu0 0.0
    %5000 = vmatpush1.msra.mxu0 0.0
    %5001 = vmatprep.subr.mxu0 0.0
    %5002 = vmatpush1.msra.mxu0 0.0
    %5003 = vmatprep.subr.mxu0 0.0
    %5004 = vmatpush1.msra.mxu0 0.0
    %5005 = vmatprep.subr.mxu0 0.0
    %5006 = vmatpush1.msra.mxu0 0.0
    %5007 = vmatprep.subr.mxu0 0.0
    %5008 = vmatpush1.msra.mxu0 0.0
    %5009 = vmatprep.subr.mxu0 0.0
    %5010 = vmatpush1.msra.mxu0 0.0
    %5011 = vmatprep.subr.mxu0 0.0
    %5012 = vmatpush1.msra.mxu0 0.0
    %5013 = vmatprep.subr.mxu0 0.0
    %5014 = vmatpush1.msra.mxu0 0.0
    %5015 = vmatprep.subr.mxu0 0.0
    %5016 = vmatpush1.msra.mxu0 0.0
    %5017 = vmatprep.subr.mxu0 0.0
    %5018 = vmatpush1.msra.mxu0 0.0
    %5019 = vmatprep.subr.mxu0 0.0
    %5020 = vmatpush1.msra.mxu0 0.0
    %5021 = vmatprep.subr.mxu0 0.0
    %5022 = vmatpush1.msra.mxu0 0.0
    %5023 = vmatprep.mubr.f32.mxu0 0.0
    %5024 = vmatmul.mubr.f32.gmra.mrb[0].mxu0 %v3374
    %v5025 = vpop.f32.mrb[0].mxu0
    %v5026 = vadd.f32 0.0, %v5025
    %v5027 = vpop.f32.mrb[0].mxu0
    %5028 = vmatprep.mubr.f32.mxu0 0.0
    %5029 = vmatmul.mubr.f32.gmra.mrb[0].mxu0 %v3377
    %v5030 = vpop.f32.mrb[0].mxu0
    %v5031 = vadd.f32 0.0, %v5030
    %v5032 = vpop.f32.mrb[0].mxu0
    %5033 = vdwg.mxu0
    %v5034 = vmul.f32 %v5026, 2.0
    %v5035 = vmul.f32 %v5031, 2.0
    %v5036 = vsub.f32 %v5034, %v3365
    %v5037 = vsub.f32 %v5035, %v3366
    %s5038 = scalar_lea.vmem [#allocation10], 64
    %v5039 = vld [vmem:[%s5038] sm:$0xff]
    %v5040 = vld [vmem:[%s5038 + $0x8] sm:$0xff]
    %v5041 = vld [vmem:[%s5038 + $0x10] sm:$0xff]
    %v5042 = vld [vmem:[%s5038 + $0x18] sm:$0xff]
    %v5044 = vsel %vm1126, %v4957, 0
    %v5047 = vsel %vm1126, %v4958, 0
    %v5050 = vsel %vm1126, %v5036, 0
    %v5053 = vsel %vm1126, %v5037, 0
    %5055 = vmatprep.subr.mxu0 0.0
    %5056 = vmatpush1.msra.mxu0 %v5039
    %5057 = vmatprep.subr.mxu0 0.0
    %5058 = vmatpush1.msra.mxu0 %v5040
    %5059 = vmatprep.subr.mxu0 0.0
    %5060 = vmatpush1.msra.mxu0 %v5041
    %5061 = vmatprep.subr.mxu0 0.0
    %5062 = vmatpush1.msra.mxu0 %v5042
    %5063 = vmatprep.subr.mxu0 0.0
    %5064 = vmatpush1.msra.mxu0 0.0
    %5065 = vmatprep.subr.mxu0 0.0
    %5066 = vmatpush1.msra.mxu0 0.0
    %5067 = vmatprep.subr.mxu0 0.0
    %5068 = vmatpush1.msra.mxu0 0.0
    %5069 = vmatprep.subr.mxu0 0.0
    %5070 = vmatpush1.msra.mxu0 0.0
    %5071 = vmatprep.subr.mxu0 0.0
    %5072 = vmatpush1.msra.mxu0 0.0
    %5073 = vmatprep.subr.mxu0 0.0
    %5074 = vmatpush1.msra.mxu0 0.0
    %5075 = vmatprep.subr.mxu0 0.0
    %5076 = vmatpush1.msra.mxu0 0.0
    %5077 = vmatprep.subr.mxu0 0.0
    %5078 = vmatpush1.msra.mxu0 0.0
    %5079 = vmatprep.subr.mxu0 0.0
    %5080 = vmatpush1.msra.mxu0 0.0
    %5081 = vmatprep.subr.mxu0 0.0
    %5082 = vmatpush1.msra.mxu0 0.0
    %5083 = vmatprep.subr.mxu0 0.0
    %5084 = vmatpush1.msra.mxu0 0.0
    %5085 = vmatprep.subr.mxu0 0.0
    %5086 = vmatpush1.msra.mxu0 0.0
    %5087 = vmatprep.subr.mxu0 0.0
    %5088 = vmatpush1.msra.mxu0 0.0
    %5089 = vmatprep.subr.mxu0 0.0
    %5090 = vmatpush1.msra.mxu0 0.0
    %5091 = vmatprep.subr.mxu0 0.0
    %5092 = vmatpush1.msra.mxu0 0.0
    %5093 = vmatprep.subr.mxu0 0.0
    %5094 = vmatpush1.msra.mxu0 0.0
    %5095 = vmatprep.subr.mxu0 0.0
    %5096 = vmatpush1.msra.mxu0 0.0
    %5097 = vmatprep.subr.mxu0 0.0
    %5098 = vmatpush1.msra.mxu0 0.0
    %5099 = vmatprep.subr.mxu0 0.0
    %5100 = vmatpush1.msra.mxu0 0.0
    %5101 = vmatprep.subr.mxu0 0.0
    %5102 = vmatpush1.msra.mxu0 0.0
    %5103 = vmatprep.subr.mxu0 0.0
    %5104 = vmatpush1.msra.mxu0 0.0
    %5105 = vmatprep.subr.mxu0 0.0
    %5106 = vmatpush1.msra.mxu0 0.0
    %5107 = vmatprep.subr.mxu0 0.0
    %5108 = vmatpush1.msra.mxu0 0.0
    %5109 = vmatprep.subr.mxu0 0.0
    %5110 = vmatpush1.msra.mxu0 0.0
    %5111 = vmatprep.subr.mxu0 0.0
    %5112 = vmatpush1.msra.mxu0 0.0
    %5113 = vmatprep.subr.mxu0 0.0
    %5114 = vmatpush1.msra.mxu0 0.0
    %5115 = vmatprep.subr.mxu0 0.0
    %5116 = vmatpush1.msra.mxu0 0.0
    %5117 = vmatprep.subr.mxu0 0.0
    %5118 = vmatpush1.msra.mxu0 0.0
    %5119 = vmatprep.mubr.f32.mxu0 0.0
    %5120 = vmatmul.mubr.f32.gmra.mrb[0].mxu0 %v5044
    %v5121 = vpop.f32.mrb[0].mxu0
    %v5122 = vadd.f32 0.0, %v5121
    %v5123 = vpop.f32.mrb[0].mxu0
    %5124 = vmatprep.mubr.f32.mxu0 0.0
    %5125 = vmatmul.mubr.f32.gmra.mrb[0].mxu0 %v5047
    %v5126 = vpop.f32.mrb[0].mxu0
    %v5127 = vadd.f32 0.0, %v5126
    %v5128 = vpop.f32.mrb[0].mxu0
    %5129 = vmatprep.mubr.f32.mxu0 0.0
    %5130 = vmatmul.mubr.f32.gmra.mrb[0].mxu0 %v5050
    %v5131 = vpop.f32.mrb[0].mxu0
    %v5132 = vadd.f32 0.0, %v5131
    %v5133 = vpop.f32.mrb[0].mxu0
    %5134 = vmatprep.mubr.f32.mxu0 0.0
    %5135 = vmatmul.mubr.f32.gmra.mrb[0].mxu0 %v5053
    %v5136 = vpop.f32.mrb[0].mxu0
    %v5137 = vadd.f32 0.0, %v5136
    %v5138 = vpop.f32.mrb[0].mxu0
    %5139 = vdwg.mxu0
    %v5140 = vadd.f32 %v4862, %v5122
    %v5141 = vadd.f32 %v4867, %v5127
    %v5142 = vadd.f32 %v4872, %v5132
    %v5143 = vadd.f32 %v4877, %v5137
    %5144 = vmatprep.subr.mxu0 0.0
    %5145 = vmatpush1.msra.mxu0 %v4598
    %5146 = vmatprep.subr.mxu0 0.0
    %5147 = vmatpush1.msra.mxu0 %v4603
    %5148 = vmatprep.subr.mxu0 0.0
    %5149 = vmatpush1.msra.mxu0 0.0
    %5150 = vmatprep.subr.mxu0 0.0
    %5151 = vmatpush1.msra.mxu0 0.0
    %5152 = vmatprep.subr.mxu0 0.0
    %5153 = vmatpush1.msra.mxu0 0.0
    %5154 = vmatprep.subr.mxu0 0.0
    %5155 = vmatpush1.msra.mxu0 0.0
    %5156 = vmatprep.subr.mxu0 0.0
    %5157 = vmatpush1.msra.mxu0 0.0
    %5158 = vmatprep.subr.mxu0 0.0
    %5159 = vmatpush1.msra.mxu0 0.0
    %5160 = vmatprep.subr.mxu0 0.0
    %5161 = vmatpush1.msra.mxu0 0.0
    %5162 = vmatprep.subr.mxu0 0.0
    %5163 = vmatpush1.msra.mxu0 0.0
    %5164 = vmatprep.subr.mxu0 0.0
    %5165 = vmatpush1.msra.mxu0 0.0
    %5166 = vmatprep.subr.mxu0 0.0
    %5167 = vmatpush1.msra.mxu0 0.0
    %5168 = vmatprep.subr.mxu0 0.0
    %5169 = vmatpush1.msra.mxu0 0.0
    %5170 = vmatprep.subr.mxu0 0.0
    %5171 = vmatpush1.msra.mxu0 0.0
    %5172 = vmatprep.subr.mxu0 0.0
    %5173 = vmatpush1.msra.mxu0 0.0
    %5174 = vmatprep.subr.mxu0 0.0
    %5175 = vmatpush1.msra.mxu0 0.0
    %5176 = vmatprep.subr.mxu0 0.0
    %5177 = vmatpush1.msra.mxu0 0.0
    %5178 = vmatprep.subr.mxu0 0.0
    %5179 = vmatpush1.msra.mxu0 0.0
    %5180 = vmatprep.subr.mxu0 0.0
    %5181 = vmatpush1.msra.mxu0 0.0
    %5182 = vmatprep.subr.mxu0 0.0
    %5183 = vmatpush1.msra.mxu0 0.0
    %5184 = vmatprep.subr.mxu0 0.0
    %5185 = vmatpush1.msra.mxu0 0.0
    %5186 = vmatprep.subr.mxu0 0.0
    %5187 = vmatpush1.msra.mxu0 0.0
    %5188 = vmatprep.subr.mxu0 0.0
    %5189 = vmatpush1.msra.mxu0 0.0
    %5190 = vmatprep.subr.mxu0 0.0
    %5191 = vmatpush1.msra.mxu0 0.0
    %5192 = vmatprep.subr.mxu0 0.0
    %5193 = vmatpush1.msra.mxu0 0.0
    %5194 = vmatprep.subr.mxu0 0.0
    %5195 = vmatpush1.msra.mxu0 0.0
    %5196 = vmatprep.subr.mxu0 0.0
    %5197 = vmatpush1.msra.mxu0 0.0
    %5198 = vmatprep.subr.mxu0 0.0
    %5199 = vmatpush1.msra.mxu0 0.0
    %5200 = vmatprep.subr.mxu0 0.0
    %5201 = vmatpush1.msra.mxu0 0.0
    %5202 = vmatprep.subr.mxu0 0.0
    %5203 = vmatpush1.msra.mxu0 0.0
    %5204 = vmatprep.subr.mxu0 0.0
    %5205 = vmatpush1.msra.mxu0 0.0
    %5206 = vmatprep.subr.mxu0 0.0
    %5207 = vmatpush1.msra.mxu0 0.0
    %5208 = vmatprep.mubr.f32.mxu0 0.0
    %5209 = vmatmul.mubr.f32.gmra.mrb[0].mxu0 %v3991
    %v5210 = vpop.f32.mrb[0].mxu0
    %v5211 = vadd.f32 0.0, %v5210
    %v5212 = vpop.f32.mrb[0].mxu0
    %5213 = vmatprep.mubr.f32.mxu0 0.0
    %5214 = vmatmul.mubr.f32.gmra.mrb[0].mxu0 %v3994
    %v5215 = vpop.f32.mrb[0].mxu0
    %v5216 = vadd.f32 0.0, %v5215
    %v5217 = vpop.f32.mrb[0].mxu0
    %5218 = vdwg.mxu0
    %5219 = vmatprep.subr.mxu0 0.0
    %5220 = vmatpush1.msra.mxu0 %v4673
    %5221 = vmatprep.subr.mxu0 0.0
    %5222 = vmatpush1.msra.mxu0 %v4678
    %5223 = vmatprep.subr.mxu0 0.0
    %5224 = vmatpush1.msra.mxu0 0.0
    %5225 = vmatprep.subr.mxu0 0.0
    %5226 = vmatpush1.msra.mxu0 0.0
    %5227 = vmatprep.subr.mxu0 0.0
    %5228 = vmatpush1.msra.mxu0 0.0
    %5229 = vmatprep.subr.mxu0 0.0
    %5230 = vmatpush1.msra.mxu0 0.0
    %5231 = vmatprep.subr.mxu0 0.0
    %5232 = vmatpush1.msra.mxu0 0.0
    %5233 = vmatprep.subr.mxu0 0.0
    %5234 = vmatpush1.msra.mxu0 0.0
    %5235 = vmatprep.subr.mxu0 0.0
    %5236 = vmatpush1.msra.mxu0 0.0
    %5237 = vmatprep.subr.mxu0 0.0
    %5238 = vmatpush1.msra.mxu0 0.0
    %5239 = vmatprep.subr.mxu0 0.0
    %5240 = vmatpush1.msra.mxu0 0.0
    %5241 = vmatprep.subr.mxu0 0.0
    %5242 = vmatpush1.msra.mxu0 0.0
    %5243 = vmatprep.subr.mxu0 0.0
    %5244 = vmatpush1.msra.mxu0 0.0
    %5245 = vmatprep.subr.mxu0 0.0
    %5246 = vmatpush1.msra.mxu0 0.0
    %5247 = vmatprep.subr.mxu0 0.0
    %5248 = vmatpush1.msra.mxu0 0.0
    %5249 = vmatprep.subr.mxu0 0.0
    %5250 = vmatpush1.msra.mxu0 0.0
    %5251 = vmatprep.subr.mxu0 0.0
    %5252 = vmatpush1.msra.mxu0 0.0
    %5253 = vmatprep.subr.mxu0 0.0
    %5254 = vmatpush1.msra.mxu0 0.0
    %5255 = vmatprep.subr.mxu0 0.0
    %5256 = vmatpush1.msra.mxu0 0.0
    %5257 = vmatprep.subr.mxu0 0.0
    %5258 = vmatpush1.msra.mxu0 0.0
    %5259 = vmatprep.subr.mxu0 0.0
    %5260 = vmatpush1.msra.mxu0 0.0
    %5261 = vmatprep.subr.mxu0 0.0
    %5262 = vmatpush1.msra.mxu0 0.0
    %5263 = vmatprep.subr.mxu0 0.0
    %5264 = vmatpush1.msra.mxu0 0.0
    %5265 = vmatprep.subr.mxu0 0.0
    %5266 = vmatpush1.msra.mxu0 0.0
    %5267 = vmatprep.subr.mxu0 0.0
    %5268 = vmatpush1.msra.mxu0 0.0
    %5269 = vmatprep.subr.mxu0 0.0
    %5270 = vmatpush1.msra.mxu0 0.0
    %5271 = vmatprep.subr.mxu0 0.0
    %5272 = vmatpush1.msra.mxu0 0.0
    %5273 = vmatprep.subr.mxu0 0.0
    %5274 = vmatpush1.msra.mxu0 0.0
    %5275 = vmatprep.subr.mxu0 0.0
    %5276 = vmatpush1.msra.mxu0 0.0
    %5277 = vmatprep.subr.mxu0 0.0
    %5278 = vmatpush1.msra.mxu0 0.0
    %5279 = vmatprep.subr.mxu0 0.0
    %5280 = vmatpush1.msra.mxu0 0.0
    %5281 = vmatprep.subr.mxu0 0.0
    %5282 = vmatpush1.msra.mxu0 0.0
    %5283 = vmatprep.mubr.f32.mxu0 0.0
    %5284 = vmatmul.mubr.f32.gmra.mrb[0].mxu0 %v3991
    %v5285 = vpop.f32.mrb[0].mxu0
    %v5286 = vadd.f32 0.0, %v5285
    %v5287 = vpop.f32.mrb[0].mxu0
    %5288 = vmatprep.mubr.f32.mxu0 0.0
    %5289 = vmatmul.mubr.f32.gmra.mrb[0].mxu0 %v3994
    %v5290 = vpop.f32.mrb[0].mxu0
    %v5291 = vadd.f32 0.0, %v5290
    %v5292 = vpop.f32.mrb[0].mxu0
    %5293 = vdwg.mxu0
    %s5294 = scalar_lea.vmem [#allocation10], 96
    %v5295 = vld [vmem:[%s5294] sm:$0xff]
    %v5296 = vld [vmem:[%s5294 + $0x8] sm:$0xff]
    %v5297 = vld [vmem:[%s5294 + $0x10] sm:$0xff]
    %v5298 = vld [vmem:[%s5294 + $0x18] sm:$0xff]
    %v5300 = vsel %vm1126, %v5211, 0
    %v5303 = vsel %vm1126, %v5216, 0
    %v5306 = vsel %vm1126, %v5286, 0
    %v5309 = vsel %vm1126, %v5291, 0
    %5311 = vmatprep.subr.mxu0 0.0
    %5312 = vmatpush1.msra.mxu0 %v5295
    %5313 = vmatprep.subr.mxu0 0.0
    %5314 = vmatpush1.msra.mxu0 %v5296
    %5315 = vmatprep.subr.mxu0 0.0
    %5316 = vmatpush1.msra.mxu0 %v5297
    %5317 = vmatprep.subr.mxu0 0.0
    %5318 = vmatpush1.msra.mxu0 %v5298
    %5319 = vmatprep.subr.mxu0 0.0
    %5320 = vmatpush1.msra.mxu0 0.0
    %5321 = vmatprep.subr.mxu0 0.0
    %5322 = vmatpush1.msra.mxu0 0.0
    %5323 = vmatprep.subr.mxu0 0.0
    %5324 = vmatpush1.msra.mxu0 0.0
    %5325 = vmatprep.subr.mxu0 0.0
    %5326 = vmatpush1.msra.mxu0 0.0
    %5327 = vmatprep.subr.mxu0 0.0
    %5328 = vmatpush1.msra.mxu0 0.0
    %5329 = vmatprep.subr.mxu0 0.0
    %5330 = vmatpush1.msra.mxu0 0.0
    %5331 = vmatprep.subr.mxu0 0.0
    %5332 = vmatpush1.msra.mxu0 0.0
    %5333 = vmatprep.subr.mxu0 0.0
    %5334 = vmatpush1.msra.mxu0 0.0
    %5335 = vmatprep.subr.mxu0 0.0
    %5336 = vmatpush1.msra.mxu0 0.0
    %5337 = vmatprep.subr.mxu0 0.0
    %5338 = vmatpush1.msra.mxu0 0.0
    %5339 = vmatprep.subr.mxu0 0.0
    %5340 = vmatpush1.msra.mxu0 0.0
    %5341 = vmatprep.subr.mxu0 0.0
    %5342 = vmatpush1.msra.mxu0 0.0
    %5343 = vmatprep.subr.mxu0 0.0
    %5344 = vmatpush1.msra.mxu0 0.0
    %5345 = vmatprep.subr.mxu0 0.0
    %5346 = vmatpush1.msra.mxu0 0.0
    %5347 = vmatprep.subr.mxu0 0.0
    %5348 = vmatpush1.msra.mxu0 0.0
    %5349 = vmatprep.subr.mxu0 0.0
    %5350 = vmatpush1.msra.mxu0 0.0
    %5351 = vmatprep.subr.mxu0 0.0
    %5352 = vmatpush1.msra.mxu0 0.0
    %5353 = vmatprep.subr.mxu0 0.0
    %5354 = vmatpush1.msra.mxu0 0.0
    %5355 = vmatprep.subr.mxu0 0.0
    %5356 = vmatpush1.msra.mxu0 0.0
    %5357 = vmatprep.subr.mxu0 0.0
    %5358 = vmatpush1.msra.mxu0 0.0
    %5359 = vmatprep.subr.mxu0 0.0
    %5360 = vmatpush1.msra.mxu0 0.0
    %5361 = vmatprep.subr.mxu0 0.0
    %5362 = vmatpush1.msra.mxu0 0.0
    %5363 = vmatprep.subr.mxu0 0.0
    %5364 = vmatpush1.msra.mxu0 0.0
    %5365 = vmatprep.subr.mxu0 0.0
    %5366 = vmatpush1.msra.mxu0 0.0
    %5367 = vmatprep.subr.mxu0 0.0
    %5368 = vmatpush1.msra.mxu0 0.0
    %5369 = vmatprep.subr.mxu0 0.0
    %5370 = vmatpush1.msra.mxu0 0.0
    %5371 = vmatprep.subr.mxu0 0.0
    %5372 = vmatpush1.msra.mxu0 0.0
    %5373 = vmatprep.subr.mxu0 0.0
    %5374 = vmatpush1.msra.mxu0 0.0
    %5375 = vmatprep.mubr.f32.mxu0 0.0
    %5376 = vmatmul.mubr.f32.gmra.mrb[0].mxu0 %v5300
    %v5377 = vpop.f32.mrb[0].mxu0
    %v5378 = vadd.f32 0.0, %v5377
    %v5379 = vpop.f32.mrb[0].mxu0
    %5380 = vmatprep.mubr.f32.mxu0 0.0
    %5381 = vmatmul.mubr.f32.gmra.mrb[0].mxu0 %v5303
    %v5382 = vpop.f32.mrb[0].mxu0
    %v5383 = vadd.f32 0.0, %v5382
    %v5384 = vpop.f32.mrb[0].mxu0
    %5385 = vmatprep.mubr.f32.mxu0 0.0
    %5386 = vmatmul.mubr.f32.gmra.mrb[0].mxu0 %v5306
    %v5387 = vpop.f32.mrb[0].mxu0
    %v5388 = vadd.f32 0.0, %v5387
    %v5389 = vpop.f32.mrb[0].mxu0
    %5390 = vmatprep.mubr.f32.mxu0 0.0
    %5391 = vmatmul.mubr.f32.gmra.mrb[0].mxu0 %v5309
    %v5392 = vpop.f32.mrb[0].mxu0
    %v5393 = vadd.f32 0.0, %v5392
    %v5394 = vpop.f32.mrb[0].mxu0
    %5395 = vdwg.mxu0
    %v5396 = vadd.f32 %v5140, %v5378
    %v5397 = vadd.f32 %v5141, %v5383
    %v5398 = vadd.f32 %v5142, %v5388
    %v5399 = vadd.f32 %v5143, %v5393
    %5400 = vmatprep.subr.mxu0 0.0
    %5401 = vmatpush1.msra.mxu0 %v5211
    %5402 = vmatprep.subr.mxu0 0.0
    %5403 = vmatpush1.msra.mxu0 %v5216
    %5404 = vmatprep.subr.mxu0 0.0
    %5405 = vmatpush1.msra.mxu0 0.0
    %5406 = vmatprep.subr.mxu0 0.0
    %5407 = vmatpush1.msra.mxu0 0.0
    %5408 = vmatprep.subr.mxu0 0.0
    %5409 = vmatpush1.msra.mxu0 0.0
    %5410 = vmatprep.subr.mxu0 0.0
    %5411 = vmatpush1.msra.mxu0 0.0
    %5412 = vmatprep.subr.mxu0 0.0
    %5413 = vmatpush1.msra.mxu0 0.0
    %5414 = vmatprep.subr.mxu0 0.0
    %5415 = vmatpush1.msra.mxu0 0.0
    %5416 = vmatprep.subr.mxu0 0.0
    %5417 = vmatpush1.msra.mxu0 0.0
    %5418 = vmatprep.subr.mxu0 0.0
    %5419 = vmatpush1.msra.mxu0 0.0
    %5420 = vmatprep.subr.mxu0 0.0
    %5421 = vmatpush1.msra.mxu0 0.0
    %5422 = vmatprep.subr.mxu0 0.0
    %5423 = vmatpush1.msra.mxu0 0.0
    %5424 = vmatprep.subr.mxu0 0.0
    %5425 = vmatpush1.msra.mxu0 0.0
    %5426 = vmatprep.subr.mxu0 0.0
    %5427 = vmatpush1.msra.mxu0 0.0
    %5428 = vmatprep.subr.mxu0 0.0
    %5429 = vmatpush1.msra.mxu0 0.0
    %5430 = vmatprep.subr.mxu0 0.0
    %5431 = vmatpush1.msra.mxu0 0.0
    %5432 = vmatprep.subr.mxu0 0.0
    %5433 = vmatpush1.msra.mxu0 0.0
    %5434 = vmatprep.subr.mxu0 0.0
    %5435 = vmatpush1.msra.mxu0 0.0
    %5436 = vmatprep.subr.mxu0 0.0
    %5437 = vmatpush1.msra.mxu0 0.0
    %5438 = vmatprep.subr.mxu0 0.0
    %5439 = vmatpush1.msra.mxu0 0.0
    %5440 = vmatprep.subr.mxu0 0.0
    %5441 = vmatpush1.msra.mxu0 0.0
    %5442 = vmatprep.subr.mxu0 0.0
    %5443 = vmatpush1.msra.mxu0 0.0
    %5444 = vmatprep.subr.mxu0 0.0
    %5445 = vmatpush1.msra.mxu0 0.0
    %5446 = vmatprep.subr.mxu0 0.0
    %5447 = vmatpush1.msra.mxu0 0.0
    %5448 = vmatprep.subr.mxu0 0.0
    %5449 = vmatpush1.msra.mxu0 0.0
    %5450 = vmatprep.subr.mxu0 0.0
    %5451 = vmatpush1.msra.mxu0 0.0
    %5452 = vmatprep.subr.mxu0 0.0
    %5453 = vmatpush1.msra.mxu0 0.0
    %5454 = vmatprep.subr.mxu0 0.0
    %5455 = vmatpush1.msra.mxu0 0.0
    %5456 = vmatprep.subr.mxu0 0.0
    %5457 = vmatpush1.msra.mxu0 0.0
    %5458 = vmatprep.subr.mxu0 0.0
    %5459 = vmatpush1.msra.mxu0 0.0
    %5460 = vmatprep.subr.mxu0 0.0
    %5461 = vmatpush1.msra.mxu0 0.0
    %5462 = vmatprep.subr.mxu0 0.0
    %5463 = vmatpush1.msra.mxu0 0.0
    %5464 = vmatprep.mubr.f32.mxu0 0.0
    %5465 = vmatmul.mubr.f32.gmra.mrb[0].mxu0 %v3991
    %v5466 = vpop.f32.mrb[0].mxu0
    %v5467 = vadd.f32 0.0, %v5466
    %v5468 = vpop.f32.mrb[0].mxu0
    %5469 = vmatprep.mubr.f32.mxu0 0.0
    %5470 = vmatmul.mubr.f32.gmra.mrb[0].mxu0 %v3994
    %v5471 = vpop.f32.mrb[0].mxu0
    %v5472 = vadd.f32 0.0, %v5471
    %v5473 = vpop.f32.mrb[0].mxu0
    %5474 = vdwg.mxu0
    %v5475 = vmul.f32 %v5467, 2.0
    %v5476 = vmul.f32 %v5472, 2.0
    %v5477 = vsub.f32 %v5475, %v4598
    %v5478 = vsub.f32 %v5476, %v4603
    %5479 = vmatprep.subr.mxu0 0.0
    %5480 = vmatpush1.msra.mxu0 %v5286
    %5481 = vmatprep.subr.mxu0 0.0
    %5482 = vmatpush1.msra.mxu0 %v5291
    %5483 = vmatprep.subr.mxu0 0.0
    %5484 = vmatpush1.msra.mxu0 0.0
    %5485 = vmatprep.subr.mxu0 0.0
    %5486 = vmatpush1.msra.mxu0 0.0
    %5487 = vmatprep.subr.mxu0 0.0
    %5488 = vmatpush1.msra.mxu0 0.0
    %5489 = vmatprep.subr.mxu0 0.0
    %5490 = vmatpush1.msra.mxu0 0.0
    %5491 = vmatprep.subr.mxu0 0.0
    %5492 = vmatpush1.msra.mxu0 0.0
    %5493 = vmatprep.subr.mxu0 0.0
    %5494 = vmatpush1.msra.mxu0 0.0
    %5495 = vmatprep.subr.mxu0 0.0
    %5496 = vmatpush1.msra.mxu0 0.0
    %5497 = vmatprep.subr.mxu0 0.0
    %5498 = vmatpush1.msra.mxu0 0.0
    %5499 = vmatprep.subr.mxu0 0.0
    %5500 = vmatpush1.msra.mxu0 0.0
    %5501 = vmatprep.subr.mxu0 0.0
    %5502 = vmatpush1.msra.mxu0 0.0
    %5503 = vmatprep.subr.mxu0 0.0
    %5504 = vmatpush1.msra.mxu0 0.0
    %5505 = vmatprep.subr.mxu0 0.0
    %5506 = vmatpush1.msra.mxu0 0.0
    %5507 = vmatprep.subr.mxu0 0.0
    %5508 = vmatpush1.msra.mxu0 0.0
    %5509 = vmatprep.subr.mxu0 0.0
    %5510 = vmatpush1.msra.mxu0 0.0
    %5511 = vmatprep.subr.mxu0 0.0
    %5512 = vmatpush1.msra.mxu0 0.0
    %5513 = vmatprep.subr.mxu0 0.0
    %5514 = vmatpush1.msra.mxu0 0.0
    %5515 = vmatprep.subr.mxu0 0.0
    %5516 = vmatpush1.msra.mxu0 0.0
    %5517 = vmatprep.subr.mxu0 0.0
    %5518 = vmatpush1.msra.mxu0 0.0
    %5519 = vmatprep.subr.mxu0 0.0
    %5520 = vmatpush1.msra.mxu0 0.0
    %5521 = vmatprep.subr.mxu0 0.0
    %5522 = vmatpush1.msra.mxu0 0.0
    %5523 = vmatprep.subr.mxu0 0.0
    %5524 = vmatpush1.msra.mxu0 0.0
    %5525 = vmatprep.subr.mxu0 0.0
    %5526 = vmatpush1.msra.mxu0 0.0
    %5527 = vmatprep.subr.mxu0 0.0
    %5528 = vmatpush1.msra.mxu0 0.0
    %5529 = vmatprep.subr.mxu0 0.0
    %5530 = vmatpush1.msra.mxu0 0.0
    %5531 = vmatprep.subr.mxu0 0.0
    %5532 = vmatpush1.msra.mxu0 0.0
    %5533 = vmatprep.subr.mxu0 0.0
    %5534 = vmatpush1.msra.mxu0 0.0
    %5535 = vmatprep.subr.mxu0 0.0
    %5536 = vmatpush1.msra.mxu0 0.0
    %5537 = vmatprep.subr.mxu0 0.0
    %5538 = vmatpush1.msra.mxu0 0.0
    %5539 = vmatprep.subr.mxu0 0.0
    %5540 = vmatpush1.msra.mxu0 0.0
    %5541 = vmatprep.subr.mxu0 0.0
    %5542 = vmatpush1.msra.mxu0 0.0
    %5543 = vmatprep.mubr.f32.mxu0 0.0
    %5544 = vmatmul.mubr.f32.gmra.mrb[0].mxu0 %v3991
    %v5545 = vpop.f32.mrb[0].mxu0
    %v5546 = vadd.f32 0.0, %v5545
    %v5547 = vpop.f32.mrb[0].mxu0
    %5548 = vmatprep.mubr.f32.mxu0 0.0
    %5549 = vmatmul.mubr.f32.gmra.mrb[0].mxu0 %v3994
    %v5550 = vpop.f32.mrb[0].mxu0
    %v5551 = vadd.f32 0.0, %v5550
    %v5552 = vpop.f32.mrb[0].mxu0
    %5553 = vdwg.mxu0
    %v5554 = vmul.f32 %v5546, 2.0
    %v5555 = vmul.f32 %v5551, 2.0
    %v5556 = vsub.f32 %v5554, %v4673
    %v5557 = vsub.f32 %v5555, %v4678
    %s5558 = scalar_lea.vmem [#allocation10], 128
    %v5559 = vld [vmem:[%s5558] sm:$0xff]
    %v5560 = vld [vmem:[%s5558 + $0x8] sm:$0xff]
    %v5561 = vld [vmem:[%s5558 + $0x10] sm:$0xff]
    %v5562 = vld [vmem:[%s5558 + $0x18] sm:$0xff]
    %v5564 = vsel %vm1126, %v5477, 0
    %v5567 = vsel %vm1126, %v5478, 0
    %v5570 = vsel %vm1126, %v5556, 0
    %v5573 = vsel %vm1126, %v5557, 0
    %5575 = vmatprep.subr.mxu0 0.0
    %5576 = vmatpush1.msra.mxu0 %v5559
    %5577 = vmatprep.subr.mxu0 0.0
    %5578 = vmatpush1.msra.mxu0 %v5560
    %5579 = vmatprep.subr.mxu0 0.0
    %5580 = vmatpush1.msra.mxu0 %v5561
    %5581 = vmatprep.subr.mxu0 0.0
    %5582 = vmatpush1.msra.mxu0 %v5562
    %5583 = vmatprep.subr.mxu0 0.0
    %5584 = vmatpush1.msra.mxu0 0.0
    %5585 = vmatprep.subr.mxu0 0.0
    %5586 = vmatpush1.msra.mxu0 0.0
    %5587 = vmatprep.subr.mxu0 0.0
    %5588 = vmatpush1.msra.mxu0 0.0
    %5589 = vmatprep.subr.mxu0 0.0
    %5590 = vmatpush1.msra.mxu0 0.0
    %5591 = vmatprep.subr.mxu0 0.0
    %5592 = vmatpush1.msra.mxu0 0.0
    %5593 = vmatprep.subr.mxu0 0.0
    %5594 = vmatpush1.msra.mxu0 0.0
    %5595 = vmatprep.subr.mxu0 0.0
    %5596 = vmatpush1.msra.mxu0 0.0
    %5597 = vmatprep.subr.mxu0 0.0
    %5598 = vmatpush1.msra.mxu0 0.0
    %5599 = vmatprep.subr.mxu0 0.0
    %5600 = vmatpush1.msra.mxu0 0.0
    %5601 = vmatprep.subr.mxu0 0.0
    %5602 = vmatpush1.msra.mxu0 0.0
    %5603 = vmatprep.subr.mxu0 0.0
    %5604 = vmatpush1.msra.mxu0 0.0
    %5605 = vmatprep.subr.mxu0 0.0
    %5606 = vmatpush1.msra.mxu0 0.0
    %5607 = vmatprep.subr.mxu0 0.0
    %5608 = vmatpush1.msra.mxu0 0.0
    %5609 = vmatprep.subr.mxu0 0.0
    %5610 = vmatpush1.msra.mxu0 0.0
    %5611 = vmatprep.subr.mxu0 0.0
    %5612 = vmatpush1.msra.mxu0 0.0
    %5613 = vmatprep.subr.mxu0 0.0
    %5614 = vmatpush1.msra.mxu0 0.0
    %5615 = vmatprep.subr.mxu0 0.0
    %5616 = vmatpush1.msra.mxu0 0.0
    %5617 = vmatprep.subr.mxu0 0.0
    %5618 = vmatpush1.msra.mxu0 0.0
    %5619 = vmatprep.subr.mxu0 0.0
    %5620 = vmatpush1.msra.mxu0 0.0
    %5621 = vmatprep.subr.mxu0 0.0
    %5622 = vmatpush1.msra.mxu0 0.0
    %5623 = vmatprep.subr.mxu0 0.0
    %5624 = vmatpush1.msra.mxu0 0.0
    %5625 = vmatprep.subr.mxu0 0.0
    %5626 = vmatpush1.msra.mxu0 0.0
    %5627 = vmatprep.subr.mxu0 0.0
    %5628 = vmatpush1.msra.mxu0 0.0
    %5629 = vmatprep.subr.mxu0 0.0
    %5630 = vmatpush1.msra.mxu0 0.0
    %5631 = vmatprep.subr.mxu0 0.0
    %5632 = vmatpush1.msra.mxu0 0.0
    %5633 = vmatprep.subr.mxu0 0.0
    %5634 = vmatpush1.msra.mxu0 0.0
    %5635 = vmatprep.subr.mxu0 0.0
    %5636 = vmatpush1.msra.mxu0 0.0
    %5637 = vmatprep.subr.mxu0 0.0
    %5638 = vmatpush1.msra.mxu0 0.0
    %5639 = vmatprep.mubr.f32.mxu0 0.0
    %5640 = vmatmul.mubr.f32.gmra.mrb[0].mxu0 %v5564
    %v5641 = vpop.f32.mrb[0].mxu0
    %v5642 = vadd.f32 0.0, %v5641
    %v5643 = vpop.f32.mrb[0].mxu0
    %5644 = vmatprep.mubr.f32.mxu0 0.0
    %5645 = vmatmul.mubr.f32.gmra.mrb[0].mxu0 %v5567
    %v5646 = vpop.f32.mrb[0].mxu0
    %v5647 = vadd.f32 0.0, %v5646
    %v5648 = vpop.f32.mrb[0].mxu0
    %5649 = vmatprep.mubr.f32.mxu0 0.0
    %5650 = vmatmul.mubr.f32.gmra.mrb[0].mxu0 %v5570
    %v5651 = vpop.f32.mrb[0].mxu0
    %v5652 = vadd.f32 0.0, %v5651
    %v5653 = vpop.f32.mrb[0].mxu0
    %5654 = vmatprep.mubr.f32.mxu0 0.0
    %5655 = vmatmul.mubr.f32.gmra.mrb[0].mxu0 %v5573
    %v5656 = vpop.f32.mrb[0].mxu0
    %v5657 = vadd.f32 0.0, %v5656
    %v5658 = vpop.f32.mrb[0].mxu0
    %5659 = vdwg.mxu0
    %v5660 = vadd.f32 %v5396, %v5642
    %v5661 = vadd.f32 %v5397, %v5647
    %v5662 = vadd.f32 %v5398, %v5652
    %v5663 = vadd.f32 %v5399, %v5657
    %v5664 = vadd.f32 %v4523, %v5660
    %v5665 = vadd.f32 %v4524, %v5661
    %v5666 = vadd.f32 %v4525, %v5662
    %v5667 = vadd.f32 %v4526, %v5663
    %v5668 = vxor.u32 %v5664, 2147483648
    %v5669 = vxor.u32 %v5665, 2147483648
    %v5670 = vxor.u32 %v5666, 2147483648
    %v5671 = vxor.u32 %v5667, 2147483648
    %v5672 = vmul.f32 %v5668, 1.442695
    %v5673 = vpow.pop %v5672
    %v5674 = vmul.f32 %v5669, 1.442695
    %v5675 = vpow.pop %v5674
    %v5676 = vmul.f32 %v5670, 1.442695
    %v5677 = vpow.pop %v5676
    %v5678 = vmul.f32 %v5671, 1.442695
    %v5679 = vpow.pop %v5678
    %v5680 = vadd.f32 %v5673, 1.0
    %v5681 = vadd.f32 %v5675, 1.0
    %v5682 = vadd.f32 %v5677, 1.0
    %v5683 = vadd.f32 %v5679, 1.0
    %v5684 = vrcp.pop %v5680
    %v5685 = vmul.f32 1.0, %v5684
    %v5686 = vrcp.pop %v5681
    %v5687 = vmul.f32 1.0, %v5686
    %v5688 = vrcp.pop %v5682
    %v5689 = vmul.f32 1.0, %v5688
    %v5690 = vrcp.pop %v5683
    %v5691 = vmul.f32 1.0, %v5690
    %v5692 = vmul.f32 %v5685, %v3363
    %v5693 = vmul.f32 %v5687, %v3364
    %v5694 = vmul.f32 %v5689, %v3365
    %v5695 = vmul.f32 %v5691, %v3366
    %v5696 = vld [vmem:[#allocation11] sm:$0xff]
    %v5697 = vld [vmem:[#allocation11 + $0x8] sm:$0xff]
    %v5698 = vld [vmem:[#allocation11 + $0x10] sm:$0xff]
    %v5699 = vld [vmem:[#allocation11 + $0x18] sm:$0xff]
    %5700 = vmatprep.subr.mxu0 0.0
    %5701 = vmatpush1.msra.mxu0 %v5692
    %5702 = vmatprep.subr.mxu0 0.0
    %5703 = vmatpush1.msra.mxu0 %v5693
    %5704 = vmatprep.subr.mxu0 0.0
    %5705 = vmatpush1.msra.mxu0 0.0
    %5706 = vmatprep.subr.mxu0 0.0
    %5707 = vmatpush1.msra.mxu0 0.0
    %5708 = vmatprep.subr.mxu0 0.0
    %5709 = vmatpush1.msra.mxu0 0.0
    %5710 = vmatprep.subr.mxu0 0.0
    %5711 = vmatpush1.msra.mxu0 0.0
    %5712 = vmatprep.subr.mxu0 0.0
    %5713 = vmatpush1.msra.mxu0 0.0
    %5714 = vmatprep.subr.mxu0 0.0
    %5715 = vmatpush1.msra.mxu0 0.0
    %5716 = vmatprep.subr.mxu0 0.0
    %5717 = vmatpush1.msra.mxu0 0.0
    %5718 = vmatprep.subr.mxu0 0.0
    %5719 = vmatpush1.msra.mxu0 0.0
    %5720 = vmatprep.subr.mxu0 0.0
    %5721 = vmatpush1.msra.mxu0 0.0
    %5722 = vmatprep.subr.mxu0 0.0
    %5723 = vmatpush1.msra.mxu0 0.0
    %5724 = vmatprep.subr.mxu0 0.0
    %5725 = vmatpush1.msra.mxu0 0.0
    %5726 = vmatprep.subr.mxu0 0.0
    %5727 = vmatpush1.msra.mxu0 0.0
    %5728 = vmatprep.subr.mxu0 0.0
    %5729 = vmatpush1.msra.mxu0 0.0
    %5730 = vmatprep.subr.mxu0 0.0
    %5731 = vmatpush1.msra.mxu0 0.0
    %5732 = vmatprep.subr.mxu0 0.0
    %5733 = vmatpush1.msra.mxu0 0.0
    %5734 = vmatprep.subr.mxu0 0.0
    %5735 = vmatpush1.msra.mxu0 0.0
    %5736 = vmatprep.subr.mxu0 0.0
    %5737 = vmatpush1.msra.mxu0 0.0
    %5738 = vmatprep.subr.mxu0 0.0
    %5739 = vmatpush1.msra.mxu0 0.0
    %5740 = vmatprep.subr.mxu0 0.0
    %5741 = vmatpush1.msra.mxu0 0.0
    %5742 = vmatprep.subr.mxu0 0.0
    %5743 = vmatpush1.msra.mxu0 0.0
    %5744 = vmatprep.subr.mxu0 0.0
    %5745 = vmatpush1.msra.mxu0 0.0
    %5746 = vmatprep.subr.mxu0 0.0
    %5747 = vmatpush1.msra.mxu0 0.0
    %5748 = vmatprep.subr.mxu0 0.0
    %5749 = vmatpush1.msra.mxu0 0.0
    %5750 = vmatprep.subr.mxu0 0.0
    %5751 = vmatpush1.msra.mxu0 0.0
    %5752 = vmatprep.subr.mxu0 0.0
    %5753 = vmatpush1.msra.mxu0 0.0
    %5754 = vmatprep.subr.mxu0 0.0
    %5755 = vmatpush1.msra.mxu0 0.0
    %5756 = vmatprep.subr.mxu0 0.0
    %5757 = vmatpush1.msra.mxu0 0.0
    %5758 = vmatprep.subr.mxu0 0.0
    %5759 = vmatpush1.msra.mxu0 0.0
    %5760 = vmatprep.subr.mxu0 0.0
    %5761 = vmatpush1.msra.mxu0 0.0
    %5762 = vmatprep.subr.mxu0 0.0
    %5763 = vmatpush1.msra.mxu0 0.0
    %5764 = vmatprep.mubr.f32.mxu0 0.0
    %5765 = vmatmul.mubr.f32.gmra.mrb[0].mxu0 %v3374
    %v5766 = vpop.f32.mrb[0].mxu0
    %v5767 = vadd.f32 0.0, %v5766
    %v5768 = vpop.f32.mrb[0].mxu0
    %5769 = vmatprep.mubr.f32.mxu0 0.0
    %5770 = vmatmul.mubr.f32.gmra.mrb[0].mxu0 %v3377
    %v5771 = vpop.f32.mrb[0].mxu0
    %v5772 = vadd.f32 0.0, %v5771
    %v5773 = vpop.f32.mrb[0].mxu0
    %5774 = vdwg.mxu0
    %5775 = vmatprep.subr.mxu0 0.0
    %5776 = vmatpush1.msra.mxu0 %v5694
    %5777 = vmatprep.subr.mxu0 0.0
    %5778 = vmatpush1.msra.mxu0 %v5695
    %5779 = vmatprep.subr.mxu0 0.0
    %5780 = vmatpush1.msra.mxu0 0.0
    %5781 = vmatprep.subr.mxu0 0.0
    %5782 = vmatpush1.msra.mxu0 0.0
    %5783 = vmatprep.subr.mxu0 0.0
    %5784 = vmatpush1.msra.mxu0 0.0
    %5785 = vmatprep.subr.mxu0 0.0
    %5786 = vmatpush1.msra.mxu0 0.0
    %5787 = vmatprep.subr.mxu0 0.0
    %5788 = vmatpush1.msra.mxu0 0.0
    %5789 = vmatprep.subr.mxu0 0.0
    %5790 = vmatpush1.msra.mxu0 0.0
    %5791 = vmatprep.subr.mxu0 0.0
    %5792 = vmatpush1.msra.mxu0 0.0
    %5793 = vmatprep.subr.mxu0 0.0
    %5794 = vmatpush1.msra.mxu0 0.0
    %5795 = vmatprep.subr.mxu0 0.0
    %5796 = vmatpush1.msra.mxu0 0.0
    %5797 = vmatprep.subr.mxu0 0.0
    %5798 = vmatpush1.msra.mxu0 0.0
    %5799 = vmatprep.subr.mxu0 0.0
    %5800 = vmatpush1.msra.mxu0 0.0
    %5801 = vmatprep.subr.mxu0 0.0
    %5802 = vmatpush1.msra.mxu0 0.0
    %5803 = vmatprep.subr.mxu0 0.0
    %5804 = vmatpush1.msra.mxu0 0.0
    %5805 = vmatprep.subr.mxu0 0.0
    %5806 = vmatpush1.msra.mxu0 0.0
    %5807 = vmatprep.subr.mxu0 0.0
    %5808 = vmatpush1.msra.mxu0 0.0
    %5809 = vmatprep.subr.mxu0 0.0
    %5810 = vmatpush1.msra.mxu0 0.0
    %5811 = vmatprep.subr.mxu0 0.0
    %5812 = vmatpush1.msra.mxu0 0.0
    %5813 = vmatprep.subr.mxu0 0.0
    %5814 = vmatpush1.msra.mxu0 0.0
    %5815 = vmatprep.subr.mxu0 0.0
    %5816 = vmatpush1.msra.mxu0 0.0
    %5817 = vmatprep.subr.mxu0 0.0
    %5818 = vmatpush1.msra.mxu0 0.0
    %5819 = vmatprep.subr.mxu0 0.0
    %5820 = vmatpush1.msra.mxu0 0.0
    %5821 = vmatprep.subr.mxu0 0.0
    %5822 = vmatpush1.msra.mxu0 0.0
    %5823 = vmatprep.subr.mxu0 0.0
    %5824 = vmatpush1.msra.mxu0 0.0
    %5825 = vmatprep.subr.mxu0 0.0
    %5826 = vmatpush1.msra.mxu0 0.0
    %5827 = vmatprep.subr.mxu0 0.0
    %5828 = vmatpush1.msra.mxu0 0.0
    %5829 = vmatprep.subr.mxu0 0.0
    %5830 = vmatpush1.msra.mxu0 0.0
    %5831 = vmatprep.subr.mxu0 0.0
    %5832 = vmatpush1.msra.mxu0 0.0
    %5833 = vmatprep.subr.mxu0 0.0
    %5834 = vmatpush1.msra.mxu0 0.0
    %5835 = vmatprep.subr.mxu0 0.0
    %5836 = vmatpush1.msra.mxu0 0.0
    %5837 = vmatprep.subr.mxu0 0.0
    %5838 = vmatpush1.msra.mxu0 0.0
    %5839 = vmatprep.mubr.f32.mxu0 0.0
    %5840 = vmatmul.mubr.f32.gmra.mrb[0].mxu0 %v3374
    %v5841 = vpop.f32.mrb[0].mxu0
    %v5842 = vadd.f32 0.0, %v5841
    %v5843 = vpop.f32.mrb[0].mxu0
    %5844 = vmatprep.mubr.f32.mxu0 0.0
    %5845 = vmatmul.mubr.f32.gmra.mrb[0].mxu0 %v3377
    %v5846 = vpop.f32.mrb[0].mxu0
    %v5847 = vadd.f32 0.0, %v5846
    %v5848 = vpop.f32.mrb[0].mxu0
    %5849 = vdwg.mxu0
    %s5850 = scalar_lea.vmem [#allocation11], 32
    %v5851 = vld [vmem:[%s5850] sm:$0xff]
    %v5852 = vld [vmem:[%s5850 + $0x8] sm:$0xff]
    %v5853 = vld [vmem:[%s5850 + $0x10] sm:$0xff]
    %v5854 = vld [vmem:[%s5850 + $0x18] sm:$0xff]
    %v5856 = vsel %vm1126, %v5767, 0
    %v5859 = vsel %vm1126, %v5772, 0
    %v5862 = vsel %vm1126, %v5842, 0
    %v5865 = vsel %vm1126, %v5847, 0
    %5867 = vmatprep.subr.mxu0 0.0
    %5868 = vmatpush1.msra.mxu0 %v5851
    %5869 = vmatprep.subr.mxu0 0.0
    %5870 = vmatpush1.msra.mxu0 %v5852
    %5871 = vmatprep.subr.mxu0 0.0
    %5872 = vmatpush1.msra.mxu0 %v5853
    %5873 = vmatprep.subr.mxu0 0.0
    %5874 = vmatpush1.msra.mxu0 %v5854
    %5875 = vmatprep.subr.mxu0 0.0
    %5876 = vmatpush1.msra.mxu0 0.0
    %5877 = vmatprep.subr.mxu0 0.0
    %5878 = vmatpush1.msra.mxu0 0.0
    %5879 = vmatprep.subr.mxu0 0.0
    %5880 = vmatpush1.msra.mxu0 0.0
    %5881 = vmatprep.subr.mxu0 0.0
    %5882 = vmatpush1.msra.mxu0 0.0
    %5883 = vmatprep.subr.mxu0 0.0
    %5884 = vmatpush1.msra.mxu0 0.0
    %5885 = vmatprep.subr.mxu0 0.0
    %5886 = vmatpush1.msra.mxu0 0.0
    %5887 = vmatprep.subr.mxu0 0.0
    %5888 = vmatpush1.msra.mxu0 0.0
    %5889 = vmatprep.subr.mxu0 0.0
    %5890 = vmatpush1.msra.mxu0 0.0
    %5891 = vmatprep.subr.mxu0 0.0
    %5892 = vmatpush1.msra.mxu0 0.0
    %5893 = vmatprep.subr.mxu0 0.0
    %5894 = vmatpush1.msra.mxu0 0.0
    %5895 = vmatprep.subr.mxu0 0.0
    %5896 = vmatpush1.msra.mxu0 0.0
    %5897 = vmatprep.subr.mxu0 0.0
    %5898 = vmatpush1.msra.mxu0 0.0
    %5899 = vmatprep.subr.mxu0 0.0
    %5900 = vmatpush1.msra.mxu0 0.0
    %5901 = vmatprep.subr.mxu0 0.0
    %5902 = vmatpush1.msra.mxu0 0.0
    %5903 = vmatprep.subr.mxu0 0.0
    %5904 = vmatpush1.msra.mxu0 0.0
    %5905 = vmatprep.subr.mxu0 0.0
    %5906 = vmatpush1.msra.mxu0 0.0
    %5907 = vmatprep.subr.mxu0 0.0
    %5908 = vmatpush1.msra.mxu0 0.0
    %5909 = vmatprep.subr.mxu0 0.0
    %5910 = vmatpush1.msra.mxu0 0.0
    %5911 = vmatprep.subr.mxu0 0.0
    %5912 = vmatpush1.msra.mxu0 0.0
    %5913 = vmatprep.subr.mxu0 0.0
    %5914 = vmatpush1.msra.mxu0 0.0
    %5915 = vmatprep.subr.mxu0 0.0
    %5916 = vmatpush1.msra.mxu0 0.0
    %5917 = vmatprep.subr.mxu0 0.0
    %5918 = vmatpush1.msra.mxu0 0.0
    %5919 = vmatprep.subr.mxu0 0.0
    %5920 = vmatpush1.msra.mxu0 0.0
    %5921 = vmatprep.subr.mxu0 0.0
    %5922 = vmatpush1.msra.mxu0 0.0
    %5923 = vmatprep.subr.mxu0 0.0
    %5924 = vmatpush1.msra.mxu0 0.0
    %5925 = vmatprep.subr.mxu0 0.0
    %5926 = vmatpush1.msra.mxu0 0.0
    %5927 = vmatprep.subr.mxu0 0.0
    %5928 = vmatpush1.msra.mxu0 0.0
    %5929 = vmatprep.subr.mxu0 0.0
    %5930 = vmatpush1.msra.mxu0 0.0
    %5931 = vmatprep.mubr.f32.mxu0 0.0
    %5932 = vmatmul.mubr.f32.gmra.mrb[0].mxu0 %v5856
    %v5933 = vpop.f32.mrb[0].mxu0
    %v5934 = vadd.f32 0.0, %v5933
    %v5935 = vpop.f32.mrb[0].mxu0
    %5936 = vmatprep.mubr.f32.mxu0 0.0
    %5937 = vmatmul.mubr.f32.gmra.mrb[0].mxu0 %v5859
    %v5938 = vpop.f32.mrb[0].mxu0
    %v5939 = vadd.f32 0.0, %v5938
    %v5940 = vpop.f32.mrb[0].mxu0
    %5941 = vmatprep.mubr.f32.mxu0 0.0
    %5942 = vmatmul.mubr.f32.gmra.mrb[0].mxu0 %v5862
    %v5943 = vpop.f32.mrb[0].mxu0
    %v5944 = vadd.f32 0.0, %v5943
    %v5945 = vpop.f32.mrb[0].mxu0
    %5946 = vmatprep.mubr.f32.mxu0 0.0
    %5947 = vmatmul.mubr.f32.gmra.mrb[0].mxu0 %v5865
    %v5948 = vpop.f32.mrb[0].mxu0
    %v5949 = vadd.f32 0.0, %v5948
    %v5950 = vpop.f32.mrb[0].mxu0
    %5951 = vdwg.mxu0
    %v5953 = vsel %vm1126, %v5692, 0
    %v5956 = vsel %vm1126, %v5693, 0
    %v5959 = vsel %vm1126, %v5694, 0
    %v5962 = vsel %vm1126, %v5695, 0
    %5964 = vmatprep.subr.mxu0 0.0
    %5965 = vmatpush1.msra.mxu0 %v5696
    %5966 = vmatprep.subr.mxu0 0.0
    %5967 = vmatpush1.msra.mxu0 %v5697
    %5968 = vmatprep.subr.mxu0 0.0
    %5969 = vmatpush1.msra.mxu0 %v5698
    %5970 = vmatprep.subr.mxu0 0.0
    %5971 = vmatpush1.msra.mxu0 %v5699
    %5972 = vmatprep.subr.mxu0 0.0
    %5973 = vmatpush1.msra.mxu0 0.0
    %5974 = vmatprep.subr.mxu0 0.0
    %5975 = vmatpush1.msra.mxu0 0.0
    %5976 = vmatprep.subr.mxu0 0.0
    %5977 = vmatpush1.msra.mxu0 0.0
    %5978 = vmatprep.subr.mxu0 0.0
    %5979 = vmatpush1.msra.mxu0 0.0
    %5980 = vmatprep.subr.mxu0 0.0
    %5981 = vmatpush1.msra.mxu0 0.0
    %5982 = vmatprep.subr.mxu0 0.0
    %5983 = vmatpush1.msra.mxu0 0.0
    %5984 = vmatprep.subr.mxu0 0.0
    %5985 = vmatpush1.msra.mxu0 0.0
    %5986 = vmatprep.subr.mxu0 0.0
    %5987 = vmatpush1.msra.mxu0 0.0
    %5988 = vmatprep.subr.mxu0 0.0
    %5989 = vmatpush1.msra.mxu0 0.0
    %5990 = vmatprep.subr.mxu0 0.0
    %5991 = vmatpush1.msra.mxu0 0.0
    %5992 = vmatprep.subr.mxu0 0.0
    %5993 = vmatpush1.msra.mxu0 0.0
    %5994 = vmatprep.subr.mxu0 0.0
    %5995 = vmatpush1.msra.mxu0 0.0
    %5996 = vmatprep.subr.mxu0 0.0
    %5997 = vmatpush1.msra.mxu0 0.0
    %5998 = vmatprep.subr.mxu0 0.0
    %5999 = vmatpush1.msra.mxu0 0.0
    %6000 = vmatprep.subr.mxu0 0.0
    %6001 = vmatpush1.msra.mxu0 0.0
    %6002 = vmatprep.subr.mxu0 0.0
    %6003 = vmatpush1.msra.mxu0 0.0
    %6004 = vmatprep.subr.mxu0 0.0
    %6005 = vmatpush1.msra.mxu0 0.0
    %6006 = vmatprep.subr.mxu0 0.0
    %6007 = vmatpush1.msra.mxu0 0.0
    %6008 = vmatprep.subr.mxu0 0.0
    %6009 = vmatpush1.msra.mxu0 0.0
    %6010 = vmatprep.subr.mxu0 0.0
    %6011 = vmatpush1.msra.mxu0 0.0
    %6012 = vmatprep.subr.mxu0 0.0
    %6013 = vmatpush1.msra.mxu0 0.0
    %6014 = vmatprep.subr.mxu0 0.0
    %6015 = vmatpush1.msra.mxu0 0.0
    %6016 = vmatprep.subr.mxu0 0.0
    %6017 = vmatpush1.msra.mxu0 0.0
    %6018 = vmatprep.subr.mxu0 0.0
    %6019 = vmatpush1.msra.mxu0 0.0
    %6020 = vmatprep.subr.mxu0 0.0
    %6021 = vmatpush1.msra.mxu0 0.0
    %6022 = vmatprep.subr.mxu0 0.0
    %6023 = vmatpush1.msra.mxu0 0.0
    %6024 = vmatprep.subr.mxu0 0.0
    %6025 = vmatpush1.msra.mxu0 0.0
    %6026 = vmatprep.subr.mxu0 0.0
    %6027 = vmatpush1.msra.mxu0 0.0
    %6028 = vmatprep.mubr.f32.mxu0 0.0
    %6029 = vmatmul.mubr.f32.gmra.mrb[0].mxu0 %v5953
    %v6030 = vpop.f32.mrb[0].mxu0
    %v6031 = vadd.f32 %v5934, %v6030
    %v6032 = vpop.f32.mrb[0].mxu0
    %6033 = vmatprep.mubr.f32.mxu0 0.0
    %6034 = vmatmul.mubr.f32.gmra.mrb[0].mxu0 %v5956
    %v6035 = vpop.f32.mrb[0].mxu0
    %v6036 = vadd.f32 %v5939, %v6035
    %v6037 = vpop.f32.mrb[0].mxu0
    %6038 = vmatprep.mubr.f32.mxu0 0.0
    %6039 = vmatmul.mubr.f32.gmra.mrb[0].mxu0 %v5959
    %v6040 = vpop.f32.mrb[0].mxu0
    %v6041 = vadd.f32 %v5944, %v6040
    %v6042 = vpop.f32.mrb[0].mxu0
    %6043 = vmatprep.mubr.f32.mxu0 0.0
    %6044 = vmatmul.mubr.f32.gmra.mrb[0].mxu0 %v5962
    %v6045 = vpop.f32.mrb[0].mxu0
    %v6046 = vadd.f32 %v5949, %v6045
    %v6047 = vpop.f32.mrb[0].mxu0
    %6048 = vdwg.mxu0
    %6049 = vmatprep.subr.mxu0 0.0
    %6050 = vmatpush1.msra.mxu0 %v5767
    %6051 = vmatprep.subr.mxu0 0.0
    %6052 = vmatpush1.msra.mxu0 %v5772
    %6053 = vmatprep.subr.mxu0 0.0
    %6054 = vmatpush1.msra.mxu0 0.0
    %6055 = vmatprep.subr.mxu0 0.0
    %6056 = vmatpush1.msra.mxu0 0.0
    %6057 = vmatprep.subr.mxu0 0.0
    %6058 = vmatpush1.msra.mxu0 0.0
    %6059 = vmatprep.subr.mxu0 0.0
    %6060 = vmatpush1.msra.mxu0 0.0
    %6061 = vmatprep.subr.mxu0 0.0
    %6062 = vmatpush1.msra.mxu0 0.0
    %6063 = vmatprep.subr.mxu0 0.0
    %6064 = vmatpush1.msra.mxu0 0.0
    %6065 = vmatprep.subr.mxu0 0.0
    %6066 = vmatpush1.msra.mxu0 0.0
    %6067 = vmatprep.subr.mxu0 0.0
    %6068 = vmatpush1.msra.mxu0 0.0
    %6069 = vmatprep.subr.mxu0 0.0
    %6070 = vmatpush1.msra.mxu0 0.0
    %6071 = vmatprep.subr.mxu0 0.0
    %6072 = vmatpush1.msra.mxu0 0.0
    %6073 = vmatprep.subr.mxu0 0.0
    %6074 = vmatpush1.msra.mxu0 0.0
    %6075 = vmatprep.subr.mxu0 0.0
    %6076 = vmatpush1.msra.mxu0 0.0
    %6077 = vmatprep.subr.mxu0 0.0
    %6078 = vmatpush1.msra.mxu0 0.0
    %6079 = vmatprep.subr.mxu0 0.0
    %6080 = vmatpush1.msra.mxu0 0.0
    %6081 = vmatprep.subr.mxu0 0.0
    %6082 = vmatpush1.msra.mxu0 0.0
    %6083 = vmatprep.subr.mxu0 0.0
    %6084 = vmatpush1.msra.mxu0 0.0
    %6085 = vmatprep.subr.mxu0 0.0
    %6086 = vmatpush1.msra.mxu0 0.0
    %6087 = vmatprep.subr.mxu0 0.0
    %6088 = vmatpush1.msra.mxu0 0.0
    %6089 = vmatprep.subr.mxu0 0.0
    %6090 = vmatpush1.msra.mxu0 0.0
    %6091 = vmatprep.subr.mxu0 0.0
    %6092 = vmatpush1.msra.mxu0 0.0
    %6093 = vmatprep.subr.mxu0 0.0
    %6094 = vmatpush1.msra.mxu0 0.0
    %6095 = vmatprep.subr.mxu0 0.0
    %6096 = vmatpush1.msra.mxu0 0.0
    %6097 = vmatprep.subr.mxu0 0.0
    %6098 = vmatpush1.msra.mxu0 0.0
    %6099 = vmatprep.subr.mxu0 0.0
    %6100 = vmatpush1.msra.mxu0 0.0
    %6101 = vmatprep.subr.mxu0 0.0
    %6102 = vmatpush1.msra.mxu0 0.0
    %6103 = vmatprep.subr.mxu0 0.0
    %6104 = vmatpush1.msra.mxu0 0.0
    %6105 = vmatprep.subr.mxu0 0.0
    %6106 = vmatpush1.msra.mxu0 0.0
    %6107 = vmatprep.subr.mxu0 0.0
    %6108 = vmatpush1.msra.mxu0 0.0
    %6109 = vmatprep.subr.mxu0 0.0
    %6110 = vmatpush1.msra.mxu0 0.0
    %6111 = vmatprep.subr.mxu0 0.0
    %6112 = vmatpush1.msra.mxu0 0.0
    %6113 = vmatprep.mubr.f32.mxu0 0.0
    %6114 = vmatmul.mubr.f32.gmra.mrb[0].mxu0 %v3374
    %v6115 = vpop.f32.mrb[0].mxu0
    %v6116 = vadd.f32 0.0, %v6115
    %v6117 = vpop.f32.mrb[0].mxu0
    %6118 = vmatprep.mubr.f32.mxu0 0.0
    %6119 = vmatmul.mubr.f32.gmra.mrb[0].mxu0 %v3377
    %v6120 = vpop.f32.mrb[0].mxu0
    %v6121 = vadd.f32 0.0, %v6120
    %v6122 = vpop.f32.mrb[0].mxu0
    %6123 = vdwg.mxu0
    %v6124 = vmul.f32 %v6116, 2.0
    %v6125 = vmul.f32 %v6121, 2.0
    %v6126 = vsub.f32 %v6124, %v5692
    %v6127 = vsub.f32 %v6125, %v5693
    %6128 = vmatprep.subr.mxu0 0.0
    %6129 = vmatpush1.msra.mxu0 %v5842
    %6130 = vmatprep.subr.mxu0 0.0
    %6131 = vmatpush1.msra.mxu0 %v5847
    %6132 = vmatprep.subr.mxu0 0.0
    %6133 = vmatpush1.msra.mxu0 0.0
    %6134 = vmatprep.subr.mxu0 0.0
    %6135 = vmatpush1.msra.mxu0 0.0
    %6136 = vmatprep.subr.mxu0 0.0
    %6137 = vmatpush1.msra.mxu0 0.0
    %6138 = vmatprep.subr.mxu0 0.0
    %6139 = vmatpush1.msra.mxu0 0.0
    %6140 = vmatprep.subr.mxu0 0.0
    %6141 = vmatpush1.msra.mxu0 0.0
    %6142 = vmatprep.subr.mxu0 0.0
    %6143 = vmatpush1.msra.mxu0 0.0
    %6144 = vmatprep.subr.mxu0 0.0
    %6145 = vmatpush1.msra.mxu0 0.0
    %6146 = vmatprep.subr.mxu0 0.0
    %6147 = vmatpush1.msra.mxu0 0.0
    %6148 = vmatprep.subr.mxu0 0.0
    %6149 = vmatpush1.msra.mxu0 0.0
    %6150 = vmatprep.subr.mxu0 0.0
    %6151 = vmatpush1.msra.mxu0 0.0
    %6152 = vmatprep.subr.mxu0 0.0
    %6153 = vmatpush1.msra.mxu0 0.0
    %6154 = vmatprep.subr.mxu0 0.0
    %6155 = vmatpush1.msra.mxu0 0.0
    %6156 = vmatprep.subr.mxu0 0.0
    %6157 = vmatpush1.msra.mxu0 0.0
    %6158 = vmatprep.subr.mxu0 0.0
    %6159 = vmatpush1.msra.mxu0 0.0
    %6160 = vmatprep.subr.mxu0 0.0
    %6161 = vmatpush1.msra.mxu0 0.0
    %6162 = vmatprep.subr.mxu0 0.0
    %6163 = vmatpush1.msra.mxu0 0.0
    %6164 = vmatprep.subr.mxu0 0.0
    %6165 = vmatpush1.msra.mxu0 0.0
    %6166 = vmatprep.subr.mxu0 0.0
    %6167 = vmatpush1.msra.mxu0 0.0
    %6168 = vmatprep.subr.mxu0 0.0
    %6169 = vmatpush1.msra.mxu0 0.0
    %6170 = vmatprep.subr.mxu0 0.0
    %6171 = vmatpush1.msra.mxu0 0.0
    %6172 = vmatprep.subr.mxu0 0.0
    %6173 = vmatpush1.msra.mxu0 0.0
    %6174 = vmatprep.subr.mxu0 0.0
    %6175 = vmatpush1.msra.mxu0 0.0
    %6176 = vmatprep.subr.mxu0 0.0
    %6177 = vmatpush1.msra.mxu0 0.0
    %6178 = vmatprep.subr.mxu0 0.0
    %6179 = vmatpush1.msra.mxu0 0.0
    %6180 = vmatprep.subr.mxu0 0.0
    %6181 = vmatpush1.msra.mxu0 0.0
    %6182 = vmatprep.subr.mxu0 0.0
    %6183 = vmatpush1.msra.mxu0 0.0
    %6184 = vmatprep.subr.mxu0 0.0
    %6185 = vmatpush1.msra.mxu0 0.0
    %6186 = vmatprep.subr.mxu0 0.0
    %6187 = vmatpush1.msra.mxu0 0.0
    %6188 = vmatprep.subr.mxu0 0.0
    %6189 = vmatpush1.msra.mxu0 0.0
    %6190 = vmatprep.subr.mxu0 0.0
    %6191 = vmatpush1.msra.mxu0 0.0
    %6192 = vmatprep.mubr.f32.mxu0 0.0
    %6193 = vmatmul.mubr.f32.gmra.mrb[0].mxu0 %v3374
    %v6194 = vpop.f32.mrb[0].mxu0
    %v6195 = vadd.f32 0.0, %v6194
    %v6196 = vpop.f32.mrb[0].mxu0
    %6197 = vmatprep.mubr.f32.mxu0 0.0
    %6198 = vmatmul.mubr.f32.gmra.mrb[0].mxu0 %v3377
    %v6199 = vpop.f32.mrb[0].mxu0
    %v6200 = vadd.f32 0.0, %v6199
    %v6201 = vpop.f32.mrb[0].mxu0
    %6202 = vdwg.mxu0
    %v6203 = vmul.f32 %v6195, 2.0
    %v6204 = vmul.f32 %v6200, 2.0
    %v6205 = vsub.f32 %v6203, %v5694
    %v6206 = vsub.f32 %v6204, %v5695
    %s6207 = scalar_lea.vmem [#allocation11], 64
    %v6208 = vld [vmem:[%s6207] sm:$0xff]
    %v6209 = vld [vmem:[%s6207 + $0x8] sm:$0xff]
    %v6210 = vld [vmem:[%s6207 + $0x10] sm:$0xff]
    %v6211 = vld [vmem:[%s6207 + $0x18] sm:$0xff]
    %v6213 = vsel %vm1126, %v6126, 0
    %v6216 = vsel %vm1126, %v6127, 0
    %v6219 = vsel %vm1126, %v6205, 0
    %v6222 = vsel %vm1126, %v6206, 0
    %6224 = vmatprep.subr.mxu0 0.0
    %6225 = vmatpush1.msra.mxu0 %v6208
    %6226 = vmatprep.subr.mxu0 0.0
    %6227 = vmatpush1.msra.mxu0 %v6209
    %6228 = vmatprep.subr.mxu0 0.0
    %6229 = vmatpush1.msra.mxu0 %v6210
    %6230 = vmatprep.subr.mxu0 0.0
    %6231 = vmatpush1.msra.mxu0 %v6211
    %6232 = vmatprep.subr.mxu0 0.0
    %6233 = vmatpush1.msra.mxu0 0.0
    %6234 = vmatprep.subr.mxu0 0.0
    %6235 = vmatpush1.msra.mxu0 0.0
    %6236 = vmatprep.subr.mxu0 0.0
    %6237 = vmatpush1.msra.mxu0 0.0
    %6238 = vmatprep.subr.mxu0 0.0
    %6239 = vmatpush1.msra.mxu0 0.0
    %6240 = vmatprep.subr.mxu0 0.0
    %6241 = vmatpush1.msra.mxu0 0.0
    %6242 = vmatprep.subr.mxu0 0.0
    %6243 = vmatpush1.msra.mxu0 0.0
    %6244 = vmatprep.subr.mxu0 0.0
    %6245 = vmatpush1.msra.mxu0 0.0
    %6246 = vmatprep.subr.mxu0 0.0
    %6247 = vmatpush1.msra.mxu0 0.0
    %6248 = vmatprep.subr.mxu0 0.0
    %6249 = vmatpush1.msra.mxu0 0.0
    %6250 = vmatprep.subr.mxu0 0.0
    %6251 = vmatpush1.msra.mxu0 0.0
    %6252 = vmatprep.subr.mxu0 0.0
    %6253 = vmatpush1.msra.mxu0 0.0
    %6254 = vmatprep.subr.mxu0 0.0
    %6255 = vmatpush1.msra.mxu0 0.0
    %6256 = vmatprep.subr.mxu0 0.0
    %6257 = vmatpush1.msra.mxu0 0.0
    %6258 = vmatprep.subr.mxu0 0.0
    %6259 = vmatpush1.msra.mxu0 0.0
    %6260 = vmatprep.subr.mxu0 0.0
    %6261 = vmatpush1.msra.mxu0 0.0
    %6262 = vmatprep.subr.mxu0 0.0
    %6263 = vmatpush1.msra.mxu0 0.0
    %6264 = vmatprep.subr.mxu0 0.0
    %6265 = vmatpush1.msra.mxu0 0.0
    %6266 = vmatprep.subr.mxu0 0.0
    %6267 = vmatpush1.msra.mxu0 0.0
    %6268 = vmatprep.subr.mxu0 0.0
    %6269 = vmatpush1.msra.mxu0 0.0
    %6270 = vmatprep.subr.mxu0 0.0
    %6271 = vmatpush1.msra.mxu0 0.0
    %6272 = vmatprep.subr.mxu0 0.0
    %6273 = vmatpush1.msra.mxu0 0.0
    %6274 = vmatprep.subr.mxu0 0.0
    %6275 = vmatpush1.msra.mxu0 0.0
    %6276 = vmatprep.subr.mxu0 0.0
    %6277 = vmatpush1.msra.mxu0 0.0
    %6278 = vmatprep.subr.mxu0 0.0
    %6279 = vmatpush1.msra.mxu0 0.0
    %6280 = vmatprep.subr.mxu0 0.0
    %6281 = vmatpush1.msra.mxu0 0.0
    %6282 = vmatprep.subr.mxu0 0.0
    %6283 = vmatpush1.msra.mxu0 0.0
    %6284 = vmatprep.subr.mxu0 0.0
    %6285 = vmatpush1.msra.mxu0 0.0
    %6286 = vmatprep.subr.mxu0 0.0
    %6287 = vmatpush1.msra.mxu0 0.0
    %6288 = vmatprep.mubr.f32.mxu0 0.0
    %6289 = vmatmul.mubr.f32.gmra.mrb[0].mxu0 %v6213
    %v6290 = vpop.f32.mrb[0].mxu0
    %v6291 = vadd.f32 0.0, %v6290
    %v6292 = vpop.f32.mrb[0].mxu0
    %6293 = vmatprep.mubr.f32.mxu0 0.0
    %6294 = vmatmul.mubr.f32.gmra.mrb[0].mxu0 %v6216
    %v6295 = vpop.f32.mrb[0].mxu0
    %v6296 = vadd.f32 0.0, %v6295
    %v6297 = vpop.f32.mrb[0].mxu0
    %6298 = vmatprep.mubr.f32.mxu0 0.0
    %6299 = vmatmul.mubr.f32.gmra.mrb[0].mxu0 %v6219
    %v6300 = vpop.f32.mrb[0].mxu0
    %v6301 = vadd.f32 0.0, %v6300
    %v6302 = vpop.f32.mrb[0].mxu0
    %6303 = vmatprep.mubr.f32.mxu0 0.0
    %6304 = vmatmul.mubr.f32.gmra.mrb[0].mxu0 %v6222
    %v6305 = vpop.f32.mrb[0].mxu0
    %v6306 = vadd.f32 0.0, %v6305
    %v6307 = vpop.f32.mrb[0].mxu0
    %6308 = vdwg.mxu0
    %v6309 = vadd.f32 %v6031, %v6291
    %v6310 = vadd.f32 %v6036, %v6296
    %v6311 = vadd.f32 %v6041, %v6301
    %v6312 = vadd.f32 %v6046, %v6306
    %6313 = vmatprep.subr.mxu0 0.0
    %6314 = vmatpush1.msra.mxu0 %v5767
    %6315 = vmatprep.subr.mxu0 0.0
    %6316 = vmatpush1.msra.mxu0 %v5772
    %6317 = vmatprep.subr.mxu0 0.0
    %6318 = vmatpush1.msra.mxu0 0.0
    %6319 = vmatprep.subr.mxu0 0.0
    %6320 = vmatpush1.msra.mxu0 0.0
    %6321 = vmatprep.subr.mxu0 0.0
    %6322 = vmatpush1.msra.mxu0 0.0
    %6323 = vmatprep.subr.mxu0 0.0
    %6324 = vmatpush1.msra.mxu0 0.0
    %6325 = vmatprep.subr.mxu0 0.0
    %6326 = vmatpush1.msra.mxu0 0.0
    %6327 = vmatprep.subr.mxu0 0.0
    %6328 = vmatpush1.msra.mxu0 0.0
    %6329 = vmatprep.subr.mxu0 0.0
    %6330 = vmatpush1.msra.mxu0 0.0
    %6331 = vmatprep.subr.mxu0 0.0
    %6332 = vmatpush1.msra.mxu0 0.0
    %6333 = vmatprep.subr.mxu0 0.0
    %6334 = vmatpush1.msra.mxu0 0.0
    %6335 = vmatprep.subr.mxu0 0.0
    %6336 = vmatpush1.msra.mxu0 0.0
    %6337 = vmatprep.subr.mxu0 0.0
    %6338 = vmatpush1.msra.mxu0 0.0
    %6339 = vmatprep.subr.mxu0 0.0
    %6340 = vmatpush1.msra.mxu0 0.0
    %6341 = vmatprep.subr.mxu0 0.0
    %6342 = vmatpush1.msra.mxu0 0.0
    %6343 = vmatprep.subr.mxu0 0.0
    %6344 = vmatpush1.msra.mxu0 0.0
    %6345 = vmatprep.subr.mxu0 0.0
    %6346 = vmatpush1.msra.mxu0 0.0
    %6347 = vmatprep.subr.mxu0 0.0
    %6348 = vmatpush1.msra.mxu0 0.0
    %6349 = vmatprep.subr.mxu0 0.0
    %6350 = vmatpush1.msra.mxu0 0.0
    %6351 = vmatprep.subr.mxu0 0.0
    %6352 = vmatpush1.msra.mxu0 0.0
    %6353 = vmatprep.subr.mxu0 0.0
    %6354 = vmatpush1.msra.mxu0 0.0
    %6355 = vmatprep.subr.mxu0 0.0
    %6356 = vmatpush1.msra.mxu0 0.0
    %6357 = vmatprep.subr.mxu0 0.0
    %6358 = vmatpush1.msra.mxu0 0.0
    %6359 = vmatprep.subr.mxu0 0.0
    %6360 = vmatpush1.msra.mxu0 0.0
    %6361 = vmatprep.subr.mxu0 0.0
    %6362 = vmatpush1.msra.mxu0 0.0
    %6363 = vmatprep.subr.mxu0 0.0
    %6364 = vmatpush1.msra.mxu0 0.0
    %6365 = vmatprep.subr.mxu0 0.0
    %6366 = vmatpush1.msra.mxu0 0.0
    %6367 = vmatprep.subr.mxu0 0.0
    %6368 = vmatpush1.msra.mxu0 0.0
    %6369 = vmatprep.subr.mxu0 0.0
    %6370 = vmatpush1.msra.mxu0 0.0
    %6371 = vmatprep.subr.mxu0 0.0
    %6372 = vmatpush1.msra.mxu0 0.0
    %6373 = vmatprep.subr.mxu0 0.0
    %6374 = vmatpush1.msra.mxu0 0.0
    %6375 = vmatprep.subr.mxu0 0.0
    %6376 = vmatpush1.msra.mxu0 0.0
    %6377 = vmatprep.mubr.f32.mxu0 0.0
    %6378 = vmatmul.mubr.f32.gmra.mrb[0].mxu0 %v3991
    %v6379 = vpop.f32.mrb[0].mxu0
    %v6380 = vadd.f32 0.0, %v6379
    %v6381 = vpop.f32.mrb[0].mxu0
    %6382 = vmatprep.mubr.f32.mxu0 0.0
    %6383 = vmatmul.mubr.f32.gmra.mrb[0].mxu0 %v3994
    %v6384 = vpop.f32.mrb[0].mxu0
    %v6385 = vadd.f32 0.0, %v6384
    %v6386 = vpop.f32.mrb[0].mxu0
    %6387 = vdwg.mxu0
    %6388 = vmatprep.subr.mxu0 0.0
    %6389 = vmatpush1.msra.mxu0 %v5842
    %6390 = vmatprep.subr.mxu0 0.0
    %6391 = vmatpush1.msra.mxu0 %v5847
    %6392 = vmatprep.subr.mxu0 0.0
    %6393 = vmatpush1.msra.mxu0 0.0
    %6394 = vmatprep.subr.mxu0 0.0
    %6395 = vmatpush1.msra.mxu0 0.0
    %6396 = vmatprep.subr.mxu0 0.0
    %6397 = vmatpush1.msra.mxu0 0.0
    %6398 = vmatprep.subr.mxu0 0.0
    %6399 = vmatpush1.msra.mxu0 0.0
    %6400 = vmatprep.subr.mxu0 0.0
    %6401 = vmatpush1.msra.mxu0 0.0
    %6402 = vmatprep.subr.mxu0 0.0
    %6403 = vmatpush1.msra.mxu0 0.0
    %6404 = vmatprep.subr.mxu0 0.0
    %6405 = vmatpush1.msra.mxu0 0.0
    %6406 = vmatprep.subr.mxu0 0.0
    %6407 = vmatpush1.msra.mxu0 0.0
    %6408 = vmatprep.subr.mxu0 0.0
    %6409 = vmatpush1.msra.mxu0 0.0
    %6410 = vmatprep.subr.mxu0 0.0
    %6411 = vmatpush1.msra.mxu0 0.0
    %6412 = vmatprep.subr.mxu0 0.0
    %6413 = vmatpush1.msra.mxu0 0.0
    %6414 = vmatprep.subr.mxu0 0.0
    %6415 = vmatpush1.msra.mxu0 0.0
    %6416 = vmatprep.subr.mxu0 0.0
    %6417 = vmatpush1.msra.mxu0 0.0
    %6418 = vmatprep.subr.mxu0 0.0
    %6419 = vmatpush1.msra.mxu0 0.0
    %6420 = vmatprep.subr.mxu0 0.0
    %6421 = vmatpush1.msra.mxu0 0.0
    %6422 = vmatprep.subr.mxu0 0.0
    %6423 = vmatpush1.msra.mxu0 0.0
    %6424 = vmatprep.subr.mxu0 0.0
    %6425 = vmatpush1.msra.mxu0 0.0
    %6426 = vmatprep.subr.mxu0 0.0
    %6427 = vmatpush1.msra.mxu0 0.0
    %6428 = vmatprep.subr.mxu0 0.0
    %6429 = vmatpush1.msra.mxu0 0.0
    %6430 = vmatprep.subr.mxu0 0.0
    %6431 = vmatpush1.msra.mxu0 0.0
    %6432 = vmatprep.subr.mxu0 0.0
    %6433 = vmatpush1.msra.mxu0 0.0
    %6434 = vmatprep.subr.mxu0 0.0
    %6435 = vmatpush1.msra.mxu0 0.0
    %6436 = vmatprep.subr.mxu0 0.0
    %6437 = vmatpush1.msra.mxu0 0.0
    %6438 = vmatprep.subr.mxu0 0.0
    %6439 = vmatpush1.msra.mxu0 0.0
    %6440 = vmatprep.subr.mxu0 0.0
    %6441 = vmatpush1.msra.mxu0 0.0
    %6442 = vmatprep.subr.mxu0 0.0
    %6443 = vmatpush1.msra.mxu0 0.0
    %6444 = vmatprep.subr.mxu0 0.0
    %6445 = vmatpush1.msra.mxu0 0.0
    %6446 = vmatprep.subr.mxu0 0.0
    %6447 = vmatpush1.msra.mxu0 0.0
    %6448 = vmatprep.subr.mxu0 0.0
    %6449 = vmatpush1.msra.mxu0 0.0
    %6450 = vmatprep.subr.mxu0 0.0
    %6451 = vmatpush1.msra.mxu0 0.0
    %6452 = vmatprep.mubr.f32.mxu0 0.0
    %6453 = vmatmul.mubr.f32.gmra.mrb[0].mxu0 %v3991
    %v6454 = vpop.f32.mrb[0].mxu0
    %v6455 = vadd.f32 0.0, %v6454
    %v6456 = vpop.f32.mrb[0].mxu0
    %6457 = vmatprep.mubr.f32.mxu0 0.0
    %6458 = vmatmul.mubr.f32.gmra.mrb[0].mxu0 %v3994
    %v6459 = vpop.f32.mrb[0].mxu0
    %v6460 = vadd.f32 0.0, %v6459
    %v6461 = vpop.f32.mrb[0].mxu0
    %6462 = vdwg.mxu0
    %s6463 = scalar_lea.vmem [#allocation11], 96
    %v6464 = vld [vmem:[%s6463] sm:$0xff]
    %v6465 = vld [vmem:[%s6463 + $0x8] sm:$0xff]
    %v6466 = vld [vmem:[%s6463 + $0x10] sm:$0xff]
    %v6467 = vld [vmem:[%s6463 + $0x18] sm:$0xff]
    %v6469 = vsel %vm1126, %v6380, 0
    %v6472 = vsel %vm1126, %v6385, 0
    %v6475 = vsel %vm1126, %v6455, 0
    %v6478 = vsel %vm1126, %v6460, 0
    %6480 = vmatprep.subr.mxu0 0.0
    %6481 = vmatpush1.msra.mxu0 %v6464
    %6482 = vmatprep.subr.mxu0 0.0
    %6483 = vmatpush1.msra.mxu0 %v6465
    %6484 = vmatprep.subr.mxu0 0.0
    %6485 = vmatpush1.msra.mxu0 %v6466
    %6486 = vmatprep.subr.mxu0 0.0
    %6487 = vmatpush1.msra.mxu0 %v6467
    %6488 = vmatprep.subr.mxu0 0.0
    %6489 = vmatpush1.msra.mxu0 0.0
    %6490 = vmatprep.subr.mxu0 0.0
    %6491 = vmatpush1.msra.mxu0 0.0
    %6492 = vmatprep.subr.mxu0 0.0
    %6493 = vmatpush1.msra.mxu0 0.0
    %6494 = vmatprep.subr.mxu0 0.0
    %6495 = vmatpush1.msra.mxu0 0.0
    %6496 = vmatprep.subr.mxu0 0.0
    %6497 = vmatpush1.msra.mxu0 0.0
    %6498 = vmatprep.subr.mxu0 0.0
    %6499 = vmatpush1.msra.mxu0 0.0
    %6500 = vmatprep.subr.mxu0 0.0
    %6501 = vmatpush1.msra.mxu0 0.0
    %6502 = vmatprep.subr.mxu0 0.0
    %6503 = vmatpush1.msra.mxu0 0.0
    %6504 = vmatprep.subr.mxu0 0.0
    %6505 = vmatpush1.msra.mxu0 0.0
    %6506 = vmatprep.subr.mxu0 0.0
    %6507 = vmatpush1.msra.mxu0 0.0
    %6508 = vmatprep.subr.mxu0 0.0
    %6509 = vmatpush1.msra.mxu0 0.0
    %6510 = vmatprep.subr.mxu0 0.0
    %6511 = vmatpush1.msra.mxu0 0.0
    %6512 = vmatprep.subr.mxu0 0.0
    %6513 = vmatpush1.msra.mxu0 0.0
    %6514 = vmatprep.subr.mxu0 0.0
    %6515 = vmatpush1.msra.mxu0 0.0
    %6516 = vmatprep.subr.mxu0 0.0
    %6517 = vmatpush1.msra.mxu0 0.0
    %6518 = vmatprep.subr.mxu0 0.0
    %6519 = vmatpush1.msra.mxu0 0.0
    %6520 = vmatprep.subr.mxu0 0.0
    %6521 = vmatpush1.msra.mxu0 0.0
    %6522 = vmatprep.subr.mxu0 0.0
    %6523 = vmatpush1.msra.mxu0 0.0
    %6524 = vmatprep.subr.mxu0 0.0
    %6525 = vmatpush1.msra.mxu0 0.0
    %6526 = vmatprep.subr.mxu0 0.0
    %6527 = vmatpush1.msra.mxu0 0.0
    %6528 = vmatprep.subr.mxu0 0.0
    %6529 = vmatpush1.msra.mxu0 0.0
    %6530 = vmatprep.subr.mxu0 0.0
    %6531 = vmatpush1.msra.mxu0 0.0
    %6532 = vmatprep.subr.mxu0 0.0
    %6533 = vmatpush1.msra.mxu0 0.0
    %6534 = vmatprep.subr.mxu0 0.0
    %6535 = vmatpush1.msra.mxu0 0.0
    %6536 = vmatprep.subr.mxu0 0.0
    %6537 = vmatpush1.msra.mxu0 0.0
    %6538 = vmatprep.subr.mxu0 0.0
    %6539 = vmatpush1.msra.mxu0 0.0
    %6540 = vmatprep.subr.mxu0 0.0
    %6541 = vmatpush1.msra.mxu0 0.0
    %6542 = vmatprep.subr.mxu0 0.0
    %6543 = vmatpush1.msra.mxu0 0.0
    %6544 = vmatprep.mubr.f32.mxu0 0.0
    %6545 = vmatmul.mubr.f32.gmra.mrb[0].mxu0 %v6469
    %v6546 = vpop.f32.mrb[0].mxu0
    %v6547 = vadd.f32 0.0, %v6546
    %v6548 = vpop.f32.mrb[0].mxu0
    %6549 = vmatprep.mubr.f32.mxu0 0.0
    %6550 = vmatmul.mubr.f32.gmra.mrb[0].mxu0 %v6472
    %v6551 = vpop.f32.mrb[0].mxu0
    %v6552 = vadd.f32 0.0, %v6551
    %v6553 = vpop.f32.mrb[0].mxu0
    %6554 = vmatprep.mubr.f32.mxu0 0.0
    %6555 = vmatmul.mubr.f32.gmra.mrb[0].mxu0 %v6475
    %v6556 = vpop.f32.mrb[0].mxu0
    %v6557 = vadd.f32 0.0, %v6556
    %v6558 = vpop.f32.mrb[0].mxu0
    %6559 = vmatprep.mubr.f32.mxu0 0.0
    %6560 = vmatmul.mubr.f32.gmra.mrb[0].mxu0 %v6478
    %v6561 = vpop.f32.mrb[0].mxu0
    %v6562 = vadd.f32 0.0, %v6561
    %v6563 = vpop.f32.mrb[0].mxu0
    %6564 = vdwg.mxu0
    %v6565 = vadd.f32 %v6309, %v6547
    %v6566 = vadd.f32 %v6310, %v6552
    %v6567 = vadd.f32 %v6311, %v6557
    %v6568 = vadd.f32 %v6312, %v6562
    %6569 = vmatprep.subr.mxu0 0.0
    %6570 = vmatpush1.msra.mxu0 %v6380
    %6571 = vmatprep.subr.mxu0 0.0
    %6572 = vmatpush1.msra.mxu0 %v6385
    %6573 = vmatprep.subr.mxu0 0.0
    %6574 = vmatpush1.msra.mxu0 0.0
    %6575 = vmatprep.subr.mxu0 0.0
    %6576 = vmatpush1.msra.mxu0 0.0
    %6577 = vmatprep.subr.mxu0 0.0
    %6578 = vmatpush1.msra.mxu0 0.0
    %6579 = vmatprep.subr.mxu0 0.0
    %6580 = vmatpush1.msra.mxu0 0.0
    %6581 = vmatprep.subr.mxu0 0.0
    %6582 = vmatpush1.msra.mxu0 0.0
    %6583 = vmatprep.subr.mxu0 0.0
    %6584 = vmatpush1.msra.mxu0 0.0
    %6585 = vmatprep.subr.mxu0 0.0
    %6586 = vmatpush1.msra.mxu0 0.0
    %6587 = vmatprep.subr.mxu0 0.0
    %6588 = vmatpush1.msra.mxu0 0.0
    %6589 = vmatprep.subr.mxu0 0.0
    %6590 = vmatpush1.msra.mxu0 0.0
    %6591 = vmatprep.subr.mxu0 0.0
    %6592 = vmatpush1.msra.mxu0 0.0
    %6593 = vmatprep.subr.mxu0 0.0
    %6594 = vmatpush1.msra.mxu0 0.0
    %6595 = vmatprep.subr.mxu0 0.0
    %6596 = vmatpush1.msra.mxu0 0.0
    %6597 = vmatprep.subr.mxu0 0.0
    %6598 = vmatpush1.msra.mxu0 0.0
    %6599 = vmatprep.subr.mxu0 0.0
    %6600 = vmatpush1.msra.mxu0 0.0
    %6601 = vmatprep.subr.mxu0 0.0
    %6602 = vmatpush1.msra.mxu0 0.0
    %6603 = vmatprep.subr.mxu0 0.0
    %6604 = vmatpush1.msra.mxu0 0.0
    %6605 = vmatprep.subr.mxu0 0.0
    %6606 = vmatpush1.msra.mxu0 0.0
    %6607 = vmatprep.subr.mxu0 0.0
    %6608 = vmatpush1.msra.mxu0 0.0
    %6609 = vmatprep.subr.mxu0 0.0
    %6610 = vmatpush1.msra.mxu0 0.0
    %6611 = vmatprep.subr.mxu0 0.0
    %6612 = vmatpush1.msra.mxu0 0.0
    %6613 = vmatprep.subr.mxu0 0.0
    %6614 = vmatpush1.msra.mxu0 0.0
    %6615 = vmatprep.subr.mxu0 0.0
    %6616 = vmatpush1.msra.mxu0 0.0
    %6617 = vmatprep.subr.mxu0 0.0
    %6618 = vmatpush1.msra.mxu0 0.0
    %6619 = vmatprep.subr.mxu0 0.0
    %6620 = vmatpush1.msra.mxu0 0.0
    %6621 = vmatprep.subr.mxu0 0.0
    %6622 = vmatpush1.msra.mxu0 0.0
    %6623 = vmatprep.subr.mxu0 0.0
    %6624 = vmatpush1.msra.mxu0 0.0
    %6625 = vmatprep.subr.mxu0 0.0
    %6626 = vmatpush1.msra.mxu0 0.0
    %6627 = vmatprep.subr.mxu0 0.0
    %6628 = vmatpush1.msra.mxu0 0.0
    %6629 = vmatprep.subr.mxu0 0.0
    %6630 = vmatpush1.msra.mxu0 0.0
    %6631 = vmatprep.subr.mxu0 0.0
    %6632 = vmatpush1.msra.mxu0 0.0
    %6633 = vmatprep.mubr.f32.mxu0 0.0
    %6634 = vmatmul.mubr.f32.gmra.mrb[0].mxu0 %v3991
    %v6635 = vpop.f32.mrb[0].mxu0
    %v6636 = vadd.f32 0.0, %v6635
    %v6637 = vpop.f32.mrb[0].mxu0
    %6638 = vmatprep.mubr.f32.mxu0 0.0
    %6639 = vmatmul.mubr.f32.gmra.mrb[0].mxu0 %v3994
    %v6640 = vpop.f32.mrb[0].mxu0
    %v6641 = vadd.f32 0.0, %v6640
    %v6642 = vpop.f32.mrb[0].mxu0
    %6643 = vdwg.mxu0
    %v6644 = vmul.f32 %v6636, 2.0
    %v6645 = vmul.f32 %v6641, 2.0
    %v6646 = vsub.f32 %v6644, %v5767
    %v6647 = vsub.f32 %v6645, %v5772
    %6648 = vmatprep.subr.mxu0 0.0
    %6649 = vmatpush1.msra.mxu0 %v6455
    %6650 = vmatprep.subr.mxu0 0.0
    %6651 = vmatpush1.msra.mxu0 %v6460
    %6652 = vmatprep.subr.mxu0 0.0
    %6653 = vmatpush1.msra.mxu0 0.0
    %6654 = vmatprep.subr.mxu0 0.0
    %6655 = vmatpush1.msra.mxu0 0.0
    %6656 = vmatprep.subr.mxu0 0.0
    %6657 = vmatpush1.msra.mxu0 0.0
    %6658 = vmatprep.subr.mxu0 0.0
    %6659 = vmatpush1.msra.mxu0 0.0
    %6660 = vmatprep.subr.mxu0 0.0
    %6661 = vmatpush1.msra.mxu0 0.0
    %6662 = vmatprep.subr.mxu0 0.0
    %6663 = vmatpush1.msra.mxu0 0.0
    %6664 = vmatprep.subr.mxu0 0.0
    %6665 = vmatpush1.msra.mxu0 0.0
    %6666 = vmatprep.subr.mxu0 0.0
    %6667 = vmatpush1.msra.mxu0 0.0
    %6668 = vmatprep.subr.mxu0 0.0
    %6669 = vmatpush1.msra.mxu0 0.0
    %6670 = vmatprep.subr.mxu0 0.0
    %6671 = vmatpush1.msra.mxu0 0.0
    %6672 = vmatprep.subr.mxu0 0.0
    %6673 = vmatpush1.msra.mxu0 0.0
    %6674 = vmatprep.subr.mxu0 0.0
    %6675 = vmatpush1.msra.mxu0 0.0
    %6676 = vmatprep.subr.mxu0 0.0
    %6677 = vmatpush1.msra.mxu0 0.0
    %6678 = vmatprep.subr.mxu0 0.0
    %6679 = vmatpush1.msra.mxu0 0.0
    %6680 = vmatprep.subr.mxu0 0.0
    %6681 = vmatpush1.msra.mxu0 0.0
    %6682 = vmatprep.subr.mxu0 0.0
    %6683 = vmatpush1.msra.mxu0 0.0
    %6684 = vmatprep.subr.mxu0 0.0
    %6685 = vmatpush1.msra.mxu0 0.0
    %6686 = vmatprep.subr.mxu0 0.0
    %6687 = vmatpush1.msra.mxu0 0.0
    %6688 = vmatprep.subr.mxu0 0.0
    %6689 = vmatpush1.msra.mxu0 0.0
    %6690 = vmatprep.subr.mxu0 0.0
    %6691 = vmatpush1.msra.mxu0 0.0
    %6692 = vmatprep.subr.mxu0 0.0
    %6693 = vmatpush1.msra.mxu0 0.0
    %6694 = vmatprep.subr.mxu0 0.0
    %6695 = vmatpush1.msra.mxu0 0.0
    %6696 = vmatprep.subr.mxu0 0.0
    %6697 = vmatpush1.msra.mxu0 0.0
    %6698 = vmatprep.subr.mxu0 0.0
    %6699 = vmatpush1.msra.mxu0 0.0
    %6700 = vmatprep.subr.mxu0 0.0
    %6701 = vmatpush1.msra.mxu0 0.0
    %6702 = vmatprep.subr.mxu0 0.0
    %6703 = vmatpush1.msra.mxu0 0.0
    %6704 = vmatprep.subr.mxu0 0.0
    %6705 = vmatpush1.msra.mxu0 0.0
    %6706 = vmatprep.subr.mxu0 0.0
    %6707 = vmatpush1.msra.mxu0 0.0
    %6708 = vmatprep.subr.mxu0 0.0
    %6709 = vmatpush1.msra.mxu0 0.0
    %6710 = vmatprep.subr.mxu0 0.0
    %6711 = vmatpush1.msra.mxu0 0.0
    %6712 = vmatprep.mubr.f32.mxu0 0.0
    %6713 = vmatmul.mubr.f32.gmra.mrb[0].mxu0 %v3991
    %v6714 = vpop.f32.mrb[0].mxu0
    %v6715 = vadd.f32 0.0, %v6714
    %v6716 = vpop.f32.mrb[0].mxu0
    %6717 = vmatprep.mubr.f32.mxu0 0.0
    %6718 = vmatmul.mubr.f32.gmra.mrb[0].mxu0 %v3994
    %v6719 = vpop.f32.mrb[0].mxu0
    %v6720 = vadd.f32 0.0, %v6719
    %v6721 = vpop.f32.mrb[0].mxu0
    %6722 = vdwg.mxu0
    %v6723 = vmul.f32 %v6715, 2.0
    %v6724 = vmul.f32 %v6720, 2.0
    %v6725 = vsub.f32 %v6723, %v5842
    %v6726 = vsub.f32 %v6724, %v5847
    %s6727 = scalar_lea.vmem [#allocation11], 128
    %v6728 = vld [vmem:[%s6727] sm:$0xff]
    %v6729 = vld [vmem:[%s6727 + $0x8] sm:$0xff]
    %v6730 = vld [vmem:[%s6727 + $0x10] sm:$0xff]
    %v6731 = vld [vmem:[%s6727 + $0x18] sm:$0xff]
    %v6733 = vsel %vm1126, %v6646, 0
    %v6736 = vsel %vm1126, %v6647, 0
    %v6739 = vsel %vm1126, %v6725, 0
    %v6742 = vsel %vm1126, %v6726, 0
    %6744 = vmatprep.subr.mxu0 0.0
    %6745 = vmatpush1.msra.mxu0 %v6728
    %6746 = vmatprep.subr.mxu0 0.0
    %6747 = vmatpush1.msra.mxu0 %v6729
    %6748 = vmatprep.subr.mxu0 0.0
    %6749 = vmatpush1.msra.mxu0 %v6730
    %6750 = vmatprep.subr.mxu0 0.0
    %6751 = vmatpush1.msra.mxu0 %v6731
    %6752 = vmatprep.subr.mxu0 0.0
    %6753 = vmatpush1.msra.mxu0 0.0
    %6754 = vmatprep.subr.mxu0 0.0
    %6755 = vmatpush1.msra.mxu0 0.0
    %6756 = vmatprep.subr.mxu0 0.0
    %6757 = vmatpush1.msra.mxu0 0.0
    %6758 = vmatprep.subr.mxu0 0.0
    %6759 = vmatpush1.msra.mxu0 0.0
    %6760 = vmatprep.subr.mxu0 0.0
    %6761 = vmatpush1.msra.mxu0 0.0
    %6762 = vmatprep.subr.mxu0 0.0
    %6763 = vmatpush1.msra.mxu0 0.0
    %6764 = vmatprep.subr.mxu0 0.0
    %6765 = vmatpush1.msra.mxu0 0.0
    %6766 = vmatprep.subr.mxu0 0.0
    %6767 = vmatpush1.msra.mxu0 0.0
    %6768 = vmatprep.subr.mxu0 0.0
    %6769 = vmatpush1.msra.mxu0 0.0
    %6770 = vmatprep.subr.mxu0 0.0
    %6771 = vmatpush1.msra.mxu0 0.0
    %6772 = vmatprep.subr.mxu0 0.0
    %6773 = vmatpush1.msra.mxu0 0.0
    %6774 = vmatprep.subr.mxu0 0.0
    %6775 = vmatpush1.msra.mxu0 0.0
    %6776 = vmatprep.subr.mxu0 0.0
    %6777 = vmatpush1.msra.mxu0 0.0
    %6778 = vmatprep.subr.mxu0 0.0
    %6779 = vmatpush1.msra.mxu0 0.0
    %6780 = vmatprep.subr.mxu0 0.0
    %6781 = vmatpush1.msra.mxu0 0.0
    %6782 = vmatprep.subr.mxu0 0.0
    %6783 = vmatpush1.msra.mxu0 0.0
    %6784 = vmatprep.subr.mxu0 0.0
    %6785 = vmatpush1.msra.mxu0 0.0
    %6786 = vmatprep.subr.mxu0 0.0
    %6787 = vmatpush1.msra.mxu0 0.0
    %6788 = vmatprep.subr.mxu0 0.0
    %6789 = vmatpush1.msra.mxu0 0.0
    %6790 = vmatprep.subr.mxu0 0.0
    %6791 = vmatpush1.msra.mxu0 0.0
    %6792 = vmatprep.subr.mxu0 0.0
    %6793 = vmatpush1.msra.mxu0 0.0
    %6794 = vmatprep.subr.mxu0 0.0
    %6795 = vmatpush1.msra.mxu0 0.0
    %6796 = vmatprep.subr.mxu0 0.0
    %6797 = vmatpush1.msra.mxu0 0.0
    %6798 = vmatprep.subr.mxu0 0.0
    %6799 = vmatpush1.msra.mxu0 0.0
    %6800 = vmatprep.subr.mxu0 0.0
    %6801 = vmatpush1.msra.mxu0 0.0
    %6802 = vmatprep.subr.mxu0 0.0
    %6803 = vmatpush1.msra.mxu0 0.0
    %6804 = vmatprep.subr.mxu0 0.0
    %6805 = vmatpush1.msra.mxu0 0.0
    %6806 = vmatprep.subr.mxu0 0.0
    %6807 = vmatpush1.msra.mxu0 0.0
    %6808 = vmatprep.mubr.f32.mxu0 0.0
    %6809 = vmatmul.mubr.f32.gmra.mrb[0].mxu0 %v6733
    %v6810 = vpop.f32.mrb[0].mxu0
    %v6811 = vadd.f32 0.0, %v6810
    %v6812 = vpop.f32.mrb[0].mxu0
    %6813 = vmatprep.mubr.f32.mxu0 0.0
    %6814 = vmatmul.mubr.f32.gmra.mrb[0].mxu0 %v6736
    %v6815 = vpop.f32.mrb[0].mxu0
    %v6816 = vadd.f32 0.0, %v6815
    %v6817 = vpop.f32.mrb[0].mxu0
    %6818 = vmatprep.mubr.f32.mxu0 0.0
    %6819 = vmatmul.mubr.f32.gmra.mrb[0].mxu0 %v6739
    %v6820 = vpop.f32.mrb[0].mxu0
    %v6821 = vadd.f32 0.0, %v6820
    %v6822 = vpop.f32.mrb[0].mxu0
    %6823 = vmatprep.mubr.f32.mxu0 0.0
    %6824 = vmatmul.mubr.f32.gmra.mrb[0].mxu0 %v6742
    %v6825 = vpop.f32.mrb[0].mxu0
    %v6826 = vadd.f32 0.0, %v6825
    %v6827 = vpop.f32.mrb[0].mxu0
    %6828 = vdwg.mxu0
    %v6829 = vadd.f32 %v6565, %v6811
    %v6830 = vadd.f32 %v6566, %v6816
    %v6831 = vadd.f32 %v6567, %v6821
    %v6832 = vadd.f32 %v6568, %v6826
    %6837 = vrot.lane.b32.xlu0 %v6829, 64
    %v6838 = vpop.permute.xlu0 %6837
    %6839 = vrot.lane.b32.xlu0 %v6830, 64
    %v6840 = vpop.permute.xlu0 %6839
    %6841 = vrot.lane.b32.xlu0 %v6831, 64
    %v6842 = vpop.permute.xlu0 %6841
    %6843 = vrot.lane.b32.xlu0 %v6832, 64
    %v6844 = vpop.permute.xlu0 %6843
    %v6849 = vadd.f32 %v4523, %v6838
    %v6850 = vadd.f32 %v4524, %v6840
    %v6851 = vadd.f32 %v4525, %v6842
    %v6852 = vadd.f32 %v4526, %v6844
    %v6853 = vtanh.pop %v6849
    %v6854 = vtanh.pop %v6850
    %v6855 = vtanh.pop %v6851
    %v6856 = vtanh.pop %v6852
    %6857 = vrot.lane.b32.xlu0 %v3363, 32
    %v6858 = vpop.permute.xlu0 %6857
    %6859 = vrot.lane.b32.xlu0 %v3364, 32
    %v6860 = vpop.permute.xlu0 %6859
    %6861 = vrot.lane.b32.xlu0 %v3365, 32
    %v6862 = vpop.permute.xlu0 %6861
    %6863 = vrot.lane.b32.xlu0 %v3366, 32
    %v6864 = vpop.permute.xlu0 %6863
    %v6869 = vmul.f32 %v5685, %v6858
    %v6870 = vmul.f32 %v5687, %v6860
    %v6871 = vmul.f32 %v5689, %v6862
    %v6872 = vmul.f32 %v5691, %v6864
    %v6873 = vsub.f32 1.0, %v5685
    %v6874 = vsub.f32 1.0, %v5687
    %v6875 = vsub.f32 1.0, %v5689
    %v6876 = vsub.f32 1.0, %v5691
    %6881 = vrot.lane.b32.xlu0 %v6853, 96
    %v6882 = vpop.permute.xlu0 %6881
    %6883 = vrot.lane.b32.xlu0 %v6854, 96
    %v6884 = vpop.permute.xlu0 %6883
    %6885 = vrot.lane.b32.xlu0 %v6855, 96
    %v6886 = vpop.permute.xlu0 %6885
    %6887 = vrot.lane.b32.xlu0 %v6856, 96
    %v6888 = vpop.permute.xlu0 %6887
    %v6893 = vmul.f32 %v6873, %v6882
    %v6894 = vmul.f32 %v6874, %v6884
    %v6895 = vmul.f32 %v6875, %v6886
    %v6896 = vmul.f32 %v6876, %v6888
    %v6897 = vadd.f32 %v6869, %v6893
    %v6898 = vadd.f32 %v6870, %v6894
    %v6899 = vadd.f32 %v6871, %v6895
    %v6900 = vadd.f32 %v6872, %v6896
    %6905 = vrot.lane.b32.xlu0 %v6897, 96
    %v6906 = vpop.permute.xlu0 %6905
    %6907 = vrot.lane.b32.xlu0 %v6898, 96
    %v6908 = vpop.permute.xlu0 %6907
    %6909 = vrot.lane.b32.xlu0 %v6899, 96
    %v6910 = vpop.permute.xlu0 %6909
    %6911 = vrot.lane.b32.xlu0 %v6900, 96
    %v6912 = vpop.permute.xlu0 %6911
    %s6917 = scalar_lea.vmem %s13, 32
    %6918 = vst.msk [vmem:[%s6917] sm:$0xff] %vm1126, %v6906
    %6919 = vst.msk [vmem:[%s6917 + $0x8] sm:$0xff] %vm1126, %v6908
    %6920 = vst.msk [vmem:[%s6917 + $0x10] sm:$0xff] %vm1126, %v6910
    %6921 = vst.msk [vmem:[%s6917 + $0x18] sm:$0xff] %vm1126, %v6912
    %v6922 = vld [vmem:[%s11] sm:$0xff]
    %v6923 = vld [vmem:[%s11 + $0x8] sm:$0xff]
    %v6924 = vld [vmem:[%s11 + $0x10] sm:$0xff]
    %v6925 = vld [vmem:[%s11 + $0x18] sm:$0xff]
    %v6926 = vld [vmem:[#allocation2] sm:$0x1]
    %v6928 = vlaneseq
    %v6929 = vshrl.u32 %v6928, 7
    %v6930 = vsub.s32 0, %v6929
    %v6931 = vrot.slane %v6926, %v6930
    %v6933 = vsel %vm1126, %v6906, 0
    %v6935 = vsel %vm1126, %v6908, 0
    %v6937 = vsel %vm1126, %v6910, 0
    %v6939 = vsel %vm1126, %v6912, 0
    %6941 = vmatprep.subr.mxu0 0.0
    %6942 = vmatpush1.msra.mxu0 %v6922
    %6943 = vmatprep.subr.mxu0 0.0
    %6944 = vmatpush1.msra.mxu0 %v6923
    %6945 = vmatprep.subr.mxu0 0.0
    %6946 = vmatpush1.msra.mxu0 %v6924
    %6947 = vmatprep.subr.mxu0 0.0
    %6948 = vmatpush1.msra.mxu0 %v6925
    %6949 = vmatprep.subr.mxu0 0.0
    %6950 = vmatpush1.msra.mxu0 0.0
    %6951 = vmatprep.subr.mxu0 0.0
    %6952 = vmatpush1.msra.mxu0 0.0
    %6953 = vmatprep.subr.mxu0 0.0
    %6954 = vmatpush1.msra.mxu0 0.0
    %6955 = vmatprep.subr.mxu0 0.0
    %6956 = vmatpush1.msra.mxu0 0.0
    %6957 = vmatprep.subr.mxu0 0.0
    %6958 = vmatpush1.msra.mxu0 0.0
    %6959 = vmatprep.subr.mxu0 0.0
    %6960 = vmatpush1.msra.mxu0 0.0
    %6961 = vmatprep.subr.mxu0 0.0
    %6962 = vmatpush1.msra.mxu0 0.0
    %6963 = vmatprep.subr.mxu0 0.0
    %6964 = vmatpush1.msra.mxu0 0.0
    %6965 = vmatprep.subr.mxu0 0.0
    %6966 = vmatpush1.msra.mxu0 0.0
    %6967 = vmatprep.subr.mxu0 0.0
    %6968 = vmatpush1.msra.mxu0 0.0
    %6969 = vmatprep.subr.mxu0 0.0
    %6970 = vmatpush1.msra.mxu0 0.0
    %6971 = vmatprep.subr.mxu0 0.0
    %6972 = vmatpush1.msra.mxu0 0.0
    %6973 = vmatprep.subr.mxu0 0.0
    %6974 = vmatpush1.msra.mxu0 0.0
    %6975 = vmatprep.subr.mxu0 0.0
    %6976 = vmatpush1.msra.mxu0 0.0
    %6977 = vmatprep.subr.mxu0 0.0
    %6978 = vmatpush1.msra.mxu0 0.0
    %6979 = vmatprep.subr.mxu0 0.0
    %6980 = vmatpush1.msra.mxu0 0.0
    %6981 = vmatprep.subr.mxu0 0.0
    %6982 = vmatpush1.msra.mxu0 0.0
    %6983 = vmatprep.subr.mxu0 0.0
    %6984 = vmatpush1.msra.mxu0 0.0
    %6985 = vmatprep.subr.mxu0 0.0
    %6986 = vmatpush1.msra.mxu0 0.0
    %6987 = vmatprep.subr.mxu0 0.0
    %6988 = vmatpush1.msra.mxu0 0.0
    %6989 = vmatprep.subr.mxu0 0.0
    %6990 = vmatpush1.msra.mxu0 0.0
    %6991 = vmatprep.subr.mxu0 0.0
    %6992 = vmatpush1.msra.mxu0 0.0
    %6993 = vmatprep.subr.mxu0 0.0
    %6994 = vmatpush1.msra.mxu0 0.0
    %6995 = vmatprep.subr.mxu0 0.0
    %6996 = vmatpush1.msra.mxu0 0.0
    %6997 = vmatprep.subr.mxu0 0.0
    %6998 = vmatpush1.msra.mxu0 0.0
    %6999 = vmatprep.subr.mxu0 0.0
    %7000 = vmatpush1.msra.mxu0 0.0
    %7001 = vmatprep.subr.mxu0 0.0
    %7002 = vmatpush1.msra.mxu0 0.0
    %7003 = vmatprep.subr.mxu0 0.0
    %7004 = vmatpush1.msra.mxu0 0.0
    %7005 = vmatprep.mubr.f32.mxu0 0.0
    %7006 = vmatmul.mubr.f32.gmra.mrb[0].mxu0 %v6933
    %v7007 = vpop.f32.mrb[0].mxu0
    %v7008 = vadd.f32 %v6931, %v7007
    %v7009 = vpop.f32.mrb[0].mxu0
    %7010 = vmatprep.mubr.f32.mxu0 0.0
    %7011 = vmatmul.mubr.f32.gmra.mrb[0].mxu0 %v6935
    %v7012 = vpop.f32.mrb[0].mxu0
    %v7013 = vadd.f32 %v6931, %v7012
    %v7014 = vpop.f32.mrb[0].mxu0
    %7015 = vmatprep.mubr.f32.mxu0 0.0
    %7016 = vmatmul.mubr.f32.gmra.mrb[0].mxu0 %v6937
    %v7017 = vpop.f32.mrb[0].mxu0
    %v7018 = vadd.f32 %v6931, %v7017
    %v7019 = vpop.f32.mrb[0].mxu0
    %7020 = vmatprep.mubr.f32.mxu0 0.0
    %7021 = vmatmul.mubr.f32.gmra.mrb[0].mxu0 %v6939
    %v7022 = vpop.f32.mrb[0].mxu0
    %v7023 = vadd.f32 %v6931, %v7022
    %v7024 = vpop.f32.mrb[0].mxu0
    %7025 = vdwg.mxu0
    %vm7026 = vcmask 7168
    %7027 = vst.msk [vmem:[%s14] sm:$0xff] %vm7026, %v7008
    %7028 = vst.msk [vmem:[%s14 + $0x8] sm:$0xff] %vm7026, %v7013
    %7029 = vst.msk [vmem:[%s14 + $0x10] sm:$0xff] %vm7026, %v7018
    %7030 = vst.msk [vmem:[%s14 + $0x18] sm:$0xff] %vm7026, %v7023
    // Predicated region
    $region82: #{decoder_sigma_forward.1} parent=1 // pred_check
      _
    $region83: #{decoder_sigma_forward.1} parent=1 // pred_check_branch
      %7032 = sbr.rel (0) target = $region85
    $region84: #{decoder_sigma_forward.1} parent=1 // pred_region
      _
    $region85: #{decoder_sigma_forward.1} parent=1 // pred_fallthru
      _
    // Predicated region
    $region86: #{decoder_sigma_forward.1} parent=1 // pred_check
      _
    $region87: #{decoder_sigma_forward.1} parent=1 // pred_check_branch
      %7034 = sbr.rel (0) target = $region89
    $region88: #{decoder_sigma_forward.1} parent=1 // pred_region
      _
    $region89: #{decoder_sigma_forward.1} parent=1 // pred_fallthru
      _
    // Predicated region
    $region90: #{decoder_sigma_forward.1} parent=1 // pred_check
      _
    $region91: #{decoder_sigma_forward.1} parent=1 // pred_check_branch
      %7036 = sbr.rel (0) target = $region93
    $region92: #{decoder_sigma_forward.1} parent=1 // pred_region
      _
    $region93: #{decoder_sigma_forward.1} parent=1 // pred_fallthru
      _
    // Predicated region
    $region94: #{decoder_sigma_forward.1} parent=1 // pred_check
      _
    $region95: #{decoder_sigma_forward.1} parent=1 // pred_check_branch
      %7038 = sbr.rel (0) target = $region97
    $region96: #{decoder_sigma_forward.1} parent=1 // pred_region
      _
    $region97: #{decoder_sigma_forward.1} parent=1 // pred_fallthru
      _
    %7039 = vsyncpa [#allocation4], 1
    %7040 = vsyncpa [#allocation6], 1
    %7041 = vsyncpa [#allocation9], 1
    %7042 = vsyncpa [#allocation12], 1

</llo_original>
